<compile_context>
chip_gen: v7x
topology: tpu7x:2x2x1
jax: 0.10.0
libtpu: 0.0.40
codegen_flags: <defaults>
</compile_context>

<pallas_src>
import functools

import jax
import jax.numpy as jnp
from jax import lax
from jax.experimental import pallas as pl
from jax.experimental.pallas import tpu as pltpu

H = 32          # hidden size
V = 64          # vocabulary size
SOS_token = 1
N_LAYERS = 1    # decoder.n_layers


# ---------------------------------------------------------------------------
# Shared GRU cell math (PyTorch gate order: reset, update, new)
# ---------------------------------------------------------------------------
def _gru_cell(x, h, w_ih, w_hh, b_ih, b_hh):
    gi = jnp.dot(x, w_ih, preferred_element_type=jnp.float32) + b_ih   # (1, 3H)
    gh = jnp.dot(h, w_hh, preferred_element_type=jnp.float32) + b_hh   # (1, 3H)
    i_r, i_z, i_n = gi[:, 0:H], gi[:, H:2 * H], gi[:, 2 * H:3 * H]
    h_r, h_z, h_n = gh[:, 0:H], gh[:, H:2 * H], gh[:, 2 * H:3 * H]
    r = jax.nn.sigmoid(i_r + h_r)
    z = jax.nn.sigmoid(i_z + h_z)
    n = jnp.tanh(i_n + r * h_n)
    return (1.0 - z) * n + z * h


# ---------------------------------------------------------------------------
# Fully fused kernel: encoder GRU + autoregressive decode + sampling.
# ---------------------------------------------------------------------------
def _fused_decode_kernel(
    tokens_ref, uniforms_ref,                                # SMEM inputs
    emb_ref,
    enc_w_ih_ref, enc_w_hh_ref, enc_b_ih_ref, enc_b_hh_ref,
    dec_w_ih_ref, dec_w_hh_ref, dec_b_ih_ref, dec_b_hh_ref,
    wc_h_ref, wc_c_ref, b_c_ref, w_out_ref, b_out_ref,       # VMEM inputs
    tokens_out_ref, scores_out_ref,                          # SMEM outputs
    enc_out_scratch,                                         # VMEM scratch (L, H)
    *, seq_len, max_length):
    emb = emb_ref[...]                                            # (V, H)
    lane_v = lax.broadcasted_iota(jnp.int32, (1, V), 1)           # 0..V-1 per lane

    # ------------------- encoder GRU over the input sequence -------------------
    enc_w_ih, enc_w_hh = enc_w_ih_ref[...], enc_w_hh_ref[...]
    enc_b_ih, enc_b_hh = enc_b_ih_ref[...], enc_b_hh_ref[...]

    h = jnp.zeros((1, H), jnp.float32)
    for t in range(seq_len):                                      # static unroll
        tok = tokens_ref[t]
        x_emb = jnp.dot(jnp.where(lane_v == tok, 1.0, 0.0), emb,  # embedding lookup
                        preferred_element_type=jnp.float32)       # (1, H)
        h = _gru_cell(x_emb, h, enc_w_ih, enc_w_hh, enc_b_ih, enc_b_hh)
        enc_out_scratch[pl.ds(t, 1), :] = h                       # static row store

    enc_out = enc_out_scratch[...]                                # (L, H)
    dec_h = h                                                     # encoder_hidden[:n_layers]

    # ------------------------- decoder weights (VMEM) --------------------------
    dec_w_ih, dec_w_hh = dec_w_ih_ref[...], dec_w_hh_ref[...]
    dec_b_ih, dec_b_hh = dec_b_ih_ref[...], dec_b_hh_ref[...]
    wc_h, wc_c, b_c = wc_h_ref[...], wc_c_ref[...], b_c_ref[...]
    w_out, b_out = w_out_ref[...], b_out_ref[...]

    # Upper-triangular ones matrix: cumsum over the vocab axis as one MXU matmul.
    rows = lax.broadcasted_iota(jnp.int32, (V, V), 0)
    cols = lax.broadcasted_iota(jnp.int32, (V, V), 1)
    cum_mat = jnp.where(rows <= cols, 1.0, 0.0)                   # (V, V)

    x_onehot = jnp.where(lane_v == SOS_token, 1.0, 0.0)           # SOS one-hot (1, V)

    # -------------------------- autoregressive decode --------------------------
    for i in range(max_length):                                   # static unroll
        # embedding lookup via one-hot matmul
        x_emb = jnp.dot(x_onehot, emb, preferred_element_type=jnp.float32)   # (1, H)

        # decoder GRU cell
        dec_h = _gru_cell(x_emb, dec_h, dec_w_ih, dec_w_hh, dec_b_ih, dec_b_hh)

        # Luong "dot" attention over encoder outputs
        att = lax.dot_general(dec_h, enc_out, (((1,), (1,)), ((), ())),
                              preferred_element_type=jnp.float32)            # (1, L)
        att = att - jnp.max(att, axis=-1, keepdims=True)
        e = jnp.exp(att)
        attn_w = e / jnp.sum(e, axis=-1, keepdims=True)
        context = jnp.dot(attn_w, enc_out, preferred_element_type=jnp.float32)  # (1, H)

        # concat layer: tanh(W_concat @ [h ; context]) with W_concat split in two
        concat_out = jnp.tanh(
            jnp.dot(dec_h, wc_h, preferred_element_type=jnp.float32)
            + jnp.dot(context, wc_c, preferred_element_type=jnp.float32)
            + b_c)                                                           # (1, H)

        # output softmax
        logits = jnp.dot(concat_out, w_out,
                         preferred_element_type=jnp.float32) + b_out         # (1, V)
        logits = logits - jnp.max(logits, axis=-1, keepdims=True)
        pe = jnp.exp(logits)
        probs = pe / jnp.sum(pe, axis=-1, keepdims=True)

        # my_random_pick: first index with x < cumulative probability
        x01 = uniforms_ref[i]                                                # scalar
        cum = jnp.dot(probs, cum_mat, preferred_element_type=jnp.float32)    # (1, V)
        n_below = jnp.sum(jnp.where(x01 >= cum, 1.0, 0.0))                   # scalar
        item = jnp.minimum(n_below, float(V - 1)).astype(jnp.int32)          # scalar

        x_onehot = jnp.where(lane_v == item, 1.0, 0.0)       # reused as next embed
        score = jnp.sum(probs * x_onehot)                    # probs[item]

        tokens_out_ref[i] = item
        scores_out_ref[i] = score


# ---------------------------------------------------------------------------
# ProbabilitySearchDecoder.forward — one pallas_call for the whole forward pass
# ---------------------------------------------------------------------------
@functools.partial(jax.jit, static_argnums=(3,))
def probability_search_decode(params, input_seq, input_length, max_length, key):
    del input_length   # single unpadded sequence: full (static) length is used
    seq_len = input_seq.shape[0]
    # One uniform [0,1) draw per decode step (== random.uniform(0,1) in the ref).
    uniforms = jax.random.uniform(key, (max_length,), jnp.float32)

    kernel = functools.partial(_fused_decode_kernel,
                               seq_len=seq_len, max_length=max_length)

    smem = pl.BlockSpec(memory_space=pltpu.MemorySpace.SMEM)
    vmem = pl.BlockSpec(memory_space=pltpu.MemorySpace.VMEM)

    tokens, scores = pl.pallas_call(
        kernel,
        out_shape=(jax.ShapeDtypeStruct((max_length,), jnp.int32),
                   jax.ShapeDtypeStruct((max_length,), jnp.float32)),
        in_specs=[smem, smem] + [vmem] * 14,
        out_specs=(smem, smem),
        scratch_shapes=[pltpu.VMEM((seq_len, H), jnp.float32)],
    )(input_seq.astype(jnp.int32), uniforms,
      params["embedding"],
      params["enc_w_ih"], params["enc_w_hh"], params["enc_b_ih"], params["enc_b_hh"],
      params["dec_w_ih"], params["dec_w_hh"], params["dec_b_ih"], params["dec_b_hh"],
      params["wc_h"], params["wc_c"], params["b_c"],
      params["w_out"], params["b_out"])
    return tokens, scores


# ---------------------------------------------------------------------------
# Deterministic parameter init
# ---------------------------------------------------------------------------
def init_params(key):
    ks = jax.random.split(key, 16)
    s = 0.1
    return {
        "embedding": jax.random.normal(ks[0], (V, H), jnp.float32) * s,
        "enc_w_ih": jax.random.normal(ks[1], (H, 3 * H), jnp.float32) * s,
        "enc_w_hh": jax.random.normal(ks[2], (H, 3 * H), jnp.float32) * s,
        "enc_b_ih": jax.random.normal(ks[3], (1, 3 * H), jnp.float32) * s,
        "enc_b_hh": jax.random.normal(ks[4], (1, 3 * H), jnp.float32) * s,
        "dec_w_ih": jax.random.normal(ks[5], (H, 3 * H), jnp.float32) * s,
        "dec_w_hh": jax.random.normal(ks[6], (H, 3 * H), jnp.float32) * s,
        "dec_b_ih": jax.random.normal(ks[7], (1, 3 * H), jnp.float32) * s,
        "dec_b_hh": jax.random.normal(ks[8], (1, 3 * H), jnp.float32) * s,
        "wc_h": jax.random.normal(ks[9], (H, H), jnp.float32) * s,
        "wc_c": jax.random.normal(ks[10], (H, H), jnp.float32) * s,
        "b_c": jax.random.normal(ks[11], (1, H), jnp.float32) * s,
        "w_out": jax.random.normal(ks[12], (H, V), jnp.float32) * s,
        "b_out": jax.random.normal(ks[13], (1, V), jnp.float32) * s,
    }


if __name__ == "__main__":
    root = jax.random.PRNGKey(0)
    pkey, skey, dkey = jax.random.split(root, 3)

    params = init_params(pkey)

    L = 8
    input_seq = jax.random.randint(skey, (L,), 2, V, dtype=jnp.int32)
    input_length = jnp.array([L], dtype=jnp.int32)
    max_length = 6

    all_tokens, all_scores = probability_search_decode(
        params, input_seq, input_length, max_length, dkey)
    jax.block_until_ready((all_tokens, all_scores))

    assert all_tokens.shape == (max_length,) and all_tokens.dtype == jnp.int32
    assert all_scores.shape == (max_length,) and all_scores.dtype == jnp.float32
    assert bool(jnp.all((all_tokens >= 0) & (all_tokens < V)))
    assert bool(jnp.all((all_scores > 0.0) & (all_scores < 1.0 + 1e-3)))
    print("KERNEL_OK")
</pallas_src>

<mosaic_0001>
module attributes {stable_mosaic.version = 11 : i64} {
  func.func @_fused_decode_kernel(%arg0: memref<8xi32, #tpu.memory_space<smem>>, %arg1: memref<6xf32, #tpu.memory_space<smem>>, %arg2: memref<64x32xf32, #tpu.memory_space<vmem>>, %arg3: memref<32x96xf32, #tpu.memory_space<vmem>>, %arg4: memref<32x96xf32, #tpu.memory_space<vmem>>, %arg5: memref<1x96xf32, #tpu.memory_space<vmem>>, %arg6: memref<1x96xf32, #tpu.memory_space<vmem>>, %arg7: memref<32x96xf32, #tpu.memory_space<vmem>>, %arg8: memref<32x96xf32, #tpu.memory_space<vmem>>, %arg9: memref<1x96xf32, #tpu.memory_space<vmem>>, %arg10: memref<1x96xf32, #tpu.memory_space<vmem>>, %arg11: memref<32x32xf32, #tpu.memory_space<vmem>>, %arg12: memref<32x32xf32, #tpu.memory_space<vmem>>, %arg13: memref<1x32xf32, #tpu.memory_space<vmem>>, %arg14: memref<32x64xf32, #tpu.memory_space<vmem>>, %arg15: memref<1x64xf32, #tpu.memory_space<vmem>>, %arg16: memref<6xi32, #tpu.memory_space<smem>>, %arg17: memref<6xf32, #tpu.memory_space<smem>>, %arg18: memref<8x32xf32, #tpu.memory_space<vmem>>) attributes {dimension_semantics = [], scalar_prefetch = 0 : i64, scratch_operands = 1 : i64, tpu.core_type = #tpu.core_type<tc>} {
    %c0 = arith.constant 0 : index
    %c0_0 = arith.constant 0 : index
    %0 = vector.load %arg2[%c0, %c0_0] : memref<64x32xf32, #tpu.memory_space<vmem>>, vector<64x32xf32>
    %1 = tpu.iota {dimensions = array<i32: 1>} : vector<1x64xi32>
    %c0_1 = arith.constant 0 : index
    %c0_2 = arith.constant 0 : index
    %2 = vector.load %arg3[%c0_1, %c0_2] : memref<32x96xf32, #tpu.memory_space<vmem>>, vector<32x96xf32>
    %c0_3 = arith.constant 0 : index
    %c0_4 = arith.constant 0 : index
    %3 = vector.load %arg4[%c0_3, %c0_4] : memref<32x96xf32, #tpu.memory_space<vmem>>, vector<32x96xf32>
    %c0_5 = arith.constant 0 : index
    %c0_6 = arith.constant 0 : index
    %4 = vector.load %arg5[%c0_5, %c0_6] : memref<1x96xf32, #tpu.memory_space<vmem>>, vector<1x96xf32>
    %c0_7 = arith.constant 0 : index
    %c0_8 = arith.constant 0 : index
    %5 = vector.load %arg6[%c0_7, %c0_8] : memref<1x96xf32, #tpu.memory_space<vmem>>, vector<1x96xf32>
    %cst = arith.constant 0.000000e+00 : f32
    %6 = vector.broadcast %cst : f32 to vector<1x32xf32>
    %c0_9 = arith.constant 0 : index
    %7 = memref.load %arg0[%c0_9] : memref<8xi32, #tpu.memory_space<smem>>
    %8 = vector.broadcast %7 : i32 to vector<1x64xi32>
    %9 = arith.cmpi eq, %1, %8 : vector<1x64xi32>
    %cst_10 = arith.constant 1.000000e+00 : f32
    %cst_11 = arith.constant 0.000000e+00 : f32
    %10 = vector.broadcast %cst_10 : f32 to vector<1x64xf32>
    %11 = vector.broadcast %cst_11 : f32 to vector<1x64xf32>
    %12 = arith.select %9, %10, %11 : vector<1x64xi1>, vector<1x64xf32>
    %cst_12 = arith.constant dense<0.000000e+00> : vector<1x32xf32>
    %13 = tpu.matmul %12, %0, %cst_12 {dimension_numbers = #tpu.dot_dimension_numbers<[1], [0], [0], [1], [0, 0, 1, 1], [], []>} : vector<1x64xf32>, vector<64x32xf32>, vector<1x32xf32> -> vector<1x32xf32>
    %cst_13 = arith.constant dense<0.000000e+00> : vector<1x96xf32>
    %14 = tpu.matmul %13, %2, %cst_13 {dimension_numbers = #tpu.dot_dimension_numbers<[1], [0], [0], [1], [0, 0, 1, 1], [], []>} : vector<1x32xf32>, vector<32x96xf32>, vector<1x96xf32> -> vector<1x96xf32>
    %15 = arith.addf %14, %4 : vector<1x96xf32>
    %cst_14 = arith.constant dense<0.000000e+00> : vector<1x96xf32>
    %16 = tpu.matmul %6, %3, %cst_14 {dimension_numbers = #tpu.dot_dimension_numbers<[1], [0], [0], [1], [0, 0, 1, 1], [], []>} : vector<1x32xf32>, vector<32x96xf32>, vector<1x96xf32> -> vector<1x96xf32>
    %17 = arith.addf %16, %5 : vector<1x96xf32>
    %18 = vector.extract_strided_slice %15 {offsets = [0, 0], sizes = [1, 32], strides = [1, 1]} : vector<1x96xf32> to vector<1x32xf32>
    %19 = vector.extract_strided_slice %15 {offsets = [0, 32], sizes = [1, 32], strides = [1, 1]} : vector<1x96xf32> to vector<1x32xf32>
    %20 = vector.extract_strided_slice %15 {offsets = [0, 64], sizes = [1, 32], strides = [1, 1]} : vector<1x96xf32> to vector<1x32xf32>
    %21 = vector.extract_strided_slice %17 {offsets = [0, 0], sizes = [1, 32], strides = [1, 1]} : vector<1x96xf32> to vector<1x32xf32>
    %22 = vector.extract_strided_slice %17 {offsets = [0, 32], sizes = [1, 32], strides = [1, 1]} : vector<1x96xf32> to vector<1x32xf32>
    %23 = vector.extract_strided_slice %17 {offsets = [0, 64], sizes = [1, 32], strides = [1, 1]} : vector<1x96xf32> to vector<1x32xf32>
    %24 = arith.addf %18, %21 : vector<1x32xf32>
    %25 = arith.negf %24 : vector<1x32xf32>
    %26 = math.exp %25 : vector<1x32xf32>
    %cst_15 = arith.constant 1.000000e+00 : f32
    %27 = vector.broadcast %cst_15 : f32 to vector<1x32xf32>
    %28 = arith.addf %27, %26 : vector<1x32xf32>
    %29 = arith.divf %27, %28 : vector<1x32xf32>
    %30 = arith.addf %19, %22 : vector<1x32xf32>
    %31 = arith.negf %30 : vector<1x32xf32>
    %32 = math.exp %31 : vector<1x32xf32>
    %cst_16 = arith.constant 1.000000e+00 : f32
    %33 = vector.broadcast %cst_16 : f32 to vector<1x32xf32>
    %34 = arith.addf %33, %32 : vector<1x32xf32>
    %35 = arith.divf %33, %34 : vector<1x32xf32>
    %36 = arith.mulf %29, %23 : vector<1x32xf32>
    %37 = arith.addf %20, %36 : vector<1x32xf32>
    %38 = math.tanh %37 : vector<1x32xf32>
    %cst_17 = arith.constant 1.000000e+00 : f32
    %39 = vector.broadcast %cst_17 : f32 to vector<1x32xf32>
    %40 = arith.subf %39, %35 : vector<1x32xf32>
    %41 = arith.mulf %40, %38 : vector<1x32xf32>
    %42 = arith.mulf %35, %6 : vector<1x32xf32>
    %43 = arith.addf %41, %42 : vector<1x32xf32>
    %c0_18 = arith.constant 0 : index
    %c0_19 = arith.constant 0 : index
    %44 = vector.load %arg18[%c0_18, %c0_19] : memref<8x32xf32, #tpu.memory_space<vmem>>, vector<1x32xf32>
    tpu.vector_store %arg18[%c0_18, %c0_19], %43 {strides = array<i32>} : memref<8x32xf32, #tpu.memory_space<vmem>>, vector<1x32xf32>,
    %c1 = arith.constant 1 : index
    %45 = memref.load %arg0[%c1] : memref<8xi32, #tpu.memory_space<smem>>
    %46 = vector.broadcast %45 : i32 to vector<1x64xi32>
    %47 = arith.cmpi eq, %1, %46 : vector<1x64xi32>
    %cst_20 = arith.constant 1.000000e+00 : f32
    %cst_21 = arith.constant 0.000000e+00 : f32
    %48 = vector.broadcast %cst_20 : f32 to vector<1x64xf32>
    %49 = vector.broadcast %cst_21 : f32 to vector<1x64xf32>
    %50 = arith.select %47, %48, %49 : vector<1x64xi1>, vector<1x64xf32>
    %cst_22 = arith.constant dense<0.000000e+00> : vector<1x32xf32>
    %51 = tpu.matmul %50, %0, %cst_22 {dimension_numbers = #tpu.dot_dimension_numbers<[1], [0], [0], [1], [0, 0, 1, 1], [], []>} : vector<1x64xf32>, vector<64x32xf32>, vector<1x32xf32> -> vector<1x32xf32>
    %cst_23 = arith.constant dense<0.000000e+00> : vector<1x96xf32>
    %52 = tpu.matmul %51, %2, %cst_23 {dimension_numbers = #tpu.dot_dimension_numbers<[1], [0], [0], [1], [0, 0, 1, 1], [], []>} : vector<1x32xf32>, vector<32x96xf32>, vector<1x96xf32> -> vector<1x96xf32>
    %53 = arith.addf %52, %4 : vector<1x96xf32>
    %cst_24 = arith.constant dense<0.000000e+00> : vector<1x96xf32>
    %54 = tpu.matmul %43, %3, %cst_24 {dimension_numbers = #tpu.dot_dimension_numbers<[1], [0], [0], [1], [0, 0, 1, 1], [], []>} : vector<1x32xf32>, vector<32x96xf32>, vector<1x96xf32> -> vector<1x96xf32>
    %55 = arith.addf %54, %5 : vector<1x96xf32>
    %56 = vector.extract_strided_slice %53 {offsets = [0, 0], sizes = [1, 32], strides = [1, 1]} : vector<1x96xf32> to vector<1x32xf32>
    %57 = vector.extract_strided_slice %53 {offsets = [0, 32], sizes = [1, 32], strides = [1, 1]} : vector<1x96xf32> to vector<1x32xf32>
    %58 = vector.extract_strided_slice %53 {offsets = [0, 64], sizes = [1, 32], strides = [1, 1]} : vector<1x96xf32> to vector<1x32xf32>
    %59 = vector.extract_strided_slice %55 {offsets = [0, 0], sizes = [1, 32], strides = [1, 1]} : vector<1x96xf32> to vector<1x32xf32>
    %60 = vector.extract_strided_slice %55 {offsets = [0, 32], sizes = [1, 32], strides = [1, 1]} : vector<1x96xf32> to vector<1x32xf32>
    %61 = vector.extract_strided_slice %55 {offsets = [0, 64], sizes = [1, 32], strides = [1, 1]} : vector<1x96xf32> to vector<1x32xf32>
    %62 = arith.addf %56, %59 : vector<1x32xf32>
    %63 = arith.negf %62 : vector<1x32xf32>
    %64 = math.exp %63 : vector<1x32xf32>
    %cst_25 = arith.constant 1.000000e+00 : f32
    %65 = vector.broadcast %cst_25 : f32 to vector<1x32xf32>
    %66 = arith.addf %65, %64 : vector<1x32xf32>
    %67 = arith.divf %65, %66 : vector<1x32xf32>
    %68 = arith.addf %57, %60 : vector<1x32xf32>
    %69 = arith.negf %68 : vector<1x32xf32>
    %70 = math.exp %69 : vector<1x32xf32>
    %cst_26 = arith.constant 1.000000e+00 : f32
    %71 = vector.broadcast %cst_26 : f32 to vector<1x32xf32>
    %72 = arith.addf %71, %70 : vector<1x32xf32>
    %73 = arith.divf %71, %72 : vector<1x32xf32>
    %74 = arith.mulf %67, %61 : vector<1x32xf32>
    %75 = arith.addf %58, %74 : vector<1x32xf32>
    %76 = math.tanh %75 : vector<1x32xf32>
    %cst_27 = arith.constant 1.000000e+00 : f32
    %77 = vector.broadcast %cst_27 : f32 to vector<1x32xf32>
    %78 = arith.subf %77, %73 : vector<1x32xf32>
    %79 = arith.mulf %78, %76 : vector<1x32xf32>
    %80 = arith.mulf %73, %43 : vector<1x32xf32>
    %81 = arith.addf %79, %80 : vector<1x32xf32>
    %c1_28 = arith.constant 1 : index
    %c0_29 = arith.constant 0 : index
    %82 = vector.load %arg18[%c1_28, %c0_29] : memref<8x32xf32, #tpu.memory_space<vmem>>, vector<1x32xf32>
    tpu.vector_store %arg18[%c1_28, %c0_29], %81 {strides = array<i32>} : memref<8x32xf32, #tpu.memory_space<vmem>>, vector<1x32xf32>,
    %c2 = arith.constant 2 : index
    %83 = memref.load %arg0[%c2] : memref<8xi32, #tpu.memory_space<smem>>
    %84 = vector.broadcast %83 : i32 to vector<1x64xi32>
    %85 = arith.cmpi eq, %1, %84 : vector<1x64xi32>
    %cst_30 = arith.constant 1.000000e+00 : f32
    %cst_31 = arith.constant 0.000000e+00 : f32
    %86 = vector.broadcast %cst_30 : f32 to vector<1x64xf32>
    %87 = vector.broadcast %cst_31 : f32 to vector<1x64xf32>
    %88 = arith.select %85, %86, %87 : vector<1x64xi1>, vector<1x64xf32>
    %cst_32 = arith.constant dense<0.000000e+00> : vector<1x32xf32>
    %89 = tpu.matmul %88, %0, %cst_32 {dimension_numbers = #tpu.dot_dimension_numbers<[1], [0], [0], [1], [0, 0, 1, 1], [], []>} : vector<1x64xf32>, vector<64x32xf32>, vector<1x32xf32> -> vector<1x32xf32>
    %cst_33 = arith.constant dense<0.000000e+00> : vector<1x96xf32>
    %90 = tpu.matmul %89, %2, %cst_33 {dimension_numbers = #tpu.dot_dimension_numbers<[1], [0], [0], [1], [0, 0, 1, 1], [], []>} : vector<1x32xf32>, vector<32x96xf32>, vector<1x96xf32> -> vector<1x96xf32>
    %91 = arith.addf %90, %4 : vector<1x96xf32>
    %cst_34 = arith.constant dense<0.000000e+00> : vector<1x96xf32>
    %92 = tpu.matmul %81, %3, %cst_34 {dimension_numbers = #tpu.dot_dimension_numbers<[1], [0], [0], [1], [0, 0, 1, 1], [], []>} : vector<1x32xf32>, vector<32x96xf32>, vector<1x96xf32> -> vector<1x96xf32>
    %93 = arith.addf %92, %5 : vector<1x96xf32>
    %94 = vector.extract_strided_slice %91 {offsets = [0, 0], sizes = [1, 32], strides = [1, 1]} : vector<1x96xf32> to vector<1x32xf32>
    %95 = vector.extract_strided_slice %91 {offsets = [0, 32], sizes = [1, 32], strides = [1, 1]} : vector<1x96xf32> to vector<1x32xf32>
    %96 = vector.extract_strided_slice %91 {offsets = [0, 64], sizes = [1, 32], strides = [1, 1]} : vector<1x96xf32> to vector<1x32xf32>
    %97 = vector.extract_strided_slice %93 {offsets = [0, 0], sizes = [1, 32], strides = [1, 1]} : vector<1x96xf32> to vector<1x32xf32>
    %98 = vector.extract_strided_slice %93 {offsets = [0, 32], sizes = [1, 32], strides = [1, 1]} : vector<1x96xf32> to vector<1x32xf32>
    %99 = vector.extract_strided_slice %93 {offsets = [0, 64], sizes = [1, 32], strides = [1, 1]} : vector<1x96xf32> to vector<1x32xf32>
    %100 = arith.addf %94, %97 : vector<1x32xf32>
    %101 = arith.negf %100 : vector<1x32xf32>
    %102 = math.exp %101 : vector<1x32xf32>
    %cst_35 = arith.constant 1.000000e+00 : f32
    %103 = vector.broadcast %cst_35 : f32 to vector<1x32xf32>
    %104 = arith.addf %103, %102 : vector<1x32xf32>
    %105 = arith.divf %103, %104 : vector<1x32xf32>
    %106 = arith.addf %95, %98 : vector<1x32xf32>
    %107 = arith.negf %106 : vector<1x32xf32>
    %108 = math.exp %107 : vector<1x32xf32>
    %cst_36 = arith.constant 1.000000e+00 : f32
    %109 = vector.broadcast %cst_36 : f32 to vector<1x32xf32>
    %110 = arith.addf %109, %108 : vector<1x32xf32>
    %111 = arith.divf %109, %110 : vector<1x32xf32>
    %112 = arith.mulf %105, %99 : vector<1x32xf32>
    %113 = arith.addf %96, %112 : vector<1x32xf32>
    %114 = math.tanh %113 : vector<1x32xf32>
    %cst_37 = arith.constant 1.000000e+00 : f32
    %115 = vector.broadcast %cst_37 : f32 to vector<1x32xf32>
    %116 = arith.subf %115, %111 : vector<1x32xf32>
    %117 = arith.mulf %116, %114 : vector<1x32xf32>
    %118 = arith.mulf %111, %81 : vector<1x32xf32>
    %119 = arith.addf %117, %118 : vector<1x32xf32>
    %c2_38 = arith.constant 2 : index
    %c0_39 = arith.constant 0 : index
    %120 = vector.load %arg18[%c2_38, %c0_39] : memref<8x32xf32, #tpu.memory_space<vmem>>, vector<1x32xf32>
    tpu.vector_store %arg18[%c2_38, %c0_39], %119 {strides = array<i32>} : memref<8x32xf32, #tpu.memory_space<vmem>>, vector<1x32xf32>,
    %c3 = arith.constant 3 : index
    %121 = memref.load %arg0[%c3] : memref<8xi32, #tpu.memory_space<smem>>
    %122 = vector.broadcast %121 : i32 to vector<1x64xi32>
    %123 = arith.cmpi eq, %1, %122 : vector<1x64xi32>
    %cst_40 = arith.constant 1.000000e+00 : f32
    %cst_41 = arith.constant 0.000000e+00 : f32
    %124 = vector.broadcast %cst_40 : f32 to vector<1x64xf32>
    %125 = vector.broadcast %cst_41 : f32 to vector<1x64xf32>
    %126 = arith.select %123, %124, %125 : vector<1x64xi1>, vector<1x64xf32>
    %cst_42 = arith.constant dense<0.000000e+00> : vector<1x32xf32>
    %127 = tpu.matmul %126, %0, %cst_42 {dimension_numbers = #tpu.dot_dimension_numbers<[1], [0], [0], [1], [0, 0, 1, 1], [], []>} : vector<1x64xf32>, vector<64x32xf32>, vector<1x32xf32> -> vector<1x32xf32>
    %cst_43 = arith.constant dense<0.000000e+00> : vector<1x96xf32>
    %128 = tpu.matmul %127, %2, %cst_43 {dimension_numbers = #tpu.dot_dimension_numbers<[1], [0], [0], [1], [0, 0, 1, 1], [], []>} : vector<1x32xf32>, vector<32x96xf32>, vector<1x96xf32> -> vector<1x96xf32>
    %129 = arith.addf %128, %4 : vector<1x96xf32>
    %cst_44 = arith.constant dense<0.000000e+00> : vector<1x96xf32>
    %130 = tpu.matmul %119, %3, %cst_44 {dimension_numbers = #tpu.dot_dimension_numbers<[1], [0], [0], [1], [0, 0, 1, 1], [], []>} : vector<1x32xf32>, vector<32x96xf32>, vector<1x96xf32> -> vector<1x96xf32>
    %131 = arith.addf %130, %5 : vector<1x96xf32>
    %132 = vector.extract_strided_slice %129 {offsets = [0, 0], sizes = [1, 32], strides = [1, 1]} : vector<1x96xf32> to vector<1x32xf32>
    %133 = vector.extract_strided_slice %129 {offsets = [0, 32], sizes = [1, 32], strides = [1, 1]} : vector<1x96xf32> to vector<1x32xf32>
    %134 = vector.extract_strided_slice %129 {offsets = [0, 64], sizes = [1, 32], strides = [1, 1]} : vector<1x96xf32> to vector<1x32xf32>
    %135 = vector.extract_strided_slice %131 {offsets = [0, 0], sizes = [1, 32], strides = [1, 1]} : vector<1x96xf32> to vector<1x32xf32>
    %136 = vector.extract_strided_slice %131 {offsets = [0, 32], sizes = [1, 32], strides = [1, 1]} : vector<1x96xf32> to vector<1x32xf32>
    %137 = vector.extract_strided_slice %131 {offsets = [0, 64], sizes = [1, 32], strides = [1, 1]} : vector<1x96xf32> to vector<1x32xf32>
    %138 = arith.addf %132, %135 : vector<1x32xf32>
    %139 = arith.negf %138 : vector<1x32xf32>
    %140 = math.exp %139 : vector<1x32xf32>
    %cst_45 = arith.constant 1.000000e+00 : f32
    %141 = vector.broadcast %cst_45 : f32 to vector<1x32xf32>
    %142 = arith.addf %141, %140 : vector<1x32xf32>
    %143 = arith.divf %141, %142 : vector<1x32xf32>
    %144 = arith.addf %133, %136 : vector<1x32xf32>
    %145 = arith.negf %144 : vector<1x32xf32>
    %146 = math.exp %145 : vector<1x32xf32>
    %cst_46 = arith.constant 1.000000e+00 : f32
    %147 = vector.broadcast %cst_46 : f32 to vector<1x32xf32>
    %148 = arith.addf %147, %146 : vector<1x32xf32>
    %149 = arith.divf %147, %148 : vector<1x32xf32>
    %150 = arith.mulf %143, %137 : vector<1x32xf32>
    %151 = arith.addf %134, %150 : vector<1x32xf32>
    %152 = math.tanh %151 : vector<1x32xf32>
    %cst_47 = arith.constant 1.000000e+00 : f32
    %153 = vector.broadcast %cst_47 : f32 to vector<1x32xf32>
    %154 = arith.subf %153, %149 : vector<1x32xf32>
    %155 = arith.mulf %154, %152 : vector<1x32xf32>
    %156 = arith.mulf %149, %119 : vector<1x32xf32>
    %157 = arith.addf %155, %156 : vector<1x32xf32>
    %c3_48 = arith.constant 3 : index
    %c0_49 = arith.constant 0 : index
    %158 = vector.load %arg18[%c3_48, %c0_49] : memref<8x32xf32, #tpu.memory_space<vmem>>, vector<1x32xf32>
    tpu.vector_store %arg18[%c3_48, %c0_49], %157 {strides = array<i32>} : memref<8x32xf32, #tpu.memory_space<vmem>>, vector<1x32xf32>,
    %c4 = arith.constant 4 : index
    %159 = memref.load %arg0[%c4] : memref<8xi32, #tpu.memory_space<smem>>
    %160 = vector.broadcast %159 : i32 to vector<1x64xi32>
    %161 = arith.cmpi eq, %1, %160 : vector<1x64xi32>
    %cst_50 = arith.constant 1.000000e+00 : f32
    %cst_51 = arith.constant 0.000000e+00 : f32
    %162 = vector.broadcast %cst_50 : f32 to vector<1x64xf32>
    %163 = vector.broadcast %cst_51 : f32 to vector<1x64xf32>
    %164 = arith.select %161, %162, %163 : vector<1x64xi1>, vector<1x64xf32>
    %cst_52 = arith.constant dense<0.000000e+00> : vector<1x32xf32>
    %165 = tpu.matmul %164, %0, %cst_52 {dimension_numbers = #tpu.dot_dimension_numbers<[1], [0], [0], [1], [0, 0, 1, 1], [], []>} : vector<1x64xf32>, vector<64x32xf32>, vector<1x32xf32> -> vector<1x32xf32>
    %cst_53 = arith.constant dense<0.000000e+00> : vector<1x96xf32>
    %166 = tpu.matmul %165, %2, %cst_53 {dimension_numbers = #tpu.dot_dimension_numbers<[1], [0], [0], [1], [0, 0, 1, 1], [], []>} : vector<1x32xf32>, vector<32x96xf32>, vector<1x96xf32> -> vector<1x96xf32>
    %167 = arith.addf %166, %4 : vector<1x96xf32>
    %cst_54 = arith.constant dense<0.000000e+00> : vector<1x96xf32>
    %168 = tpu.matmul %157, %3, %cst_54 {dimension_numbers = #tpu.dot_dimension_numbers<[1], [0], [0], [1], [0, 0, 1, 1], [], []>} : vector<1x32xf32>, vector<32x96xf32>, vector<1x96xf32> -> vector<1x96xf32>
    %169 = arith.addf %168, %5 : vector<1x96xf32>
    %170 = vector.extract_strided_slice %167 {offsets = [0, 0], sizes = [1, 32], strides = [1, 1]} : vector<1x96xf32> to vector<1x32xf32>
    %171 = vector.extract_strided_slice %167 {offsets = [0, 32], sizes = [1, 32], strides = [1, 1]} : vector<1x96xf32> to vector<1x32xf32>
    %172 = vector.extract_strided_slice %167 {offsets = [0, 64], sizes = [1, 32], strides = [1, 1]} : vector<1x96xf32> to vector<1x32xf32>
    %173 = vector.extract_strided_slice %169 {offsets = [0, 0], sizes = [1, 32], strides = [1, 1]} : vector<1x96xf32> to vector<1x32xf32>
    %174 = vector.extract_strided_slice %169 {offsets = [0, 32], sizes = [1, 32], strides = [1, 1]} : vector<1x96xf32> to vector<1x32xf32>
    %175 = vector.extract_strided_slice %169 {offsets = [0, 64], sizes = [1, 32], strides = [1, 1]} : vector<1x96xf32> to vector<1x32xf32>
    %176 = arith.addf %170, %173 : vector<1x32xf32>
    %177 = arith.negf %176 : vector<1x32xf32>
    %178 = math.exp %177 : vector<1x32xf32>
    %cst_55 = arith.constant 1.000000e+00 : f32
    %179 = vector.broadcast %cst_55 : f32 to vector<1x32xf32>
    %180 = arith.addf %179, %178 : vector<1x32xf32>
    %181 = arith.divf %179, %180 : vector<1x32xf32>
    %182 = arith.addf %171, %174 : vector<1x32xf32>
    %183 = arith.negf %182 : vector<1x32xf32>
    %184 = math.exp %183 : vector<1x32xf32>
    %cst_56 = arith.constant 1.000000e+00 : f32
    %185 = vector.broadcast %cst_56 : f32 to vector<1x32xf32>
    %186 = arith.addf %185, %184 : vector<1x32xf32>
    %187 = arith.divf %185, %186 : vector<1x32xf32>
    %188 = arith.mulf %181, %175 : vector<1x32xf32>
    %189 = arith.addf %172, %188 : vector<1x32xf32>
    %190 = math.tanh %189 : vector<1x32xf32>
    %cst_57 = arith.constant 1.000000e+00 : f32
    %191 = vector.broadcast %cst_57 : f32 to vector<1x32xf32>
    %192 = arith.subf %191, %187 : vector<1x32xf32>
    %193 = arith.mulf %192, %190 : vector<1x32xf32>
    %194 = arith.mulf %187, %157 : vector<1x32xf32>
    %195 = arith.addf %193, %194 : vector<1x32xf32>
    %c4_58 = arith.constant 4 : index
    %c0_59 = arith.constant 0 : index
    %196 = vector.load %arg18[%c4_58, %c0_59] : memref<8x32xf32, #tpu.memory_space<vmem>>, vector<1x32xf32>
    tpu.vector_store %arg18[%c4_58, %c0_59], %195 {strides = array<i32>} : memref<8x32xf32, #tpu.memory_space<vmem>>, vector<1x32xf32>,
    %c5 = arith.constant 5 : index
    %197 = memref.load %arg0[%c5] : memref<8xi32, #tpu.memory_space<smem>>
    %198 = vector.broadcast %197 : i32 to vector<1x64xi32>
    %199 = arith.cmpi eq, %1, %198 : vector<1x64xi32>
    %cst_60 = arith.constant 1.000000e+00 : f32
    %cst_61 = arith.constant 0.000000e+00 : f32
    %200 = vector.broadcast %cst_60 : f32 to vector<1x64xf32>
    %201 = vector.broadcast %cst_61 : f32 to vector<1x64xf32>
    %202 = arith.select %199, %200, %201 : vector<1x64xi1>, vector<1x64xf32>
    %cst_62 = arith.constant dense<0.000000e+00> : vector<1x32xf32>
    %203 = tpu.matmul %202, %0, %cst_62 {dimension_numbers = #tpu.dot_dimension_numbers<[1], [0], [0], [1], [0, 0, 1, 1], [], []>} : vector<1x64xf32>, vector<64x32xf32>, vector<1x32xf32> -> vector<1x32xf32>
    %cst_63 = arith.constant dense<0.000000e+00> : vector<1x96xf32>
    %204 = tpu.matmul %203, %2, %cst_63 {dimension_numbers = #tpu.dot_dimension_numbers<[1], [0], [0], [1], [0, 0, 1, 1], [], []>} : vector<1x32xf32>, vector<32x96xf32>, vector<1x96xf32> -> vector<1x96xf32>
    %205 = arith.addf %204, %4 : vector<1x96xf32>
    %cst_64 = arith.constant dense<0.000000e+00> : vector<1x96xf32>
    %206 = tpu.matmul %195, %3, %cst_64 {dimension_numbers = #tpu.dot_dimension_numbers<[1], [0], [0], [1], [0, 0, 1, 1], [], []>} : vector<1x32xf32>, vector<32x96xf32>, vector<1x96xf32> -> vector<1x96xf32>
    %207 = arith.addf %206, %5 : vector<1x96xf32>
    %208 = vector.extract_strided_slice %205 {offsets = [0, 0], sizes = [1, 32], strides = [1, 1]} : vector<1x96xf32> to vector<1x32xf32>
    %209 = vector.extract_strided_slice %205 {offsets = [0, 32], sizes = [1, 32], strides = [1, 1]} : vector<1x96xf32> to vector<1x32xf32>
    %210 = vector.extract_strided_slice %205 {offsets = [0, 64], sizes = [1, 32], strides = [1, 1]} : vector<1x96xf32> to vector<1x32xf32>
    %211 = vector.extract_strided_slice %207 {offsets = [0, 0], sizes = [1, 32], strides = [1, 1]} : vector<1x96xf32> to vector<1x32xf32>
    %212 = vector.extract_strided_slice %207 {offsets = [0, 32], sizes = [1, 32], strides = [1, 1]} : vector<1x96xf32> to vector<1x32xf32>
    %213 = vector.extract_strided_slice %207 {offsets = [0, 64], sizes = [1, 32], strides = [1, 1]} : vector<1x96xf32> to vector<1x32xf32>
    %214 = arith.addf %208, %211 : vector<1x32xf32>
    %215 = arith.negf %214 : vector<1x32xf32>
    %216 = math.exp %215 : vector<1x32xf32>
    %cst_65 = arith.constant 1.000000e+00 : f32
    %217 = vector.broadcast %cst_65 : f32 to vector<1x32xf32>
    %218 = arith.addf %217, %216 : vector<1x32xf32>
    %219 = arith.divf %217, %218 : vector<1x32xf32>
    %220 = arith.addf %209, %212 : vector<1x32xf32>
    %221 = arith.negf %220 : vector<1x32xf32>
    %222 = math.exp %221 : vector<1x32xf32>
    %cst_66 = arith.constant 1.000000e+00 : f32
    %223 = vector.broadcast %cst_66 : f32 to vector<1x32xf32>
    %224 = arith.addf %223, %222 : vector<1x32xf32>
    %225 = arith.divf %223, %224 : vector<1x32xf32>
    %226 = arith.mulf %219, %213 : vector<1x32xf32>
    %227 = arith.addf %210, %226 : vector<1x32xf32>
    %228 = math.tanh %227 : vector<1x32xf32>
    %cst_67 = arith.constant 1.000000e+00 : f32
    %229 = vector.broadcast %cst_67 : f32 to vector<1x32xf32>
    %230 = arith.subf %229, %225 : vector<1x32xf32>
    %231 = arith.mulf %230, %228 : vector<1x32xf32>
    %232 = arith.mulf %225, %195 : vector<1x32xf32>
    %233 = arith.addf %231, %232 : vector<1x32xf32>
    %c5_68 = arith.constant 5 : index
    %c0_69 = arith.constant 0 : index
    %234 = vector.load %arg18[%c5_68, %c0_69] : memref<8x32xf32, #tpu.memory_space<vmem>>, vector<1x32xf32>
    tpu.vector_store %arg18[%c5_68, %c0_69], %233 {strides = array<i32>} : memref<8x32xf32, #tpu.memory_space<vmem>>, vector<1x32xf32>,
    %c6 = arith.constant 6 : index
    %235 = memref.load %arg0[%c6] : memref<8xi32, #tpu.memory_space<smem>>
    %236 = vector.broadcast %235 : i32 to vector<1x64xi32>
    %237 = arith.cmpi eq, %1, %236 : vector<1x64xi32>
    %cst_70 = arith.constant 1.000000e+00 : f32
    %cst_71 = arith.constant 0.000000e+00 : f32
    %238 = vector.broadcast %cst_70 : f32 to vector<1x64xf32>
    %239 = vector.broadcast %cst_71 : f32 to vector<1x64xf32>
    %240 = arith.select %237, %238, %239 : vector<1x64xi1>, vector<1x64xf32>
    %cst_72 = arith.constant dense<0.000000e+00> : vector<1x32xf32>
    %241 = tpu.matmul %240, %0, %cst_72 {dimension_numbers = #tpu.dot_dimension_numbers<[1], [0], [0], [1], [0, 0, 1, 1], [], []>} : vector<1x64xf32>, vector<64x32xf32>, vector<1x32xf32> -> vector<1x32xf32>
    %cst_73 = arith.constant dense<0.000000e+00> : vector<1x96xf32>
    %242 = tpu.matmul %241, %2, %cst_73 {dimension_numbers = #tpu.dot_dimension_numbers<[1], [0], [0], [1], [0, 0, 1, 1], [], []>} : vector<1x32xf32>, vector<32x96xf32>, vector<1x96xf32> -> vector<1x96xf32>
    %243 = arith.addf %242, %4 : vector<1x96xf32>
    %cst_74 = arith.constant dense<0.000000e+00> : vector<1x96xf32>
    %244 = tpu.matmul %233, %3, %cst_74 {dimension_numbers = #tpu.dot_dimension_numbers<[1], [0], [0], [1], [0, 0, 1, 1], [], []>} : vector<1x32xf32>, vector<32x96xf32>, vector<1x96xf32> -> vector<1x96xf32>
    %245 = arith.addf %244, %5 : vector<1x96xf32>
    %246 = vector.extract_strided_slice %243 {offsets = [0, 0], sizes = [1, 32], strides = [1, 1]} : vector<1x96xf32> to vector<1x32xf32>
    %247 = vector.extract_strided_slice %243 {offsets = [0, 32], sizes = [1, 32], strides = [1, 1]} : vector<1x96xf32> to vector<1x32xf32>
    %248 = vector.extract_strided_slice %243 {offsets = [0, 64], sizes = [1, 32], strides = [1, 1]} : vector<1x96xf32> to vector<1x32xf32>
    %249 = vector.extract_strided_slice %245 {offsets = [0, 0], sizes = [1, 32], strides = [1, 1]} : vector<1x96xf32> to vector<1x32xf32>
    %250 = vector.extract_strided_slice %245 {offsets = [0, 32], sizes = [1, 32], strides = [1, 1]} : vector<1x96xf32> to vector<1x32xf32>
    %251 = vector.extract_strided_slice %245 {offsets = [0, 64], sizes = [1, 32], strides = [1, 1]} : vector<1x96xf32> to vector<1x32xf32>
    %252 = arith.addf %246, %249 : vector<1x32xf32>
    %253 = arith.negf %252 : vector<1x32xf32>
    %254 = math.exp %253 : vector<1x32xf32>
    %cst_75 = arith.constant 1.000000e+00 : f32
    %255 = vector.broadcast %cst_75 : f32 to vector<1x32xf32>
    %256 = arith.addf %255, %254 : vector<1x32xf32>
    %257 = arith.divf %255, %256 : vector<1x32xf32>
    %258 = arith.addf %247, %250 : vector<1x32xf32>
    %259 = arith.negf %258 : vector<1x32xf32>
    %260 = math.exp %259 : vector<1x32xf32>
    %cst_76 = arith.constant 1.000000e+00 : f32
    %261 = vector.broadcast %cst_76 : f32 to vector<1x32xf32>
    %262 = arith.addf %261, %260 : vector<1x32xf32>
    %263 = arith.divf %261, %262 : vector<1x32xf32>
    %264 = arith.mulf %257, %251 : vector<1x32xf32>
    %265 = arith.addf %248, %264 : vector<1x32xf32>
    %266 = math.tanh %265 : vector<1x32xf32>
    %cst_77 = arith.constant 1.000000e+00 : f32
    %267 = vector.broadcast %cst_77 : f32 to vector<1x32xf32>
    %268 = arith.subf %267, %263 : vector<1x32xf32>
    %269 = arith.mulf %268, %266 : vector<1x32xf32>
    %270 = arith.mulf %263, %233 : vector<1x32xf32>
    %271 = arith.addf %269, %270 : vector<1x32xf32>
    %c6_78 = arith.constant 6 : index
    %c0_79 = arith.constant 0 : index
    %272 = vector.load %arg18[%c6_78, %c0_79] : memref<8x32xf32, #tpu.memory_space<vmem>>, vector<1x32xf32>
    tpu.vector_store %arg18[%c6_78, %c0_79], %271 {strides = array<i32>} : memref<8x32xf32, #tpu.memory_space<vmem>>, vector<1x32xf32>,
    %c7 = arith.constant 7 : index
    %273 = memref.load %arg0[%c7] : memref<8xi32, #tpu.memory_space<smem>>
    %274 = vector.broadcast %273 : i32 to vector<1x64xi32>
    %275 = arith.cmpi eq, %1, %274 : vector<1x64xi32>
    %cst_80 = arith.constant 1.000000e+00 : f32
    %cst_81 = arith.constant 0.000000e+00 : f32
    %276 = vector.broadcast %cst_80 : f32 to vector<1x64xf32>
    %277 = vector.broadcast %cst_81 : f32 to vector<1x64xf32>
    %278 = arith.select %275, %276, %277 : vector<1x64xi1>, vector<1x64xf32>
    %cst_82 = arith.constant dense<0.000000e+00> : vector<1x32xf32>
    %279 = tpu.matmul %278, %0, %cst_82 {dimension_numbers = #tpu.dot_dimension_numbers<[1], [0], [0], [1], [0, 0, 1, 1], [], []>} : vector<1x64xf32>, vector<64x32xf32>, vector<1x32xf32> -> vector<1x32xf32>
    %cst_83 = arith.constant dense<0.000000e+00> : vector<1x96xf32>
    %280 = tpu.matmul %279, %2, %cst_83 {dimension_numbers = #tpu.dot_dimension_numbers<[1], [0], [0], [1], [0, 0, 1, 1], [], []>} : vector<1x32xf32>, vector<32x96xf32>, vector<1x96xf32> -> vector<1x96xf32>
    %281 = arith.addf %280, %4 : vector<1x96xf32>
    %cst_84 = arith.constant dense<0.000000e+00> : vector<1x96xf32>
    %282 = tpu.matmul %271, %3, %cst_84 {dimension_numbers = #tpu.dot_dimension_numbers<[1], [0], [0], [1], [0, 0, 1, 1], [], []>} : vector<1x32xf32>, vector<32x96xf32>, vector<1x96xf32> -> vector<1x96xf32>
    %283 = arith.addf %282, %5 : vector<1x96xf32>
    %284 = vector.extract_strided_slice %281 {offsets = [0, 0], sizes = [1, 32], strides = [1, 1]} : vector<1x96xf32> to vector<1x32xf32>
    %285 = vector.extract_strided_slice %281 {offsets = [0, 32], sizes = [1, 32], strides = [1, 1]} : vector<1x96xf32> to vector<1x32xf32>
    %286 = vector.extract_strided_slice %281 {offsets = [0, 64], sizes = [1, 32], strides = [1, 1]} : vector<1x96xf32> to vector<1x32xf32>
    %287 = vector.extract_strided_slice %283 {offsets = [0, 0], sizes = [1, 32], strides = [1, 1]} : vector<1x96xf32> to vector<1x32xf32>
    %288 = vector.extract_strided_slice %283 {offsets = [0, 32], sizes = [1, 32], strides = [1, 1]} : vector<1x96xf32> to vector<1x32xf32>
    %289 = vector.extract_strided_slice %283 {offsets = [0, 64], sizes = [1, 32], strides = [1, 1]} : vector<1x96xf32> to vector<1x32xf32>
    %290 = arith.addf %284, %287 : vector<1x32xf32>
    %291 = arith.negf %290 : vector<1x32xf32>
    %292 = math.exp %291 : vector<1x32xf32>
    %cst_85 = arith.constant 1.000000e+00 : f32
    %293 = vector.broadcast %cst_85 : f32 to vector<1x32xf32>
    %294 = arith.addf %293, %292 : vector<1x32xf32>
    %295 = arith.divf %293, %294 : vector<1x32xf32>
    %296 = arith.addf %285, %288 : vector<1x32xf32>
    %297 = arith.negf %296 : vector<1x32xf32>
    %298 = math.exp %297 : vector<1x32xf32>
    %cst_86 = arith.constant 1.000000e+00 : f32
    %299 = vector.broadcast %cst_86 : f32 to vector<1x32xf32>
    %300 = arith.addf %299, %298 : vector<1x32xf32>
    %301 = arith.divf %299, %300 : vector<1x32xf32>
    %302 = arith.mulf %295, %289 : vector<1x32xf32>
    %303 = arith.addf %286, %302 : vector<1x32xf32>
    %304 = math.tanh %303 : vector<1x32xf32>
    %cst_87 = arith.constant 1.000000e+00 : f32
    %305 = vector.broadcast %cst_87 : f32 to vector<1x32xf32>
    %306 = arith.subf %305, %301 : vector<1x32xf32>
    %307 = arith.mulf %306, %304 : vector<1x32xf32>
    %308 = arith.mulf %301, %271 : vector<1x32xf32>
    %309 = arith.addf %307, %308 : vector<1x32xf32>
    %c7_88 = arith.constant 7 : index
    %c0_89 = arith.constant 0 : index
    %310 = vector.load %arg18[%c7_88, %c0_89] : memref<8x32xf32, #tpu.memory_space<vmem>>, vector<1x32xf32>
    tpu.vector_store %arg18[%c7_88, %c0_89], %309 {strides = array<i32>} : memref<8x32xf32, #tpu.memory_space<vmem>>, vector<1x32xf32>,
    %c0_90 = arith.constant 0 : index
    %c0_91 = arith.constant 0 : index
    %311 = vector.load %arg18[%c0_90, %c0_91] : memref<8x32xf32, #tpu.memory_space<vmem>>, vector<8x32xf32>
    %c0_92 = arith.constant 0 : index
    %c0_93 = arith.constant 0 : index
    %312 = vector.load %arg7[%c0_92, %c0_93] : memref<32x96xf32, #tpu.memory_space<vmem>>, vector<32x96xf32>
    %c0_94 = arith.constant 0 : index
    %c0_95 = arith.constant 0 : index
    %313 = vector.load %arg8[%c0_94, %c0_95] : memref<32x96xf32, #tpu.memory_space<vmem>>, vector<32x96xf32>
    %c0_96 = arith.constant 0 : index
    %c0_97 = arith.constant 0 : index
    %314 = vector.load %arg9[%c0_96, %c0_97] : memref<1x96xf32, #tpu.memory_space<vmem>>, vector<1x96xf32>
    %c0_98 = arith.constant 0 : index
    %c0_99 = arith.constant 0 : index
    %315 = vector.load %arg10[%c0_98, %c0_99] : memref<1x96xf32, #tpu.memory_space<vmem>>, vector<1x96xf32>
    %c0_100 = arith.constant 0 : index
    %c0_101 = arith.constant 0 : index
    %316 = vector.load %arg11[%c0_100, %c0_101] : memref<32x32xf32, #tpu.memory_space<vmem>>, vector<32x32xf32>
    %c0_102 = arith.constant 0 : index
    %c0_103 = arith.constant 0 : index
    %317 = vector.load %arg12[%c0_102, %c0_103] : memref<32x32xf32, #tpu.memory_space<vmem>>, vector<32x32xf32>
    %c0_104 = arith.constant 0 : index
    %c0_105 = arith.constant 0 : index
    %318 = vector.load %arg13[%c0_104, %c0_105] : memref<1x32xf32, #tpu.memory_space<vmem>>, vector<1x32xf32>
    %c0_106 = arith.constant 0 : index
    %c0_107 = arith.constant 0 : index
    %319 = vector.load %arg14[%c0_106, %c0_107] : memref<32x64xf32, #tpu.memory_space<vmem>>, vector<32x64xf32>
    %c0_108 = arith.constant 0 : index
    %c0_109 = arith.constant 0 : index
    %320 = vector.load %arg15[%c0_108, %c0_109] : memref<1x64xf32, #tpu.memory_space<vmem>>, vector<1x64xf32>
    %321 = tpu.iota {dimensions = array<i32: 0>} : vector<64x64xi32>
    %322 = tpu.iota {dimensions = array<i32: 1>} : vector<64x64xi32>
    %323 = arith.cmpi sle, %321, %322 : vector<64x64xi32>
    %cst_110 = arith.constant 1.000000e+00 : f32
    %cst_111 = arith.constant 0.000000e+00 : f32
    %324 = vector.broadcast %cst_110 : f32 to vector<64x64xf32>
    %325 = vector.broadcast %cst_111 : f32 to vector<64x64xf32>
    %326 = arith.select %323, %324, %325 : vector<64x64xi1>, vector<64x64xf32>
    %c1_i32 = arith.constant 1 : i32
    %327 = vector.broadcast %c1_i32 : i32 to vector<1x64xi32>
    %328 = arith.cmpi eq, %1, %327 : vector<1x64xi32>
    %cst_112 = arith.constant 1.000000e+00 : f32
    %cst_113 = arith.constant 0.000000e+00 : f32
    %329 = vector.broadcast %cst_112 : f32 to vector<1x64xf32>
    %330 = vector.broadcast %cst_113 : f32 to vector<1x64xf32>
    %331 = arith.select %328, %329, %330 : vector<1x64xi1>, vector<1x64xf32>
    %cst_114 = arith.constant dense<0.000000e+00> : vector<1x32xf32>
    %332 = tpu.matmul %331, %0, %cst_114 {dimension_numbers = #tpu.dot_dimension_numbers<[1], [0], [0], [1], [0, 0, 1, 1], [], []>} : vector<1x64xf32>, vector<64x32xf32>, vector<1x32xf32> -> vector<1x32xf32>
    %cst_115 = arith.constant dense<0.000000e+00> : vector<1x96xf32>
    %333 = tpu.matmul %332, %312, %cst_115 {dimension_numbers = #tpu.dot_dimension_numbers<[1], [0], [0], [1], [0, 0, 1, 1], [], []>} : vector<1x32xf32>, vector<32x96xf32>, vector<1x96xf32> -> vector<1x96xf32>
    %334 = arith.addf %333, %314 : vector<1x96xf32>
    %cst_116 = arith.constant dense<0.000000e+00> : vector<1x96xf32>
    %335 = tpu.matmul %309, %313, %cst_116 {dimension_numbers = #tpu.dot_dimension_numbers<[1], [0], [0], [1], [0, 0, 1, 1], [], []>} : vector<1x32xf32>, vector<32x96xf32>, vector<1x96xf32> -> vector<1x96xf32>
    %336 = arith.addf %335, %315 : vector<1x96xf32>
    %337 = vector.extract_strided_slice %334 {offsets = [0, 0], sizes = [1, 32], strides = [1, 1]} : vector<1x96xf32> to vector<1x32xf32>
    %338 = vector.extract_strided_slice %334 {offsets = [0, 32], sizes = [1, 32], strides = [1, 1]} : vector<1x96xf32> to vector<1x32xf32>
    %339 = vector.extract_strided_slice %334 {offsets = [0, 64], sizes = [1, 32], strides = [1, 1]} : vector<1x96xf32> to vector<1x32xf32>
    %340 = vector.extract_strided_slice %336 {offsets = [0, 0], sizes = [1, 32], strides = [1, 1]} : vector<1x96xf32> to vector<1x32xf32>
    %341 = vector.extract_strided_slice %336 {offsets = [0, 32], sizes = [1, 32], strides = [1, 1]} : vector<1x96xf32> to vector<1x32xf32>
    %342 = vector.extract_strided_slice %336 {offsets = [0, 64], sizes = [1, 32], strides = [1, 1]} : vector<1x96xf32> to vector<1x32xf32>
    %343 = arith.addf %337, %340 : vector<1x32xf32>
    %344 = arith.negf %343 : vector<1x32xf32>
    %345 = math.exp %344 : vector<1x32xf32>
    %cst_117 = arith.constant 1.000000e+00 : f32
    %346 = vector.broadcast %cst_117 : f32 to vector<1x32xf32>
    %347 = arith.addf %346, %345 : vector<1x32xf32>
    %348 = arith.divf %346, %347 : vector<1x32xf32>
    %349 = arith.addf %338, %341 : vector<1x32xf32>
    %350 = arith.negf %349 : vector<1x32xf32>
    %351 = math.exp %350 : vector<1x32xf32>
    %cst_118 = arith.constant 1.000000e+00 : f32
    %352 = vector.broadcast %cst_118 : f32 to vector<1x32xf32>
    %353 = arith.addf %352, %351 : vector<1x32xf32>
    %354 = arith.divf %352, %353 : vector<1x32xf32>
    %355 = arith.mulf %348, %342 : vector<1x32xf32>
    %356 = arith.addf %339, %355 : vector<1x32xf32>
    %357 = math.tanh %356 : vector<1x32xf32>
    %cst_119 = arith.constant 1.000000e+00 : f32
    %358 = vector.broadcast %cst_119 : f32 to vector<1x32xf32>
    %359 = arith.subf %358, %354 : vector<1x32xf32>
    %360 = arith.mulf %359, %357 : vector<1x32xf32>
    %361 = arith.mulf %354, %309 : vector<1x32xf32>
    %362 = arith.addf %360, %361 : vector<1x32xf32>
    %cst_120 = arith.constant dense<0.000000e+00> : vector<1x8xf32>
    %363 = tpu.matmul %362, %311, %cst_120 {dimension_numbers = #tpu.dot_dimension_numbers<[1], [1], [0], [0], [0, 0, 1, 0], [], []>} : vector<1x32xf32>, vector<8x32xf32>, vector<1x8xf32> -> vector<1x8xf32>
    %cst_121 = arith.constant dense<0xFF800000> : vector<1xf32>
    %364 = vector.multi_reduction <maximumf>, %363, %cst_121 [1] : vector<1x8xf32> to vector<1xf32>
    %365 = vector.shape_cast %364 : vector<1xf32> to vector<1x1xf32>
    %366 = vector.broadcast %365 : vector<1x1xf32> to vector<1x8xf32>
    %367 = arith.subf %363, %366 : vector<1x8xf32>
    %368 = math.exp %367 : vector<1x8xf32>
    %cst_122 = arith.constant dense<0.000000e+00> : vector<1xf32>
    %369 = vector.multi_reduction <add>, %368, %cst_122 [1] : vector<1x8xf32> to vector<1xf32>
    %370 = vector.shape_cast %369 : vector<1xf32> to vector<1x1xf32>
    %371 = vector.broadcast %370 : vector<1x1xf32> to vector<1x8xf32>
    %372 = arith.divf %368, %371 : vector<1x8xf32>
    %cst_123 = arith.constant dense<0.000000e+00> : vector<1x32xf32>
    %373 = tpu.matmul %372, %311, %cst_123 {dimension_numbers = #tpu.dot_dimension_numbers<[1], [0], [0], [1], [0, 0, 1, 1], [], []>} : vector<1x8xf32>, vector<8x32xf32>, vector<1x32xf32> -> vector<1x32xf32>
    %cst_124 = arith.constant dense<0.000000e+00> : vector<1x32xf32>
    %374 = tpu.matmul %362, %316, %cst_124 {dimension_numbers = #tpu.dot_dimension_numbers<[1], [0], [0], [1], [0, 0, 1, 1], [], []>} : vector<1x32xf32>, vector<32x32xf32>, vector<1x32xf32> -> vector<1x32xf32>
    %cst_125 = arith.constant dense<0.000000e+00> : vector<1x32xf32>
    %375 = tpu.matmul %373, %317, %cst_125 {dimension_numbers = #tpu.dot_dimension_numbers<[1], [0], [0], [1], [0, 0, 1, 1], [], []>} : vector<1x32xf32>, vector<32x32xf32>, vector<1x32xf32> -> vector<1x32xf32>
    %376 = arith.addf %374, %375 : vector<1x32xf32>
    %377 = arith.addf %376, %318 : vector<1x32xf32>
    %378 = math.tanh %377 : vector<1x32xf32>
    %cst_126 = arith.constant dense<0.000000e+00> : vector<1x64xf32>
    %379 = tpu.matmul %378, %319, %cst_126 {dimension_numbers = #tpu.dot_dimension_numbers<[1], [0], [0], [1], [0, 0, 1, 1], [], []>} : vector<1x32xf32>, vector<32x64xf32>, vector<1x64xf32> -> vector<1x64xf32>
    %380 = arith.addf %379, %320 : vector<1x64xf32>
    %cst_127 = arith.constant dense<0xFF800000> : vector<1xf32>
    %381 = vector.multi_reduction <maximumf>, %380, %cst_127 [1] : vector<1x64xf32> to vector<1xf32>
    %382 = vector.shape_cast %381 : vector<1xf32> to vector<1x1xf32>
    %383 = vector.broadcast %382 : vector<1x1xf32> to vector<1x64xf32>
    %384 = arith.subf %380, %383 : vector<1x64xf32>
    %385 = math.exp %384 : vector<1x64xf32>
    %cst_128 = arith.constant dense<0.000000e+00> : vector<1xf32>
    %386 = vector.multi_reduction <add>, %385, %cst_128 [1] : vector<1x64xf32> to vector<1xf32>
    %387 = vector.shape_cast %386 : vector<1xf32> to vector<1x1xf32>
    %388 = vector.broadcast %387 : vector<1x1xf32> to vector<1x64xf32>
    %389 = arith.divf %385, %388 : vector<1x64xf32>
    %c0_129 = arith.constant 0 : index
    %390 = memref.load %arg1[%c0_129] : memref<6xf32, #tpu.memory_space<smem>>
    %cst_130 = arith.constant dense<0.000000e+00> : vector<1x64xf32>
    %391 = tpu.matmul %389, %326, %cst_130 {dimension_numbers = #tpu.dot_dimension_numbers<[1], [0], [0], [1], [0, 0, 1, 1], [], []>} : vector<1x64xf32>, vector<64x64xf32>, vector<1x64xf32> -> vector<1x64xf32>
    %392 = vector.broadcast %390 : f32 to vector<1x64xf32>
    %393 = arith.cmpf oge, %392, %391 : vector<1x64xf32>
    %cst_131 = arith.constant 1.000000e+00 : f32
    %cst_132 = arith.constant 0.000000e+00 : f32
    %394 = vector.broadcast %cst_131 : f32 to vector<1x64xf32>
    %395 = vector.broadcast %cst_132 : f32 to vector<1x64xf32>
    %396 = arith.select %393, %394, %395 : vector<1x64xi1>, vector<1x64xf32>
    %397 = vector.shape_cast %396 : vector<1x64xf32> to vector<1x1x64xf32>
    %cst_133 = arith.constant dense<0.000000e+00> : vector<1xf32>
    %398 = vector.multi_reduction <add>, %397, %cst_133 [1, 2] : vector<1x1x64xf32> to vector<1xf32>
    %399 = vector.shape_cast %398 : vector<1xf32> to vector<1x1x1xf32>
    %400 = vector.extract %399[0, 0, 0] : f32 from vector<1x1x1xf32>
    %cst_134 = arith.constant 6.300000e+01 : f32
    %401 = arith.minimumf %400, %cst_134 : f32
    %402 = arith.fptosi %401 : f32 to i32
    %403 = vector.broadcast %402 : i32 to vector<1x64xi32>
    %404 = arith.cmpi eq, %1, %403 : vector<1x64xi32>
    %cst_135 = arith.constant 1.000000e+00 : f32
    %cst_136 = arith.constant 0.000000e+00 : f32
    %405 = vector.broadcast %cst_135 : f32 to vector<1x64xf32>
    %406 = vector.broadcast %cst_136 : f32 to vector<1x64xf32>
    %407 = arith.select %404, %405, %406 : vector<1x64xi1>, vector<1x64xf32>
    %408 = arith.mulf %389, %407 : vector<1x64xf32>
    %409 = vector.shape_cast %408 : vector<1x64xf32> to vector<1x1x64xf32>
    %cst_137 = arith.constant dense<0.000000e+00> : vector<1xf32>
    %410 = vector.multi_reduction <add>, %409, %cst_137 [1, 2] : vector<1x1x64xf32> to vector<1xf32>
    %411 = vector.shape_cast %410 : vector<1xf32> to vector<1x1x1xf32>
    %412 = vector.extract %411[0, 0, 0] : f32 from vector<1x1x1xf32>
    %c0_138 = arith.constant 0 : index
    %413 = memref.load %arg16[%c0_138] : memref<6xi32, #tpu.memory_space<smem>>
    memref.store %402, %arg16[%c0_138] : memref<6xi32, #tpu.memory_space<smem>>
    %c0_139 = arith.constant 0 : index
    %414 = memref.load %arg17[%c0_139] : memref<6xf32, #tpu.memory_space<smem>>
    memref.store %412, %arg17[%c0_139] : memref<6xf32, #tpu.memory_space<smem>>
    %cst_140 = arith.constant dense<0.000000e+00> : vector<1x32xf32>
    %415 = tpu.matmul %407, %0, %cst_140 {dimension_numbers = #tpu.dot_dimension_numbers<[1], [0], [0], [1], [0, 0, 1, 1], [], []>} : vector<1x64xf32>, vector<64x32xf32>, vector<1x32xf32> -> vector<1x32xf32>
    %cst_141 = arith.constant dense<0.000000e+00> : vector<1x96xf32>
    %416 = tpu.matmul %415, %312, %cst_141 {dimension_numbers = #tpu.dot_dimension_numbers<[1], [0], [0], [1], [0, 0, 1, 1], [], []>} : vector<1x32xf32>, vector<32x96xf32>, vector<1x96xf32> -> vector<1x96xf32>
    %417 = arith.addf %416, %314 : vector<1x96xf32>
    %cst_142 = arith.constant dense<0.000000e+00> : vector<1x96xf32>
    %418 = tpu.matmul %362, %313, %cst_142 {dimension_numbers = #tpu.dot_dimension_numbers<[1], [0], [0], [1], [0, 0, 1, 1], [], []>} : vector<1x32xf32>, vector<32x96xf32>, vector<1x96xf32> -> vector<1x96xf32>
    %419 = arith.addf %418, %315 : vector<1x96xf32>
    %420 = vector.extract_strided_slice %417 {offsets = [0, 0], sizes = [1, 32], strides = [1, 1]} : vector<1x96xf32> to vector<1x32xf32>
    %421 = vector.extract_strided_slice %417 {offsets = [0, 32], sizes = [1, 32], strides = [1, 1]} : vector<1x96xf32> to vector<1x32xf32>
    %422 = vector.extract_strided_slice %417 {offsets = [0, 64], sizes = [1, 32], strides = [1, 1]} : vector<1x96xf32> to vector<1x32xf32>
    %423 = vector.extract_strided_slice %419 {offsets = [0, 0], sizes = [1, 32], strides = [1, 1]} : vector<1x96xf32> to vector<1x32xf32>
    %424 = vector.extract_strided_slice %419 {offsets = [0, 32], sizes = [1, 32], strides = [1, 1]} : vector<1x96xf32> to vector<1x32xf32>
    %425 = vector.extract_strided_slice %419 {offsets = [0, 64], sizes = [1, 32], strides = [1, 1]} : vector<1x96xf32> to vector<1x32xf32>
    %426 = arith.addf %420, %423 : vector<1x32xf32>
    %427 = arith.negf %426 : vector<1x32xf32>
    %428 = math.exp %427 : vector<1x32xf32>
    %cst_143 = arith.constant 1.000000e+00 : f32
    %429 = vector.broadcast %cst_143 : f32 to vector<1x32xf32>
    %430 = arith.addf %429, %428 : vector<1x32xf32>
    %431 = arith.divf %429, %430 : vector<1x32xf32>
    %432 = arith.addf %421, %424 : vector<1x32xf32>
    %433 = arith.negf %432 : vector<1x32xf32>
    %434 = math.exp %433 : vector<1x32xf32>
    %cst_144 = arith.constant 1.000000e+00 : f32
    %435 = vector.broadcast %cst_144 : f32 to vector<1x32xf32>
    %436 = arith.addf %435, %434 : vector<1x32xf32>
    %437 = arith.divf %435, %436 : vector<1x32xf32>
    %438 = arith.mulf %431, %425 : vector<1x32xf32>
    %439 = arith.addf %422, %438 : vector<1x32xf32>
    %440 = math.tanh %439 : vector<1x32xf32>
    %cst_145 = arith.constant 1.000000e+00 : f32
    %441 = vector.broadcast %cst_145 : f32 to vector<1x32xf32>
    %442 = arith.subf %441, %437 : vector<1x32xf32>
    %443 = arith.mulf %442, %440 : vector<1x32xf32>
    %444 = arith.mulf %437, %362 : vector<1x32xf32>
    %445 = arith.addf %443, %444 : vector<1x32xf32>
    %cst_146 = arith.constant dense<0.000000e+00> : vector<1x8xf32>
    %446 = tpu.matmul %445, %311, %cst_146 {dimension_numbers = #tpu.dot_dimension_numbers<[1], [1], [0], [0], [0, 0, 1, 0], [], []>} : vector<1x32xf32>, vector<8x32xf32>, vector<1x8xf32> -> vector<1x8xf32>
    %cst_147 = arith.constant dense<0xFF800000> : vector<1xf32>
    %447 = vector.multi_reduction <maximumf>, %446, %cst_147 [1] : vector<1x8xf32> to vector<1xf32>
    %448 = vector.shape_cast %447 : vector<1xf32> to vector<1x1xf32>
    %449 = vector.broadcast %448 : vector<1x1xf32> to vector<1x8xf32>
    %450 = arith.subf %446, %449 : vector<1x8xf32>
    %451 = math.exp %450 : vector<1x8xf32>
    %cst_148 = arith.constant dense<0.000000e+00> : vector<1xf32>
    %452 = vector.multi_reduction <add>, %451, %cst_148 [1] : vector<1x8xf32> to vector<1xf32>
    %453 = vector.shape_cast %452 : vector<1xf32> to vector<1x1xf32>
    %454 = vector.broadcast %453 : vector<1x1xf32> to vector<1x8xf32>
    %455 = arith.divf %451, %454 : vector<1x8xf32>
    %cst_149 = arith.constant dense<0.000000e+00> : vector<1x32xf32>
    %456 = tpu.matmul %455, %311, %cst_149 {dimension_numbers = #tpu.dot_dimension_numbers<[1], [0], [0], [1], [0, 0, 1, 1], [], []>} : vector<1x8xf32>, vector<8x32xf32>, vector<1x32xf32> -> vector<1x32xf32>
    %cst_150 = arith.constant dense<0.000000e+00> : vector<1x32xf32>
    %457 = tpu.matmul %445, %316, %cst_150 {dimension_numbers = #tpu.dot_dimension_numbers<[1], [0], [0], [1], [0, 0, 1, 1], [], []>} : vector<1x32xf32>, vector<32x32xf32>, vector<1x32xf32> -> vector<1x32xf32>
    %cst_151 = arith.constant dense<0.000000e+00> : vector<1x32xf32>
    %458 = tpu.matmul %456, %317, %cst_151 {dimension_numbers = #tpu.dot_dimension_numbers<[1], [0], [0], [1], [0, 0, 1, 1], [], []>} : vector<1x32xf32>, vector<32x32xf32>, vector<1x32xf32> -> vector<1x32xf32>
    %459 = arith.addf %457, %458 : vector<1x32xf32>
    %460 = arith.addf %459, %318 : vector<1x32xf32>
    %461 = math.tanh %460 : vector<1x32xf32>
    %cst_152 = arith.constant dense<0.000000e+00> : vector<1x64xf32>
    %462 = tpu.matmul %461, %319, %cst_152 {dimension_numbers = #tpu.dot_dimension_numbers<[1], [0], [0], [1], [0, 0, 1, 1], [], []>} : vector<1x32xf32>, vector<32x64xf32>, vector<1x64xf32> -> vector<1x64xf32>
    %463 = arith.addf %462, %320 : vector<1x64xf32>
    %cst_153 = arith.constant dense<0xFF800000> : vector<1xf32>
    %464 = vector.multi_reduction <maximumf>, %463, %cst_153 [1] : vector<1x64xf32> to vector<1xf32>
    %465 = vector.shape_cast %464 : vector<1xf32> to vector<1x1xf32>
    %466 = vector.broadcast %465 : vector<1x1xf32> to vector<1x64xf32>
    %467 = arith.subf %463, %466 : vector<1x64xf32>
    %468 = math.exp %467 : vector<1x64xf32>
    %cst_154 = arith.constant dense<0.000000e+00> : vector<1xf32>
    %469 = vector.multi_reduction <add>, %468, %cst_154 [1] : vector<1x64xf32> to vector<1xf32>
    %470 = vector.shape_cast %469 : vector<1xf32> to vector<1x1xf32>
    %471 = vector.broadcast %470 : vector<1x1xf32> to vector<1x64xf32>
    %472 = arith.divf %468, %471 : vector<1x64xf32>
    %c1_155 = arith.constant 1 : index
    %473 = memref.load %arg1[%c1_155] : memref<6xf32, #tpu.memory_space<smem>>
    %cst_156 = arith.constant dense<0.000000e+00> : vector<1x64xf32>
    %474 = tpu.matmul %472, %326, %cst_156 {dimension_numbers = #tpu.dot_dimension_numbers<[1], [0], [0], [1], [0, 0, 1, 1], [], []>} : vector<1x64xf32>, vector<64x64xf32>, vector<1x64xf32> -> vector<1x64xf32>
    %475 = vector.broadcast %473 : f32 to vector<1x64xf32>
    %476 = arith.cmpf oge, %475, %474 : vector<1x64xf32>
    %cst_157 = arith.constant 1.000000e+00 : f32
    %cst_158 = arith.constant 0.000000e+00 : f32
    %477 = vector.broadcast %cst_157 : f32 to vector<1x64xf32>
    %478 = vector.broadcast %cst_158 : f32 to vector<1x64xf32>
    %479 = arith.select %476, %477, %478 : vector<1x64xi1>, vector<1x64xf32>
    %480 = vector.shape_cast %479 : vector<1x64xf32> to vector<1x1x64xf32>
    %cst_159 = arith.constant dense<0.000000e+00> : vector<1xf32>
    %481 = vector.multi_reduction <add>, %480, %cst_159 [1, 2] : vector<1x1x64xf32> to vector<1xf32>
    %482 = vector.shape_cast %481 : vector<1xf32> to vector<1x1x1xf32>
    %483 = vector.extract %482[0, 0, 0] : f32 from vector<1x1x1xf32>
    %cst_160 = arith.constant 6.300000e+01 : f32
    %484 = arith.minimumf %483, %cst_160 : f32
    %485 = arith.fptosi %484 : f32 to i32
    %486 = vector.broadcast %485 : i32 to vector<1x64xi32>
    %487 = arith.cmpi eq, %1, %486 : vector<1x64xi32>
    %cst_161 = arith.constant 1.000000e+00 : f32
    %cst_162 = arith.constant 0.000000e+00 : f32
    %488 = vector.broadcast %cst_161 : f32 to vector<1x64xf32>
    %489 = vector.broadcast %cst_162 : f32 to vector<1x64xf32>
    %490 = arith.select %487, %488, %489 : vector<1x64xi1>, vector<1x64xf32>
    %491 = arith.mulf %472, %490 : vector<1x64xf32>
    %492 = vector.shape_cast %491 : vector<1x64xf32> to vector<1x1x64xf32>
    %cst_163 = arith.constant dense<0.000000e+00> : vector<1xf32>
    %493 = vector.multi_reduction <add>, %492, %cst_163 [1, 2] : vector<1x1x64xf32> to vector<1xf32>
    %494 = vector.shape_cast %493 : vector<1xf32> to vector<1x1x1xf32>
    %495 = vector.extract %494[0, 0, 0] : f32 from vector<1x1x1xf32>
    %c1_164 = arith.constant 1 : index
    %496 = memref.load %arg16[%c1_164] : memref<6xi32, #tpu.memory_space<smem>>
    memref.store %485, %arg16[%c1_164] : memref<6xi32, #tpu.memory_space<smem>>
    %c1_165 = arith.constant 1 : index
    %497 = memref.load %arg17[%c1_165] : memref<6xf32, #tpu.memory_space<smem>>
    memref.store %495, %arg17[%c1_165] : memref<6xf32, #tpu.memory_space<smem>>
    %cst_166 = arith.constant dense<0.000000e+00> : vector<1x32xf32>
    %498 = tpu.matmul %490, %0, %cst_166 {dimension_numbers = #tpu.dot_dimension_numbers<[1], [0], [0], [1], [0, 0, 1, 1], [], []>} : vector<1x64xf32>, vector<64x32xf32>, vector<1x32xf32> -> vector<1x32xf32>
    %cst_167 = arith.constant dense<0.000000e+00> : vector<1x96xf32>
    %499 = tpu.matmul %498, %312, %cst_167 {dimension_numbers = #tpu.dot_dimension_numbers<[1], [0], [0], [1], [0, 0, 1, 1], [], []>} : vector<1x32xf32>, vector<32x96xf32>, vector<1x96xf32> -> vector<1x96xf32>
    %500 = arith.addf %499, %314 : vector<1x96xf32>
    %cst_168 = arith.constant dense<0.000000e+00> : vector<1x96xf32>
    %501 = tpu.matmul %445, %313, %cst_168 {dimension_numbers = #tpu.dot_dimension_numbers<[1], [0], [0], [1], [0, 0, 1, 1], [], []>} : vector<1x32xf32>, vector<32x96xf32>, vector<1x96xf32> -> vector<1x96xf32>
    %502 = arith.addf %501, %315 : vector<1x96xf32>
    %503 = vector.extract_strided_slice %500 {offsets = [0, 0], sizes = [1, 32], strides = [1, 1]} : vector<1x96xf32> to vector<1x32xf32>
    %504 = vector.extract_strided_slice %500 {offsets = [0, 32], sizes = [1, 32], strides = [1, 1]} : vector<1x96xf32> to vector<1x32xf32>
    %505 = vector.extract_strided_slice %500 {offsets = [0, 64], sizes = [1, 32], strides = [1, 1]} : vector<1x96xf32> to vector<1x32xf32>
    %506 = vector.extract_strided_slice %502 {offsets = [0, 0], sizes = [1, 32], strides = [1, 1]} : vector<1x96xf32> to vector<1x32xf32>
    %507 = vector.extract_strided_slice %502 {offsets = [0, 32], sizes = [1, 32], strides = [1, 1]} : vector<1x96xf32> to vector<1x32xf32>
    %508 = vector.extract_strided_slice %502 {offsets = [0, 64], sizes = [1, 32], strides = [1, 1]} : vector<1x96xf32> to vector<1x32xf32>
    %509 = arith.addf %503, %506 : vector<1x32xf32>
    %510 = arith.negf %509 : vector<1x32xf32>
    %511 = math.exp %510 : vector<1x32xf32>
    %cst_169 = arith.constant 1.000000e+00 : f32
    %512 = vector.broadcast %cst_169 : f32 to vector<1x32xf32>
    %513 = arith.addf %512, %511 : vector<1x32xf32>
    %514 = arith.divf %512, %513 : vector<1x32xf32>
    %515 = arith.addf %504, %507 : vector<1x32xf32>
    %516 = arith.negf %515 : vector<1x32xf32>
    %517 = math.exp %516 : vector<1x32xf32>
    %cst_170 = arith.constant 1.000000e+00 : f32
    %518 = vector.broadcast %cst_170 : f32 to vector<1x32xf32>
    %519 = arith.addf %518, %517 : vector<1x32xf32>
    %520 = arith.divf %518, %519 : vector<1x32xf32>
    %521 = arith.mulf %514, %508 : vector<1x32xf32>
    %522 = arith.addf %505, %521 : vector<1x32xf32>
    %523 = math.tanh %522 : vector<1x32xf32>
    %cst_171 = arith.constant 1.000000e+00 : f32
    %524 = vector.broadcast %cst_171 : f32 to vector<1x32xf32>
    %525 = arith.subf %524, %520 : vector<1x32xf32>
    %526 = arith.mulf %525, %523 : vector<1x32xf32>
    %527 = arith.mulf %520, %445 : vector<1x32xf32>
    %528 = arith.addf %526, %527 : vector<1x32xf32>
    %cst_172 = arith.constant dense<0.000000e+00> : vector<1x8xf32>
    %529 = tpu.matmul %528, %311, %cst_172 {dimension_numbers = #tpu.dot_dimension_numbers<[1], [1], [0], [0], [0, 0, 1, 0], [], []>} : vector<1x32xf32>, vector<8x32xf32>, vector<1x8xf32> -> vector<1x8xf32>
    %cst_173 = arith.constant dense<0xFF800000> : vector<1xf32>
    %530 = vector.multi_reduction <maximumf>, %529, %cst_173 [1] : vector<1x8xf32> to vector<1xf32>
    %531 = vector.shape_cast %530 : vector<1xf32> to vector<1x1xf32>
    %532 = vector.broadcast %531 : vector<1x1xf32> to vector<1x8xf32>
    %533 = arith.subf %529, %532 : vector<1x8xf32>
    %534 = math.exp %533 : vector<1x8xf32>
    %cst_174 = arith.constant dense<0.000000e+00> : vector<1xf32>
    %535 = vector.multi_reduction <add>, %534, %cst_174 [1] : vector<1x8xf32> to vector<1xf32>
    %536 = vector.shape_cast %535 : vector<1xf32> to vector<1x1xf32>
    %537 = vector.broadcast %536 : vector<1x1xf32> to vector<1x8xf32>
    %538 = arith.divf %534, %537 : vector<1x8xf32>
    %cst_175 = arith.constant dense<0.000000e+00> : vector<1x32xf32>
    %539 = tpu.matmul %538, %311, %cst_175 {dimension_numbers = #tpu.dot_dimension_numbers<[1], [0], [0], [1], [0, 0, 1, 1], [], []>} : vector<1x8xf32>, vector<8x32xf32>, vector<1x32xf32> -> vector<1x32xf32>
    %cst_176 = arith.constant dense<0.000000e+00> : vector<1x32xf32>
    %540 = tpu.matmul %528, %316, %cst_176 {dimension_numbers = #tpu.dot_dimension_numbers<[1], [0], [0], [1], [0, 0, 1, 1], [], []>} : vector<1x32xf32>, vector<32x32xf32>, vector<1x32xf32> -> vector<1x32xf32>
    %cst_177 = arith.constant dense<0.000000e+00> : vector<1x32xf32>
    %541 = tpu.matmul %539, %317, %cst_177 {dimension_numbers = #tpu.dot_dimension_numbers<[1], [0], [0], [1], [0, 0, 1, 1], [], []>} : vector<1x32xf32>, vector<32x32xf32>, vector<1x32xf32> -> vector<1x32xf32>
    %542 = arith.addf %540, %541 : vector<1x32xf32>
    %543 = arith.addf %542, %318 : vector<1x32xf32>
    %544 = math.tanh %543 : vector<1x32xf32>
    %cst_178 = arith.constant dense<0.000000e+00> : vector<1x64xf32>
    %545 = tpu.matmul %544, %319, %cst_178 {dimension_numbers = #tpu.dot_dimension_numbers<[1], [0], [0], [1], [0, 0, 1, 1], [], []>} : vector<1x32xf32>, vector<32x64xf32>, vector<1x64xf32> -> vector<1x64xf32>
    %546 = arith.addf %545, %320 : vector<1x64xf32>
    %cst_179 = arith.constant dense<0xFF800000> : vector<1xf32>
    %547 = vector.multi_reduction <maximumf>, %546, %cst_179 [1] : vector<1x64xf32> to vector<1xf32>
    %548 = vector.shape_cast %547 : vector<1xf32> to vector<1x1xf32>
    %549 = vector.broadcast %548 : vector<1x1xf32> to vector<1x64xf32>
    %550 = arith.subf %546, %549 : vector<1x64xf32>
    %551 = math.exp %550 : vector<1x64xf32>
    %cst_180 = arith.constant dense<0.000000e+00> : vector<1xf32>
    %552 = vector.multi_reduction <add>, %551, %cst_180 [1] : vector<1x64xf32> to vector<1xf32>
    %553 = vector.shape_cast %552 : vector<1xf32> to vector<1x1xf32>
    %554 = vector.broadcast %553 : vector<1x1xf32> to vector<1x64xf32>
    %555 = arith.divf %551, %554 : vector<1x64xf32>
    %c2_181 = arith.constant 2 : index
    %556 = memref.load %arg1[%c2_181] : memref<6xf32, #tpu.memory_space<smem>>
    %cst_182 = arith.constant dense<0.000000e+00> : vector<1x64xf32>
    %557 = tpu.matmul %555, %326, %cst_182 {dimension_numbers = #tpu.dot_dimension_numbers<[1], [0], [0], [1], [0, 0, 1, 1], [], []>} : vector<1x64xf32>, vector<64x64xf32>, vector<1x64xf32> -> vector<1x64xf32>
    %558 = vector.broadcast %556 : f32 to vector<1x64xf32>
    %559 = arith.cmpf oge, %558, %557 : vector<1x64xf32>
    %cst_183 = arith.constant 1.000000e+00 : f32
    %cst_184 = arith.constant 0.000000e+00 : f32
    %560 = vector.broadcast %cst_183 : f32 to vector<1x64xf32>
    %561 = vector.broadcast %cst_184 : f32 to vector<1x64xf32>
    %562 = arith.select %559, %560, %561 : vector<1x64xi1>, vector<1x64xf32>
    %563 = vector.shape_cast %562 : vector<1x64xf32> to vector<1x1x64xf32>
    %cst_185 = arith.constant dense<0.000000e+00> : vector<1xf32>
    %564 = vector.multi_reduction <add>, %563, %cst_185 [1, 2] : vector<1x1x64xf32> to vector<1xf32>
    %565 = vector.shape_cast %564 : vector<1xf32> to vector<1x1x1xf32>
    %566 = vector.extract %565[0, 0, 0] : f32 from vector<1x1x1xf32>
    %cst_186 = arith.constant 6.300000e+01 : f32
    %567 = arith.minimumf %566, %cst_186 : f32
    %568 = arith.fptosi %567 : f32 to i32
    %569 = vector.broadcast %568 : i32 to vector<1x64xi32>
    %570 = arith.cmpi eq, %1, %569 : vector<1x64xi32>
    %cst_187 = arith.constant 1.000000e+00 : f32
    %cst_188 = arith.constant 0.000000e+00 : f32
    %571 = vector.broadcast %cst_187 : f32 to vector<1x64xf32>
    %572 = vector.broadcast %cst_188 : f32 to vector<1x64xf32>
    %573 = arith.select %570, %571, %572 : vector<1x64xi1>, vector<1x64xf32>
    %574 = arith.mulf %555, %573 : vector<1x64xf32>
    %575 = vector.shape_cast %574 : vector<1x64xf32> to vector<1x1x64xf32>
    %cst_189 = arith.constant dense<0.000000e+00> : vector<1xf32>
    %576 = vector.multi_reduction <add>, %575, %cst_189 [1, 2] : vector<1x1x64xf32> to vector<1xf32>
    %577 = vector.shape_cast %576 : vector<1xf32> to vector<1x1x1xf32>
    %578 = vector.extract %577[0, 0, 0] : f32 from vector<1x1x1xf32>
    %c2_190 = arith.constant 2 : index
    %579 = memref.load %arg16[%c2_190] : memref<6xi32, #tpu.memory_space<smem>>
    memref.store %568, %arg16[%c2_190] : memref<6xi32, #tpu.memory_space<smem>>
    %c2_191 = arith.constant 2 : index
    %580 = memref.load %arg17[%c2_191] : memref<6xf32, #tpu.memory_space<smem>>
    memref.store %578, %arg17[%c2_191] : memref<6xf32, #tpu.memory_space<smem>>
    %cst_192 = arith.constant dense<0.000000e+00> : vector<1x32xf32>
    %581 = tpu.matmul %573, %0, %cst_192 {dimension_numbers = #tpu.dot_dimension_numbers<[1], [0], [0], [1], [0, 0, 1, 1], [], []>} : vector<1x64xf32>, vector<64x32xf32>, vector<1x32xf32> -> vector<1x32xf32>
    %cst_193 = arith.constant dense<0.000000e+00> : vector<1x96xf32>
    %582 = tpu.matmul %581, %312, %cst_193 {dimension_numbers = #tpu.dot_dimension_numbers<[1], [0], [0], [1], [0, 0, 1, 1], [], []>} : vector<1x32xf32>, vector<32x96xf32>, vector<1x96xf32> -> vector<1x96xf32>
    %583 = arith.addf %582, %314 : vector<1x96xf32>
    %cst_194 = arith.constant dense<0.000000e+00> : vector<1x96xf32>
    %584 = tpu.matmul %528, %313, %cst_194 {dimension_numbers = #tpu.dot_dimension_numbers<[1], [0], [0], [1], [0, 0, 1, 1], [], []>} : vector<1x32xf32>, vector<32x96xf32>, vector<1x96xf32> -> vector<1x96xf32>
    %585 = arith.addf %584, %315 : vector<1x96xf32>
    %586 = vector.extract_strided_slice %583 {offsets = [0, 0], sizes = [1, 32], strides = [1, 1]} : vector<1x96xf32> to vector<1x32xf32>
    %587 = vector.extract_strided_slice %583 {offsets = [0, 32], sizes = [1, 32], strides = [1, 1]} : vector<1x96xf32> to vector<1x32xf32>
    %588 = vector.extract_strided_slice %583 {offsets = [0, 64], sizes = [1, 32], strides = [1, 1]} : vector<1x96xf32> to vector<1x32xf32>
    %589 = vector.extract_strided_slice %585 {offsets = [0, 0], sizes = [1, 32], strides = [1, 1]} : vector<1x96xf32> to vector<1x32xf32>
    %590 = vector.extract_strided_slice %585 {offsets = [0, 32], sizes = [1, 32], strides = [1, 1]} : vector<1x96xf32> to vector<1x32xf32>
    %591 = vector.extract_strided_slice %585 {offsets = [0, 64], sizes = [1, 32], strides = [1, 1]} : vector<1x96xf32> to vector<1x32xf32>
    %592 = arith.addf %586, %589 : vector<1x32xf32>
    %593 = arith.negf %592 : vector<1x32xf32>
    %594 = math.exp %593 : vector<1x32xf32>
    %cst_195 = arith.constant 1.000000e+00 : f32
    %595 = vector.broadcast %cst_195 : f32 to vector<1x32xf32>
    %596 = arith.addf %595, %594 : vector<1x32xf32>
    %597 = arith.divf %595, %596 : vector<1x32xf32>
    %598 = arith.addf %587, %590 : vector<1x32xf32>
    %599 = arith.negf %598 : vector<1x32xf32>
    %600 = math.exp %599 : vector<1x32xf32>
    %cst_196 = arith.constant 1.000000e+00 : f32
    %601 = vector.broadcast %cst_196 : f32 to vector<1x32xf32>
    %602 = arith.addf %601, %600 : vector<1x32xf32>
    %603 = arith.divf %601, %602 : vector<1x32xf32>
    %604 = arith.mulf %597, %591 : vector<1x32xf32>
    %605 = arith.addf %588, %604 : vector<1x32xf32>
    %606 = math.tanh %605 : vector<1x32xf32>
    %cst_197 = arith.constant 1.000000e+00 : f32
    %607 = vector.broadcast %cst_197 : f32 to vector<1x32xf32>
    %608 = arith.subf %607, %603 : vector<1x32xf32>
    %609 = arith.mulf %608, %606 : vector<1x32xf32>
    %610 = arith.mulf %603, %528 : vector<1x32xf32>
    %611 = arith.addf %609, %610 : vector<1x32xf32>
    %cst_198 = arith.constant dense<0.000000e+00> : vector<1x8xf32>
    %612 = tpu.matmul %611, %311, %cst_198 {dimension_numbers = #tpu.dot_dimension_numbers<[1], [1], [0], [0], [0, 0, 1, 0], [], []>} : vector<1x32xf32>, vector<8x32xf32>, vector<1x8xf32> -> vector<1x8xf32>
    %cst_199 = arith.constant dense<0xFF800000> : vector<1xf32>
    %613 = vector.multi_reduction <maximumf>, %612, %cst_199 [1] : vector<1x8xf32> to vector<1xf32>
    %614 = vector.shape_cast %613 : vector<1xf32> to vector<1x1xf32>
    %615 = vector.broadcast %614 : vector<1x1xf32> to vector<1x8xf32>
    %616 = arith.subf %612, %615 : vector<1x8xf32>
    %617 = math.exp %616 : vector<1x8xf32>
    %cst_200 = arith.constant dense<0.000000e+00> : vector<1xf32>
    %618 = vector.multi_reduction <add>, %617, %cst_200 [1] : vector<1x8xf32> to vector<1xf32>
    %619 = vector.shape_cast %618 : vector<1xf32> to vector<1x1xf32>
    %620 = vector.broadcast %619 : vector<1x1xf32> to vector<1x8xf32>
    %621 = arith.divf %617, %620 : vector<1x8xf32>
    %cst_201 = arith.constant dense<0.000000e+00> : vector<1x32xf32>
    %622 = tpu.matmul %621, %311, %cst_201 {dimension_numbers = #tpu.dot_dimension_numbers<[1], [0], [0], [1], [0, 0, 1, 1], [], []>} : vector<1x8xf32>, vector<8x32xf32>, vector<1x32xf32> -> vector<1x32xf32>
    %cst_202 = arith.constant dense<0.000000e+00> : vector<1x32xf32>
    %623 = tpu.matmul %611, %316, %cst_202 {dimension_numbers = #tpu.dot_dimension_numbers<[1], [0], [0], [1], [0, 0, 1, 1], [], []>} : vector<1x32xf32>, vector<32x32xf32>, vector<1x32xf32> -> vector<1x32xf32>
    %cst_203 = arith.constant dense<0.000000e+00> : vector<1x32xf32>
    %624 = tpu.matmul %622, %317, %cst_203 {dimension_numbers = #tpu.dot_dimension_numbers<[1], [0], [0], [1], [0, 0, 1, 1], [], []>} : vector<1x32xf32>, vector<32x32xf32>, vector<1x32xf32> -> vector<1x32xf32>
    %625 = arith.addf %623, %624 : vector<1x32xf32>
    %626 = arith.addf %625, %318 : vector<1x32xf32>
    %627 = math.tanh %626 : vector<1x32xf32>
    %cst_204 = arith.constant dense<0.000000e+00> : vector<1x64xf32>
    %628 = tpu.matmul %627, %319, %cst_204 {dimension_numbers = #tpu.dot_dimension_numbers<[1], [0], [0], [1], [0, 0, 1, 1], [], []>} : vector<1x32xf32>, vector<32x64xf32>, vector<1x64xf32> -> vector<1x64xf32>
    %629 = arith.addf %628, %320 : vector<1x64xf32>
    %cst_205 = arith.constant dense<0xFF800000> : vector<1xf32>
    %630 = vector.multi_reduction <maximumf>, %629, %cst_205 [1] : vector<1x64xf32> to vector<1xf32>
    %631 = vector.shape_cast %630 : vector<1xf32> to vector<1x1xf32>
    %632 = vector.broadcast %631 : vector<1x1xf32> to vector<1x64xf32>
    %633 = arith.subf %629, %632 : vector<1x64xf32>
    %634 = math.exp %633 : vector<1x64xf32>
    %cst_206 = arith.constant dense<0.000000e+00> : vector<1xf32>
    %635 = vector.multi_reduction <add>, %634, %cst_206 [1] : vector<1x64xf32> to vector<1xf32>
    %636 = vector.shape_cast %635 : vector<1xf32> to vector<1x1xf32>
    %637 = vector.broadcast %636 : vector<1x1xf32> to vector<1x64xf32>
    %638 = arith.divf %634, %637 : vector<1x64xf32>
    %c3_207 = arith.constant 3 : index
    %639 = memref.load %arg1[%c3_207] : memref<6xf32, #tpu.memory_space<smem>>
    %cst_208 = arith.constant dense<0.000000e+00> : vector<1x64xf32>
    %640 = tpu.matmul %638, %326, %cst_208 {dimension_numbers = #tpu.dot_dimension_numbers<[1], [0], [0], [1], [0, 0, 1, 1], [], []>} : vector<1x64xf32>, vector<64x64xf32>, vector<1x64xf32> -> vector<1x64xf32>
    %641 = vector.broadcast %639 : f32 to vector<1x64xf32>
    %642 = arith.cmpf oge, %641, %640 : vector<1x64xf32>
    %cst_209 = arith.constant 1.000000e+00 : f32
    %cst_210 = arith.constant 0.000000e+00 : f32
    %643 = vector.broadcast %cst_209 : f32 to vector<1x64xf32>
    %644 = vector.broadcast %cst_210 : f32 to vector<1x64xf32>
    %645 = arith.select %642, %643, %644 : vector<1x64xi1>, vector<1x64xf32>
    %646 = vector.shape_cast %645 : vector<1x64xf32> to vector<1x1x64xf32>
    %cst_211 = arith.constant dense<0.000000e+00> : vector<1xf32>
    %647 = vector.multi_reduction <add>, %646, %cst_211 [1, 2] : vector<1x1x64xf32> to vector<1xf32>
    %648 = vector.shape_cast %647 : vector<1xf32> to vector<1x1x1xf32>
    %649 = vector.extract %648[0, 0, 0] : f32 from vector<1x1x1xf32>
    %cst_212 = arith.constant 6.300000e+01 : f32
    %650 = arith.minimumf %649, %cst_212 : f32
    %651 = arith.fptosi %650 : f32 to i32
    %652 = vector.broadcast %651 : i32 to vector<1x64xi32>
    %653 = arith.cmpi eq, %1, %652 : vector<1x64xi32>
    %cst_213 = arith.constant 1.000000e+00 : f32
    %cst_214 = arith.constant 0.000000e+00 : f32
    %654 = vector.broadcast %cst_213 : f32 to vector<1x64xf32>
    %655 = vector.broadcast %cst_214 : f32 to vector<1x64xf32>
    %656 = arith.select %653, %654, %655 : vector<1x64xi1>, vector<1x64xf32>
    %657 = arith.mulf %638, %656 : vector<1x64xf32>
    %658 = vector.shape_cast %657 : vector<1x64xf32> to vector<1x1x64xf32>
    %cst_215 = arith.constant dense<0.000000e+00> : vector<1xf32>
    %659 = vector.multi_reduction <add>, %658, %cst_215 [1, 2] : vector<1x1x64xf32> to vector<1xf32>
    %660 = vector.shape_cast %659 : vector<1xf32> to vector<1x1x1xf32>
    %661 = vector.extract %660[0, 0, 0] : f32 from vector<1x1x1xf32>
    %c3_216 = arith.constant 3 : index
    %662 = memref.load %arg16[%c3_216] : memref<6xi32, #tpu.memory_space<smem>>
    memref.store %651, %arg16[%c3_216] : memref<6xi32, #tpu.memory_space<smem>>
    %c3_217 = arith.constant 3 : index
    %663 = memref.load %arg17[%c3_217] : memref<6xf32, #tpu.memory_space<smem>>
    memref.store %661, %arg17[%c3_217] : memref<6xf32, #tpu.memory_space<smem>>
    %cst_218 = arith.constant dense<0.000000e+00> : vector<1x32xf32>
    %664 = tpu.matmul %656, %0, %cst_218 {dimension_numbers = #tpu.dot_dimension_numbers<[1], [0], [0], [1], [0, 0, 1, 1], [], []>} : vector<1x64xf32>, vector<64x32xf32>, vector<1x32xf32> -> vector<1x32xf32>
    %cst_219 = arith.constant dense<0.000000e+00> : vector<1x96xf32>
    %665 = tpu.matmul %664, %312, %cst_219 {dimension_numbers = #tpu.dot_dimension_numbers<[1], [0], [0], [1], [0, 0, 1, 1], [], []>} : vector<1x32xf32>, vector<32x96xf32>, vector<1x96xf32> -> vector<1x96xf32>
    %666 = arith.addf %665, %314 : vector<1x96xf32>
    %cst_220 = arith.constant dense<0.000000e+00> : vector<1x96xf32>
    %667 = tpu.matmul %611, %313, %cst_220 {dimension_numbers = #tpu.dot_dimension_numbers<[1], [0], [0], [1], [0, 0, 1, 1], [], []>} : vector<1x32xf32>, vector<32x96xf32>, vector<1x96xf32> -> vector<1x96xf32>
    %668 = arith.addf %667, %315 : vector<1x96xf32>
    %669 = vector.extract_strided_slice %666 {offsets = [0, 0], sizes = [1, 32], strides = [1, 1]} : vector<1x96xf32> to vector<1x32xf32>
    %670 = vector.extract_strided_slice %666 {offsets = [0, 32], sizes = [1, 32], strides = [1, 1]} : vector<1x96xf32> to vector<1x32xf32>
    %671 = vector.extract_strided_slice %666 {offsets = [0, 64], sizes = [1, 32], strides = [1, 1]} : vector<1x96xf32> to vector<1x32xf32>
    %672 = vector.extract_strided_slice %668 {offsets = [0, 0], sizes = [1, 32], strides = [1, 1]} : vector<1x96xf32> to vector<1x32xf32>
    %673 = vector.extract_strided_slice %668 {offsets = [0, 32], sizes = [1, 32], strides = [1, 1]} : vector<1x96xf32> to vector<1x32xf32>
    %674 = vector.extract_strided_slice %668 {offsets = [0, 64], sizes = [1, 32], strides = [1, 1]} : vector<1x96xf32> to vector<1x32xf32>
    %675 = arith.addf %669, %672 : vector<1x32xf32>
    %676 = arith.negf %675 : vector<1x32xf32>
    %677 = math.exp %676 : vector<1x32xf32>
    %cst_221 = arith.constant 1.000000e+00 : f32
    %678 = vector.broadcast %cst_221 : f32 to vector<1x32xf32>
    %679 = arith.addf %678, %677 : vector<1x32xf32>
    %680 = arith.divf %678, %679 : vector<1x32xf32>
    %681 = arith.addf %670, %673 : vector<1x32xf32>
    %682 = arith.negf %681 : vector<1x32xf32>
    %683 = math.exp %682 : vector<1x32xf32>
    %cst_222 = arith.constant 1.000000e+00 : f32
    %684 = vector.broadcast %cst_222 : f32 to vector<1x32xf32>
    %685 = arith.addf %684, %683 : vector<1x32xf32>
    %686 = arith.divf %684, %685 : vector<1x32xf32>
    %687 = arith.mulf %680, %674 : vector<1x32xf32>
    %688 = arith.addf %671, %687 : vector<1x32xf32>
    %689 = math.tanh %688 : vector<1x32xf32>
    %cst_223 = arith.constant 1.000000e+00 : f32
    %690 = vector.broadcast %cst_223 : f32 to vector<1x32xf32>
    %691 = arith.subf %690, %686 : vector<1x32xf32>
    %692 = arith.mulf %691, %689 : vector<1x32xf32>
    %693 = arith.mulf %686, %611 : vector<1x32xf32>
    %694 = arith.addf %692, %693 : vector<1x32xf32>
    %cst_224 = arith.constant dense<0.000000e+00> : vector<1x8xf32>
    %695 = tpu.matmul %694, %311, %cst_224 {dimension_numbers = #tpu.dot_dimension_numbers<[1], [1], [0], [0], [0, 0, 1, 0], [], []>} : vector<1x32xf32>, vector<8x32xf32>, vector<1x8xf32> -> vector<1x8xf32>
    %cst_225 = arith.constant dense<0xFF800000> : vector<1xf32>
    %696 = vector.multi_reduction <maximumf>, %695, %cst_225 [1] : vector<1x8xf32> to vector<1xf32>
    %697 = vector.shape_cast %696 : vector<1xf32> to vector<1x1xf32>
    %698 = vector.broadcast %697 : vector<1x1xf32> to vector<1x8xf32>
    %699 = arith.subf %695, %698 : vector<1x8xf32>
    %700 = math.exp %699 : vector<1x8xf32>
    %cst_226 = arith.constant dense<0.000000e+00> : vector<1xf32>
    %701 = vector.multi_reduction <add>, %700, %cst_226 [1] : vector<1x8xf32> to vector<1xf32>
    %702 = vector.shape_cast %701 : vector<1xf32> to vector<1x1xf32>
    %703 = vector.broadcast %702 : vector<1x1xf32> to vector<1x8xf32>
    %704 = arith.divf %700, %703 : vector<1x8xf32>
    %cst_227 = arith.constant dense<0.000000e+00> : vector<1x32xf32>
    %705 = tpu.matmul %704, %311, %cst_227 {dimension_numbers = #tpu.dot_dimension_numbers<[1], [0], [0], [1], [0, 0, 1, 1], [], []>} : vector<1x8xf32>, vector<8x32xf32>, vector<1x32xf32> -> vector<1x32xf32>
    %cst_228 = arith.constant dense<0.000000e+00> : vector<1x32xf32>
    %706 = tpu.matmul %694, %316, %cst_228 {dimension_numbers = #tpu.dot_dimension_numbers<[1], [0], [0], [1], [0, 0, 1, 1], [], []>} : vector<1x32xf32>, vector<32x32xf32>, vector<1x32xf32> -> vector<1x32xf32>
    %cst_229 = arith.constant dense<0.000000e+00> : vector<1x32xf32>
    %707 = tpu.matmul %705, %317, %cst_229 {dimension_numbers = #tpu.dot_dimension_numbers<[1], [0], [0], [1], [0, 0, 1, 1], [], []>} : vector<1x32xf32>, vector<32x32xf32>, vector<1x32xf32> -> vector<1x32xf32>
    %708 = arith.addf %706, %707 : vector<1x32xf32>
    %709 = arith.addf %708, %318 : vector<1x32xf32>
    %710 = math.tanh %709 : vector<1x32xf32>
    %cst_230 = arith.constant dense<0.000000e+00> : vector<1x64xf32>
    %711 = tpu.matmul %710, %319, %cst_230 {dimension_numbers = #tpu.dot_dimension_numbers<[1], [0], [0], [1], [0, 0, 1, 1], [], []>} : vector<1x32xf32>, vector<32x64xf32>, vector<1x64xf32> -> vector<1x64xf32>
    %712 = arith.addf %711, %320 : vector<1x64xf32>
    %cst_231 = arith.constant dense<0xFF800000> : vector<1xf32>
    %713 = vector.multi_reduction <maximumf>, %712, %cst_231 [1] : vector<1x64xf32> to vector<1xf32>
    %714 = vector.shape_cast %713 : vector<1xf32> to vector<1x1xf32>
    %715 = vector.broadcast %714 : vector<1x1xf32> to vector<1x64xf32>
    %716 = arith.subf %712, %715 : vector<1x64xf32>
    %717 = math.exp %716 : vector<1x64xf32>
    %cst_232 = arith.constant dense<0.000000e+00> : vector<1xf32>
    %718 = vector.multi_reduction <add>, %717, %cst_232 [1] : vector<1x64xf32> to vector<1xf32>
    %719 = vector.shape_cast %718 : vector<1xf32> to vector<1x1xf32>
    %720 = vector.broadcast %719 : vector<1x1xf32> to vector<1x64xf32>
    %721 = arith.divf %717, %720 : vector<1x64xf32>
    %c4_233 = arith.constant 4 : index
    %722 = memref.load %arg1[%c4_233] : memref<6xf32, #tpu.memory_space<smem>>
    %cst_234 = arith.constant dense<0.000000e+00> : vector<1x64xf32>
    %723 = tpu.matmul %721, %326, %cst_234 {dimension_numbers = #tpu.dot_dimension_numbers<[1], [0], [0], [1], [0, 0, 1, 1], [], []>} : vector<1x64xf32>, vector<64x64xf32>, vector<1x64xf32> -> vector<1x64xf32>
    %724 = vector.broadcast %722 : f32 to vector<1x64xf32>
    %725 = arith.cmpf oge, %724, %723 : vector<1x64xf32>
    %cst_235 = arith.constant 1.000000e+00 : f32
    %cst_236 = arith.constant 0.000000e+00 : f32
    %726 = vector.broadcast %cst_235 : f32 to vector<1x64xf32>
    %727 = vector.broadcast %cst_236 : f32 to vector<1x64xf32>
    %728 = arith.select %725, %726, %727 : vector<1x64xi1>, vector<1x64xf32>
    %729 = vector.shape_cast %728 : vector<1x64xf32> to vector<1x1x64xf32>
    %cst_237 = arith.constant dense<0.000000e+00> : vector<1xf32>
    %730 = vector.multi_reduction <add>, %729, %cst_237 [1, 2] : vector<1x1x64xf32> to vector<1xf32>
    %731 = vector.shape_cast %730 : vector<1xf32> to vector<1x1x1xf32>
    %732 = vector.extract %731[0, 0, 0] : f32 from vector<1x1x1xf32>
    %cst_238 = arith.constant 6.300000e+01 : f32
    %733 = arith.minimumf %732, %cst_238 : f32
    %734 = arith.fptosi %733 : f32 to i32
    %735 = vector.broadcast %734 : i32 to vector<1x64xi32>
    %736 = arith.cmpi eq, %1, %735 : vector<1x64xi32>
    %cst_239 = arith.constant 1.000000e+00 : f32
    %cst_240 = arith.constant 0.000000e+00 : f32
    %737 = vector.broadcast %cst_239 : f32 to vector<1x64xf32>
    %738 = vector.broadcast %cst_240 : f32 to vector<1x64xf32>
    %739 = arith.select %736, %737, %738 : vector<1x64xi1>, vector<1x64xf32>
    %740 = arith.mulf %721, %739 : vector<1x64xf32>
    %741 = vector.shape_cast %740 : vector<1x64xf32> to vector<1x1x64xf32>
    %cst_241 = arith.constant dense<0.000000e+00> : vector<1xf32>
    %742 = vector.multi_reduction <add>, %741, %cst_241 [1, 2] : vector<1x1x64xf32> to vector<1xf32>
    %743 = vector.shape_cast %742 : vector<1xf32> to vector<1x1x1xf32>
    %744 = vector.extract %743[0, 0, 0] : f32 from vector<1x1x1xf32>
    %c4_242 = arith.constant 4 : index
    %745 = memref.load %arg16[%c4_242] : memref<6xi32, #tpu.memory_space<smem>>
    memref.store %734, %arg16[%c4_242] : memref<6xi32, #tpu.memory_space<smem>>
    %c4_243 = arith.constant 4 : index
    %746 = memref.load %arg17[%c4_243] : memref<6xf32, #tpu.memory_space<smem>>
    memref.store %744, %arg17[%c4_243] : memref<6xf32, #tpu.memory_space<smem>>
    %cst_244 = arith.constant dense<0.000000e+00> : vector<1x32xf32>
    %747 = tpu.matmul %739, %0, %cst_244 {dimension_numbers = #tpu.dot_dimension_numbers<[1], [0], [0], [1], [0, 0, 1, 1], [], []>} : vector<1x64xf32>, vector<64x32xf32>, vector<1x32xf32> -> vector<1x32xf32>
    %cst_245 = arith.constant dense<0.000000e+00> : vector<1x96xf32>
    %748 = tpu.matmul %747, %312, %cst_245 {dimension_numbers = #tpu.dot_dimension_numbers<[1], [0], [0], [1], [0, 0, 1, 1], [], []>} : vector<1x32xf32>, vector<32x96xf32>, vector<1x96xf32> -> vector<1x96xf32>
    %749 = arith.addf %748, %314 : vector<1x96xf32>
    %cst_246 = arith.constant dense<0.000000e+00> : vector<1x96xf32>
    %750 = tpu.matmul %694, %313, %cst_246 {dimension_numbers = #tpu.dot_dimension_numbers<[1], [0], [0], [1], [0, 0, 1, 1], [], []>} : vector<1x32xf32>, vector<32x96xf32>, vector<1x96xf32> -> vector<1x96xf32>
    %751 = arith.addf %750, %315 : vector<1x96xf32>
    %752 = vector.extract_strided_slice %749 {offsets = [0, 0], sizes = [1, 32], strides = [1, 1]} : vector<1x96xf32> to vector<1x32xf32>
    %753 = vector.extract_strided_slice %749 {offsets = [0, 32], sizes = [1, 32], strides = [1, 1]} : vector<1x96xf32> to vector<1x32xf32>
    %754 = vector.extract_strided_slice %749 {offsets = [0, 64], sizes = [1, 32], strides = [1, 1]} : vector<1x96xf32> to vector<1x32xf32>
    %755 = vector.extract_strided_slice %751 {offsets = [0, 0], sizes = [1, 32], strides = [1, 1]} : vector<1x96xf32> to vector<1x32xf32>
    %756 = vector.extract_strided_slice %751 {offsets = [0, 32], sizes = [1, 32], strides = [1, 1]} : vector<1x96xf32> to vector<1x32xf32>
    %757 = vector.extract_strided_slice %751 {offsets = [0, 64], sizes = [1, 32], strides = [1, 1]} : vector<1x96xf32> to vector<1x32xf32>
    %758 = arith.addf %752, %755 : vector<1x32xf32>
    %759 = arith.negf %758 : vector<1x32xf32>
    %760 = math.exp %759 : vector<1x32xf32>
    %cst_247 = arith.constant 1.000000e+00 : f32
    %761 = vector.broadcast %cst_247 : f32 to vector<1x32xf32>
    %762 = arith.addf %761, %760 : vector<1x32xf32>
    %763 = arith.divf %761, %762 : vector<1x32xf32>
    %764 = arith.addf %753, %756 : vector<1x32xf32>
    %765 = arith.negf %764 : vector<1x32xf32>
    %766 = math.exp %765 : vector<1x32xf32>
    %cst_248 = arith.constant 1.000000e+00 : f32
    %767 = vector.broadcast %cst_248 : f32 to vector<1x32xf32>
    %768 = arith.addf %767, %766 : vector<1x32xf32>
    %769 = arith.divf %767, %768 : vector<1x32xf32>
    %770 = arith.mulf %763, %757 : vector<1x32xf32>
    %771 = arith.addf %754, %770 : vector<1x32xf32>
    %772 = math.tanh %771 : vector<1x32xf32>
    %cst_249 = arith.constant 1.000000e+00 : f32
    %773 = vector.broadcast %cst_249 : f32 to vector<1x32xf32>
    %774 = arith.subf %773, %769 : vector<1x32xf32>
    %775 = arith.mulf %774, %772 : vector<1x32xf32>
    %776 = arith.mulf %769, %694 : vector<1x32xf32>
    %777 = arith.addf %775, %776 : vector<1x32xf32>
    %cst_250 = arith.constant dense<0.000000e+00> : vector<1x8xf32>
    %778 = tpu.matmul %777, %311, %cst_250 {dimension_numbers = #tpu.dot_dimension_numbers<[1], [1], [0], [0], [0, 0, 1, 0], [], []>} : vector<1x32xf32>, vector<8x32xf32>, vector<1x8xf32> -> vector<1x8xf32>
    %cst_251 = arith.constant dense<0xFF800000> : vector<1xf32>
    %779 = vector.multi_reduction <maximumf>, %778, %cst_251 [1] : vector<1x8xf32> to vector<1xf32>
    %780 = vector.shape_cast %779 : vector<1xf32> to vector<1x1xf32>
    %781 = vector.broadcast %780 : vector<1x1xf32> to vector<1x8xf32>
    %782 = arith.subf %778, %781 : vector<1x8xf32>
    %783 = math.exp %782 : vector<1x8xf32>
    %cst_252 = arith.constant dense<0.000000e+00> : vector<1xf32>
    %784 = vector.multi_reduction <add>, %783, %cst_252 [1] : vector<1x8xf32> to vector<1xf32>
    %785 = vector.shape_cast %784 : vector<1xf32> to vector<1x1xf32>
    %786 = vector.broadcast %785 : vector<1x1xf32> to vector<1x8xf32>
    %787 = arith.divf %783, %786 : vector<1x8xf32>
    %cst_253 = arith.constant dense<0.000000e+00> : vector<1x32xf32>
    %788 = tpu.matmul %787, %311, %cst_253 {dimension_numbers = #tpu.dot_dimension_numbers<[1], [0], [0], [1], [0, 0, 1, 1], [], []>} : vector<1x8xf32>, vector<8x32xf32>, vector<1x32xf32> -> vector<1x32xf32>
    %cst_254 = arith.constant dense<0.000000e+00> : vector<1x32xf32>
    %789 = tpu.matmul %777, %316, %cst_254 {dimension_numbers = #tpu.dot_dimension_numbers<[1], [0], [0], [1], [0, 0, 1, 1], [], []>} : vector<1x32xf32>, vector<32x32xf32>, vector<1x32xf32> -> vector<1x32xf32>
    %cst_255 = arith.constant dense<0.000000e+00> : vector<1x32xf32>
    %790 = tpu.matmul %788, %317, %cst_255 {dimension_numbers = #tpu.dot_dimension_numbers<[1], [0], [0], [1], [0, 0, 1, 1], [], []>} : vector<1x32xf32>, vector<32x32xf32>, vector<1x32xf32> -> vector<1x32xf32>
    %791 = arith.addf %789, %790 : vector<1x32xf32>
    %792 = arith.addf %791, %318 : vector<1x32xf32>
    %793 = math.tanh %792 : vector<1x32xf32>
    %cst_256 = arith.constant dense<0.000000e+00> : vector<1x64xf32>
    %794 = tpu.matmul %793, %319, %cst_256 {dimension_numbers = #tpu.dot_dimension_numbers<[1], [0], [0], [1], [0, 0, 1, 1], [], []>} : vector<1x32xf32>, vector<32x64xf32>, vector<1x64xf32> -> vector<1x64xf32>
    %795 = arith.addf %794, %320 : vector<1x64xf32>
    %cst_257 = arith.constant dense<0xFF800000> : vector<1xf32>
    %796 = vector.multi_reduction <maximumf>, %795, %cst_257 [1] : vector<1x64xf32> to vector<1xf32>
    %797 = vector.shape_cast %796 : vector<1xf32> to vector<1x1xf32>
    %798 = vector.broadcast %797 : vector<1x1xf32> to vector<1x64xf32>
    %799 = arith.subf %795, %798 : vector<1x64xf32>
    %800 = math.exp %799 : vector<1x64xf32>
    %cst_258 = arith.constant dense<0.000000e+00> : vector<1xf32>
    %801 = vector.multi_reduction <add>, %800, %cst_258 [1] : vector<1x64xf32> to vector<1xf32>
    %802 = vector.shape_cast %801 : vector<1xf32> to vector<1x1xf32>
    %803 = vector.broadcast %802 : vector<1x1xf32> to vector<1x64xf32>
    %804 = arith.divf %800, %803 : vector<1x64xf32>
    %c5_259 = arith.constant 5 : index
    %805 = memref.load %arg1[%c5_259] : memref<6xf32, #tpu.memory_space<smem>>
    %cst_260 = arith.constant dense<0.000000e+00> : vector<1x64xf32>
    %806 = tpu.matmul %804, %326, %cst_260 {dimension_numbers = #tpu.dot_dimension_numbers<[1], [0], [0], [1], [0, 0, 1, 1], [], []>} : vector<1x64xf32>, vector<64x64xf32>, vector<1x64xf32> -> vector<1x64xf32>
    %807 = vector.broadcast %805 : f32 to vector<1x64xf32>
    %808 = arith.cmpf oge, %807, %806 : vector<1x64xf32>
    %cst_261 = arith.constant 1.000000e+00 : f32
    %cst_262 = arith.constant 0.000000e+00 : f32
    %809 = vector.broadcast %cst_261 : f32 to vector<1x64xf32>
    %810 = vector.broadcast %cst_262 : f32 to vector<1x64xf32>
    %811 = arith.select %808, %809, %810 : vector<1x64xi1>, vector<1x64xf32>
    %812 = vector.shape_cast %811 : vector<1x64xf32> to vector<1x1x64xf32>
    %cst_263 = arith.constant dense<0.000000e+00> : vector<1xf32>
    %813 = vector.multi_reduction <add>, %812, %cst_263 [1, 2] : vector<1x1x64xf32> to vector<1xf32>
    %814 = vector.shape_cast %813 : vector<1xf32> to vector<1x1x1xf32>
    %815 = vector.extract %814[0, 0, 0] : f32 from vector<1x1x1xf32>
    %cst_264 = arith.constant 6.300000e+01 : f32
    %816 = arith.minimumf %815, %cst_264 : f32
    %817 = arith.fptosi %816 : f32 to i32
    %818 = vector.broadcast %817 : i32 to vector<1x64xi32>
    %819 = arith.cmpi eq, %1, %818 : vector<1x64xi32>
    %cst_265 = arith.constant 1.000000e+00 : f32
    %cst_266 = arith.constant 0.000000e+00 : f32
    %820 = vector.broadcast %cst_265 : f32 to vector<1x64xf32>
    %821 = vector.broadcast %cst_266 : f32 to vector<1x64xf32>
    %822 = arith.select %819, %820, %821 : vector<1x64xi1>, vector<1x64xf32>
    %823 = arith.mulf %804, %822 : vector<1x64xf32>
    %824 = vector.shape_cast %823 : vector<1x64xf32> to vector<1x1x64xf32>
    %cst_267 = arith.constant dense<0.000000e+00> : vector<1xf32>
    %825 = vector.multi_reduction <add>, %824, %cst_267 [1, 2] : vector<1x1x64xf32> to vector<1xf32>
    %826 = vector.shape_cast %825 : vector<1xf32> to vector<1x1x1xf32>
    %827 = vector.extract %826[0, 0, 0] : f32 from vector<1x1x1xf32>
    %c5_268 = arith.constant 5 : index
    %828 = memref.load %arg16[%c5_268] : memref<6xi32, #tpu.memory_space<smem>>
    memref.store %817, %arg16[%c5_268] : memref<6xi32, #tpu.memory_space<smem>>
    %c5_269 = arith.constant 5 : index
    %829 = memref.load %arg17[%c5_269] : memref<6xf32, #tpu.memory_space<smem>>
    memref.store %827, %arg17[%c5_269] : memref<6xf32, #tpu.memory_space<smem>>
    return
  }
}

</mosaic_0001>

<llo_original>
// kernel: probability_search_decode.1
$region0: #{probability_search_decode.1}
  #allocation0 [shape = 'u32[]', space=smem, size = 0x4, offset = 0x4, fixed_abs, tag = 'smem constant byte address 0x4 - core index']
  #allocation1 [shape = 'u32[144,128]{1,0:T(1,128)}', space=vmem, size = 0x12000, scoped, tag = 'internal scratch']
  #allocation2 [shape = 'f32[8,32]{1,0:T(8,128)}', space=vmem, size = 0x1000, scoped, tag = 'scratch operand']
  %s0 = inlined_call_operand.hbm [shape: s32[8], index: 0, kind: input, shape index: {}]
  %s1 = inlined_call_operand.vmem [shape: f32[6], index: 1, kind: input, shape index: {}]
  %s2 = inlined_call_operand.vmem [shape: f32[64,32], index: 2, kind: input, shape index: {}]
  %s3 = inlined_call_operand.vmem [shape: f32[32,96], index: 3, kind: input, shape index: {}]
  %s4 = inlined_call_operand.vmem [shape: f32[32,96], index: 4, kind: input, shape index: {}]
  %s5 = inlined_call_operand.hbm [shape: f32[1,96], index: 5, kind: input, shape index: {}]
  %s6 = inlined_call_operand.hbm [shape: f32[1,96], index: 6, kind: input, shape index: {}]
  %s7 = inlined_call_operand.vmem [shape: f32[32,96], index: 7, kind: input, shape index: {}]
  %s8 = inlined_call_operand.hbm [shape: f32[32,96], index: 8, kind: input, shape index: {}]
  %s9 = inlined_call_operand.hbm [shape: f32[1,96], index: 9, kind: input, shape index: {}]
  %s10 = inlined_call_operand.vmem [shape: f32[1,96], index: 10, kind: input, shape index: {}]
  %s11 = inlined_call_operand.vmem [shape: f32[32,32], index: 11, kind: input, shape index: {}]
  %s12 = inlined_call_operand.hbm [shape: f32[32,32], index: 12, kind: input, shape index: {}]
  %s13 = inlined_call_operand.vmem [shape: f32[1,32], index: 13, kind: input, shape index: {}]
  %s14 = inlined_call_operand.hbm [shape: f32[32,64], index: 14, kind: input, shape index: {}]
  %s15 = inlined_call_operand.vmem [shape: f32[1,64], index: 15, kind: input, shape index: {}]
  %s16 = inlined_call_operand.hbm [shape: s32[6], index: 16, kind: output, shape index: {0}]
  %s17 = inlined_call_operand.hbm [shape: f32[6], index: 17, kind: output, shape index: {1}]
  %18 = xla_tuple %s16, %s17
  %s19 = sld [smem:[#allocation0]]
  $region114: #{probability_search_decode.1} parent=0
    _
  %s21 = ssub.s32 1, %s19
  %s22 = scalar_select 0, %s21, %s19
  $region1: #{probability_search_decode.1} parent=0
    #allocation3 [shape = 'u8[512]{0}', space=smem, size = 0x200, scoped, tag = 'input window, operand 0, single buffered']
    #allocation4 [shape = 's32[1]{0}', space=sflag, size = 0x4, scoped, tag = 'scoped memory for probability_search_decode.1']
    #allocation5 [shape = 's32[1]{0}', space=sflag, size = 0x4, scoped, tag = 'scoped memory for probability_search_decode.1']
    #allocation6 [shape = 's32[1]{0}', space=sflag, size = 0x4, scoped, tag = 'scoped memory for probability_search_decode.1']
    #allocation7 [shape = 's32[1]{0}', space=sflag, size = 0x4, scoped, tag = 'scoped memory for probability_search_decode.1']
    #allocation8 [shape = 'u8[512]{0}', space=smem, size = 0x200, scoped, tag = 'input window, operand 1, single buffered']
    #allocation9 [shape = 'u8[512]{0}', space=vmem, size = 0x400, scoped, tag = 'input window, operand 5, single buffered']
    #allocation10 [shape = 'u8[512]{0}', space=vmem, size = 0x400, scoped, tag = 'input window, operand 6, single buffered']
    #allocation11 [shape = 's32[1]{0}', space=sflag, size = 0x4, scoped, tag = 'scoped memory for probability_search_decode.1']
    #allocation12 [shape = 'u8[16384]{0}', space=vmem, size = 0x4000, scoped, tag = 'input window, operand 8, single buffered']
    #allocation13 [shape = 'u8[512]{0}', space=vmem, size = 0x400, scoped, tag = 'input window, operand 9, single buffered']
    #allocation14 [shape = 's32[1]{0}', space=sflag, size = 0x4, scoped, tag = 'scoped memory for probability_search_decode.1']
    #allocation15 [shape = 'u8[16384]{0}', space=vmem, size = 0x4000, scoped, tag = 'input window, operand 12, single buffered']
    #allocation16 [shape = 'u8[16384]{0}', space=vmem, size = 0x4000, scoped, tag = 'input window, operand 14, single buffered']
    #allocation17 [shape = 's32[1]{0}', space=sflag, size = 0x4, scoped, tag = 'scoped memory for probability_search_decode.1']
    #allocation18 [shape = 'u8[512]{0}', space=smem, size = 0x200, scoped, tag = 'output window, operand 0, single buffered']
    #allocation19 [shape = 'u8[512]{0}', space=smem, size = 0x200, scoped, tag = 'output window, operand 1, single buffered']
    #allocation20 [shape = 's32[1]{0}', space=sflag, size = 0x4, scoped, tag = 'scoped memory for probability_search_decode.1']
    %23 = vsyncpa [#allocation5], 0
    %24 = vsyncpa [#allocation7], 0
    %25 = vsyncpa [#allocation4], 0
    %26 = vsyncpa [#allocation11], 0
    %27 = vsyncpa [#allocation14], 0
    %28 = vsyncpa [#allocation17], 0
    %29 = vsyncpa [#allocation6], 0
    %30 = vsyncpa [#allocation20], 0
    // Predicated region
    $region2: #{probability_search_decode.1} parent=1 // pred_check
      _
    $region3: #{probability_search_decode.1} parent=1 // pred_check_branch
      %32 = sbr.rel (0) target = $region5
    $region4: #{probability_search_decode.1} parent=1 // pred_region
      %s34 = ssub.s32 16, 16
      %35 = vsyncadd [#allocation5], %s34
      %38 = dma.hbm_to_smem %s0, 16, [#allocation3], [#allocation5]
    $region5: #{probability_search_decode.1} parent=1 // pred_fallthru
      _
    // Predicated region
    $region6: #{probability_search_decode.1} parent=1 // pred_check
      _
    $region7: #{probability_search_decode.1} parent=1 // pred_check_branch
      %40 = sbr.rel (0) target = $region9
    $region8: #{probability_search_decode.1} parent=1 // pred_region
      %s42 = ssub.s32 16, 16
      %43 = vsyncadd [#allocation7], %s42
      %s45 = sshll.u32 %s1, 4
      %s46 = int_to_ptr.vmem [resolvable:$true] %s45
      %48 = dma.vmem_to_smem %s46, 16, [#allocation8], [#allocation7]
    $region9: #{probability_search_decode.1} parent=1 // pred_fallthru
      _
    // Predicated region
    $region10: #{probability_search_decode.1} parent=1 // pred_check
      _
    $region11: #{probability_search_decode.1} parent=1 // pred_check_branch
      %50 = sbr.rel (0) target = $region13
    $region12: #{probability_search_decode.1} parent=1 // pred_region
      _
    $region13: #{probability_search_decode.1} parent=1 // pred_fallthru
      _
    // Predicated region
    $region14: #{probability_search_decode.1} parent=1 // pred_check
      _
    $region15: #{probability_search_decode.1} parent=1 // pred_check_branch
      %52 = sbr.rel (0) target = $region17
    $region16: #{probability_search_decode.1} parent=1 // pred_region
      _
    $region17: #{probability_search_decode.1} parent=1 // pred_fallthru
      _
    // Predicated region
    $region18: #{probability_search_decode.1} parent=1 // pred_check
      _
    $region19: #{probability_search_decode.1} parent=1 // pred_check_branch
      %54 = sbr.rel (0) target = $region21
    $region20: #{probability_search_decode.1} parent=1 // pred_region
      _
    $region21: #{probability_search_decode.1} parent=1 // pred_fallthru
      _
    // Predicated region
    $region22: #{probability_search_decode.1} parent=1 // pred_check
      _
    $region23: #{probability_search_decode.1} parent=1 // pred_check_branch
      %56 = sbr.rel (0) target = $region25
    $region24: #{probability_search_decode.1} parent=1 // pred_region
      %s58 = ssub.s32 16, 16
      %59 = vsyncadd [#allocation4], %s58
      %s61 = sshll.u32 [#allocation9], 4
      %s62 = int_to_ptr.vmem [resolvable:$true] %s61
      %64 = dma.hbm_to_vmem [thread:$0]  %s5, 16, %s62, [#allocation4]
    $region25: #{probability_search_decode.1} parent=1 // pred_fallthru
      _
    // Predicated region
    $region26: #{probability_search_decode.1} parent=1 // pred_check
      _
    $region27: #{probability_search_decode.1} parent=1 // pred_check_branch
      %66 = sbr.rel (0) target = $region29
    $region28: #{probability_search_decode.1} parent=1 // pred_region
      %s68 = ssub.s32 16, 16
      %69 = vsyncadd [#allocation11], %s68
      %s71 = sshll.u32 [#allocation10], 4
      %s72 = int_to_ptr.vmem [resolvable:$true] %s71
      %74 = dma.hbm_to_vmem [thread:$0]  %s6, 16, %s72, [#allocation11]
    $region29: #{probability_search_decode.1} parent=1 // pred_fallthru
      _
    // Predicated region
    $region30: #{probability_search_decode.1} parent=1 // pred_check
      _
    $region31: #{probability_search_decode.1} parent=1 // pred_check_branch
      %76 = sbr.rel (0) target = $region33
    $region32: #{probability_search_decode.1} parent=1 // pred_region
      _
    $region33: #{probability_search_decode.1} parent=1 // pred_fallthru
      _
    // Predicated region
    $region34: #{probability_search_decode.1} parent=1 // pred_check
      _
    $region35: #{probability_search_decode.1} parent=1 // pred_check_branch
      %78 = sbr.rel (0) target = $region37
    $region36: #{probability_search_decode.1} parent=1 // pred_region
      %s80 = ssub.s32 512, 512
      %81 = vsyncadd [#allocation11], %s80
      %s82 = sshll.u32 [#allocation12], 4
      %s83 = int_to_ptr.vmem [resolvable:$true] %s82
      %88 = dma.hbm_to_vmem [thread:$0]  %s8, 512, %s83, [#allocation11], 128, 128, 8
    $region37: #{probability_search_decode.1} parent=1 // pred_fallthru
      _
    // Predicated region
    $region38: #{probability_search_decode.1} parent=1 // pred_check
      _
    $region39: #{probability_search_decode.1} parent=1 // pred_check_branch
      %90 = sbr.rel (0) target = $region41
    $region40: #{probability_search_decode.1} parent=1 // pred_region
      %s92 = ssub.s32 16, 16
      %93 = vsyncadd [#allocation14], %s92
      %s95 = sshll.u32 [#allocation13], 4
      %s96 = int_to_ptr.vmem [resolvable:$true] %s95
      %98 = dma.hbm_to_vmem [thread:$0]  %s9, 16, %s96, [#allocation14]
    $region41: #{probability_search_decode.1} parent=1 // pred_fallthru
      _
    // Predicated region
    $region42: #{probability_search_decode.1} parent=1 // pred_check
      _
    $region43: #{probability_search_decode.1} parent=1 // pred_check_branch
      %100 = sbr.rel (0) target = $region45
    $region44: #{probability_search_decode.1} parent=1 // pred_region
      _
    $region45: #{probability_search_decode.1} parent=1 // pred_fallthru
      _
    // Predicated region
    $region46: #{probability_search_decode.1} parent=1 // pred_check
      _
    $region47: #{probability_search_decode.1} parent=1 // pred_check_branch
      %102 = sbr.rel (0) target = $region49
    $region48: #{probability_search_decode.1} parent=1 // pred_region
      _
    $region49: #{probability_search_decode.1} parent=1 // pred_fallthru
      _
    // Predicated region
    $region50: #{probability_search_decode.1} parent=1 // pred_check
      _
    $region51: #{probability_search_decode.1} parent=1 // pred_check_branch
      %104 = sbr.rel (0) target = $region53
    $region52: #{probability_search_decode.1} parent=1 // pred_region
      %s106 = ssub.s32 512, 512
      %107 = vsyncadd [#allocation14], %s106
      %s108 = sshll.u32 [#allocation15], 4
      %s109 = int_to_ptr.vmem [resolvable:$true] %s108
      %114 = dma.hbm_to_vmem [thread:$0]  %s12, 512, %s109, [#allocation14], 128, 128, 8
    $region53: #{probability_search_decode.1} parent=1 // pred_fallthru
      _
    // Predicated region
    $region54: #{probability_search_decode.1} parent=1 // pred_check
      _
    $region55: #{probability_search_decode.1} parent=1 // pred_check_branch
      %116 = sbr.rel (0) target = $region57
    $region56: #{probability_search_decode.1} parent=1 // pred_region
      _
    $region57: #{probability_search_decode.1} parent=1 // pred_fallthru
      _
    // Predicated region
    $region58: #{probability_search_decode.1} parent=1 // pred_check
      _
    $region59: #{probability_search_decode.1} parent=1 // pred_check_branch
      %118 = sbr.rel (0) target = $region61
    $region60: #{probability_search_decode.1} parent=1 // pred_region
      %s120 = ssub.s32 512, 512
      %121 = vsyncadd [#allocation17], %s120
      %s122 = sshll.u32 [#allocation16], 4
      %s123 = int_to_ptr.vmem [resolvable:$true] %s122
      %128 = dma.hbm_to_vmem [thread:$0]  %s14, 512, %s123, [#allocation17], 128, 128, 8
    $region61: #{probability_search_decode.1} parent=1 // pred_fallthru
      _
    // Predicated region
    $region62: #{probability_search_decode.1} parent=1 // pred_check
      _
    $region63: #{probability_search_decode.1} parent=1 // pred_check_branch
      %130 = sbr.rel (0) target = $region65
    $region64: #{probability_search_decode.1} parent=1 // pred_region
      _
    $region65: #{probability_search_decode.1} parent=1 // pred_fallthru
      _
    // Predicated region
    $region66: #{probability_search_decode.1} parent=1 // pred_check
      _
    $region67: #{probability_search_decode.1} parent=1 // pred_check_branch
      %132 = sbr.rel (0) target = $region69
    $region68: #{probability_search_decode.1} parent=1 // pred_region
      %133 = dma.done [#allocation5], 16
    $region69: #{probability_search_decode.1} parent=1 // pred_fallthru
      _
    // Predicated region
    $region70: #{probability_search_decode.1} parent=1 // pred_check
      _
    $region71: #{probability_search_decode.1} parent=1 // pred_check_branch
      %135 = sbr.rel (0) target = $region73
    $region72: #{probability_search_decode.1} parent=1 // pred_region
      %136 = dma.done [#allocation7], 16
    $region73: #{probability_search_decode.1} parent=1 // pred_fallthru
      _
    // Predicated region
    $region74: #{probability_search_decode.1} parent=1 // pred_check
      _
    $region75: #{probability_search_decode.1} parent=1 // pred_check_branch
      %138 = sbr.rel (0) target = $region77
    $region76: #{probability_search_decode.1} parent=1 // pred_region
      %139 = dma.done [#allocation4], 16
    $region77: #{probability_search_decode.1} parent=1 // pred_fallthru
      _
    // Predicated region
    $region78: #{probability_search_decode.1} parent=1 // pred_check
      _
    $region79: #{probability_search_decode.1} parent=1 // pred_check_branch
      %141 = sbr.rel (0) target = $region81
    $region80: #{probability_search_decode.1} parent=1 // pred_region
      %142 = dma.done [#allocation11], 16
    $region81: #{probability_search_decode.1} parent=1 // pred_fallthru
      _
    // Predicated region
    $region82: #{probability_search_decode.1} parent=1 // pred_check
      _
    $region83: #{probability_search_decode.1} parent=1 // pred_check_branch
      %144 = sbr.rel (0) target = $region85
    $region84: #{probability_search_decode.1} parent=1 // pred_region
      %145 = dma.done [#allocation11], 512
    $region85: #{probability_search_decode.1} parent=1 // pred_fallthru
      _
    // Predicated region
    $region86: #{probability_search_decode.1} parent=1 // pred_check
      _
    $region87: #{probability_search_decode.1} parent=1 // pred_check_branch
      %147 = sbr.rel (0) target = $region89
    $region88: #{probability_search_decode.1} parent=1 // pred_region
      %148 = dma.done [#allocation14], 16
    $region89: #{probability_search_decode.1} parent=1 // pred_fallthru
      _
    // Predicated region
    $region90: #{probability_search_decode.1} parent=1 // pred_check
      _
    $region91: #{probability_search_decode.1} parent=1 // pred_check_branch
      %150 = sbr.rel (0) target = $region93
    $region92: #{probability_search_decode.1} parent=1 // pred_region
      %151 = dma.done [#allocation14], 512
    $region93: #{probability_search_decode.1} parent=1 // pred_fallthru
      _
    // Predicated region
    $region94: #{probability_search_decode.1} parent=1 // pred_check
      _
    $region95: #{probability_search_decode.1} parent=1 // pred_check_branch
      %153 = sbr.rel (0) target = $region97
    $region96: #{probability_search_decode.1} parent=1 // pred_region
      %154 = dma.done [#allocation17], 512
    $region97: #{probability_search_decode.1} parent=1 // pred_fallthru
      _
    %155 = sfence
    %v156 = vld [vmem:[%s2] sm:$0xff]
    %v157 = vld [vmem:[%s2 + $0x8] sm:$0xff]
    %v158 = vld [vmem:[%s2 + $0x10] sm:$0xff]
    %v159 = vld [vmem:[%s2 + $0x18] sm:$0xff]
    %v160 = vld [vmem:[%s2 + $0x20] sm:$0xff]
    %v161 = vld [vmem:[%s2 + $0x28] sm:$0xff]
    %v162 = vld [vmem:[%s2 + $0x30] sm:$0xff]
    %v163 = vld [vmem:[%s2 + $0x38] sm:$0xff]
    %v164 = vlaneseq
    %v165 = vand.u32 %v164, 127
    %v166 = vld [vmem:[%s3] sm:$0xff]
    %v167 = vld [vmem:[%s3 + $0x8] sm:$0xff]
    %v168 = vld [vmem:[%s3 + $0x10] sm:$0xff]
    %v169 = vld [vmem:[%s3 + $0x18] sm:$0xff]
    %v170 = vld [vmem:[%s4] sm:$0xff]
    %v171 = vld [vmem:[%s4 + $0x8] sm:$0xff]
    %v172 = vld [vmem:[%s4 + $0x10] sm:$0xff]
    %v173 = vld [vmem:[%s4 + $0x18] sm:$0xff]
    %v174 = vld [vmem:[#allocation9] sm:$0x1]
    %v175 = vld [vmem:[#allocation10] sm:$0x1]
    %s176 = sld [smem:[#allocation3]]
    %v177 = vstv %s176
    %vm178 = vcmp.eq.s32.totalorder %v165, %v177
    %v179 = vsel %vm178, 1.0, 0.0
    %vm180 = vcmask 523264
    %v182 = vsel %vm180, %v179, 0
    %184 = vmatprep.subr.mxu0 0.0
    %185 = vmatpush1.msra.mxu0 %v156
    %186 = vmatprep.subr.mxu0 0.0
    %187 = vmatpush1.msra.mxu0 %v157
    %188 = vmatprep.subr.mxu0 0.0
    %189 = vmatpush1.msra.mxu0 %v158
    %190 = vmatprep.subr.mxu0 0.0
    %191 = vmatpush1.msra.mxu0 %v159
    %192 = vmatprep.subr.mxu0 0.0
    %193 = vmatpush1.msra.mxu0 %v160
    %194 = vmatprep.subr.mxu0 0.0
    %195 = vmatpush1.msra.mxu0 %v161
    %196 = vmatprep.subr.mxu0 0.0
    %197 = vmatpush1.msra.mxu0 %v162
    %198 = vmatprep.subr.mxu0 0.0
    %199 = vmatpush1.msra.mxu0 %v163
    %200 = vmatprep.subr.mxu0 0.0
    %201 = vmatpush1.msra.mxu0 0.0
    %202 = vmatprep.subr.mxu0 0.0
    %203 = vmatpush1.msra.mxu0 0.0
    %204 = vmatprep.subr.mxu0 0.0
    %205 = vmatpush1.msra.mxu0 0.0
    %206 = vmatprep.subr.mxu0 0.0
    %207 = vmatpush1.msra.mxu0 0.0
    %208 = vmatprep.subr.mxu0 0.0
    %209 = vmatpush1.msra.mxu0 0.0
    %210 = vmatprep.subr.mxu0 0.0
    %211 = vmatpush1.msra.mxu0 0.0
    %212 = vmatprep.subr.mxu0 0.0
    %213 = vmatpush1.msra.mxu0 0.0
    %214 = vmatprep.subr.mxu0 0.0
    %215 = vmatpush1.msra.mxu0 0.0
    %216 = vmatprep.subr.mxu0 0.0
    %217 = vmatpush1.msra.mxu0 0.0
    %218 = vmatprep.subr.mxu0 0.0
    %219 = vmatpush1.msra.mxu0 0.0
    %220 = vmatprep.subr.mxu0 0.0
    %221 = vmatpush1.msra.mxu0 0.0
    %222 = vmatprep.subr.mxu0 0.0
    %223 = vmatpush1.msra.mxu0 0.0
    %224 = vmatprep.subr.mxu0 0.0
    %225 = vmatpush1.msra.mxu0 0.0
    %226 = vmatprep.subr.mxu0 0.0
    %227 = vmatpush1.msra.mxu0 0.0
    %228 = vmatprep.subr.mxu0 0.0
    %229 = vmatpush1.msra.mxu0 0.0
    %230 = vmatprep.subr.mxu0 0.0
    %231 = vmatpush1.msra.mxu0 0.0
    %232 = vmatprep.subr.mxu0 0.0
    %233 = vmatpush1.msra.mxu0 0.0
    %234 = vmatprep.subr.mxu0 0.0
    %235 = vmatpush1.msra.mxu0 0.0
    %236 = vmatprep.subr.mxu0 0.0
    %237 = vmatpush1.msra.mxu0 0.0
    %238 = vmatprep.subr.mxu0 0.0
    %239 = vmatpush1.msra.mxu0 0.0
    %240 = vmatprep.subr.mxu0 0.0
    %241 = vmatpush1.msra.mxu0 0.0
    %242 = vmatprep.subr.mxu0 0.0
    %243 = vmatpush1.msra.mxu0 0.0
    %244 = vmatprep.subr.mxu0 0.0
    %245 = vmatpush1.msra.mxu0 0.0
    %246 = vmatprep.subr.mxu0 0.0
    %247 = vmatpush1.msra.mxu0 0.0
    %248 = vmatprep.mubr.f32.mxu0 0.0
    %249 = vmatmul.mubr.f32.gmra.mrb[0].mxu0 %v182
    %v250 = vpop.f32.mrb[0].mxu0
    %v251 = vadd.f32 0.0, %v250
    %v252 = vpop.f32.mrb[0].mxu0
    %253 = vdwg.mxu0
    %vm254 = vcmask 261120
    %v256 = vsel %vm254, %v251, 0
    %258 = vmatprep.subr.mxu0 0.0
    %259 = vmatpush1.msra.mxu0 %v166
    %260 = vmatprep.subr.mxu0 0.0
    %261 = vmatpush1.msra.mxu0 %v167
    %262 = vmatprep.subr.mxu0 0.0
    %263 = vmatpush1.msra.mxu0 %v168
    %264 = vmatprep.subr.mxu0 0.0
    %265 = vmatpush1.msra.mxu0 %v169
    %266 = vmatprep.subr.mxu0 0.0
    %267 = vmatpush1.msra.mxu0 0.0
    %268 = vmatprep.subr.mxu0 0.0
    %269 = vmatpush1.msra.mxu0 0.0
    %270 = vmatprep.subr.mxu0 0.0
    %271 = vmatpush1.msra.mxu0 0.0
    %272 = vmatprep.subr.mxu0 0.0
    %273 = vmatpush1.msra.mxu0 0.0
    %274 = vmatprep.subr.mxu0 0.0
    %275 = vmatpush1.msra.mxu0 0.0
    %276 = vmatprep.subr.mxu0 0.0
    %277 = vmatpush1.msra.mxu0 0.0
    %278 = vmatprep.subr.mxu0 0.0
    %279 = vmatpush1.msra.mxu0 0.0
    %280 = vmatprep.subr.mxu0 0.0
    %281 = vmatpush1.msra.mxu0 0.0
    %282 = vmatprep.subr.mxu0 0.0
    %283 = vmatpush1.msra.mxu0 0.0
    %284 = vmatprep.subr.mxu0 0.0
    %285 = vmatpush1.msra.mxu0 0.0
    %286 = vmatprep.subr.mxu0 0.0
    %287 = vmatpush1.msra.mxu0 0.0
    %288 = vmatprep.subr.mxu0 0.0
    %289 = vmatpush1.msra.mxu0 0.0
    %290 = vmatprep.subr.mxu0 0.0
    %291 = vmatpush1.msra.mxu0 0.0
    %292 = vmatprep.subr.mxu0 0.0
    %293 = vmatpush1.msra.mxu0 0.0
    %294 = vmatprep.subr.mxu0 0.0
    %295 = vmatpush1.msra.mxu0 0.0
    %296 = vmatprep.subr.mxu0 0.0
    %297 = vmatpush1.msra.mxu0 0.0
    %298 = vmatprep.subr.mxu0 0.0
    %299 = vmatpush1.msra.mxu0 0.0
    %300 = vmatprep.subr.mxu0 0.0
    %301 = vmatpush1.msra.mxu0 0.0
    %302 = vmatprep.subr.mxu0 0.0
    %303 = vmatpush1.msra.mxu0 0.0
    %304 = vmatprep.subr.mxu0 0.0
    %305 = vmatpush1.msra.mxu0 0.0
    %306 = vmatprep.subr.mxu0 0.0
    %307 = vmatpush1.msra.mxu0 0.0
    %308 = vmatprep.subr.mxu0 0.0
    %309 = vmatpush1.msra.mxu0 0.0
    %310 = vmatprep.subr.mxu0 0.0
    %311 = vmatpush1.msra.mxu0 0.0
    %312 = vmatprep.subr.mxu0 0.0
    %313 = vmatpush1.msra.mxu0 0.0
    %314 = vmatprep.subr.mxu0 0.0
    %315 = vmatpush1.msra.mxu0 0.0
    %316 = vmatprep.subr.mxu0 0.0
    %317 = vmatpush1.msra.mxu0 0.0
    %318 = vmatprep.subr.mxu0 0.0
    %319 = vmatpush1.msra.mxu0 0.0
    %320 = vmatprep.subr.mxu0 0.0
    %321 = vmatpush1.msra.mxu0 0.0
    %322 = vmatprep.mubr.f32.mxu0 0.0
    %323 = vmatmul.mubr.f32.gmra.mrb[0].mxu0 %v256
    %v324 = vpop.f32.mrb[0].mxu0
    %v325 = vadd.f32 %v174, %v324
    %v326 = vpop.f32.mrb[0].mxu0
    %327 = vdwg.mxu0
    %v329 = vsel %vm254, 0.0, 0
    %331 = vmatprep.subr.mxu0 0.0
    %332 = vmatpush1.msra.mxu0 %v170
    %333 = vmatprep.subr.mxu0 0.0
    %334 = vmatpush1.msra.mxu0 %v171
    %335 = vmatprep.subr.mxu0 0.0
    %336 = vmatpush1.msra.mxu0 %v172
    %337 = vmatprep.subr.mxu0 0.0
    %338 = vmatpush1.msra.mxu0 %v173
    %339 = vmatprep.subr.mxu0 0.0
    %340 = vmatpush1.msra.mxu0 0.0
    %341 = vmatprep.subr.mxu0 0.0
    %342 = vmatpush1.msra.mxu0 0.0
    %343 = vmatprep.subr.mxu0 0.0
    %344 = vmatpush1.msra.mxu0 0.0
    %345 = vmatprep.subr.mxu0 0.0
    %346 = vmatpush1.msra.mxu0 0.0
    %347 = vmatprep.subr.mxu0 0.0
    %348 = vmatpush1.msra.mxu0 0.0
    %349 = vmatprep.subr.mxu0 0.0
    %350 = vmatpush1.msra.mxu0 0.0
    %351 = vmatprep.subr.mxu0 0.0
    %352 = vmatpush1.msra.mxu0 0.0
    %353 = vmatprep.subr.mxu0 0.0
    %354 = vmatpush1.msra.mxu0 0.0
    %355 = vmatprep.subr.mxu0 0.0
    %356 = vmatpush1.msra.mxu0 0.0
    %357 = vmatprep.subr.mxu0 0.0
    %358 = vmatpush1.msra.mxu0 0.0
    %359 = vmatprep.subr.mxu0 0.0
    %360 = vmatpush1.msra.mxu0 0.0
    %361 = vmatprep.subr.mxu0 0.0
    %362 = vmatpush1.msra.mxu0 0.0
    %363 = vmatprep.subr.mxu0 0.0
    %364 = vmatpush1.msra.mxu0 0.0
    %365 = vmatprep.subr.mxu0 0.0
    %366 = vmatpush1.msra.mxu0 0.0
    %367 = vmatprep.subr.mxu0 0.0
    %368 = vmatpush1.msra.mxu0 0.0
    %369 = vmatprep.subr.mxu0 0.0
    %370 = vmatpush1.msra.mxu0 0.0
    %371 = vmatprep.subr.mxu0 0.0
    %372 = vmatpush1.msra.mxu0 0.0
    %373 = vmatprep.subr.mxu0 0.0
    %374 = vmatpush1.msra.mxu0 0.0
    %375 = vmatprep.subr.mxu0 0.0
    %376 = vmatpush1.msra.mxu0 0.0
    %377 = vmatprep.subr.mxu0 0.0
    %378 = vmatpush1.msra.mxu0 0.0
    %379 = vmatprep.subr.mxu0 0.0
    %380 = vmatpush1.msra.mxu0 0.0
    %381 = vmatprep.subr.mxu0 0.0
    %382 = vmatpush1.msra.mxu0 0.0
    %383 = vmatprep.subr.mxu0 0.0
    %384 = vmatpush1.msra.mxu0 0.0
    %385 = vmatprep.subr.mxu0 0.0
    %386 = vmatpush1.msra.mxu0 0.0
    %387 = vmatprep.subr.mxu0 0.0
    %388 = vmatpush1.msra.mxu0 0.0
    %389 = vmatprep.subr.mxu0 0.0
    %390 = vmatpush1.msra.mxu0 0.0
    %391 = vmatprep.subr.mxu0 0.0
    %392 = vmatpush1.msra.mxu0 0.0
    %393 = vmatprep.subr.mxu0 0.0
    %394 = vmatpush1.msra.mxu0 0.0
    %395 = vmatprep.mubr.f32.mxu0 0.0
    %396 = vmatmul.mubr.f32.gmra.mrb[0].mxu0 %v329
    %v397 = vpop.f32.mrb[0].mxu0
    %v398 = vadd.f32 %v175, %v397
    %v399 = vpop.f32.mrb[0].mxu0
    %400 = vdwg.mxu0
    %v401 = vadd.f32 %v325, %v398
    %v402 = vxor.u32 %v401, 2147483648
    %v403 = vmul.f32 %v402, 1.442695
    %v404 = vpow.pop %v403
    %v405 = vadd.f32 %v404, 1.0
    %v406 = vrcp.pop %v405
    %v407 = vmul.f32 1.0, %v406
    %409 = vrot.lane.b32.xlu0 %v398, 64
    %v410 = vpop.permute.xlu0 %409
    %v412 = vmul.f32 %v407, %v410
    %414 = vrot.lane.b32.xlu0 %v412, 64
    %v415 = vpop.permute.xlu0 %414
    %v417 = vadd.f32 %v325, %v415
    %v418 = vtanh.pop %v417
    %v419 = vsub.f32 1.0, %v407
    %421 = vrot.lane.b32.xlu0 %v418, 96
    %v422 = vpop.permute.xlu0 %421
    %v424 = vmul.f32 %v419, %v422
    %v425 = vmul.f32 %v407, 0.0
    %v426 = vadd.f32 %v424, %v425
    %428 = vrot.lane.b32.xlu0 %v426, 96
    %v429 = vpop.permute.xlu0 %428
    %vm431 = vcmask 253952
    %432 = vst.msk [vmem:[#allocation2] sm:$0x1] %vm431, %v429
    %s433 = sld [smem:[#allocation3 + $0x1]]
    %v434 = vstv %s433
    %vm435 = vcmp.eq.s32.totalorder %v165, %v434
    %v436 = vsel %vm435, 1.0, 0.0
    %v438 = vsel %vm180, %v436, 0
    %440 = vmatprep.subr.mxu0 0.0
    %441 = vmatpush1.msra.mxu0 %v156
    %442 = vmatprep.subr.mxu0 0.0
    %443 = vmatpush1.msra.mxu0 %v157
    %444 = vmatprep.subr.mxu0 0.0
    %445 = vmatpush1.msra.mxu0 %v158
    %446 = vmatprep.subr.mxu0 0.0
    %447 = vmatpush1.msra.mxu0 %v159
    %448 = vmatprep.subr.mxu0 0.0
    %449 = vmatpush1.msra.mxu0 %v160
    %450 = vmatprep.subr.mxu0 0.0
    %451 = vmatpush1.msra.mxu0 %v161
    %452 = vmatprep.subr.mxu0 0.0
    %453 = vmatpush1.msra.mxu0 %v162
    %454 = vmatprep.subr.mxu0 0.0
    %455 = vmatpush1.msra.mxu0 %v163
    %456 = vmatprep.subr.mxu0 0.0
    %457 = vmatpush1.msra.mxu0 0.0
    %458 = vmatprep.subr.mxu0 0.0
    %459 = vmatpush1.msra.mxu0 0.0
    %460 = vmatprep.subr.mxu0 0.0
    %461 = vmatpush1.msra.mxu0 0.0
    %462 = vmatprep.subr.mxu0 0.0
    %463 = vmatpush1.msra.mxu0 0.0
    %464 = vmatprep.subr.mxu0 0.0
    %465 = vmatpush1.msra.mxu0 0.0
    %466 = vmatprep.subr.mxu0 0.0
    %467 = vmatpush1.msra.mxu0 0.0
    %468 = vmatprep.subr.mxu0 0.0
    %469 = vmatpush1.msra.mxu0 0.0
    %470 = vmatprep.subr.mxu0 0.0
    %471 = vmatpush1.msra.mxu0 0.0
    %472 = vmatprep.subr.mxu0 0.0
    %473 = vmatpush1.msra.mxu0 0.0
    %474 = vmatprep.subr.mxu0 0.0
    %475 = vmatpush1.msra.mxu0 0.0
    %476 = vmatprep.subr.mxu0 0.0
    %477 = vmatpush1.msra.mxu0 0.0
    %478 = vmatprep.subr.mxu0 0.0
    %479 = vmatpush1.msra.mxu0 0.0
    %480 = vmatprep.subr.mxu0 0.0
    %481 = vmatpush1.msra.mxu0 0.0
    %482 = vmatprep.subr.mxu0 0.0
    %483 = vmatpush1.msra.mxu0 0.0
    %484 = vmatprep.subr.mxu0 0.0
    %485 = vmatpush1.msra.mxu0 0.0
    %486 = vmatprep.subr.mxu0 0.0
    %487 = vmatpush1.msra.mxu0 0.0
    %488 = vmatprep.subr.mxu0 0.0
    %489 = vmatpush1.msra.mxu0 0.0
    %490 = vmatprep.subr.mxu0 0.0
    %491 = vmatpush1.msra.mxu0 0.0
    %492 = vmatprep.subr.mxu0 0.0
    %493 = vmatpush1.msra.mxu0 0.0
    %494 = vmatprep.subr.mxu0 0.0
    %495 = vmatpush1.msra.mxu0 0.0
    %496 = vmatprep.subr.mxu0 0.0
    %497 = vmatpush1.msra.mxu0 0.0
    %498 = vmatprep.subr.mxu0 0.0
    %499 = vmatpush1.msra.mxu0 0.0
    %500 = vmatprep.subr.mxu0 0.0
    %501 = vmatpush1.msra.mxu0 0.0
    %502 = vmatprep.subr.mxu0 0.0
    %503 = vmatpush1.msra.mxu0 0.0
    %504 = vmatprep.mubr.f32.mxu0 0.0
    %505 = vmatmul.mubr.f32.gmra.mrb[0].mxu0 %v438
    %v506 = vpop.f32.mrb[0].mxu0
    %v507 = vadd.f32 0.0, %v506
    %v508 = vpop.f32.mrb[0].mxu0
    %509 = vdwg.mxu0
    %v511 = vsel %vm254, %v507, 0
    %513 = vmatprep.subr.mxu0 0.0
    %514 = vmatpush1.msra.mxu0 %v166
    %515 = vmatprep.subr.mxu0 0.0
    %516 = vmatpush1.msra.mxu0 %v167
    %517 = vmatprep.subr.mxu0 0.0
    %518 = vmatpush1.msra.mxu0 %v168
    %519 = vmatprep.subr.mxu0 0.0
    %520 = vmatpush1.msra.mxu0 %v169
    %521 = vmatprep.subr.mxu0 0.0
    %522 = vmatpush1.msra.mxu0 0.0
    %523 = vmatprep.subr.mxu0 0.0
    %524 = vmatpush1.msra.mxu0 0.0
    %525 = vmatprep.subr.mxu0 0.0
    %526 = vmatpush1.msra.mxu0 0.0
    %527 = vmatprep.subr.mxu0 0.0
    %528 = vmatpush1.msra.mxu0 0.0
    %529 = vmatprep.subr.mxu0 0.0
    %530 = vmatpush1.msra.mxu0 0.0
    %531 = vmatprep.subr.mxu0 0.0
    %532 = vmatpush1.msra.mxu0 0.0
    %533 = vmatprep.subr.mxu0 0.0
    %534 = vmatpush1.msra.mxu0 0.0
    %535 = vmatprep.subr.mxu0 0.0
    %536 = vmatpush1.msra.mxu0 0.0
    %537 = vmatprep.subr.mxu0 0.0
    %538 = vmatpush1.msra.mxu0 0.0
    %539 = vmatprep.subr.mxu0 0.0
    %540 = vmatpush1.msra.mxu0 0.0
    %541 = vmatprep.subr.mxu0 0.0
    %542 = vmatpush1.msra.mxu0 0.0
    %543 = vmatprep.subr.mxu0 0.0
    %544 = vmatpush1.msra.mxu0 0.0
    %545 = vmatprep.subr.mxu0 0.0
    %546 = vmatpush1.msra.mxu0 0.0
    %547 = vmatprep.subr.mxu0 0.0
    %548 = vmatpush1.msra.mxu0 0.0
    %549 = vmatprep.subr.mxu0 0.0
    %550 = vmatpush1.msra.mxu0 0.0
    %551 = vmatprep.subr.mxu0 0.0
    %552 = vmatpush1.msra.mxu0 0.0
    %553 = vmatprep.subr.mxu0 0.0
    %554 = vmatpush1.msra.mxu0 0.0
    %555 = vmatprep.subr.mxu0 0.0
    %556 = vmatpush1.msra.mxu0 0.0
    %557 = vmatprep.subr.mxu0 0.0
    %558 = vmatpush1.msra.mxu0 0.0
    %559 = vmatprep.subr.mxu0 0.0
    %560 = vmatpush1.msra.mxu0 0.0
    %561 = vmatprep.subr.mxu0 0.0
    %562 = vmatpush1.msra.mxu0 0.0
    %563 = vmatprep.subr.mxu0 0.0
    %564 = vmatpush1.msra.mxu0 0.0
    %565 = vmatprep.subr.mxu0 0.0
    %566 = vmatpush1.msra.mxu0 0.0
    %567 = vmatprep.subr.mxu0 0.0
    %568 = vmatpush1.msra.mxu0 0.0
    %569 = vmatprep.subr.mxu0 0.0
    %570 = vmatpush1.msra.mxu0 0.0
    %571 = vmatprep.subr.mxu0 0.0
    %572 = vmatpush1.msra.mxu0 0.0
    %573 = vmatprep.subr.mxu0 0.0
    %574 = vmatpush1.msra.mxu0 0.0
    %575 = vmatprep.subr.mxu0 0.0
    %576 = vmatpush1.msra.mxu0 0.0
    %577 = vmatprep.mubr.f32.mxu0 0.0
    %578 = vmatmul.mubr.f32.gmra.mrb[0].mxu0 %v511
    %v579 = vpop.f32.mrb[0].mxu0
    %v580 = vadd.f32 %v174, %v579
    %v581 = vpop.f32.mrb[0].mxu0
    %582 = vdwg.mxu0
    %v583 = vsel %vm254, %v429, 0
    %585 = vmatprep.subr.mxu0 0.0
    %586 = vmatpush1.msra.mxu0 %v170
    %587 = vmatprep.subr.mxu0 0.0
    %588 = vmatpush1.msra.mxu0 %v171
    %589 = vmatprep.subr.mxu0 0.0
    %590 = vmatpush1.msra.mxu0 %v172
    %591 = vmatprep.subr.mxu0 0.0
    %592 = vmatpush1.msra.mxu0 %v173
    %593 = vmatprep.subr.mxu0 0.0
    %594 = vmatpush1.msra.mxu0 0.0
    %595 = vmatprep.subr.mxu0 0.0
    %596 = vmatpush1.msra.mxu0 0.0
    %597 = vmatprep.subr.mxu0 0.0
    %598 = vmatpush1.msra.mxu0 0.0
    %599 = vmatprep.subr.mxu0 0.0
    %600 = vmatpush1.msra.mxu0 0.0
    %601 = vmatprep.subr.mxu0 0.0
    %602 = vmatpush1.msra.mxu0 0.0
    %603 = vmatprep.subr.mxu0 0.0
    %604 = vmatpush1.msra.mxu0 0.0
    %605 = vmatprep.subr.mxu0 0.0
    %606 = vmatpush1.msra.mxu0 0.0
    %607 = vmatprep.subr.mxu0 0.0
    %608 = vmatpush1.msra.mxu0 0.0
    %609 = vmatprep.subr.mxu0 0.0
    %610 = vmatpush1.msra.mxu0 0.0
    %611 = vmatprep.subr.mxu0 0.0
    %612 = vmatpush1.msra.mxu0 0.0
    %613 = vmatprep.subr.mxu0 0.0
    %614 = vmatpush1.msra.mxu0 0.0
    %615 = vmatprep.subr.mxu0 0.0
    %616 = vmatpush1.msra.mxu0 0.0
    %617 = vmatprep.subr.mxu0 0.0
    %618 = vmatpush1.msra.mxu0 0.0
    %619 = vmatprep.subr.mxu0 0.0
    %620 = vmatpush1.msra.mxu0 0.0
    %621 = vmatprep.subr.mxu0 0.0
    %622 = vmatpush1.msra.mxu0 0.0
    %623 = vmatprep.subr.mxu0 0.0
    %624 = vmatpush1.msra.mxu0 0.0
    %625 = vmatprep.subr.mxu0 0.0
    %626 = vmatpush1.msra.mxu0 0.0
    %627 = vmatprep.subr.mxu0 0.0
    %628 = vmatpush1.msra.mxu0 0.0
    %629 = vmatprep.subr.mxu0 0.0
    %630 = vmatpush1.msra.mxu0 0.0
    %631 = vmatprep.subr.mxu0 0.0
    %632 = vmatpush1.msra.mxu0 0.0
    %633 = vmatprep.subr.mxu0 0.0
    %634 = vmatpush1.msra.mxu0 0.0
    %635 = vmatprep.subr.mxu0 0.0
    %636 = vmatpush1.msra.mxu0 0.0
    %637 = vmatprep.subr.mxu0 0.0
    %638 = vmatpush1.msra.mxu0 0.0
    %639 = vmatprep.subr.mxu0 0.0
    %640 = vmatpush1.msra.mxu0 0.0
    %641 = vmatprep.subr.mxu0 0.0
    %642 = vmatpush1.msra.mxu0 0.0
    %643 = vmatprep.subr.mxu0 0.0
    %644 = vmatpush1.msra.mxu0 0.0
    %645 = vmatprep.subr.mxu0 0.0
    %646 = vmatpush1.msra.mxu0 0.0
    %647 = vmatprep.subr.mxu0 0.0
    %648 = vmatpush1.msra.mxu0 0.0
    %649 = vmatprep.mubr.f32.mxu0 0.0
    %650 = vmatmul.mubr.f32.gmra.mrb[0].mxu0 %v583
    %v651 = vpop.f32.mrb[0].mxu0
    %v652 = vadd.f32 %v175, %v651
    %v653 = vpop.f32.mrb[0].mxu0
    %654 = vdwg.mxu0
    %v655 = vadd.f32 %v580, %v652
    %v656 = vxor.u32 %v655, 2147483648
    %v657 = vmul.f32 %v656, 1.442695
    %v658 = vpow.pop %v657
    %v659 = vadd.f32 %v658, 1.0
    %v660 = vrcp.pop %v659
    %v661 = vmul.f32 1.0, %v660
    %663 = vrot.lane.b32.xlu0 %v652, 64
    %v664 = vpop.permute.xlu0 %663
    %v666 = vmul.f32 %v661, %v664
    %668 = vrot.lane.b32.xlu0 %v666, 64
    %v669 = vpop.permute.xlu0 %668
    %v671 = vadd.f32 %v580, %v669
    %v672 = vtanh.pop %v671
    %v673 = vsub.f32 1.0, %v661
    %675 = vrot.lane.b32.xlu0 %v672, 96
    %v676 = vpop.permute.xlu0 %675
    %v678 = vmul.f32 %v673, %v676
    %v679 = vmul.f32 %v661, %v426
    %v680 = vadd.f32 %v678, %v679
    %682 = vrot.lane.b32.xlu0 %v680, 96
    %v683 = vpop.permute.xlu0 %682
    %685 = vst.msk [vmem:[#allocation2 + $0x1] sm:$0x1] %vm431, %v683
    %s686 = sld [smem:[#allocation3 + $0x2]]
    %v687 = vstv %s686
    %vm688 = vcmp.eq.s32.totalorder %v165, %v687
    %v689 = vsel %vm688, 1.0, 0.0
    %v691 = vsel %vm180, %v689, 0
    %693 = vmatprep.subr.mxu0 0.0
    %694 = vmatpush1.msra.mxu0 %v156
    %695 = vmatprep.subr.mxu0 0.0
    %696 = vmatpush1.msra.mxu0 %v157
    %697 = vmatprep.subr.mxu0 0.0
    %698 = vmatpush1.msra.mxu0 %v158
    %699 = vmatprep.subr.mxu0 0.0
    %700 = vmatpush1.msra.mxu0 %v159
    %701 = vmatprep.subr.mxu0 0.0
    %702 = vmatpush1.msra.mxu0 %v160
    %703 = vmatprep.subr.mxu0 0.0
    %704 = vmatpush1.msra.mxu0 %v161
    %705 = vmatprep.subr.mxu0 0.0
    %706 = vmatpush1.msra.mxu0 %v162
    %707 = vmatprep.subr.mxu0 0.0
    %708 = vmatpush1.msra.mxu0 %v163
    %709 = vmatprep.subr.mxu0 0.0
    %710 = vmatpush1.msra.mxu0 0.0
    %711 = vmatprep.subr.mxu0 0.0
    %712 = vmatpush1.msra.mxu0 0.0
    %713 = vmatprep.subr.mxu0 0.0
    %714 = vmatpush1.msra.mxu0 0.0
    %715 = vmatprep.subr.mxu0 0.0
    %716 = vmatpush1.msra.mxu0 0.0
    %717 = vmatprep.subr.mxu0 0.0
    %718 = vmatpush1.msra.mxu0 0.0
    %719 = vmatprep.subr.mxu0 0.0
    %720 = vmatpush1.msra.mxu0 0.0
    %721 = vmatprep.subr.mxu0 0.0
    %722 = vmatpush1.msra.mxu0 0.0
    %723 = vmatprep.subr.mxu0 0.0
    %724 = vmatpush1.msra.mxu0 0.0
    %725 = vmatprep.subr.mxu0 0.0
    %726 = vmatpush1.msra.mxu0 0.0
    %727 = vmatprep.subr.mxu0 0.0
    %728 = vmatpush1.msra.mxu0 0.0
    %729 = vmatprep.subr.mxu0 0.0
    %730 = vmatpush1.msra.mxu0 0.0
    %731 = vmatprep.subr.mxu0 0.0
    %732 = vmatpush1.msra.mxu0 0.0
    %733 = vmatprep.subr.mxu0 0.0
    %734 = vmatpush1.msra.mxu0 0.0
    %735 = vmatprep.subr.mxu0 0.0
    %736 = vmatpush1.msra.mxu0 0.0
    %737 = vmatprep.subr.mxu0 0.0
    %738 = vmatpush1.msra.mxu0 0.0
    %739 = vmatprep.subr.mxu0 0.0
    %740 = vmatpush1.msra.mxu0 0.0
    %741 = vmatprep.subr.mxu0 0.0
    %742 = vmatpush1.msra.mxu0 0.0
    %743 = vmatprep.subr.mxu0 0.0
    %744 = vmatpush1.msra.mxu0 0.0
    %745 = vmatprep.subr.mxu0 0.0
    %746 = vmatpush1.msra.mxu0 0.0
    %747 = vmatprep.subr.mxu0 0.0
    %748 = vmatpush1.msra.mxu0 0.0
    %749 = vmatprep.subr.mxu0 0.0
    %750 = vmatpush1.msra.mxu0 0.0
    %751 = vmatprep.subr.mxu0 0.0
    %752 = vmatpush1.msra.mxu0 0.0
    %753 = vmatprep.subr.mxu0 0.0
    %754 = vmatpush1.msra.mxu0 0.0
    %755 = vmatprep.subr.mxu0 0.0
    %756 = vmatpush1.msra.mxu0 0.0
    %757 = vmatprep.mubr.f32.mxu0 0.0
    %758 = vmatmul.mubr.f32.gmra.mrb[0].mxu0 %v691
    %v759 = vpop.f32.mrb[0].mxu0
    %v760 = vadd.f32 0.0, %v759
    %v761 = vpop.f32.mrb[0].mxu0
    %762 = vdwg.mxu0
    %v764 = vsel %vm254, %v760, 0
    %766 = vmatprep.subr.mxu0 0.0
    %767 = vmatpush1.msra.mxu0 %v166
    %768 = vmatprep.subr.mxu0 0.0
    %769 = vmatpush1.msra.mxu0 %v167
    %770 = vmatprep.subr.mxu0 0.0
    %771 = vmatpush1.msra.mxu0 %v168
    %772 = vmatprep.subr.mxu0 0.0
    %773 = vmatpush1.msra.mxu0 %v169
    %774 = vmatprep.subr.mxu0 0.0
    %775 = vmatpush1.msra.mxu0 0.0
    %776 = vmatprep.subr.mxu0 0.0
    %777 = vmatpush1.msra.mxu0 0.0
    %778 = vmatprep.subr.mxu0 0.0
    %779 = vmatpush1.msra.mxu0 0.0
    %780 = vmatprep.subr.mxu0 0.0
    %781 = vmatpush1.msra.mxu0 0.0
    %782 = vmatprep.subr.mxu0 0.0
    %783 = vmatpush1.msra.mxu0 0.0
    %784 = vmatprep.subr.mxu0 0.0
    %785 = vmatpush1.msra.mxu0 0.0
    %786 = vmatprep.subr.mxu0 0.0
    %787 = vmatpush1.msra.mxu0 0.0
    %788 = vmatprep.subr.mxu0 0.0
    %789 = vmatpush1.msra.mxu0 0.0
    %790 = vmatprep.subr.mxu0 0.0
    %791 = vmatpush1.msra.mxu0 0.0
    %792 = vmatprep.subr.mxu0 0.0
    %793 = vmatpush1.msra.mxu0 0.0
    %794 = vmatprep.subr.mxu0 0.0
    %795 = vmatpush1.msra.mxu0 0.0
    %796 = vmatprep.subr.mxu0 0.0
    %797 = vmatpush1.msra.mxu0 0.0
    %798 = vmatprep.subr.mxu0 0.0
    %799 = vmatpush1.msra.mxu0 0.0
    %800 = vmatprep.subr.mxu0 0.0
    %801 = vmatpush1.msra.mxu0 0.0
    %802 = vmatprep.subr.mxu0 0.0
    %803 = vmatpush1.msra.mxu0 0.0
    %804 = vmatprep.subr.mxu0 0.0
    %805 = vmatpush1.msra.mxu0 0.0
    %806 = vmatprep.subr.mxu0 0.0
    %807 = vmatpush1.msra.mxu0 0.0
    %808 = vmatprep.subr.mxu0 0.0
    %809 = vmatpush1.msra.mxu0 0.0
    %810 = vmatprep.subr.mxu0 0.0
    %811 = vmatpush1.msra.mxu0 0.0
    %812 = vmatprep.subr.mxu0 0.0
    %813 = vmatpush1.msra.mxu0 0.0
    %814 = vmatprep.subr.mxu0 0.0
    %815 = vmatpush1.msra.mxu0 0.0
    %816 = vmatprep.subr.mxu0 0.0
    %817 = vmatpush1.msra.mxu0 0.0
    %818 = vmatprep.subr.mxu0 0.0
    %819 = vmatpush1.msra.mxu0 0.0
    %820 = vmatprep.subr.mxu0 0.0
    %821 = vmatpush1.msra.mxu0 0.0
    %822 = vmatprep.subr.mxu0 0.0
    %823 = vmatpush1.msra.mxu0 0.0
    %824 = vmatprep.subr.mxu0 0.0
    %825 = vmatpush1.msra.mxu0 0.0
    %826 = vmatprep.subr.mxu0 0.0
    %827 = vmatpush1.msra.mxu0 0.0
    %828 = vmatprep.subr.mxu0 0.0
    %829 = vmatpush1.msra.mxu0 0.0
    %830 = vmatprep.mubr.f32.mxu0 0.0
    %831 = vmatmul.mubr.f32.gmra.mrb[0].mxu0 %v764
    %v832 = vpop.f32.mrb[0].mxu0
    %v833 = vadd.f32 %v174, %v832
    %v834 = vpop.f32.mrb[0].mxu0
    %835 = vdwg.mxu0
    %v836 = vsel %vm254, %v683, 0
    %838 = vmatprep.subr.mxu0 0.0
    %839 = vmatpush1.msra.mxu0 %v170
    %840 = vmatprep.subr.mxu0 0.0
    %841 = vmatpush1.msra.mxu0 %v171
    %842 = vmatprep.subr.mxu0 0.0
    %843 = vmatpush1.msra.mxu0 %v172
    %844 = vmatprep.subr.mxu0 0.0
    %845 = vmatpush1.msra.mxu0 %v173
    %846 = vmatprep.subr.mxu0 0.0
    %847 = vmatpush1.msra.mxu0 0.0
    %848 = vmatprep.subr.mxu0 0.0
    %849 = vmatpush1.msra.mxu0 0.0
    %850 = vmatprep.subr.mxu0 0.0
    %851 = vmatpush1.msra.mxu0 0.0
    %852 = vmatprep.subr.mxu0 0.0
    %853 = vmatpush1.msra.mxu0 0.0
    %854 = vmatprep.subr.mxu0 0.0
    %855 = vmatpush1.msra.mxu0 0.0
    %856 = vmatprep.subr.mxu0 0.0
    %857 = vmatpush1.msra.mxu0 0.0
    %858 = vmatprep.subr.mxu0 0.0
    %859 = vmatpush1.msra.mxu0 0.0
    %860 = vmatprep.subr.mxu0 0.0
    %861 = vmatpush1.msra.mxu0 0.0
    %862 = vmatprep.subr.mxu0 0.0
    %863 = vmatpush1.msra.mxu0 0.0
    %864 = vmatprep.subr.mxu0 0.0
    %865 = vmatpush1.msra.mxu0 0.0
    %866 = vmatprep.subr.mxu0 0.0
    %867 = vmatpush1.msra.mxu0 0.0
    %868 = vmatprep.subr.mxu0 0.0
    %869 = vmatpush1.msra.mxu0 0.0
    %870 = vmatprep.subr.mxu0 0.0
    %871 = vmatpush1.msra.mxu0 0.0
    %872 = vmatprep.subr.mxu0 0.0
    %873 = vmatpush1.msra.mxu0 0.0
    %874 = vmatprep.subr.mxu0 0.0
    %875 = vmatpush1.msra.mxu0 0.0
    %876 = vmatprep.subr.mxu0 0.0
    %877 = vmatpush1.msra.mxu0 0.0
    %878 = vmatprep.subr.mxu0 0.0
    %879 = vmatpush1.msra.mxu0 0.0
    %880 = vmatprep.subr.mxu0 0.0
    %881 = vmatpush1.msra.mxu0 0.0
    %882 = vmatprep.subr.mxu0 0.0
    %883 = vmatpush1.msra.mxu0 0.0
    %884 = vmatprep.subr.mxu0 0.0
    %885 = vmatpush1.msra.mxu0 0.0
    %886 = vmatprep.subr.mxu0 0.0
    %887 = vmatpush1.msra.mxu0 0.0
    %888 = vmatprep.subr.mxu0 0.0
    %889 = vmatpush1.msra.mxu0 0.0
    %890 = vmatprep.subr.mxu0 0.0
    %891 = vmatpush1.msra.mxu0 0.0
    %892 = vmatprep.subr.mxu0 0.0
    %893 = vmatpush1.msra.mxu0 0.0
    %894 = vmatprep.subr.mxu0 0.0
    %895 = vmatpush1.msra.mxu0 0.0
    %896 = vmatprep.subr.mxu0 0.0
    %897 = vmatpush1.msra.mxu0 0.0
    %898 = vmatprep.subr.mxu0 0.0
    %899 = vmatpush1.msra.mxu0 0.0
    %900 = vmatprep.subr.mxu0 0.0
    %901 = vmatpush1.msra.mxu0 0.0
    %902 = vmatprep.mubr.f32.mxu0 0.0
    %903 = vmatmul.mubr.f32.gmra.mrb[0].mxu0 %v836
    %v904 = vpop.f32.mrb[0].mxu0
    %v905 = vadd.f32 %v175, %v904
    %v906 = vpop.f32.mrb[0].mxu0
    %907 = vdwg.mxu0
    %v908 = vadd.f32 %v833, %v905
    %v909 = vxor.u32 %v908, 2147483648
    %v910 = vmul.f32 %v909, 1.442695
    %v911 = vpow.pop %v910
    %v912 = vadd.f32 %v911, 1.0
    %v913 = vrcp.pop %v912
    %v914 = vmul.f32 1.0, %v913
    %916 = vrot.lane.b32.xlu0 %v905, 64
    %v917 = vpop.permute.xlu0 %916
    %v919 = vmul.f32 %v914, %v917
    %921 = vrot.lane.b32.xlu0 %v919, 64
    %v922 = vpop.permute.xlu0 %921
    %v924 = vadd.f32 %v833, %v922
    %v925 = vtanh.pop %v924
    %v926 = vsub.f32 1.0, %v914
    %928 = vrot.lane.b32.xlu0 %v925, 96
    %v929 = vpop.permute.xlu0 %928
    %v931 = vmul.f32 %v926, %v929
    %v932 = vmul.f32 %v914, %v680
    %v933 = vadd.f32 %v931, %v932
    %935 = vrot.lane.b32.xlu0 %v933, 96
    %v936 = vpop.permute.xlu0 %935
    %938 = vst.msk [vmem:[#allocation2 + $0x2] sm:$0x1] %vm431, %v936
    %s939 = sld [smem:[#allocation3 + $0x3]]
    %v940 = vstv %s939
    %vm941 = vcmp.eq.s32.totalorder %v165, %v940
    %v942 = vsel %vm941, 1.0, 0.0
    %v944 = vsel %vm180, %v942, 0
    %946 = vmatprep.subr.mxu0 0.0
    %947 = vmatpush1.msra.mxu0 %v156
    %948 = vmatprep.subr.mxu0 0.0
    %949 = vmatpush1.msra.mxu0 %v157
    %950 = vmatprep.subr.mxu0 0.0
    %951 = vmatpush1.msra.mxu0 %v158
    %952 = vmatprep.subr.mxu0 0.0
    %953 = vmatpush1.msra.mxu0 %v159
    %954 = vmatprep.subr.mxu0 0.0
    %955 = vmatpush1.msra.mxu0 %v160
    %956 = vmatprep.subr.mxu0 0.0
    %957 = vmatpush1.msra.mxu0 %v161
    %958 = vmatprep.subr.mxu0 0.0
    %959 = vmatpush1.msra.mxu0 %v162
    %960 = vmatprep.subr.mxu0 0.0
    %961 = vmatpush1.msra.mxu0 %v163
    %962 = vmatprep.subr.mxu0 0.0
    %963 = vmatpush1.msra.mxu0 0.0
    %964 = vmatprep.subr.mxu0 0.0
    %965 = vmatpush1.msra.mxu0 0.0
    %966 = vmatprep.subr.mxu0 0.0
    %967 = vmatpush1.msra.mxu0 0.0
    %968 = vmatprep.subr.mxu0 0.0
    %969 = vmatpush1.msra.mxu0 0.0
    %970 = vmatprep.subr.mxu0 0.0
    %971 = vmatpush1.msra.mxu0 0.0
    %972 = vmatprep.subr.mxu0 0.0
    %973 = vmatpush1.msra.mxu0 0.0
    %974 = vmatprep.subr.mxu0 0.0
    %975 = vmatpush1.msra.mxu0 0.0
    %976 = vmatprep.subr.mxu0 0.0
    %977 = vmatpush1.msra.mxu0 0.0
    %978 = vmatprep.subr.mxu0 0.0
    %979 = vmatpush1.msra.mxu0 0.0
    %980 = vmatprep.subr.mxu0 0.0
    %981 = vmatpush1.msra.mxu0 0.0
    %982 = vmatprep.subr.mxu0 0.0
    %983 = vmatpush1.msra.mxu0 0.0
    %984 = vmatprep.subr.mxu0 0.0
    %985 = vmatpush1.msra.mxu0 0.0
    %986 = vmatprep.subr.mxu0 0.0
    %987 = vmatpush1.msra.mxu0 0.0
    %988 = vmatprep.subr.mxu0 0.0
    %989 = vmatpush1.msra.mxu0 0.0
    %990 = vmatprep.subr.mxu0 0.0
    %991 = vmatpush1.msra.mxu0 0.0
    %992 = vmatprep.subr.mxu0 0.0
    %993 = vmatpush1.msra.mxu0 0.0
    %994 = vmatprep.subr.mxu0 0.0
    %995 = vmatpush1.msra.mxu0 0.0
    %996 = vmatprep.subr.mxu0 0.0
    %997 = vmatpush1.msra.mxu0 0.0
    %998 = vmatprep.subr.mxu0 0.0
    %999 = vmatpush1.msra.mxu0 0.0
    %1000 = vmatprep.subr.mxu0 0.0
    %1001 = vmatpush1.msra.mxu0 0.0
    %1002 = vmatprep.subr.mxu0 0.0
    %1003 = vmatpush1.msra.mxu0 0.0
    %1004 = vmatprep.subr.mxu0 0.0
    %1005 = vmatpush1.msra.mxu0 0.0
    %1006 = vmatprep.subr.mxu0 0.0
    %1007 = vmatpush1.msra.mxu0 0.0
    %1008 = vmatprep.subr.mxu0 0.0
    %1009 = vmatpush1.msra.mxu0 0.0
    %1010 = vmatprep.mubr.f32.mxu0 0.0
    %1011 = vmatmul.mubr.f32.gmra.mrb[0].mxu0 %v944
    %v1012 = vpop.f32.mrb[0].mxu0
    %v1013 = vadd.f32 0.0, %v1012
    %v1014 = vpop.f32.mrb[0].mxu0
    %1015 = vdwg.mxu0
    %v1017 = vsel %vm254, %v1013, 0
    %1019 = vmatprep.subr.mxu0 0.0
    %1020 = vmatpush1.msra.mxu0 %v166
    %1021 = vmatprep.subr.mxu0 0.0
    %1022 = vmatpush1.msra.mxu0 %v167
    %1023 = vmatprep.subr.mxu0 0.0
    %1024 = vmatpush1.msra.mxu0 %v168
    %1025 = vmatprep.subr.mxu0 0.0
    %1026 = vmatpush1.msra.mxu0 %v169
    %1027 = vmatprep.subr.mxu0 0.0
    %1028 = vmatpush1.msra.mxu0 0.0
    %1029 = vmatprep.subr.mxu0 0.0
    %1030 = vmatpush1.msra.mxu0 0.0
    %1031 = vmatprep.subr.mxu0 0.0
    %1032 = vmatpush1.msra.mxu0 0.0
    %1033 = vmatprep.subr.mxu0 0.0
    %1034 = vmatpush1.msra.mxu0 0.0
    %1035 = vmatprep.subr.mxu0 0.0
    %1036 = vmatpush1.msra.mxu0 0.0
    %1037 = vmatprep.subr.mxu0 0.0
    %1038 = vmatpush1.msra.mxu0 0.0
    %1039 = vmatprep.subr.mxu0 0.0
    %1040 = vmatpush1.msra.mxu0 0.0
    %1041 = vmatprep.subr.mxu0 0.0
    %1042 = vmatpush1.msra.mxu0 0.0
    %1043 = vmatprep.subr.mxu0 0.0
    %1044 = vmatpush1.msra.mxu0 0.0
    %1045 = vmatprep.subr.mxu0 0.0
    %1046 = vmatpush1.msra.mxu0 0.0
    %1047 = vmatprep.subr.mxu0 0.0
    %1048 = vmatpush1.msra.mxu0 0.0
    %1049 = vmatprep.subr.mxu0 0.0
    %1050 = vmatpush1.msra.mxu0 0.0
    %1051 = vmatprep.subr.mxu0 0.0
    %1052 = vmatpush1.msra.mxu0 0.0
    %1053 = vmatprep.subr.mxu0 0.0
    %1054 = vmatpush1.msra.mxu0 0.0
    %1055 = vmatprep.subr.mxu0 0.0
    %1056 = vmatpush1.msra.mxu0 0.0
    %1057 = vmatprep.subr.mxu0 0.0
    %1058 = vmatpush1.msra.mxu0 0.0
    %1059 = vmatprep.subr.mxu0 0.0
    %1060 = vmatpush1.msra.mxu0 0.0
    %1061 = vmatprep.subr.mxu0 0.0
    %1062 = vmatpush1.msra.mxu0 0.0
    %1063 = vmatprep.subr.mxu0 0.0
    %1064 = vmatpush1.msra.mxu0 0.0
    %1065 = vmatprep.subr.mxu0 0.0
    %1066 = vmatpush1.msra.mxu0 0.0
    %1067 = vmatprep.subr.mxu0 0.0
    %1068 = vmatpush1.msra.mxu0 0.0
    %1069 = vmatprep.subr.mxu0 0.0
    %1070 = vmatpush1.msra.mxu0 0.0
    %1071 = vmatprep.subr.mxu0 0.0
    %1072 = vmatpush1.msra.mxu0 0.0
    %1073 = vmatprep.subr.mxu0 0.0
    %1074 = vmatpush1.msra.mxu0 0.0
    %1075 = vmatprep.subr.mxu0 0.0
    %1076 = vmatpush1.msra.mxu0 0.0
    %1077 = vmatprep.subr.mxu0 0.0
    %1078 = vmatpush1.msra.mxu0 0.0
    %1079 = vmatprep.subr.mxu0 0.0
    %1080 = vmatpush1.msra.mxu0 0.0
    %1081 = vmatprep.subr.mxu0 0.0
    %1082 = vmatpush1.msra.mxu0 0.0
    %1083 = vmatprep.mubr.f32.mxu0 0.0
    %1084 = vmatmul.mubr.f32.gmra.mrb[0].mxu0 %v1017
    %v1085 = vpop.f32.mrb[0].mxu0
    %v1086 = vadd.f32 %v174, %v1085
    %v1087 = vpop.f32.mrb[0].mxu0
    %1088 = vdwg.mxu0
    %v1089 = vsel %vm254, %v936, 0
    %1091 = vmatprep.subr.mxu0 0.0
    %1092 = vmatpush1.msra.mxu0 %v170
    %1093 = vmatprep.subr.mxu0 0.0
    %1094 = vmatpush1.msra.mxu0 %v171
    %1095 = vmatprep.subr.mxu0 0.0
    %1096 = vmatpush1.msra.mxu0 %v172
    %1097 = vmatprep.subr.mxu0 0.0
    %1098 = vmatpush1.msra.mxu0 %v173
    %1099 = vmatprep.subr.mxu0 0.0
    %1100 = vmatpush1.msra.mxu0 0.0
    %1101 = vmatprep.subr.mxu0 0.0
    %1102 = vmatpush1.msra.mxu0 0.0
    %1103 = vmatprep.subr.mxu0 0.0
    %1104 = vmatpush1.msra.mxu0 0.0
    %1105 = vmatprep.subr.mxu0 0.0
    %1106 = vmatpush1.msra.mxu0 0.0
    %1107 = vmatprep.subr.mxu0 0.0
    %1108 = vmatpush1.msra.mxu0 0.0
    %1109 = vmatprep.subr.mxu0 0.0
    %1110 = vmatpush1.msra.mxu0 0.0
    %1111 = vmatprep.subr.mxu0 0.0
    %1112 = vmatpush1.msra.mxu0 0.0
    %1113 = vmatprep.subr.mxu0 0.0
    %1114 = vmatpush1.msra.mxu0 0.0
    %1115 = vmatprep.subr.mxu0 0.0
    %1116 = vmatpush1.msra.mxu0 0.0
    %1117 = vmatprep.subr.mxu0 0.0
    %1118 = vmatpush1.msra.mxu0 0.0
    %1119 = vmatprep.subr.mxu0 0.0
    %1120 = vmatpush1.msra.mxu0 0.0
    %1121 = vmatprep.subr.mxu0 0.0
    %1122 = vmatpush1.msra.mxu0 0.0
    %1123 = vmatprep.subr.mxu0 0.0
    %1124 = vmatpush1.msra.mxu0 0.0
    %1125 = vmatprep.subr.mxu0 0.0
    %1126 = vmatpush1.msra.mxu0 0.0
    %1127 = vmatprep.subr.mxu0 0.0
    %1128 = vmatpush1.msra.mxu0 0.0
    %1129 = vmatprep.subr.mxu0 0.0
    %1130 = vmatpush1.msra.mxu0 0.0
    %1131 = vmatprep.subr.mxu0 0.0
    %1132 = vmatpush1.msra.mxu0 0.0
    %1133 = vmatprep.subr.mxu0 0.0
    %1134 = vmatpush1.msra.mxu0 0.0
    %1135 = vmatprep.subr.mxu0 0.0
    %1136 = vmatpush1.msra.mxu0 0.0
    %1137 = vmatprep.subr.mxu0 0.0
    %1138 = vmatpush1.msra.mxu0 0.0
    %1139 = vmatprep.subr.mxu0 0.0
    %1140 = vmatpush1.msra.mxu0 0.0
    %1141 = vmatprep.subr.mxu0 0.0
    %1142 = vmatpush1.msra.mxu0 0.0
    %1143 = vmatprep.subr.mxu0 0.0
    %1144 = vmatpush1.msra.mxu0 0.0
    %1145 = vmatprep.subr.mxu0 0.0
    %1146 = vmatpush1.msra.mxu0 0.0
    %1147 = vmatprep.subr.mxu0 0.0
    %1148 = vmatpush1.msra.mxu0 0.0
    %1149 = vmatprep.subr.mxu0 0.0
    %1150 = vmatpush1.msra.mxu0 0.0
    %1151 = vmatprep.subr.mxu0 0.0
    %1152 = vmatpush1.msra.mxu0 0.0
    %1153 = vmatprep.subr.mxu0 0.0
    %1154 = vmatpush1.msra.mxu0 0.0
    %1155 = vmatprep.mubr.f32.mxu0 0.0
    %1156 = vmatmul.mubr.f32.gmra.mrb[0].mxu0 %v1089
    %v1157 = vpop.f32.mrb[0].mxu0
    %v1158 = vadd.f32 %v175, %v1157
    %v1159 = vpop.f32.mrb[0].mxu0
    %1160 = vdwg.mxu0
    %v1161 = vadd.f32 %v1086, %v1158
    %v1162 = vxor.u32 %v1161, 2147483648
    %v1163 = vmul.f32 %v1162, 1.442695
    %v1164 = vpow.pop %v1163
    %v1165 = vadd.f32 %v1164, 1.0
    %v1166 = vrcp.pop %v1165
    %v1167 = vmul.f32 1.0, %v1166
    %1169 = vrot.lane.b32.xlu0 %v1158, 64
    %v1170 = vpop.permute.xlu0 %1169
    %v1172 = vmul.f32 %v1167, %v1170
    %1174 = vrot.lane.b32.xlu0 %v1172, 64
    %v1175 = vpop.permute.xlu0 %1174
    %v1177 = vadd.f32 %v1086, %v1175
    %v1178 = vtanh.pop %v1177
    %v1179 = vsub.f32 1.0, %v1167
    %1181 = vrot.lane.b32.xlu0 %v1178, 96
    %v1182 = vpop.permute.xlu0 %1181
    %v1184 = vmul.f32 %v1179, %v1182
    %v1185 = vmul.f32 %v1167, %v933
    %v1186 = vadd.f32 %v1184, %v1185
    %1188 = vrot.lane.b32.xlu0 %v1186, 96
    %v1189 = vpop.permute.xlu0 %1188
    %1191 = vst.msk [vmem:[#allocation2 + $0x3] sm:$0x1] %vm431, %v1189
    %s1192 = sld [smem:[#allocation3 + $0x4]]
    %v1193 = vstv %s1192
    %vm1194 = vcmp.eq.s32.totalorder %v165, %v1193
    %v1195 = vsel %vm1194, 1.0, 0.0
    %v1197 = vsel %vm180, %v1195, 0
    %1199 = vmatprep.subr.mxu0 0.0
    %1200 = vmatpush1.msra.mxu0 %v156
    %1201 = vmatprep.subr.mxu0 0.0
    %1202 = vmatpush1.msra.mxu0 %v157
    %1203 = vmatprep.subr.mxu0 0.0
    %1204 = vmatpush1.msra.mxu0 %v158
    %1205 = vmatprep.subr.mxu0 0.0
    %1206 = vmatpush1.msra.mxu0 %v159
    %1207 = vmatprep.subr.mxu0 0.0
    %1208 = vmatpush1.msra.mxu0 %v160
    %1209 = vmatprep.subr.mxu0 0.0
    %1210 = vmatpush1.msra.mxu0 %v161
    %1211 = vmatprep.subr.mxu0 0.0
    %1212 = vmatpush1.msra.mxu0 %v162
    %1213 = vmatprep.subr.mxu0 0.0
    %1214 = vmatpush1.msra.mxu0 %v163
    %1215 = vmatprep.subr.mxu0 0.0
    %1216 = vmatpush1.msra.mxu0 0.0
    %1217 = vmatprep.subr.mxu0 0.0
    %1218 = vmatpush1.msra.mxu0 0.0
    %1219 = vmatprep.subr.mxu0 0.0
    %1220 = vmatpush1.msra.mxu0 0.0
    %1221 = vmatprep.subr.mxu0 0.0
    %1222 = vmatpush1.msra.mxu0 0.0
    %1223 = vmatprep.subr.mxu0 0.0
    %1224 = vmatpush1.msra.mxu0 0.0
    %1225 = vmatprep.subr.mxu0 0.0
    %1226 = vmatpush1.msra.mxu0 0.0
    %1227 = vmatprep.subr.mxu0 0.0
    %1228 = vmatpush1.msra.mxu0 0.0
    %1229 = vmatprep.subr.mxu0 0.0
    %1230 = vmatpush1.msra.mxu0 0.0
    %1231 = vmatprep.subr.mxu0 0.0
    %1232 = vmatpush1.msra.mxu0 0.0
    %1233 = vmatprep.subr.mxu0 0.0
    %1234 = vmatpush1.msra.mxu0 0.0
    %1235 = vmatprep.subr.mxu0 0.0
    %1236 = vmatpush1.msra.mxu0 0.0
    %1237 = vmatprep.subr.mxu0 0.0
    %1238 = vmatpush1.msra.mxu0 0.0
    %1239 = vmatprep.subr.mxu0 0.0
    %1240 = vmatpush1.msra.mxu0 0.0
    %1241 = vmatprep.subr.mxu0 0.0
    %1242 = vmatpush1.msra.mxu0 0.0
    %1243 = vmatprep.subr.mxu0 0.0
    %1244 = vmatpush1.msra.mxu0 0.0
    %1245 = vmatprep.subr.mxu0 0.0
    %1246 = vmatpush1.msra.mxu0 0.0
    %1247 = vmatprep.subr.mxu0 0.0
    %1248 = vmatpush1.msra.mxu0 0.0
    %1249 = vmatprep.subr.mxu0 0.0
    %1250 = vmatpush1.msra.mxu0 0.0
    %1251 = vmatprep.subr.mxu0 0.0
    %1252 = vmatpush1.msra.mxu0 0.0
    %1253 = vmatprep.subr.mxu0 0.0
    %1254 = vmatpush1.msra.mxu0 0.0
    %1255 = vmatprep.subr.mxu0 0.0
    %1256 = vmatpush1.msra.mxu0 0.0
    %1257 = vmatprep.subr.mxu0 0.0
    %1258 = vmatpush1.msra.mxu0 0.0
    %1259 = vmatprep.subr.mxu0 0.0
    %1260 = vmatpush1.msra.mxu0 0.0
    %1261 = vmatprep.subr.mxu0 0.0
    %1262 = vmatpush1.msra.mxu0 0.0
    %1263 = vmatprep.mubr.f32.mxu0 0.0
    %1264 = vmatmul.mubr.f32.gmra.mrb[0].mxu0 %v1197
    %v1265 = vpop.f32.mrb[0].mxu0
    %v1266 = vadd.f32 0.0, %v1265
    %v1267 = vpop.f32.mrb[0].mxu0
    %1268 = vdwg.mxu0
    %v1270 = vsel %vm254, %v1266, 0
    %1272 = vmatprep.subr.mxu0 0.0
    %1273 = vmatpush1.msra.mxu0 %v166
    %1274 = vmatprep.subr.mxu0 0.0
    %1275 = vmatpush1.msra.mxu0 %v167
    %1276 = vmatprep.subr.mxu0 0.0
    %1277 = vmatpush1.msra.mxu0 %v168
    %1278 = vmatprep.subr.mxu0 0.0
    %1279 = vmatpush1.msra.mxu0 %v169
    %1280 = vmatprep.subr.mxu0 0.0
    %1281 = vmatpush1.msra.mxu0 0.0
    %1282 = vmatprep.subr.mxu0 0.0
    %1283 = vmatpush1.msra.mxu0 0.0
    %1284 = vmatprep.subr.mxu0 0.0
    %1285 = vmatpush1.msra.mxu0 0.0
    %1286 = vmatprep.subr.mxu0 0.0
    %1287 = vmatpush1.msra.mxu0 0.0
    %1288 = vmatprep.subr.mxu0 0.0
    %1289 = vmatpush1.msra.mxu0 0.0
    %1290 = vmatprep.subr.mxu0 0.0
    %1291 = vmatpush1.msra.mxu0 0.0
    %1292 = vmatprep.subr.mxu0 0.0
    %1293 = vmatpush1.msra.mxu0 0.0
    %1294 = vmatprep.subr.mxu0 0.0
    %1295 = vmatpush1.msra.mxu0 0.0
    %1296 = vmatprep.subr.mxu0 0.0
    %1297 = vmatpush1.msra.mxu0 0.0
    %1298 = vmatprep.subr.mxu0 0.0
    %1299 = vmatpush1.msra.mxu0 0.0
    %1300 = vmatprep.subr.mxu0 0.0
    %1301 = vmatpush1.msra.mxu0 0.0
    %1302 = vmatprep.subr.mxu0 0.0
    %1303 = vmatpush1.msra.mxu0 0.0
    %1304 = vmatprep.subr.mxu0 0.0
    %1305 = vmatpush1.msra.mxu0 0.0
    %1306 = vmatprep.subr.mxu0 0.0
    %1307 = vmatpush1.msra.mxu0 0.0
    %1308 = vmatprep.subr.mxu0 0.0
    %1309 = vmatpush1.msra.mxu0 0.0
    %1310 = vmatprep.subr.mxu0 0.0
    %1311 = vmatpush1.msra.mxu0 0.0
    %1312 = vmatprep.subr.mxu0 0.0
    %1313 = vmatpush1.msra.mxu0 0.0
    %1314 = vmatprep.subr.mxu0 0.0
    %1315 = vmatpush1.msra.mxu0 0.0
    %1316 = vmatprep.subr.mxu0 0.0
    %1317 = vmatpush1.msra.mxu0 0.0
    %1318 = vmatprep.subr.mxu0 0.0
    %1319 = vmatpush1.msra.mxu0 0.0
    %1320 = vmatprep.subr.mxu0 0.0
    %1321 = vmatpush1.msra.mxu0 0.0
    %1322 = vmatprep.subr.mxu0 0.0
    %1323 = vmatpush1.msra.mxu0 0.0
    %1324 = vmatprep.subr.mxu0 0.0
    %1325 = vmatpush1.msra.mxu0 0.0
    %1326 = vmatprep.subr.mxu0 0.0
    %1327 = vmatpush1.msra.mxu0 0.0
    %1328 = vmatprep.subr.mxu0 0.0
    %1329 = vmatpush1.msra.mxu0 0.0
    %1330 = vmatprep.subr.mxu0 0.0
    %1331 = vmatpush1.msra.mxu0 0.0
    %1332 = vmatprep.subr.mxu0 0.0
    %1333 = vmatpush1.msra.mxu0 0.0
    %1334 = vmatprep.subr.mxu0 0.0
    %1335 = vmatpush1.msra.mxu0 0.0
    %1336 = vmatprep.mubr.f32.mxu0 0.0
    %1337 = vmatmul.mubr.f32.gmra.mrb[0].mxu0 %v1270
    %v1338 = vpop.f32.mrb[0].mxu0
    %v1339 = vadd.f32 %v174, %v1338
    %v1340 = vpop.f32.mrb[0].mxu0
    %1341 = vdwg.mxu0
    %v1342 = vsel %vm254, %v1189, 0
    %1344 = vmatprep.subr.mxu0 0.0
    %1345 = vmatpush1.msra.mxu0 %v170
    %1346 = vmatprep.subr.mxu0 0.0
    %1347 = vmatpush1.msra.mxu0 %v171
    %1348 = vmatprep.subr.mxu0 0.0
    %1349 = vmatpush1.msra.mxu0 %v172
    %1350 = vmatprep.subr.mxu0 0.0
    %1351 = vmatpush1.msra.mxu0 %v173
    %1352 = vmatprep.subr.mxu0 0.0
    %1353 = vmatpush1.msra.mxu0 0.0
    %1354 = vmatprep.subr.mxu0 0.0
    %1355 = vmatpush1.msra.mxu0 0.0
    %1356 = vmatprep.subr.mxu0 0.0
    %1357 = vmatpush1.msra.mxu0 0.0
    %1358 = vmatprep.subr.mxu0 0.0
    %1359 = vmatpush1.msra.mxu0 0.0
    %1360 = vmatprep.subr.mxu0 0.0
    %1361 = vmatpush1.msra.mxu0 0.0
    %1362 = vmatprep.subr.mxu0 0.0
    %1363 = vmatpush1.msra.mxu0 0.0
    %1364 = vmatprep.subr.mxu0 0.0
    %1365 = vmatpush1.msra.mxu0 0.0
    %1366 = vmatprep.subr.mxu0 0.0
    %1367 = vmatpush1.msra.mxu0 0.0
    %1368 = vmatprep.subr.mxu0 0.0
    %1369 = vmatpush1.msra.mxu0 0.0
    %1370 = vmatprep.subr.mxu0 0.0
    %1371 = vmatpush1.msra.mxu0 0.0
    %1372 = vmatprep.subr.mxu0 0.0
    %1373 = vmatpush1.msra.mxu0 0.0
    %1374 = vmatprep.subr.mxu0 0.0
    %1375 = vmatpush1.msra.mxu0 0.0
    %1376 = vmatprep.subr.mxu0 0.0
    %1377 = vmatpush1.msra.mxu0 0.0
    %1378 = vmatprep.subr.mxu0 0.0
    %1379 = vmatpush1.msra.mxu0 0.0
    %1380 = vmatprep.subr.mxu0 0.0
    %1381 = vmatpush1.msra.mxu0 0.0
    %1382 = vmatprep.subr.mxu0 0.0
    %1383 = vmatpush1.msra.mxu0 0.0
    %1384 = vmatprep.subr.mxu0 0.0
    %1385 = vmatpush1.msra.mxu0 0.0
    %1386 = vmatprep.subr.mxu0 0.0
    %1387 = vmatpush1.msra.mxu0 0.0
    %1388 = vmatprep.subr.mxu0 0.0
    %1389 = vmatpush1.msra.mxu0 0.0
    %1390 = vmatprep.subr.mxu0 0.0
    %1391 = vmatpush1.msra.mxu0 0.0
    %1392 = vmatprep.subr.mxu0 0.0
    %1393 = vmatpush1.msra.mxu0 0.0
    %1394 = vmatprep.subr.mxu0 0.0
    %1395 = vmatpush1.msra.mxu0 0.0
    %1396 = vmatprep.subr.mxu0 0.0
    %1397 = vmatpush1.msra.mxu0 0.0
    %1398 = vmatprep.subr.mxu0 0.0
    %1399 = vmatpush1.msra.mxu0 0.0
    %1400 = vmatprep.subr.mxu0 0.0
    %1401 = vmatpush1.msra.mxu0 0.0
    %1402 = vmatprep.subr.mxu0 0.0
    %1403 = vmatpush1.msra.mxu0 0.0
    %1404 = vmatprep.subr.mxu0 0.0
    %1405 = vmatpush1.msra.mxu0 0.0
    %1406 = vmatprep.subr.mxu0 0.0
    %1407 = vmatpush1.msra.mxu0 0.0
    %1408 = vmatprep.mubr.f32.mxu0 0.0
    %1409 = vmatmul.mubr.f32.gmra.mrb[0].mxu0 %v1342
    %v1410 = vpop.f32.mrb[0].mxu0
    %v1411 = vadd.f32 %v175, %v1410
    %v1412 = vpop.f32.mrb[0].mxu0
    %1413 = vdwg.mxu0
    %v1414 = vadd.f32 %v1339, %v1411
    %v1415 = vxor.u32 %v1414, 2147483648
    %v1416 = vmul.f32 %v1415, 1.442695
    %v1417 = vpow.pop %v1416
    %v1418 = vadd.f32 %v1417, 1.0
    %v1419 = vrcp.pop %v1418
    %v1420 = vmul.f32 1.0, %v1419
    %1422 = vrot.lane.b32.xlu0 %v1411, 64
    %v1423 = vpop.permute.xlu0 %1422
    %v1425 = vmul.f32 %v1420, %v1423
    %1427 = vrot.lane.b32.xlu0 %v1425, 64
    %v1428 = vpop.permute.xlu0 %1427
    %v1430 = vadd.f32 %v1339, %v1428
    %v1431 = vtanh.pop %v1430
    %v1432 = vsub.f32 1.0, %v1420
    %1434 = vrot.lane.b32.xlu0 %v1431, 96
    %v1435 = vpop.permute.xlu0 %1434
    %v1437 = vmul.f32 %v1432, %v1435
    %v1438 = vmul.f32 %v1420, %v1186
    %v1439 = vadd.f32 %v1437, %v1438
    %1441 = vrot.lane.b32.xlu0 %v1439, 96
    %v1442 = vpop.permute.xlu0 %1441
    %1444 = vst.msk [vmem:[#allocation2 + $0x4] sm:$0x1] %vm431, %v1442
    %s1445 = sld [smem:[#allocation3 + $0x5]]
    %v1446 = vstv %s1445
    %vm1447 = vcmp.eq.s32.totalorder %v165, %v1446
    %v1448 = vsel %vm1447, 1.0, 0.0
    %v1450 = vsel %vm180, %v1448, 0
    %1452 = vmatprep.subr.mxu0 0.0
    %1453 = vmatpush1.msra.mxu0 %v156
    %1454 = vmatprep.subr.mxu0 0.0
    %1455 = vmatpush1.msra.mxu0 %v157
    %1456 = vmatprep.subr.mxu0 0.0
    %1457 = vmatpush1.msra.mxu0 %v158
    %1458 = vmatprep.subr.mxu0 0.0
    %1459 = vmatpush1.msra.mxu0 %v159
    %1460 = vmatprep.subr.mxu0 0.0
    %1461 = vmatpush1.msra.mxu0 %v160
    %1462 = vmatprep.subr.mxu0 0.0
    %1463 = vmatpush1.msra.mxu0 %v161
    %1464 = vmatprep.subr.mxu0 0.0
    %1465 = vmatpush1.msra.mxu0 %v162
    %1466 = vmatprep.subr.mxu0 0.0
    %1467 = vmatpush1.msra.mxu0 %v163
    %1468 = vmatprep.subr.mxu0 0.0
    %1469 = vmatpush1.msra.mxu0 0.0
    %1470 = vmatprep.subr.mxu0 0.0
    %1471 = vmatpush1.msra.mxu0 0.0
    %1472 = vmatprep.subr.mxu0 0.0
    %1473 = vmatpush1.msra.mxu0 0.0
    %1474 = vmatprep.subr.mxu0 0.0
    %1475 = vmatpush1.msra.mxu0 0.0
    %1476 = vmatprep.subr.mxu0 0.0
    %1477 = vmatpush1.msra.mxu0 0.0
    %1478 = vmatprep.subr.mxu0 0.0
    %1479 = vmatpush1.msra.mxu0 0.0
    %1480 = vmatprep.subr.mxu0 0.0
    %1481 = vmatpush1.msra.mxu0 0.0
    %1482 = vmatprep.subr.mxu0 0.0
    %1483 = vmatpush1.msra.mxu0 0.0
    %1484 = vmatprep.subr.mxu0 0.0
    %1485 = vmatpush1.msra.mxu0 0.0
    %1486 = vmatprep.subr.mxu0 0.0
    %1487 = vmatpush1.msra.mxu0 0.0
    %1488 = vmatprep.subr.mxu0 0.0
    %1489 = vmatpush1.msra.mxu0 0.0
    %1490 = vmatprep.subr.mxu0 0.0
    %1491 = vmatpush1.msra.mxu0 0.0
    %1492 = vmatprep.subr.mxu0 0.0
    %1493 = vmatpush1.msra.mxu0 0.0
    %1494 = vmatprep.subr.mxu0 0.0
    %1495 = vmatpush1.msra.mxu0 0.0
    %1496 = vmatprep.subr.mxu0 0.0
    %1497 = vmatpush1.msra.mxu0 0.0
    %1498 = vmatprep.subr.mxu0 0.0
    %1499 = vmatpush1.msra.mxu0 0.0
    %1500 = vmatprep.subr.mxu0 0.0
    %1501 = vmatpush1.msra.mxu0 0.0
    %1502 = vmatprep.subr.mxu0 0.0
    %1503 = vmatpush1.msra.mxu0 0.0
    %1504 = vmatprep.subr.mxu0 0.0
    %1505 = vmatpush1.msra.mxu0 0.0
    %1506 = vmatprep.subr.mxu0 0.0
    %1507 = vmatpush1.msra.mxu0 0.0
    %1508 = vmatprep.subr.mxu0 0.0
    %1509 = vmatpush1.msra.mxu0 0.0
    %1510 = vmatprep.subr.mxu0 0.0
    %1511 = vmatpush1.msra.mxu0 0.0
    %1512 = vmatprep.subr.mxu0 0.0
    %1513 = vmatpush1.msra.mxu0 0.0
    %1514 = vmatprep.subr.mxu0 0.0
    %1515 = vmatpush1.msra.mxu0 0.0
    %1516 = vmatprep.mubr.f32.mxu0 0.0
    %1517 = vmatmul.mubr.f32.gmra.mrb[0].mxu0 %v1450
    %v1518 = vpop.f32.mrb[0].mxu0
    %v1519 = vadd.f32 0.0, %v1518
    %v1520 = vpop.f32.mrb[0].mxu0
    %1521 = vdwg.mxu0
    %v1523 = vsel %vm254, %v1519, 0
    %1525 = vmatprep.subr.mxu0 0.0
    %1526 = vmatpush1.msra.mxu0 %v166
    %1527 = vmatprep.subr.mxu0 0.0
    %1528 = vmatpush1.msra.mxu0 %v167
    %1529 = vmatprep.subr.mxu0 0.0
    %1530 = vmatpush1.msra.mxu0 %v168
    %1531 = vmatprep.subr.mxu0 0.0
    %1532 = vmatpush1.msra.mxu0 %v169
    %1533 = vmatprep.subr.mxu0 0.0
    %1534 = vmatpush1.msra.mxu0 0.0
    %1535 = vmatprep.subr.mxu0 0.0
    %1536 = vmatpush1.msra.mxu0 0.0
    %1537 = vmatprep.subr.mxu0 0.0
    %1538 = vmatpush1.msra.mxu0 0.0
    %1539 = vmatprep.subr.mxu0 0.0
    %1540 = vmatpush1.msra.mxu0 0.0
    %1541 = vmatprep.subr.mxu0 0.0
    %1542 = vmatpush1.msra.mxu0 0.0
    %1543 = vmatprep.subr.mxu0 0.0
    %1544 = vmatpush1.msra.mxu0 0.0
    %1545 = vmatprep.subr.mxu0 0.0
    %1546 = vmatpush1.msra.mxu0 0.0
    %1547 = vmatprep.subr.mxu0 0.0
    %1548 = vmatpush1.msra.mxu0 0.0
    %1549 = vmatprep.subr.mxu0 0.0
    %1550 = vmatpush1.msra.mxu0 0.0
    %1551 = vmatprep.subr.mxu0 0.0
    %1552 = vmatpush1.msra.mxu0 0.0
    %1553 = vmatprep.subr.mxu0 0.0
    %1554 = vmatpush1.msra.mxu0 0.0
    %1555 = vmatprep.subr.mxu0 0.0
    %1556 = vmatpush1.msra.mxu0 0.0
    %1557 = vmatprep.subr.mxu0 0.0
    %1558 = vmatpush1.msra.mxu0 0.0
    %1559 = vmatprep.subr.mxu0 0.0
    %1560 = vmatpush1.msra.mxu0 0.0
    %1561 = vmatprep.subr.mxu0 0.0
    %1562 = vmatpush1.msra.mxu0 0.0
    %1563 = vmatprep.subr.mxu0 0.0
    %1564 = vmatpush1.msra.mxu0 0.0
    %1565 = vmatprep.subr.mxu0 0.0
    %1566 = vmatpush1.msra.mxu0 0.0
    %1567 = vmatprep.subr.mxu0 0.0
    %1568 = vmatpush1.msra.mxu0 0.0
    %1569 = vmatprep.subr.mxu0 0.0
    %1570 = vmatpush1.msra.mxu0 0.0
    %1571 = vmatprep.subr.mxu0 0.0
    %1572 = vmatpush1.msra.mxu0 0.0
    %1573 = vmatprep.subr.mxu0 0.0
    %1574 = vmatpush1.msra.mxu0 0.0
    %1575 = vmatprep.subr.mxu0 0.0
    %1576 = vmatpush1.msra.mxu0 0.0
    %1577 = vmatprep.subr.mxu0 0.0
    %1578 = vmatpush1.msra.mxu0 0.0
    %1579 = vmatprep.subr.mxu0 0.0
    %1580 = vmatpush1.msra.mxu0 0.0
    %1581 = vmatprep.subr.mxu0 0.0
    %1582 = vmatpush1.msra.mxu0 0.0
    %1583 = vmatprep.subr.mxu0 0.0
    %1584 = vmatpush1.msra.mxu0 0.0
    %1585 = vmatprep.subr.mxu0 0.0
    %1586 = vmatpush1.msra.mxu0 0.0
    %1587 = vmatprep.subr.mxu0 0.0
    %1588 = vmatpush1.msra.mxu0 0.0
    %1589 = vmatprep.mubr.f32.mxu0 0.0
    %1590 = vmatmul.mubr.f32.gmra.mrb[0].mxu0 %v1523
    %v1591 = vpop.f32.mrb[0].mxu0
    %v1592 = vadd.f32 %v174, %v1591
    %v1593 = vpop.f32.mrb[0].mxu0
    %1594 = vdwg.mxu0
    %v1595 = vsel %vm254, %v1442, 0
    %1597 = vmatprep.subr.mxu0 0.0
    %1598 = vmatpush1.msra.mxu0 %v170
    %1599 = vmatprep.subr.mxu0 0.0
    %1600 = vmatpush1.msra.mxu0 %v171
    %1601 = vmatprep.subr.mxu0 0.0
    %1602 = vmatpush1.msra.mxu0 %v172
    %1603 = vmatprep.subr.mxu0 0.0
    %1604 = vmatpush1.msra.mxu0 %v173
    %1605 = vmatprep.subr.mxu0 0.0
    %1606 = vmatpush1.msra.mxu0 0.0
    %1607 = vmatprep.subr.mxu0 0.0
    %1608 = vmatpush1.msra.mxu0 0.0
    %1609 = vmatprep.subr.mxu0 0.0
    %1610 = vmatpush1.msra.mxu0 0.0
    %1611 = vmatprep.subr.mxu0 0.0
    %1612 = vmatpush1.msra.mxu0 0.0
    %1613 = vmatprep.subr.mxu0 0.0
    %1614 = vmatpush1.msra.mxu0 0.0
    %1615 = vmatprep.subr.mxu0 0.0
    %1616 = vmatpush1.msra.mxu0 0.0
    %1617 = vmatprep.subr.mxu0 0.0
    %1618 = vmatpush1.msra.mxu0 0.0
    %1619 = vmatprep.subr.mxu0 0.0
    %1620 = vmatpush1.msra.mxu0 0.0
    %1621 = vmatprep.subr.mxu0 0.0
    %1622 = vmatpush1.msra.mxu0 0.0
    %1623 = vmatprep.subr.mxu0 0.0
    %1624 = vmatpush1.msra.mxu0 0.0
    %1625 = vmatprep.subr.mxu0 0.0
    %1626 = vmatpush1.msra.mxu0 0.0
    %1627 = vmatprep.subr.mxu0 0.0
    %1628 = vmatpush1.msra.mxu0 0.0
    %1629 = vmatprep.subr.mxu0 0.0
    %1630 = vmatpush1.msra.mxu0 0.0
    %1631 = vmatprep.subr.mxu0 0.0
    %1632 = vmatpush1.msra.mxu0 0.0
    %1633 = vmatprep.subr.mxu0 0.0
    %1634 = vmatpush1.msra.mxu0 0.0
    %1635 = vmatprep.subr.mxu0 0.0
    %1636 = vmatpush1.msra.mxu0 0.0
    %1637 = vmatprep.subr.mxu0 0.0
    %1638 = vmatpush1.msra.mxu0 0.0
    %1639 = vmatprep.subr.mxu0 0.0
    %1640 = vmatpush1.msra.mxu0 0.0
    %1641 = vmatprep.subr.mxu0 0.0
    %1642 = vmatpush1.msra.mxu0 0.0
    %1643 = vmatprep.subr.mxu0 0.0
    %1644 = vmatpush1.msra.mxu0 0.0
    %1645 = vmatprep.subr.mxu0 0.0
    %1646 = vmatpush1.msra.mxu0 0.0
    %1647 = vmatprep.subr.mxu0 0.0
    %1648 = vmatpush1.msra.mxu0 0.0
    %1649 = vmatprep.subr.mxu0 0.0
    %1650 = vmatpush1.msra.mxu0 0.0
    %1651 = vmatprep.subr.mxu0 0.0
    %1652 = vmatpush1.msra.mxu0 0.0
    %1653 = vmatprep.subr.mxu0 0.0
    %1654 = vmatpush1.msra.mxu0 0.0
    %1655 = vmatprep.subr.mxu0 0.0
    %1656 = vmatpush1.msra.mxu0 0.0
    %1657 = vmatprep.subr.mxu0 0.0
    %1658 = vmatpush1.msra.mxu0 0.0
    %1659 = vmatprep.subr.mxu0 0.0
    %1660 = vmatpush1.msra.mxu0 0.0
    %1661 = vmatprep.mubr.f32.mxu0 0.0
    %1662 = vmatmul.mubr.f32.gmra.mrb[0].mxu0 %v1595
    %v1663 = vpop.f32.mrb[0].mxu0
    %v1664 = vadd.f32 %v175, %v1663
    %v1665 = vpop.f32.mrb[0].mxu0
    %1666 = vdwg.mxu0
    %v1667 = vadd.f32 %v1592, %v1664
    %v1668 = vxor.u32 %v1667, 2147483648
    %v1669 = vmul.f32 %v1668, 1.442695
    %v1670 = vpow.pop %v1669
    %v1671 = vadd.f32 %v1670, 1.0
    %v1672 = vrcp.pop %v1671
    %v1673 = vmul.f32 1.0, %v1672
    %1675 = vrot.lane.b32.xlu0 %v1664, 64
    %v1676 = vpop.permute.xlu0 %1675
    %v1678 = vmul.f32 %v1673, %v1676
    %1680 = vrot.lane.b32.xlu0 %v1678, 64
    %v1681 = vpop.permute.xlu0 %1680
    %v1683 = vadd.f32 %v1592, %v1681
    %v1684 = vtanh.pop %v1683
    %v1685 = vsub.f32 1.0, %v1673
    %1687 = vrot.lane.b32.xlu0 %v1684, 96
    %v1688 = vpop.permute.xlu0 %1687
    %v1690 = vmul.f32 %v1685, %v1688
    %v1691 = vmul.f32 %v1673, %v1439
    %v1692 = vadd.f32 %v1690, %v1691
    %1694 = vrot.lane.b32.xlu0 %v1692, 96
    %v1695 = vpop.permute.xlu0 %1694
    %1697 = vst.msk [vmem:[#allocation2 + $0x5] sm:$0x1] %vm431, %v1695
    %s1698 = sld [smem:[#allocation3 + $0x6]]
    %v1699 = vstv %s1698
    %vm1700 = vcmp.eq.s32.totalorder %v165, %v1699
    %v1701 = vsel %vm1700, 1.0, 0.0
    %v1703 = vsel %vm180, %v1701, 0
    %1705 = vmatprep.subr.mxu0 0.0
    %1706 = vmatpush1.msra.mxu0 %v156
    %1707 = vmatprep.subr.mxu0 0.0
    %1708 = vmatpush1.msra.mxu0 %v157
    %1709 = vmatprep.subr.mxu0 0.0
    %1710 = vmatpush1.msra.mxu0 %v158
    %1711 = vmatprep.subr.mxu0 0.0
    %1712 = vmatpush1.msra.mxu0 %v159
    %1713 = vmatprep.subr.mxu0 0.0
    %1714 = vmatpush1.msra.mxu0 %v160
    %1715 = vmatprep.subr.mxu0 0.0
    %1716 = vmatpush1.msra.mxu0 %v161
    %1717 = vmatprep.subr.mxu0 0.0
    %1718 = vmatpush1.msra.mxu0 %v162
    %1719 = vmatprep.subr.mxu0 0.0
    %1720 = vmatpush1.msra.mxu0 %v163
    %1721 = vmatprep.subr.mxu0 0.0
    %1722 = vmatpush1.msra.mxu0 0.0
    %1723 = vmatprep.subr.mxu0 0.0
    %1724 = vmatpush1.msra.mxu0 0.0
    %1725 = vmatprep.subr.mxu0 0.0
    %1726 = vmatpush1.msra.mxu0 0.0
    %1727 = vmatprep.subr.mxu0 0.0
    %1728 = vmatpush1.msra.mxu0 0.0
    %1729 = vmatprep.subr.mxu0 0.0
    %1730 = vmatpush1.msra.mxu0 0.0
    %1731 = vmatprep.subr.mxu0 0.0
    %1732 = vmatpush1.msra.mxu0 0.0
    %1733 = vmatprep.subr.mxu0 0.0
    %1734 = vmatpush1.msra.mxu0 0.0
    %1735 = vmatprep.subr.mxu0 0.0
    %1736 = vmatpush1.msra.mxu0 0.0
    %1737 = vmatprep.subr.mxu0 0.0
    %1738 = vmatpush1.msra.mxu0 0.0
    %1739 = vmatprep.subr.mxu0 0.0
    %1740 = vmatpush1.msra.mxu0 0.0
    %1741 = vmatprep.subr.mxu0 0.0
    %1742 = vmatpush1.msra.mxu0 0.0
    %1743 = vmatprep.subr.mxu0 0.0
    %1744 = vmatpush1.msra.mxu0 0.0
    %1745 = vmatprep.subr.mxu0 0.0
    %1746 = vmatpush1.msra.mxu0 0.0
    %1747 = vmatprep.subr.mxu0 0.0
    %1748 = vmatpush1.msra.mxu0 0.0
    %1749 = vmatprep.subr.mxu0 0.0
    %1750 = vmatpush1.msra.mxu0 0.0
    %1751 = vmatprep.subr.mxu0 0.0
    %1752 = vmatpush1.msra.mxu0 0.0
    %1753 = vmatprep.subr.mxu0 0.0
    %1754 = vmatpush1.msra.mxu0 0.0
    %1755 = vmatprep.subr.mxu0 0.0
    %1756 = vmatpush1.msra.mxu0 0.0
    %1757 = vmatprep.subr.mxu0 0.0
    %1758 = vmatpush1.msra.mxu0 0.0
    %1759 = vmatprep.subr.mxu0 0.0
    %1760 = vmatpush1.msra.mxu0 0.0
    %1761 = vmatprep.subr.mxu0 0.0
    %1762 = vmatpush1.msra.mxu0 0.0
    %1763 = vmatprep.subr.mxu0 0.0
    %1764 = vmatpush1.msra.mxu0 0.0
    %1765 = vmatprep.subr.mxu0 0.0
    %1766 = vmatpush1.msra.mxu0 0.0
    %1767 = vmatprep.subr.mxu0 0.0
    %1768 = vmatpush1.msra.mxu0 0.0
    %1769 = vmatprep.mubr.f32.mxu0 0.0
    %1770 = vmatmul.mubr.f32.gmra.mrb[0].mxu0 %v1703
    %v1771 = vpop.f32.mrb[0].mxu0
    %v1772 = vadd.f32 0.0, %v1771
    %v1773 = vpop.f32.mrb[0].mxu0
    %1774 = vdwg.mxu0
    %v1776 = vsel %vm254, %v1772, 0
    %1778 = vmatprep.subr.mxu0 0.0
    %1779 = vmatpush1.msra.mxu0 %v166
    %1780 = vmatprep.subr.mxu0 0.0
    %1781 = vmatpush1.msra.mxu0 %v167
    %1782 = vmatprep.subr.mxu0 0.0
    %1783 = vmatpush1.msra.mxu0 %v168
    %1784 = vmatprep.subr.mxu0 0.0
    %1785 = vmatpush1.msra.mxu0 %v169
    %1786 = vmatprep.subr.mxu0 0.0
    %1787 = vmatpush1.msra.mxu0 0.0
    %1788 = vmatprep.subr.mxu0 0.0
    %1789 = vmatpush1.msra.mxu0 0.0
    %1790 = vmatprep.subr.mxu0 0.0
    %1791 = vmatpush1.msra.mxu0 0.0
    %1792 = vmatprep.subr.mxu0 0.0
    %1793 = vmatpush1.msra.mxu0 0.0
    %1794 = vmatprep.subr.mxu0 0.0
    %1795 = vmatpush1.msra.mxu0 0.0
    %1796 = vmatprep.subr.mxu0 0.0
    %1797 = vmatpush1.msra.mxu0 0.0
    %1798 = vmatprep.subr.mxu0 0.0
    %1799 = vmatpush1.msra.mxu0 0.0
    %1800 = vmatprep.subr.mxu0 0.0
    %1801 = vmatpush1.msra.mxu0 0.0
    %1802 = vmatprep.subr.mxu0 0.0
    %1803 = vmatpush1.msra.mxu0 0.0
    %1804 = vmatprep.subr.mxu0 0.0
    %1805 = vmatpush1.msra.mxu0 0.0
    %1806 = vmatprep.subr.mxu0 0.0
    %1807 = vmatpush1.msra.mxu0 0.0
    %1808 = vmatprep.subr.mxu0 0.0
    %1809 = vmatpush1.msra.mxu0 0.0
    %1810 = vmatprep.subr.mxu0 0.0
    %1811 = vmatpush1.msra.mxu0 0.0
    %1812 = vmatprep.subr.mxu0 0.0
    %1813 = vmatpush1.msra.mxu0 0.0
    %1814 = vmatprep.subr.mxu0 0.0
    %1815 = vmatpush1.msra.mxu0 0.0
    %1816 = vmatprep.subr.mxu0 0.0
    %1817 = vmatpush1.msra.mxu0 0.0
    %1818 = vmatprep.subr.mxu0 0.0
    %1819 = vmatpush1.msra.mxu0 0.0
    %1820 = vmatprep.subr.mxu0 0.0
    %1821 = vmatpush1.msra.mxu0 0.0
    %1822 = vmatprep.subr.mxu0 0.0
    %1823 = vmatpush1.msra.mxu0 0.0
    %1824 = vmatprep.subr.mxu0 0.0
    %1825 = vmatpush1.msra.mxu0 0.0
    %1826 = vmatprep.subr.mxu0 0.0
    %1827 = vmatpush1.msra.mxu0 0.0
    %1828 = vmatprep.subr.mxu0 0.0
    %1829 = vmatpush1.msra.mxu0 0.0
    %1830 = vmatprep.subr.mxu0 0.0
    %1831 = vmatpush1.msra.mxu0 0.0
    %1832 = vmatprep.subr.mxu0 0.0
    %1833 = vmatpush1.msra.mxu0 0.0
    %1834 = vmatprep.subr.mxu0 0.0
    %1835 = vmatpush1.msra.mxu0 0.0
    %1836 = vmatprep.subr.mxu0 0.0
    %1837 = vmatpush1.msra.mxu0 0.0
    %1838 = vmatprep.subr.mxu0 0.0
    %1839 = vmatpush1.msra.mxu0 0.0
    %1840 = vmatprep.subr.mxu0 0.0
    %1841 = vmatpush1.msra.mxu0 0.0
    %1842 = vmatprep.mubr.f32.mxu0 0.0
    %1843 = vmatmul.mubr.f32.gmra.mrb[0].mxu0 %v1776
    %v1844 = vpop.f32.mrb[0].mxu0
    %v1845 = vadd.f32 %v174, %v1844
    %v1846 = vpop.f32.mrb[0].mxu0
    %1847 = vdwg.mxu0
    %v1848 = vsel %vm254, %v1695, 0
    %1850 = vmatprep.subr.mxu0 0.0
    %1851 = vmatpush1.msra.mxu0 %v170
    %1852 = vmatprep.subr.mxu0 0.0
    %1853 = vmatpush1.msra.mxu0 %v171
    %1854 = vmatprep.subr.mxu0 0.0
    %1855 = vmatpush1.msra.mxu0 %v172
    %1856 = vmatprep.subr.mxu0 0.0
    %1857 = vmatpush1.msra.mxu0 %v173
    %1858 = vmatprep.subr.mxu0 0.0
    %1859 = vmatpush1.msra.mxu0 0.0
    %1860 = vmatprep.subr.mxu0 0.0
    %1861 = vmatpush1.msra.mxu0 0.0
    %1862 = vmatprep.subr.mxu0 0.0
    %1863 = vmatpush1.msra.mxu0 0.0
    %1864 = vmatprep.subr.mxu0 0.0
    %1865 = vmatpush1.msra.mxu0 0.0
    %1866 = vmatprep.subr.mxu0 0.0
    %1867 = vmatpush1.msra.mxu0 0.0
    %1868 = vmatprep.subr.mxu0 0.0
    %1869 = vmatpush1.msra.mxu0 0.0
    %1870 = vmatprep.subr.mxu0 0.0
    %1871 = vmatpush1.msra.mxu0 0.0
    %1872 = vmatprep.subr.mxu0 0.0
    %1873 = vmatpush1.msra.mxu0 0.0
    %1874 = vmatprep.subr.mxu0 0.0
    %1875 = vmatpush1.msra.mxu0 0.0
    %1876 = vmatprep.subr.mxu0 0.0
    %1877 = vmatpush1.msra.mxu0 0.0
    %1878 = vmatprep.subr.mxu0 0.0
    %1879 = vmatpush1.msra.mxu0 0.0
    %1880 = vmatprep.subr.mxu0 0.0
    %1881 = vmatpush1.msra.mxu0 0.0
    %1882 = vmatprep.subr.mxu0 0.0
    %1883 = vmatpush1.msra.mxu0 0.0
    %1884 = vmatprep.subr.mxu0 0.0
    %1885 = vmatpush1.msra.mxu0 0.0
    %1886 = vmatprep.subr.mxu0 0.0
    %1887 = vmatpush1.msra.mxu0 0.0
    %1888 = vmatprep.subr.mxu0 0.0
    %1889 = vmatpush1.msra.mxu0 0.0
    %1890 = vmatprep.subr.mxu0 0.0
    %1891 = vmatpush1.msra.mxu0 0.0
    %1892 = vmatprep.subr.mxu0 0.0
    %1893 = vmatpush1.msra.mxu0 0.0
    %1894 = vmatprep.subr.mxu0 0.0
    %1895 = vmatpush1.msra.mxu0 0.0
    %1896 = vmatprep.subr.mxu0 0.0
    %1897 = vmatpush1.msra.mxu0 0.0
    %1898 = vmatprep.subr.mxu0 0.0
    %1899 = vmatpush1.msra.mxu0 0.0
    %1900 = vmatprep.subr.mxu0 0.0
    %1901 = vmatpush1.msra.mxu0 0.0
    %1902 = vmatprep.subr.mxu0 0.0
    %1903 = vmatpush1.msra.mxu0 0.0
    %1904 = vmatprep.subr.mxu0 0.0
    %1905 = vmatpush1.msra.mxu0 0.0
    %1906 = vmatprep.subr.mxu0 0.0
    %1907 = vmatpush1.msra.mxu0 0.0
    %1908 = vmatprep.subr.mxu0 0.0
    %1909 = vmatpush1.msra.mxu0 0.0
    %1910 = vmatprep.subr.mxu0 0.0
    %1911 = vmatpush1.msra.mxu0 0.0
    %1912 = vmatprep.subr.mxu0 0.0
    %1913 = vmatpush1.msra.mxu0 0.0
    %1914 = vmatprep.mubr.f32.mxu0 0.0
    %1915 = vmatmul.mubr.f32.gmra.mrb[0].mxu0 %v1848
    %v1916 = vpop.f32.mrb[0].mxu0
    %v1917 = vadd.f32 %v175, %v1916
    %v1918 = vpop.f32.mrb[0].mxu0
    %1919 = vdwg.mxu0
    %v1920 = vadd.f32 %v1845, %v1917
    %v1921 = vxor.u32 %v1920, 2147483648
    %v1922 = vmul.f32 %v1921, 1.442695
    %v1923 = vpow.pop %v1922
    %v1924 = vadd.f32 %v1923, 1.0
    %v1925 = vrcp.pop %v1924
    %v1926 = vmul.f32 1.0, %v1925
    %1928 = vrot.lane.b32.xlu0 %v1917, 64
    %v1929 = vpop.permute.xlu0 %1928
    %v1931 = vmul.f32 %v1926, %v1929
    %1933 = vrot.lane.b32.xlu0 %v1931, 64
    %v1934 = vpop.permute.xlu0 %1933
    %v1936 = vadd.f32 %v1845, %v1934
    %v1937 = vtanh.pop %v1936
    %v1938 = vsub.f32 1.0, %v1926
    %1940 = vrot.lane.b32.xlu0 %v1937, 96
    %v1941 = vpop.permute.xlu0 %1940
    %v1943 = vmul.f32 %v1938, %v1941
    %v1944 = vmul.f32 %v1926, %v1692
    %v1945 = vadd.f32 %v1943, %v1944
    %1947 = vrot.lane.b32.xlu0 %v1945, 96
    %v1948 = vpop.permute.xlu0 %1947
    %1950 = vst.msk [vmem:[#allocation2 + $0x6] sm:$0x1] %vm431, %v1948
    %s1951 = sld [smem:[#allocation3 + $0x7]]
    %v1952 = vstv %s1951
    %vm1953 = vcmp.eq.s32.totalorder %v165, %v1952
    %v1954 = vsel %vm1953, 1.0, 0.0
    %v1956 = vsel %vm180, %v1954, 0
    %1958 = vmatprep.subr.mxu0 0.0
    %1959 = vmatpush1.msra.mxu0 %v156
    %1960 = vmatprep.subr.mxu0 0.0
    %1961 = vmatpush1.msra.mxu0 %v157
    %1962 = vmatprep.subr.mxu0 0.0
    %1963 = vmatpush1.msra.mxu0 %v158
    %1964 = vmatprep.subr.mxu0 0.0
    %1965 = vmatpush1.msra.mxu0 %v159
    %1966 = vmatprep.subr.mxu0 0.0
    %1967 = vmatpush1.msra.mxu0 %v160
    %1968 = vmatprep.subr.mxu0 0.0
    %1969 = vmatpush1.msra.mxu0 %v161
    %1970 = vmatprep.subr.mxu0 0.0
    %1971 = vmatpush1.msra.mxu0 %v162
    %1972 = vmatprep.subr.mxu0 0.0
    %1973 = vmatpush1.msra.mxu0 %v163
    %1974 = vmatprep.subr.mxu0 0.0
    %1975 = vmatpush1.msra.mxu0 0.0
    %1976 = vmatprep.subr.mxu0 0.0
    %1977 = vmatpush1.msra.mxu0 0.0
    %1978 = vmatprep.subr.mxu0 0.0
    %1979 = vmatpush1.msra.mxu0 0.0
    %1980 = vmatprep.subr.mxu0 0.0
    %1981 = vmatpush1.msra.mxu0 0.0
    %1982 = vmatprep.subr.mxu0 0.0
    %1983 = vmatpush1.msra.mxu0 0.0
    %1984 = vmatprep.subr.mxu0 0.0
    %1985 = vmatpush1.msra.mxu0 0.0
    %1986 = vmatprep.subr.mxu0 0.0
    %1987 = vmatpush1.msra.mxu0 0.0
    %1988 = vmatprep.subr.mxu0 0.0
    %1989 = vmatpush1.msra.mxu0 0.0
    %1990 = vmatprep.subr.mxu0 0.0
    %1991 = vmatpush1.msra.mxu0 0.0
    %1992 = vmatprep.subr.mxu0 0.0
    %1993 = vmatpush1.msra.mxu0 0.0
    %1994 = vmatprep.subr.mxu0 0.0
    %1995 = vmatpush1.msra.mxu0 0.0
    %1996 = vmatprep.subr.mxu0 0.0
    %1997 = vmatpush1.msra.mxu0 0.0
    %1998 = vmatprep.subr.mxu0 0.0
    %1999 = vmatpush1.msra.mxu0 0.0
    %2000 = vmatprep.subr.mxu0 0.0
    %2001 = vmatpush1.msra.mxu0 0.0
    %2002 = vmatprep.subr.mxu0 0.0
    %2003 = vmatpush1.msra.mxu0 0.0
    %2004 = vmatprep.subr.mxu0 0.0
    %2005 = vmatpush1.msra.mxu0 0.0
    %2006 = vmatprep.subr.mxu0 0.0
    %2007 = vmatpush1.msra.mxu0 0.0
    %2008 = vmatprep.subr.mxu0 0.0
    %2009 = vmatpush1.msra.mxu0 0.0
    %2010 = vmatprep.subr.mxu0 0.0
    %2011 = vmatpush1.msra.mxu0 0.0
    %2012 = vmatprep.subr.mxu0 0.0
    %2013 = vmatpush1.msra.mxu0 0.0
    %2014 = vmatprep.subr.mxu0 0.0
    %2015 = vmatpush1.msra.mxu0 0.0
    %2016 = vmatprep.subr.mxu0 0.0
    %2017 = vmatpush1.msra.mxu0 0.0
    %2018 = vmatprep.subr.mxu0 0.0
    %2019 = vmatpush1.msra.mxu0 0.0
    %2020 = vmatprep.subr.mxu0 0.0
    %2021 = vmatpush1.msra.mxu0 0.0
    %2022 = vmatprep.mubr.f32.mxu0 0.0
    %2023 = vmatmul.mubr.f32.gmra.mrb[0].mxu0 %v1956
    %v2024 = vpop.f32.mrb[0].mxu0
    %v2025 = vadd.f32 0.0, %v2024
    %v2026 = vpop.f32.mrb[0].mxu0
    %2027 = vdwg.mxu0
    %v2029 = vsel %vm254, %v2025, 0
    %2031 = vmatprep.subr.mxu0 0.0
    %2032 = vmatpush1.msra.mxu0 %v166
    %2033 = vmatprep.subr.mxu0 0.0
    %2034 = vmatpush1.msra.mxu0 %v167
    %2035 = vmatprep.subr.mxu0 0.0
    %2036 = vmatpush1.msra.mxu0 %v168
    %2037 = vmatprep.subr.mxu0 0.0
    %2038 = vmatpush1.msra.mxu0 %v169
    %2039 = vmatprep.subr.mxu0 0.0
    %2040 = vmatpush1.msra.mxu0 0.0
    %2041 = vmatprep.subr.mxu0 0.0
    %2042 = vmatpush1.msra.mxu0 0.0
    %2043 = vmatprep.subr.mxu0 0.0
    %2044 = vmatpush1.msra.mxu0 0.0
    %2045 = vmatprep.subr.mxu0 0.0
    %2046 = vmatpush1.msra.mxu0 0.0
    %2047 = vmatprep.subr.mxu0 0.0
    %2048 = vmatpush1.msra.mxu0 0.0
    %2049 = vmatprep.subr.mxu0 0.0
    %2050 = vmatpush1.msra.mxu0 0.0
    %2051 = vmatprep.subr.mxu0 0.0
    %2052 = vmatpush1.msra.mxu0 0.0
    %2053 = vmatprep.subr.mxu0 0.0
    %2054 = vmatpush1.msra.mxu0 0.0
    %2055 = vmatprep.subr.mxu0 0.0
    %2056 = vmatpush1.msra.mxu0 0.0
    %2057 = vmatprep.subr.mxu0 0.0
    %2058 = vmatpush1.msra.mxu0 0.0
    %2059 = vmatprep.subr.mxu0 0.0
    %2060 = vmatpush1.msra.mxu0 0.0
    %2061 = vmatprep.subr.mxu0 0.0
    %2062 = vmatpush1.msra.mxu0 0.0
    %2063 = vmatprep.subr.mxu0 0.0
    %2064 = vmatpush1.msra.mxu0 0.0
    %2065 = vmatprep.subr.mxu0 0.0
    %2066 = vmatpush1.msra.mxu0 0.0
    %2067 = vmatprep.subr.mxu0 0.0
    %2068 = vmatpush1.msra.mxu0 0.0
    %2069 = vmatprep.subr.mxu0 0.0
    %2070 = vmatpush1.msra.mxu0 0.0
    %2071 = vmatprep.subr.mxu0 0.0
    %2072 = vmatpush1.msra.mxu0 0.0
    %2073 = vmatprep.subr.mxu0 0.0
    %2074 = vmatpush1.msra.mxu0 0.0
    %2075 = vmatprep.subr.mxu0 0.0
    %2076 = vmatpush1.msra.mxu0 0.0
    %2077 = vmatprep.subr.mxu0 0.0
    %2078 = vmatpush1.msra.mxu0 0.0
    %2079 = vmatprep.subr.mxu0 0.0
    %2080 = vmatpush1.msra.mxu0 0.0
    %2081 = vmatprep.subr.mxu0 0.0
    %2082 = vmatpush1.msra.mxu0 0.0
    %2083 = vmatprep.subr.mxu0 0.0
    %2084 = vmatpush1.msra.mxu0 0.0
    %2085 = vmatprep.subr.mxu0 0.0
    %2086 = vmatpush1.msra.mxu0 0.0
    %2087 = vmatprep.subr.mxu0 0.0
    %2088 = vmatpush1.msra.mxu0 0.0
    %2089 = vmatprep.subr.mxu0 0.0
    %2090 = vmatpush1.msra.mxu0 0.0
    %2091 = vmatprep.subr.mxu0 0.0
    %2092 = vmatpush1.msra.mxu0 0.0
    %2093 = vmatprep.subr.mxu0 0.0
    %2094 = vmatpush1.msra.mxu0 0.0
    %2095 = vmatprep.mubr.f32.mxu0 0.0
    %2096 = vmatmul.mubr.f32.gmra.mrb[0].mxu0 %v2029
    %v2097 = vpop.f32.mrb[0].mxu0
    %v2098 = vadd.f32 %v174, %v2097
    %v2099 = vpop.f32.mrb[0].mxu0
    %2100 = vdwg.mxu0
    %v2101 = vsel %vm254, %v1948, 0
    %2103 = vmatprep.subr.mxu0 0.0
    %2104 = vmatpush1.msra.mxu0 %v170
    %2105 = vmatprep.subr.mxu0 0.0
    %2106 = vmatpush1.msra.mxu0 %v171
    %2107 = vmatprep.subr.mxu0 0.0
    %2108 = vmatpush1.msra.mxu0 %v172
    %2109 = vmatprep.subr.mxu0 0.0
    %2110 = vmatpush1.msra.mxu0 %v173
    %2111 = vmatprep.subr.mxu0 0.0
    %2112 = vmatpush1.msra.mxu0 0.0
    %2113 = vmatprep.subr.mxu0 0.0
    %2114 = vmatpush1.msra.mxu0 0.0
    %2115 = vmatprep.subr.mxu0 0.0
    %2116 = vmatpush1.msra.mxu0 0.0
    %2117 = vmatprep.subr.mxu0 0.0
    %2118 = vmatpush1.msra.mxu0 0.0
    %2119 = vmatprep.subr.mxu0 0.0
    %2120 = vmatpush1.msra.mxu0 0.0
    %2121 = vmatprep.subr.mxu0 0.0
    %2122 = vmatpush1.msra.mxu0 0.0
    %2123 = vmatprep.subr.mxu0 0.0
    %2124 = vmatpush1.msra.mxu0 0.0
    %2125 = vmatprep.subr.mxu0 0.0
    %2126 = vmatpush1.msra.mxu0 0.0
    %2127 = vmatprep.subr.mxu0 0.0
    %2128 = vmatpush1.msra.mxu0 0.0
    %2129 = vmatprep.subr.mxu0 0.0
    %2130 = vmatpush1.msra.mxu0 0.0
    %2131 = vmatprep.subr.mxu0 0.0
    %2132 = vmatpush1.msra.mxu0 0.0
    %2133 = vmatprep.subr.mxu0 0.0
    %2134 = vmatpush1.msra.mxu0 0.0
    %2135 = vmatprep.subr.mxu0 0.0
    %2136 = vmatpush1.msra.mxu0 0.0
    %2137 = vmatprep.subr.mxu0 0.0
    %2138 = vmatpush1.msra.mxu0 0.0
    %2139 = vmatprep.subr.mxu0 0.0
    %2140 = vmatpush1.msra.mxu0 0.0
    %2141 = vmatprep.subr.mxu0 0.0
    %2142 = vmatpush1.msra.mxu0 0.0
    %2143 = vmatprep.subr.mxu0 0.0
    %2144 = vmatpush1.msra.mxu0 0.0
    %2145 = vmatprep.subr.mxu0 0.0
    %2146 = vmatpush1.msra.mxu0 0.0
    %2147 = vmatprep.subr.mxu0 0.0
    %2148 = vmatpush1.msra.mxu0 0.0
    %2149 = vmatprep.subr.mxu0 0.0
    %2150 = vmatpush1.msra.mxu0 0.0
    %2151 = vmatprep.subr.mxu0 0.0
    %2152 = vmatpush1.msra.mxu0 0.0
    %2153 = vmatprep.subr.mxu0 0.0
    %2154 = vmatpush1.msra.mxu0 0.0
    %2155 = vmatprep.subr.mxu0 0.0
    %2156 = vmatpush1.msra.mxu0 0.0
    %2157 = vmatprep.subr.mxu0 0.0
    %2158 = vmatpush1.msra.mxu0 0.0
    %2159 = vmatprep.subr.mxu0 0.0
    %2160 = vmatpush1.msra.mxu0 0.0
    %2161 = vmatprep.subr.mxu0 0.0
    %2162 = vmatpush1.msra.mxu0 0.0
    %2163 = vmatprep.subr.mxu0 0.0
    %2164 = vmatpush1.msra.mxu0 0.0
    %2165 = vmatprep.subr.mxu0 0.0
    %2166 = vmatpush1.msra.mxu0 0.0
    %2167 = vmatprep.mubr.f32.mxu0 0.0
    %2168 = vmatmul.mubr.f32.gmra.mrb[0].mxu0 %v2101
    %v2169 = vpop.f32.mrb[0].mxu0
    %v2170 = vadd.f32 %v175, %v2169
    %v2171 = vpop.f32.mrb[0].mxu0
    %2172 = vdwg.mxu0
    %v2173 = vadd.f32 %v2098, %v2170
    %v2174 = vxor.u32 %v2173, 2147483648
    %v2175 = vmul.f32 %v2174, 1.442695
    %v2176 = vpow.pop %v2175
    %v2177 = vadd.f32 %v2176, 1.0
    %v2178 = vrcp.pop %v2177
    %v2179 = vmul.f32 1.0, %v2178
    %2181 = vrot.lane.b32.xlu0 %v2170, 64
    %v2182 = vpop.permute.xlu0 %2181
    %v2184 = vmul.f32 %v2179, %v2182
    %2186 = vrot.lane.b32.xlu0 %v2184, 64
    %v2187 = vpop.permute.xlu0 %2186
    %v2189 = vadd.f32 %v2098, %v2187
    %v2190 = vtanh.pop %v2189
    %v2191 = vsub.f32 1.0, %v2179
    %2193 = vrot.lane.b32.xlu0 %v2190, 96
    %v2194 = vpop.permute.xlu0 %2193
    %v2196 = vmul.f32 %v2191, %v2194
    %v2197 = vmul.f32 %v2179, %v1945
    %v2198 = vadd.f32 %v2196, %v2197
    %2200 = vrot.lane.b32.xlu0 %v2198, 96
    %v2201 = vpop.permute.xlu0 %2200
    %2203 = vst.msk [vmem:[#allocation2 + $0x7] sm:$0x1] %vm431, %v2201
    %v2204 = vld [vmem:[#allocation2] sm:$0xff]
    %v2205 = vld [vmem:[%s7] sm:$0xff]
    %v2206 = vld [vmem:[%s7 + $0x8] sm:$0xff]
    %v2207 = vld [vmem:[%s7 + $0x10] sm:$0xff]
    %v2208 = vld [vmem:[%s7 + $0x18] sm:$0xff]
    %v2209 = vld [vmem:[#allocation12] sm:$0xff]
    %v2210 = vld [vmem:[#allocation12 + $0x8] sm:$0xff]
    %v2211 = vld [vmem:[#allocation12 + $0x10] sm:$0xff]
    %v2212 = vld [vmem:[#allocation12 + $0x18] sm:$0xff]
    %v2213 = vld [vmem:[#allocation13] sm:$0x1]
    %v2214 = vld [vmem:[%s10] sm:$0x1]
    %v2215 = vld [vmem:[%s11] sm:$0xff]
    %v2216 = vld [vmem:[%s11 + $0x8] sm:$0xff]
    %v2217 = vld [vmem:[%s11 + $0x10] sm:$0xff]
    %v2218 = vld [vmem:[%s11 + $0x18] sm:$0xff]
    %v2219 = vld [vmem:[#allocation15] sm:$0xff]
    %v2220 = vld [vmem:[#allocation15 + $0x8] sm:$0xff]
    %v2221 = vld [vmem:[#allocation15 + $0x10] sm:$0xff]
    %v2222 = vld [vmem:[#allocation15 + $0x18] sm:$0xff]
    %v2223 = vld [vmem:[%s13] sm:$0x1]
    %v2224 = vld [vmem:[#allocation16] sm:$0xff]
    %v2225 = vld [vmem:[#allocation16 + $0x8] sm:$0xff]
    %v2226 = vld [vmem:[#allocation16 + $0x10] sm:$0xff]
    %v2227 = vld [vmem:[#allocation16 + $0x18] sm:$0xff]
    %v2228 = vld [vmem:[%s15] sm:$0x1]
    %v2229 = vlaneseq
    %v2230 = vshrl.u32 %v2229, 7
    %v2231 = vadd.s32 %v2230, 8
    %v2232 = vadd.s32 %v2230, 16
    %v2233 = vadd.s32 %v2230, 24
    %v2234 = vadd.s32 %v2230, 32
    %v2235 = vadd.s32 %v2230, 40
    %v2236 = vadd.s32 %v2230, 48
    %v2237 = vadd.s32 %v2230, 56
    %vm2238 = vcmp.le.s32.totalorder %v2230, %v165
    %vm2239 = vcmp.le.s32.totalorder %v2231, %v165
    %vm2240 = vcmp.le.s32.totalorder %v2232, %v165
    %vm2241 = vcmp.le.s32.totalorder %v2233, %v165
    %vm2242 = vcmp.le.s32.totalorder %v2234, %v165
    %vm2243 = vcmp.le.s32.totalorder %v2235, %v165
    %vm2244 = vcmp.le.s32.totalorder %v2236, %v165
    %vm2245 = vcmp.le.s32.totalorder %v2237, %v165
    %v2246 = vsel %vm2238, 1.0, 0.0
    %v2247 = vsel %vm2239, 1.0, 0.0
    %v2248 = vsel %vm2240, 1.0, 0.0
    %v2249 = vsel %vm2241, 1.0, 0.0
    %v2250 = vsel %vm2242, 1.0, 0.0
    %v2251 = vsel %vm2243, 1.0, 0.0
    %v2252 = vsel %vm2244, 1.0, 0.0
    %v2253 = vsel %vm2245, 1.0, 0.0
    %vm2254 = vcmp.eq.s32.totalorder %v165, 1
    %v2255 = vsel %vm2254, 1.0, 0.0
    %v2257 = vsel %vm180, %v2255, 0
    %2259 = vmatprep.subr.mxu0 0.0
    %2260 = vmatpush1.msra.mxu0 %v156
    %2261 = vmatprep.subr.mxu0 0.0
    %2262 = vmatpush1.msra.mxu0 %v157
    %2263 = vmatprep.subr.mxu0 0.0
    %2264 = vmatpush1.msra.mxu0 %v158
    %2265 = vmatprep.subr.mxu0 0.0
    %2266 = vmatpush1.msra.mxu0 %v159
    %2267 = vmatprep.subr.mxu0 0.0
    %2268 = vmatpush1.msra.mxu0 %v160
    %2269 = vmatprep.subr.mxu0 0.0
    %2270 = vmatpush1.msra.mxu0 %v161
    %2271 = vmatprep.subr.mxu0 0.0
    %2272 = vmatpush1.msra.mxu0 %v162
    %2273 = vmatprep.subr.mxu0 0.0
    %2274 = vmatpush1.msra.mxu0 %v163
    %2275 = vmatprep.subr.mxu0 0.0
    %2276 = vmatpush1.msra.mxu0 0.0
    %2277 = vmatprep.subr.mxu0 0.0
    %2278 = vmatpush1.msra.mxu0 0.0
    %2279 = vmatprep.subr.mxu0 0.0
    %2280 = vmatpush1.msra.mxu0 0.0
    %2281 = vmatprep.subr.mxu0 0.0
    %2282 = vmatpush1.msra.mxu0 0.0
    %2283 = vmatprep.subr.mxu0 0.0
    %2284 = vmatpush1.msra.mxu0 0.0
    %2285 = vmatprep.subr.mxu0 0.0
    %2286 = vmatpush1.msra.mxu0 0.0
    %2287 = vmatprep.subr.mxu0 0.0
    %2288 = vmatpush1.msra.mxu0 0.0
    %2289 = vmatprep.subr.mxu0 0.0
    %2290 = vmatpush1.msra.mxu0 0.0
    %2291 = vmatprep.subr.mxu0 0.0
    %2292 = vmatpush1.msra.mxu0 0.0
    %2293 = vmatprep.subr.mxu0 0.0
    %2294 = vmatpush1.msra.mxu0 0.0
    %2295 = vmatprep.subr.mxu0 0.0
    %2296 = vmatpush1.msra.mxu0 0.0
    %2297 = vmatprep.subr.mxu0 0.0
    %2298 = vmatpush1.msra.mxu0 0.0
    %2299 = vmatprep.subr.mxu0 0.0
    %2300 = vmatpush1.msra.mxu0 0.0
    %2301 = vmatprep.subr.mxu0 0.0
    %2302 = vmatpush1.msra.mxu0 0.0
    %2303 = vmatprep.subr.mxu0 0.0
    %2304 = vmatpush1.msra.mxu0 0.0
    %2305 = vmatprep.subr.mxu0 0.0
    %2306 = vmatpush1.msra.mxu0 0.0
    %2307 = vmatprep.subr.mxu0 0.0
    %2308 = vmatpush1.msra.mxu0 0.0
    %2309 = vmatprep.subr.mxu0 0.0
    %2310 = vmatpush1.msra.mxu0 0.0
    %2311 = vmatprep.subr.mxu0 0.0
    %2312 = vmatpush1.msra.mxu0 0.0
    %2313 = vmatprep.subr.mxu0 0.0
    %2314 = vmatpush1.msra.mxu0 0.0
    %2315 = vmatprep.subr.mxu0 0.0
    %2316 = vmatpush1.msra.mxu0 0.0
    %2317 = vmatprep.subr.mxu0 0.0
    %2318 = vmatpush1.msra.mxu0 0.0
    %2319 = vmatprep.subr.mxu0 0.0
    %2320 = vmatpush1.msra.mxu0 0.0
    %2321 = vmatprep.subr.mxu0 0.0
    %2322 = vmatpush1.msra.mxu0 0.0
    %2323 = vmatprep.mubr.f32.mxu0 0.0
    %2324 = vmatmul.mubr.f32.gmra.mrb[0].mxu0 %v2257
    %v2325 = vpop.f32.mrb[0].mxu0
    %v2326 = vadd.f32 0.0, %v2325
    %v2327 = vpop.f32.mrb[0].mxu0
    %2328 = vdwg.mxu0
    %v2330 = vsel %vm254, %v2326, 0
    %2332 = vmatprep.subr.mxu0 0.0
    %2333 = vmatpush1.msra.mxu0 %v2205
    %2334 = vmatprep.subr.mxu0 0.0
    %2335 = vmatpush1.msra.mxu0 %v2206
    %2336 = vmatprep.subr.mxu0 0.0
    %2337 = vmatpush1.msra.mxu0 %v2207
    %2338 = vmatprep.subr.mxu0 0.0
    %2339 = vmatpush1.msra.mxu0 %v2208
    %2340 = vmatprep.subr.mxu0 0.0
    %2341 = vmatpush1.msra.mxu0 0.0
    %2342 = vmatprep.subr.mxu0 0.0
    %2343 = vmatpush1.msra.mxu0 0.0
    %2344 = vmatprep.subr.mxu0 0.0
    %2345 = vmatpush1.msra.mxu0 0.0
    %2346 = vmatprep.subr.mxu0 0.0
    %2347 = vmatpush1.msra.mxu0 0.0
    %2348 = vmatprep.subr.mxu0 0.0
    %2349 = vmatpush1.msra.mxu0 0.0
    %2350 = vmatprep.subr.mxu0 0.0
    %2351 = vmatpush1.msra.mxu0 0.0
    %2352 = vmatprep.subr.mxu0 0.0
    %2353 = vmatpush1.msra.mxu0 0.0
    %2354 = vmatprep.subr.mxu0 0.0
    %2355 = vmatpush1.msra.mxu0 0.0
    %2356 = vmatprep.subr.mxu0 0.0
    %2357 = vmatpush1.msra.mxu0 0.0
    %2358 = vmatprep.subr.mxu0 0.0
    %2359 = vmatpush1.msra.mxu0 0.0
    %2360 = vmatprep.subr.mxu0 0.0
    %2361 = vmatpush1.msra.mxu0 0.0
    %2362 = vmatprep.subr.mxu0 0.0
    %2363 = vmatpush1.msra.mxu0 0.0
    %2364 = vmatprep.subr.mxu0 0.0
    %2365 = vmatpush1.msra.mxu0 0.0
    %2366 = vmatprep.subr.mxu0 0.0
    %2367 = vmatpush1.msra.mxu0 0.0
    %2368 = vmatprep.subr.mxu0 0.0
    %2369 = vmatpush1.msra.mxu0 0.0
    %2370 = vmatprep.subr.mxu0 0.0
    %2371 = vmatpush1.msra.mxu0 0.0
    %2372 = vmatprep.subr.mxu0 0.0
    %2373 = vmatpush1.msra.mxu0 0.0
    %2374 = vmatprep.subr.mxu0 0.0
    %2375 = vmatpush1.msra.mxu0 0.0
    %2376 = vmatprep.subr.mxu0 0.0
    %2377 = vmatpush1.msra.mxu0 0.0
    %2378 = vmatprep.subr.mxu0 0.0
    %2379 = vmatpush1.msra.mxu0 0.0
    %2380 = vmatprep.subr.mxu0 0.0
    %2381 = vmatpush1.msra.mxu0 0.0
    %2382 = vmatprep.subr.mxu0 0.0
    %2383 = vmatpush1.msra.mxu0 0.0
    %2384 = vmatprep.subr.mxu0 0.0
    %2385 = vmatpush1.msra.mxu0 0.0
    %2386 = vmatprep.subr.mxu0 0.0
    %2387 = vmatpush1.msra.mxu0 0.0
    %2388 = vmatprep.subr.mxu0 0.0
    %2389 = vmatpush1.msra.mxu0 0.0
    %2390 = vmatprep.subr.mxu0 0.0
    %2391 = vmatpush1.msra.mxu0 0.0
    %2392 = vmatprep.subr.mxu0 0.0
    %2393 = vmatpush1.msra.mxu0 0.0
    %2394 = vmatprep.subr.mxu0 0.0
    %2395 = vmatpush1.msra.mxu0 0.0
    %2396 = vmatprep.mubr.f32.mxu0 0.0
    %2397 = vmatmul.mubr.f32.gmra.mrb[0].mxu0 %v2330
    %v2398 = vpop.f32.mrb[0].mxu0
    %v2399 = vadd.f32 %v2213, %v2398
    %v2400 = vpop.f32.mrb[0].mxu0
    %2401 = vdwg.mxu0
    %v2402 = vsel %vm254, %v2201, 0
    %2404 = vmatprep.subr.mxu0 0.0
    %2405 = vmatpush1.msra.mxu0 %v2209
    %2406 = vmatprep.subr.mxu0 0.0
    %2407 = vmatpush1.msra.mxu0 %v2210
    %2408 = vmatprep.subr.mxu0 0.0
    %2409 = vmatpush1.msra.mxu0 %v2211
    %2410 = vmatprep.subr.mxu0 0.0
    %2411 = vmatpush1.msra.mxu0 %v2212
    %2412 = vmatprep.subr.mxu0 0.0
    %2413 = vmatpush1.msra.mxu0 0.0
    %2414 = vmatprep.subr.mxu0 0.0
    %2415 = vmatpush1.msra.mxu0 0.0
    %2416 = vmatprep.subr.mxu0 0.0
    %2417 = vmatpush1.msra.mxu0 0.0
    %2418 = vmatprep.subr.mxu0 0.0
    %2419 = vmatpush1.msra.mxu0 0.0
    %2420 = vmatprep.subr.mxu0 0.0
    %2421 = vmatpush1.msra.mxu0 0.0
    %2422 = vmatprep.subr.mxu0 0.0
    %2423 = vmatpush1.msra.mxu0 0.0
    %2424 = vmatprep.subr.mxu0 0.0
    %2425 = vmatpush1.msra.mxu0 0.0
    %2426 = vmatprep.subr.mxu0 0.0
    %2427 = vmatpush1.msra.mxu0 0.0
    %2428 = vmatprep.subr.mxu0 0.0
    %2429 = vmatpush1.msra.mxu0 0.0
    %2430 = vmatprep.subr.mxu0 0.0
    %2431 = vmatpush1.msra.mxu0 0.0
    %2432 = vmatprep.subr.mxu0 0.0
    %2433 = vmatpush1.msra.mxu0 0.0
    %2434 = vmatprep.subr.mxu0 0.0
    %2435 = vmatpush1.msra.mxu0 0.0
    %2436 = vmatprep.subr.mxu0 0.0
    %2437 = vmatpush1.msra.mxu0 0.0
    %2438 = vmatprep.subr.mxu0 0.0
    %2439 = vmatpush1.msra.mxu0 0.0
    %2440 = vmatprep.subr.mxu0 0.0
    %2441 = vmatpush1.msra.mxu0 0.0
    %2442 = vmatprep.subr.mxu0 0.0
    %2443 = vmatpush1.msra.mxu0 0.0
    %2444 = vmatprep.subr.mxu0 0.0
    %2445 = vmatpush1.msra.mxu0 0.0
    %2446 = vmatprep.subr.mxu0 0.0
    %2447 = vmatpush1.msra.mxu0 0.0
    %2448 = vmatprep.subr.mxu0 0.0
    %2449 = vmatpush1.msra.mxu0 0.0
    %2450 = vmatprep.subr.mxu0 0.0
    %2451 = vmatpush1.msra.mxu0 0.0
    %2452 = vmatprep.subr.mxu0 0.0
    %2453 = vmatpush1.msra.mxu0 0.0
    %2454 = vmatprep.subr.mxu0 0.0
    %2455 = vmatpush1.msra.mxu0 0.0
    %2456 = vmatprep.subr.mxu0 0.0
    %2457 = vmatpush1.msra.mxu0 0.0
    %2458 = vmatprep.subr.mxu0 0.0
    %2459 = vmatpush1.msra.mxu0 0.0
    %2460 = vmatprep.subr.mxu0 0.0
    %2461 = vmatpush1.msra.mxu0 0.0
    %2462 = vmatprep.subr.mxu0 0.0
    %2463 = vmatpush1.msra.mxu0 0.0
    %2464 = vmatprep.subr.mxu0 0.0
    %2465 = vmatpush1.msra.mxu0 0.0
    %2466 = vmatprep.subr.mxu0 0.0
    %2467 = vmatpush1.msra.mxu0 0.0
    %2468 = vmatprep.mubr.f32.mxu0 0.0
    %2469 = vmatmul.mubr.f32.gmra.mrb[0].mxu0 %v2402
    %v2470 = vpop.f32.mrb[0].mxu0
    %v2471 = vadd.f32 %v2214, %v2470
    %v2472 = vpop.f32.mrb[0].mxu0
    %2473 = vdwg.mxu0
    %v2474 = vadd.f32 %v2399, %v2471
    %v2475 = vxor.u32 %v2474, 2147483648
    %v2476 = vmul.f32 %v2475, 1.442695
    %v2477 = vpow.pop %v2476
    %v2478 = vadd.f32 %v2477, 1.0
    %v2479 = vrcp.pop %v2478
    %v2480 = vmul.f32 1.0, %v2479
    %2482 = vrot.lane.b32.xlu0 %v2471, 64
    %v2483 = vpop.permute.xlu0 %2482
    %v2485 = vmul.f32 %v2480, %v2483
    %2487 = vrot.lane.b32.xlu0 %v2485, 64
    %v2488 = vpop.permute.xlu0 %2487
    %v2490 = vadd.f32 %v2399, %v2488
    %v2491 = vtanh.pop %v2490
    %v2492 = vsub.f32 1.0, %v2480
    %2494 = vrot.lane.b32.xlu0 %v2491, 96
    %v2495 = vpop.permute.xlu0 %2494
    %v2497 = vmul.f32 %v2492, %v2495
    %v2498 = vmul.f32 %v2480, %v2198
    %v2499 = vadd.f32 %v2497, %v2498
    %2501 = vrot.lane.b32.xlu0 %v2499, 96
    %v2502 = vpop.permute.xlu0 %2501
    %v2503 = vsel %vm254, %v2502, 0
    %v2506 = vsel %vm254, %v2204, 0
    %2508 = vmatprep.subr.mxu0 0.0
    %2509 = vmatpush1.xpose.msra.mxu0 %v2506
    %2510 = vmatprep.subr.mxu0 0.0
    %2511 = vmatpush1.xpose.msra.mxu0 0.0
    %2512 = vmatprep.subr.mxu0 0.0
    %2513 = vmatpush1.xpose.msra.mxu0 0.0
    %2514 = vmatprep.subr.mxu0 0.0
    %2515 = vmatpush1.xpose.msra.mxu0 0.0
    %2516 = vmatprep.subr.mxu0 0.0
    %2517 = vmatpush1.xpose.msra.mxu0 0.0
    %2518 = vmatprep.subr.mxu0 0.0
    %2519 = vmatpush1.xpose.msra.mxu0 0.0
    %2520 = vmatprep.subr.mxu0 0.0
    %2521 = vmatpush1.xpose.msra.mxu0 0.0
    %2522 = vmatprep.subr.mxu0 0.0
    %2523 = vmatpush1.xpose.msra.mxu0 0.0
    %2524 = vmatprep.subr.mxu0 0.0
    %2525 = vmatpush1.xpose.msra.mxu0 0.0
    %2526 = vmatprep.subr.mxu0 0.0
    %2527 = vmatpush1.xpose.msra.mxu0 0.0
    %2528 = vmatprep.subr.mxu0 0.0
    %2529 = vmatpush1.xpose.msra.mxu0 0.0
    %2530 = vmatprep.subr.mxu0 0.0
    %2531 = vmatpush1.xpose.msra.mxu0 0.0
    %2532 = vmatprep.subr.mxu0 0.0
    %2533 = vmatpush1.xpose.msra.mxu0 0.0
    %2534 = vmatprep.subr.mxu0 0.0
    %2535 = vmatpush1.xpose.msra.mxu0 0.0
    %2536 = vmatprep.subr.mxu0 0.0
    %2537 = vmatpush1.xpose.msra.mxu0 0.0
    %2538 = vmatprep.subr.mxu0 0.0
    %2539 = vmatpush1.xpose.msra.mxu0 0.0
    %2540 = vmatprep.subr.mxu0 0.0
    %2541 = vmatpush1.xpose.msra.mxu0 0.0
    %2542 = vmatprep.subr.mxu0 0.0
    %2543 = vmatpush1.xpose.msra.mxu0 0.0
    %2544 = vmatprep.subr.mxu0 0.0
    %2545 = vmatpush1.xpose.msra.mxu0 0.0
    %2546 = vmatprep.subr.mxu0 0.0
    %2547 = vmatpush1.xpose.msra.mxu0 0.0
    %2548 = vmatprep.subr.mxu0 0.0
    %2549 = vmatpush1.xpose.msra.mxu0 0.0
    %2550 = vmatprep.subr.mxu0 0.0
    %2551 = vmatpush1.xpose.msra.mxu0 0.0
    %2552 = vmatprep.subr.mxu0 0.0
    %2553 = vmatpush1.xpose.msra.mxu0 0.0
    %2554 = vmatprep.subr.mxu0 0.0
    %2555 = vmatpush1.xpose.msra.mxu0 0.0
    %2556 = vmatprep.subr.mxu0 0.0
    %2557 = vmatpush1.xpose.msra.mxu0 0.0
    %2558 = vmatprep.subr.mxu0 0.0
    %2559 = vmatpush1.xpose.msra.mxu0 0.0
    %2560 = vmatprep.subr.mxu0 0.0
    %2561 = vmatpush1.xpose.msra.mxu0 0.0
    %2562 = vmatprep.subr.mxu0 0.0
    %2563 = vmatpush1.xpose.msra.mxu0 0.0
    %2564 = vmatprep.subr.mxu0 0.0
    %2565 = vmatpush1.xpose.msra.mxu0 0.0
    %2566 = vmatprep.subr.mxu0 0.0
    %2567 = vmatpush1.xpose.msra.mxu0 0.0
    %2568 = vmatprep.subr.mxu0 0.0
    %2569 = vmatpush1.xpose.msra.mxu0 0.0
    %2570 = vmatprep.subr.mxu0 0.0
    %2571 = vmatpush1.xpose.msra.mxu0 0.0
    %2572 = vmatprep.mubr.f32.mxu0 0.0
    %2573 = vmatmul.mubr.f32.gmra.mrb[0].mxu0 %v2503
    %v2574 = vpop.f32.mrb[0].mxu0
    %v2575 = vadd.f32 0.0, %v2574
    %v2576 = vpop.f32.mrb[0].mxu0
    %2577 = vdwg.mxu0
    %vm2578 = vcmask 57344
    %v2579 = vsel %vm2578, %v2575, -inf
    %2580 = vmax.xlane.f32.xlu0 %v2579
    %v2581 = vpop.xlane.xlu0 %2580
    %v2582 = vsub.f32 %v2575, %v2581
    %v2583 = vmul.f32 %v2582, 1.442695
    %v2584 = vpow.pop %v2583
    %v2585 = vsel %vm2578, %v2584, 0.0
    %2586 = vadd.xlane.f32.xlu0 %v2585
    %v2587 = vpop.xlane.xlu0 %2586
    %v2588 = vrcp.pop %v2587
    %v2589 = vmul.f32 %v2584, %v2588
    %vm2590 = vcmask 64512
    %v2592 = vsel %vm2590, %v2589, 0
    %2594 = vmatprep.subr.mxu0 0.0
    %2595 = vmatpush1.msra.mxu0 %v2204
    %2596 = vmatprep.subr.mxu0 0.0
    %2597 = vmatpush1.msra.mxu0 0.0
    %2598 = vmatprep.subr.mxu0 0.0
    %2599 = vmatpush1.msra.mxu0 0.0
    %2600 = vmatprep.subr.mxu0 0.0
    %2601 = vmatpush1.msra.mxu0 0.0
    %2602 = vmatprep.subr.mxu0 0.0
    %2603 = vmatpush1.msra.mxu0 0.0
    %2604 = vmatprep.subr.mxu0 0.0
    %2605 = vmatpush1.msra.mxu0 0.0
    %2606 = vmatprep.subr.mxu0 0.0
    %2607 = vmatpush1.msra.mxu0 0.0
    %2608 = vmatprep.subr.mxu0 0.0
    %2609 = vmatpush1.msra.mxu0 0.0
    %2610 = vmatprep.subr.mxu0 0.0
    %2611 = vmatpush1.msra.mxu0 0.0
    %2612 = vmatprep.subr.mxu0 0.0
    %2613 = vmatpush1.msra.mxu0 0.0
    %2614 = vmatprep.subr.mxu0 0.0
    %2615 = vmatpush1.msra.mxu0 0.0
    %2616 = vmatprep.subr.mxu0 0.0
    %2617 = vmatpush1.msra.mxu0 0.0
    %2618 = vmatprep.subr.mxu0 0.0
    %2619 = vmatpush1.msra.mxu0 0.0
    %2620 = vmatprep.subr.mxu0 0.0
    %2621 = vmatpush1.msra.mxu0 0.0
    %2622 = vmatprep.subr.mxu0 0.0
    %2623 = vmatpush1.msra.mxu0 0.0
    %2624 = vmatprep.subr.mxu0 0.0
    %2625 = vmatpush1.msra.mxu0 0.0
    %2626 = vmatprep.subr.mxu0 0.0
    %2627 = vmatpush1.msra.mxu0 0.0
    %2628 = vmatprep.subr.mxu0 0.0
    %2629 = vmatpush1.msra.mxu0 0.0
    %2630 = vmatprep.subr.mxu0 0.0
    %2631 = vmatpush1.msra.mxu0 0.0
    %2632 = vmatprep.subr.mxu0 0.0
    %2633 = vmatpush1.msra.mxu0 0.0
    %2634 = vmatprep.subr.mxu0 0.0
    %2635 = vmatpush1.msra.mxu0 0.0
    %2636 = vmatprep.subr.mxu0 0.0
    %2637 = vmatpush1.msra.mxu0 0.0
    %2638 = vmatprep.subr.mxu0 0.0
    %2639 = vmatpush1.msra.mxu0 0.0
    %2640 = vmatprep.subr.mxu0 0.0
    %2641 = vmatpush1.msra.mxu0 0.0
    %2642 = vmatprep.subr.mxu0 0.0
    %2643 = vmatpush1.msra.mxu0 0.0
    %2644 = vmatprep.subr.mxu0 0.0
    %2645 = vmatpush1.msra.mxu0 0.0
    %2646 = vmatprep.subr.mxu0 0.0
    %2647 = vmatpush1.msra.mxu0 0.0
    %2648 = vmatprep.subr.mxu0 0.0
    %2649 = vmatpush1.msra.mxu0 0.0
    %2650 = vmatprep.subr.mxu0 0.0
    %2651 = vmatpush1.msra.mxu0 0.0
    %2652 = vmatprep.subr.mxu0 0.0
    %2653 = vmatpush1.msra.mxu0 0.0
    %2654 = vmatprep.subr.mxu0 0.0
    %2655 = vmatpush1.msra.mxu0 0.0
    %2656 = vmatprep.subr.mxu0 0.0
    %2657 = vmatpush1.msra.mxu0 0.0
    %2658 = vmatprep.mubr.f32.mxu0 0.0
    %2659 = vmatmul.mubr.f32.gmra.mrb[0].mxu0 %v2592
    %v2660 = vpop.f32.mrb[0].mxu0
    %v2661 = vadd.f32 0.0, %v2660
    %v2662 = vpop.f32.mrb[0].mxu0
    %2663 = vdwg.mxu0
    %v2665 = vsel %vm254, %v2661, 0
    %2667 = vmatprep.subr.mxu0 0.0
    %2668 = vmatpush1.msra.mxu0 %v2219
    %2669 = vmatprep.subr.mxu0 0.0
    %2670 = vmatpush1.msra.mxu0 %v2220
    %2671 = vmatprep.subr.mxu0 0.0
    %2672 = vmatpush1.msra.mxu0 %v2221
    %2673 = vmatprep.subr.mxu0 0.0
    %2674 = vmatpush1.msra.mxu0 %v2222
    %2675 = vmatprep.subr.mxu0 0.0
    %2676 = vmatpush1.msra.mxu0 0.0
    %2677 = vmatprep.subr.mxu0 0.0
    %2678 = vmatpush1.msra.mxu0 0.0
    %2679 = vmatprep.subr.mxu0 0.0
    %2680 = vmatpush1.msra.mxu0 0.0
    %2681 = vmatprep.subr.mxu0 0.0
    %2682 = vmatpush1.msra.mxu0 0.0
    %2683 = vmatprep.subr.mxu0 0.0
    %2684 = vmatpush1.msra.mxu0 0.0
    %2685 = vmatprep.subr.mxu0 0.0
    %2686 = vmatpush1.msra.mxu0 0.0
    %2687 = vmatprep.subr.mxu0 0.0
    %2688 = vmatpush1.msra.mxu0 0.0
    %2689 = vmatprep.subr.mxu0 0.0
    %2690 = vmatpush1.msra.mxu0 0.0
    %2691 = vmatprep.subr.mxu0 0.0
    %2692 = vmatpush1.msra.mxu0 0.0
    %2693 = vmatprep.subr.mxu0 0.0
    %2694 = vmatpush1.msra.mxu0 0.0
    %2695 = vmatprep.subr.mxu0 0.0
    %2696 = vmatpush1.msra.mxu0 0.0
    %2697 = vmatprep.subr.mxu0 0.0
    %2698 = vmatpush1.msra.mxu0 0.0
    %2699 = vmatprep.subr.mxu0 0.0
    %2700 = vmatpush1.msra.mxu0 0.0
    %2701 = vmatprep.subr.mxu0 0.0
    %2702 = vmatpush1.msra.mxu0 0.0
    %2703 = vmatprep.subr.mxu0 0.0
    %2704 = vmatpush1.msra.mxu0 0.0
    %2705 = vmatprep.subr.mxu0 0.0
    %2706 = vmatpush1.msra.mxu0 0.0
    %2707 = vmatprep.subr.mxu0 0.0
    %2708 = vmatpush1.msra.mxu0 0.0
    %2709 = vmatprep.subr.mxu0 0.0
    %2710 = vmatpush1.msra.mxu0 0.0
    %2711 = vmatprep.subr.mxu0 0.0
    %2712 = vmatpush1.msra.mxu0 0.0
    %2713 = vmatprep.subr.mxu0 0.0
    %2714 = vmatpush1.msra.mxu0 0.0
    %2715 = vmatprep.subr.mxu0 0.0
    %2716 = vmatpush1.msra.mxu0 0.0
    %2717 = vmatprep.subr.mxu0 0.0
    %2718 = vmatpush1.msra.mxu0 0.0
    %2719 = vmatprep.subr.mxu0 0.0
    %2720 = vmatpush1.msra.mxu0 0.0
    %2721 = vmatprep.subr.mxu0 0.0
    %2722 = vmatpush1.msra.mxu0 0.0
    %2723 = vmatprep.subr.mxu0 0.0
    %2724 = vmatpush1.msra.mxu0 0.0
    %2725 = vmatprep.subr.mxu0 0.0
    %2726 = vmatpush1.msra.mxu0 0.0
    %2727 = vmatprep.subr.mxu0 0.0
    %2728 = vmatpush1.msra.mxu0 0.0
    %2729 = vmatprep.subr.mxu0 0.0
    %2730 = vmatpush1.msra.mxu0 0.0
    %2731 = vmatprep.mubr.f32.mxu0 0.0
    %2732 = vmatmul.mubr.f32.gmra.mrb[0].mxu0 %v2665
    %v2733 = vpop.f32.mrb[0].mxu0
    %v2734 = vadd.f32 0.0, %v2733
    %v2735 = vpop.f32.mrb[0].mxu0
    %2736 = vdwg.mxu0
    %2737 = vmatprep.subr.mxu0 0.0
    %2738 = vmatpush1.msra.mxu0 %v2215
    %2739 = vmatprep.subr.mxu0 0.0
    %2740 = vmatpush1.msra.mxu0 %v2216
    %2741 = vmatprep.subr.mxu0 0.0
    %2742 = vmatpush1.msra.mxu0 %v2217
    %2743 = vmatprep.subr.mxu0 0.0
    %2744 = vmatpush1.msra.mxu0 %v2218
    %2745 = vmatprep.subr.mxu0 0.0
    %2746 = vmatpush1.msra.mxu0 0.0
    %2747 = vmatprep.subr.mxu0 0.0
    %2748 = vmatpush1.msra.mxu0 0.0
    %2749 = vmatprep.subr.mxu0 0.0
    %2750 = vmatpush1.msra.mxu0 0.0
    %2751 = vmatprep.subr.mxu0 0.0
    %2752 = vmatpush1.msra.mxu0 0.0
    %2753 = vmatprep.subr.mxu0 0.0
    %2754 = vmatpush1.msra.mxu0 0.0
    %2755 = vmatprep.subr.mxu0 0.0
    %2756 = vmatpush1.msra.mxu0 0.0
    %2757 = vmatprep.subr.mxu0 0.0
    %2758 = vmatpush1.msra.mxu0 0.0
    %2759 = vmatprep.subr.mxu0 0.0
    %2760 = vmatpush1.msra.mxu0 0.0
    %2761 = vmatprep.subr.mxu0 0.0
    %2762 = vmatpush1.msra.mxu0 0.0
    %2763 = vmatprep.subr.mxu0 0.0
    %2764 = vmatpush1.msra.mxu0 0.0
    %2765 = vmatprep.subr.mxu0 0.0
    %2766 = vmatpush1.msra.mxu0 0.0
    %2767 = vmatprep.subr.mxu0 0.0
    %2768 = vmatpush1.msra.mxu0 0.0
    %2769 = vmatprep.subr.mxu0 0.0
    %2770 = vmatpush1.msra.mxu0 0.0
    %2771 = vmatprep.subr.mxu0 0.0
    %2772 = vmatpush1.msra.mxu0 0.0
    %2773 = vmatprep.subr.mxu0 0.0
    %2774 = vmatpush1.msra.mxu0 0.0
    %2775 = vmatprep.subr.mxu0 0.0
    %2776 = vmatpush1.msra.mxu0 0.0
    %2777 = vmatprep.subr.mxu0 0.0
    %2778 = vmatpush1.msra.mxu0 0.0
    %2779 = vmatprep.subr.mxu0 0.0
    %2780 = vmatpush1.msra.mxu0 0.0
    %2781 = vmatprep.subr.mxu0 0.0
    %2782 = vmatpush1.msra.mxu0 0.0
    %2783 = vmatprep.subr.mxu0 0.0
    %2784 = vmatpush1.msra.mxu0 0.0
    %2785 = vmatprep.subr.mxu0 0.0
    %2786 = vmatpush1.msra.mxu0 0.0
    %2787 = vmatprep.subr.mxu0 0.0
    %2788 = vmatpush1.msra.mxu0 0.0
    %2789 = vmatprep.subr.mxu0 0.0
    %2790 = vmatpush1.msra.mxu0 0.0
    %2791 = vmatprep.subr.mxu0 0.0
    %2792 = vmatpush1.msra.mxu0 0.0
    %2793 = vmatprep.subr.mxu0 0.0
    %2794 = vmatpush1.msra.mxu0 0.0
    %2795 = vmatprep.subr.mxu0 0.0
    %2796 = vmatpush1.msra.mxu0 0.0
    %2797 = vmatprep.subr.mxu0 0.0
    %2798 = vmatpush1.msra.mxu0 0.0
    %2799 = vmatprep.subr.mxu0 0.0
    %2800 = vmatpush1.msra.mxu0 0.0
    %2801 = vmatprep.mubr.f32.mxu0 0.0
    %2802 = vmatmul.mubr.f32.gmra.mrb[0].mxu0 %v2503
    %v2803 = vpop.f32.mrb[0].mxu0
    %v2804 = vadd.f32 %v2734, %v2803
    %v2805 = vpop.f32.mrb[0].mxu0
    %2806 = vdwg.mxu0
    %v2807 = vadd.f32 %v2804, %v2223
    %v2808 = vtanh.pop %v2807
    %v2810 = vsel %vm254, %v2808, 0
    %2812 = vmatprep.subr.mxu0 0.0
    %2813 = vmatpush1.msra.mxu0 %v2224
    %2814 = vmatprep.subr.mxu0 0.0
    %2815 = vmatpush1.msra.mxu0 %v2225
    %2816 = vmatprep.subr.mxu0 0.0
    %2817 = vmatpush1.msra.mxu0 %v2226
    %2818 = vmatprep.subr.mxu0 0.0
    %2819 = vmatpush1.msra.mxu0 %v2227
    %2820 = vmatprep.subr.mxu0 0.0
    %2821 = vmatpush1.msra.mxu0 0.0
    %2822 = vmatprep.subr.mxu0 0.0
    %2823 = vmatpush1.msra.mxu0 0.0
    %2824 = vmatprep.subr.mxu0 0.0
    %2825 = vmatpush1.msra.mxu0 0.0
    %2826 = vmatprep.subr.mxu0 0.0
    %2827 = vmatpush1.msra.mxu0 0.0
    %2828 = vmatprep.subr.mxu0 0.0
    %2829 = vmatpush1.msra.mxu0 0.0
    %2830 = vmatprep.subr.mxu0 0.0
    %2831 = vmatpush1.msra.mxu0 0.0
    %2832 = vmatprep.subr.mxu0 0.0
    %2833 = vmatpush1.msra.mxu0 0.0
    %2834 = vmatprep.subr.mxu0 0.0
    %2835 = vmatpush1.msra.mxu0 0.0
    %2836 = vmatprep.subr.mxu0 0.0
    %2837 = vmatpush1.msra.mxu0 0.0
    %2838 = vmatprep.subr.mxu0 0.0
    %2839 = vmatpush1.msra.mxu0 0.0
    %2840 = vmatprep.subr.mxu0 0.0
    %2841 = vmatpush1.msra.mxu0 0.0
    %2842 = vmatprep.subr.mxu0 0.0
    %2843 = vmatpush1.msra.mxu0 0.0
    %2844 = vmatprep.subr.mxu0 0.0
    %2845 = vmatpush1.msra.mxu0 0.0
    %2846 = vmatprep.subr.mxu0 0.0
    %2847 = vmatpush1.msra.mxu0 0.0
    %2848 = vmatprep.subr.mxu0 0.0
    %2849 = vmatpush1.msra.mxu0 0.0
    %2850 = vmatprep.subr.mxu0 0.0
    %2851 = vmatpush1.msra.mxu0 0.0
    %2852 = vmatprep.subr.mxu0 0.0
    %2853 = vmatpush1.msra.mxu0 0.0
    %2854 = vmatprep.subr.mxu0 0.0
    %2855 = vmatpush1.msra.mxu0 0.0
    %2856 = vmatprep.subr.mxu0 0.0
    %2857 = vmatpush1.msra.mxu0 0.0
    %2858 = vmatprep.subr.mxu0 0.0
    %2859 = vmatpush1.msra.mxu0 0.0
    %2860 = vmatprep.subr.mxu0 0.0
    %2861 = vmatpush1.msra.mxu0 0.0
    %2862 = vmatprep.subr.mxu0 0.0
    %2863 = vmatpush1.msra.mxu0 0.0
    %2864 = vmatprep.subr.mxu0 0.0
    %2865 = vmatpush1.msra.mxu0 0.0
    %2866 = vmatprep.subr.mxu0 0.0
    %2867 = vmatpush1.msra.mxu0 0.0
    %2868 = vmatprep.subr.mxu0 0.0
    %2869 = vmatpush1.msra.mxu0 0.0
    %2870 = vmatprep.subr.mxu0 0.0
    %2871 = vmatpush1.msra.mxu0 0.0
    %2872 = vmatprep.subr.mxu0 0.0
    %2873 = vmatpush1.msra.mxu0 0.0
    %2874 = vmatprep.subr.mxu0 0.0
    %2875 = vmatpush1.msra.mxu0 0.0
    %2876 = vmatprep.mubr.f32.mxu0 0.0
    %2877 = vmatmul.mubr.f32.gmra.mrb[0].mxu0 %v2810
    %v2878 = vpop.f32.mrb[0].mxu0
    %v2879 = vadd.f32 %v2228, %v2878
    %v2880 = vpop.f32.mrb[0].mxu0
    %2881 = vdwg.mxu0
    %vm2882 = vcmask 516096
    %v2883 = vsel %vm2882, %v2879, -inf
    %2884 = vmax.xlane.f32.xlu0 %v2883
    %v2885 = vpop.xlane.xlu0 %2884
    %v2886 = vsub.f32 %v2879, %v2885
    %v2887 = vmul.f32 %v2886, 1.442695
    %v2888 = vpow.pop %v2887
    %v2889 = vsel %vm2882, %v2888, 0.0
    %2890 = vadd.xlane.f32.xlu0 %v2889
    %v2891 = vpop.xlane.xlu0 %2890
    %v2892 = vrcp.pop %v2891
    %v2893 = vmul.f32 %v2888, %v2892
    %s2894 = sld [smem:[#allocation8]]
    %v2896 = vsel %vm180, %v2893, 0
    %2898 = vmatprep.subr.mxu0 0.0
    %2899 = vmatpush1.msra.mxu0 %v2246
    %2900 = vmatprep.subr.mxu0 0.0
    %2901 = vmatpush1.msra.mxu0 %v2247
    %2902 = vmatprep.subr.mxu0 0.0
    %2903 = vmatpush1.msra.mxu0 %v2248
    %2904 = vmatprep.subr.mxu0 0.0
    %2905 = vmatpush1.msra.mxu0 %v2249
    %2906 = vmatprep.subr.mxu0 0.0
    %2907 = vmatpush1.msra.mxu0 %v2250
    %2908 = vmatprep.subr.mxu0 0.0
    %2909 = vmatpush1.msra.mxu0 %v2251
    %2910 = vmatprep.subr.mxu0 0.0
    %2911 = vmatpush1.msra.mxu0 %v2252
    %2912 = vmatprep.subr.mxu0 0.0
    %2913 = vmatpush1.msra.mxu0 %v2253
    %2914 = vmatprep.subr.mxu0 0.0
    %2915 = vmatpush1.msra.mxu0 0.0
    %2916 = vmatprep.subr.mxu0 0.0
    %2917 = vmatpush1.msra.mxu0 0.0
    %2918 = vmatprep.subr.mxu0 0.0
    %2919 = vmatpush1.msra.mxu0 0.0
    %2920 = vmatprep.subr.mxu0 0.0
    %2921 = vmatpush1.msra.mxu0 0.0
    %2922 = vmatprep.subr.mxu0 0.0
    %2923 = vmatpush1.msra.mxu0 0.0
    %2924 = vmatprep.subr.mxu0 0.0
    %2925 = vmatpush1.msra.mxu0 0.0
    %2926 = vmatprep.subr.mxu0 0.0
    %2927 = vmatpush1.msra.mxu0 0.0
    %2928 = vmatprep.subr.mxu0 0.0
    %2929 = vmatpush1.msra.mxu0 0.0
    %2930 = vmatprep.subr.mxu0 0.0
    %2931 = vmatpush1.msra.mxu0 0.0
    %2932 = vmatprep.subr.mxu0 0.0
    %2933 = vmatpush1.msra.mxu0 0.0
    %2934 = vmatprep.subr.mxu0 0.0
    %2935 = vmatpush1.msra.mxu0 0.0
    %2936 = vmatprep.subr.mxu0 0.0
    %2937 = vmatpush1.msra.mxu0 0.0
    %2938 = vmatprep.subr.mxu0 0.0
    %2939 = vmatpush1.msra.mxu0 0.0
    %2940 = vmatprep.subr.mxu0 0.0
    %2941 = vmatpush1.msra.mxu0 0.0
    %2942 = vmatprep.subr.mxu0 0.0
    %2943 = vmatpush1.msra.mxu0 0.0
    %2944 = vmatprep.subr.mxu0 0.0
    %2945 = vmatpush1.msra.mxu0 0.0
    %2946 = vmatprep.subr.mxu0 0.0
    %2947 = vmatpush1.msra.mxu0 0.0
    %2948 = vmatprep.subr.mxu0 0.0
    %2949 = vmatpush1.msra.mxu0 0.0
    %2950 = vmatprep.subr.mxu0 0.0
    %2951 = vmatpush1.msra.mxu0 0.0
    %2952 = vmatprep.subr.mxu0 0.0
    %2953 = vmatpush1.msra.mxu0 0.0
    %2954 = vmatprep.subr.mxu0 0.0
    %2955 = vmatpush1.msra.mxu0 0.0
    %2956 = vmatprep.subr.mxu0 0.0
    %2957 = vmatpush1.msra.mxu0 0.0
    %2958 = vmatprep.subr.mxu0 0.0
    %2959 = vmatpush1.msra.mxu0 0.0
    %2960 = vmatprep.subr.mxu0 0.0
    %2961 = vmatpush1.msra.mxu0 0.0
    %2962 = vmatprep.mubr.f32.mxu0 0.0
    %2963 = vmatmul.mubr.f32.gmra.mrb[0].mxu0 %v2896
    %v2964 = vpop.f32.mrb[0].mxu0
    %v2965 = vadd.f32 0.0, %v2964
    %v2966 = vpop.f32.mrb[0].mxu0
    %2967 = vdwg.mxu0
    %v2968 = vstv %s2894
    %vm2969 = vcmp.ge.f32.partialorder %v2968, %v2965
    %v2970 = vsel %vm2969, 1.0, 0.0
    %v2971 = vsel %vm2882, %v2970, 0.0
    %2972 = vadd.xlane.f32.xlu0 %v2971
    %v2973 = vpop.xlane.xlu0 %2972
    %v2974 = vrot.slane %v2973, 4
    %v2975 = vadd.f32 %v2973, %v2974
    %v2976 = vrot.slane %v2975, 2
    %v2977 = vadd.f32 %v2975, %v2976
    %v2978 = vrot.slane %v2977, 1
    %v2979 = vadd.f32 %v2977, %v2978
    %s2980 = vtos %v2979
    %s2981 = smin.f32 %s2980, 63.0
    %s2982 = scvt.f32.s32.to.zero.pseudo %s2981
    %v2983 = vstv %s2982
    %vm2984 = vcmp.eq.s32.totalorder %v165, %v2983
    %v2985 = vsel %vm2984, 1.0, 0.0
    %v2986 = vmul.f32 %v2893, %v2985
    %v2987 = vsel %vm2882, %v2986, 0.0
    %2988 = vadd.xlane.f32.xlu0 %v2987
    %v2989 = vpop.xlane.xlu0 %2988
    %v2990 = vrot.slane %v2989, 4
    %v2991 = vadd.f32 %v2989, %v2990
    %v2992 = vrot.slane %v2991, 2
    %v2993 = vadd.f32 %v2991, %v2992
    %v2994 = vrot.slane %v2993, 1
    %v2995 = vadd.f32 %v2993, %v2994
    %s2996 = vtos %v2995
    %s2997 = scalar_lea.smem [#allocation18], 0
    %2998 = sst [smem:[%s2997]] %s2982
    %s2999 = scalar_lea.smem [#allocation19], 0
    %3000 = sst [smem:[%s2999]] %s2996
    %v3002 = vsel %vm180, %v2985, 0
    %3004 = vmatprep.subr.mxu0 0.0
    %3005 = vmatpush1.msra.mxu0 %v156
    %3006 = vmatprep.subr.mxu0 0.0
    %3007 = vmatpush1.msra.mxu0 %v157
    %3008 = vmatprep.subr.mxu0 0.0
    %3009 = vmatpush1.msra.mxu0 %v158
    %3010 = vmatprep.subr.mxu0 0.0
    %3011 = vmatpush1.msra.mxu0 %v159
    %3012 = vmatprep.subr.mxu0 0.0
    %3013 = vmatpush1.msra.mxu0 %v160
    %3014 = vmatprep.subr.mxu0 0.0
    %3015 = vmatpush1.msra.mxu0 %v161
    %3016 = vmatprep.subr.mxu0 0.0
    %3017 = vmatpush1.msra.mxu0 %v162
    %3018 = vmatprep.subr.mxu0 0.0
    %3019 = vmatpush1.msra.mxu0 %v163
    %3020 = vmatprep.subr.mxu0 0.0
    %3021 = vmatpush1.msra.mxu0 0.0
    %3022 = vmatprep.subr.mxu0 0.0
    %3023 = vmatpush1.msra.mxu0 0.0
    %3024 = vmatprep.subr.mxu0 0.0
    %3025 = vmatpush1.msra.mxu0 0.0
    %3026 = vmatprep.subr.mxu0 0.0
    %3027 = vmatpush1.msra.mxu0 0.0
    %3028 = vmatprep.subr.mxu0 0.0
    %3029 = vmatpush1.msra.mxu0 0.0
    %3030 = vmatprep.subr.mxu0 0.0
    %3031 = vmatpush1.msra.mxu0 0.0
    %3032 = vmatprep.subr.mxu0 0.0
    %3033 = vmatpush1.msra.mxu0 0.0
    %3034 = vmatprep.subr.mxu0 0.0
    %3035 = vmatpush1.msra.mxu0 0.0
    %3036 = vmatprep.subr.mxu0 0.0
    %3037 = vmatpush1.msra.mxu0 0.0
    %3038 = vmatprep.subr.mxu0 0.0
    %3039 = vmatpush1.msra.mxu0 0.0
    %3040 = vmatprep.subr.mxu0 0.0
    %3041 = vmatpush1.msra.mxu0 0.0
    %3042 = vmatprep.subr.mxu0 0.0
    %3043 = vmatpush1.msra.mxu0 0.0
    %3044 = vmatprep.subr.mxu0 0.0
    %3045 = vmatpush1.msra.mxu0 0.0
    %3046 = vmatprep.subr.mxu0 0.0
    %3047 = vmatpush1.msra.mxu0 0.0
    %3048 = vmatprep.subr.mxu0 0.0
    %3049 = vmatpush1.msra.mxu0 0.0
    %3050 = vmatprep.subr.mxu0 0.0
    %3051 = vmatpush1.msra.mxu0 0.0
    %3052 = vmatprep.subr.mxu0 0.0
    %3053 = vmatpush1.msra.mxu0 0.0
    %3054 = vmatprep.subr.mxu0 0.0
    %3055 = vmatpush1.msra.mxu0 0.0
    %3056 = vmatprep.subr.mxu0 0.0
    %3057 = vmatpush1.msra.mxu0 0.0
    %3058 = vmatprep.subr.mxu0 0.0
    %3059 = vmatpush1.msra.mxu0 0.0
    %3060 = vmatprep.subr.mxu0 0.0
    %3061 = vmatpush1.msra.mxu0 0.0
    %3062 = vmatprep.subr.mxu0 0.0
    %3063 = vmatpush1.msra.mxu0 0.0
    %3064 = vmatprep.subr.mxu0 0.0
    %3065 = vmatpush1.msra.mxu0 0.0
    %3066 = vmatprep.subr.mxu0 0.0
    %3067 = vmatpush1.msra.mxu0 0.0
    %3068 = vmatprep.mubr.f32.mxu0 0.0
    %3069 = vmatmul.mubr.f32.gmra.mrb[0].mxu0 %v3002
    %v3070 = vpop.f32.mrb[0].mxu0
    %v3071 = vadd.f32 0.0, %v3070
    %v3072 = vpop.f32.mrb[0].mxu0
    %3073 = vdwg.mxu0
    %v3075 = vsel %vm254, %v3071, 0
    %3077 = vmatprep.subr.mxu0 0.0
    %3078 = vmatpush1.msra.mxu0 %v2205
    %3079 = vmatprep.subr.mxu0 0.0
    %3080 = vmatpush1.msra.mxu0 %v2206
    %3081 = vmatprep.subr.mxu0 0.0
    %3082 = vmatpush1.msra.mxu0 %v2207
    %3083 = vmatprep.subr.mxu0 0.0
    %3084 = vmatpush1.msra.mxu0 %v2208
    %3085 = vmatprep.subr.mxu0 0.0
    %3086 = vmatpush1.msra.mxu0 0.0
    %3087 = vmatprep.subr.mxu0 0.0
    %3088 = vmatpush1.msra.mxu0 0.0
    %3089 = vmatprep.subr.mxu0 0.0
    %3090 = vmatpush1.msra.mxu0 0.0
    %3091 = vmatprep.subr.mxu0 0.0
    %3092 = vmatpush1.msra.mxu0 0.0
    %3093 = vmatprep.subr.mxu0 0.0
    %3094 = vmatpush1.msra.mxu0 0.0
    %3095 = vmatprep.subr.mxu0 0.0
    %3096 = vmatpush1.msra.mxu0 0.0
    %3097 = vmatprep.subr.mxu0 0.0
    %3098 = vmatpush1.msra.mxu0 0.0
    %3099 = vmatprep.subr.mxu0 0.0
    %3100 = vmatpush1.msra.mxu0 0.0
    %3101 = vmatprep.subr.mxu0 0.0
    %3102 = vmatpush1.msra.mxu0 0.0
    %3103 = vmatprep.subr.mxu0 0.0
    %3104 = vmatpush1.msra.mxu0 0.0
    %3105 = vmatprep.subr.mxu0 0.0
    %3106 = vmatpush1.msra.mxu0 0.0
    %3107 = vmatprep.subr.mxu0 0.0
    %3108 = vmatpush1.msra.mxu0 0.0
    %3109 = vmatprep.subr.mxu0 0.0
    %3110 = vmatpush1.msra.mxu0 0.0
    %3111 = vmatprep.subr.mxu0 0.0
    %3112 = vmatpush1.msra.mxu0 0.0
    %3113 = vmatprep.subr.mxu0 0.0
    %3114 = vmatpush1.msra.mxu0 0.0
    %3115 = vmatprep.subr.mxu0 0.0
    %3116 = vmatpush1.msra.mxu0 0.0
    %3117 = vmatprep.subr.mxu0 0.0
    %3118 = vmatpush1.msra.mxu0 0.0
    %3119 = vmatprep.subr.mxu0 0.0
    %3120 = vmatpush1.msra.mxu0 0.0
    %3121 = vmatprep.subr.mxu0 0.0
    %3122 = vmatpush1.msra.mxu0 0.0
    %3123 = vmatprep.subr.mxu0 0.0
    %3124 = vmatpush1.msra.mxu0 0.0
    %3125 = vmatprep.subr.mxu0 0.0
    %3126 = vmatpush1.msra.mxu0 0.0
    %3127 = vmatprep.subr.mxu0 0.0
    %3128 = vmatpush1.msra.mxu0 0.0
    %3129 = vmatprep.subr.mxu0 0.0
    %3130 = vmatpush1.msra.mxu0 0.0
    %3131 = vmatprep.subr.mxu0 0.0
    %3132 = vmatpush1.msra.mxu0 0.0
    %3133 = vmatprep.subr.mxu0 0.0
    %3134 = vmatpush1.msra.mxu0 0.0
    %3135 = vmatprep.subr.mxu0 0.0
    %3136 = vmatpush1.msra.mxu0 0.0
    %3137 = vmatprep.subr.mxu0 0.0
    %3138 = vmatpush1.msra.mxu0 0.0
    %3139 = vmatprep.subr.mxu0 0.0
    %3140 = vmatpush1.msra.mxu0 0.0
    %3141 = vmatprep.mubr.f32.mxu0 0.0
    %3142 = vmatmul.mubr.f32.gmra.mrb[0].mxu0 %v3075
    %v3143 = vpop.f32.mrb[0].mxu0
    %v3144 = vadd.f32 %v2213, %v3143
    %v3145 = vpop.f32.mrb[0].mxu0
    %3146 = vdwg.mxu0
    %3147 = vmatprep.subr.mxu0 0.0
    %3148 = vmatpush1.msra.mxu0 %v2209
    %3149 = vmatprep.subr.mxu0 0.0
    %3150 = vmatpush1.msra.mxu0 %v2210
    %3151 = vmatprep.subr.mxu0 0.0
    %3152 = vmatpush1.msra.mxu0 %v2211
    %3153 = vmatprep.subr.mxu0 0.0
    %3154 = vmatpush1.msra.mxu0 %v2212
    %3155 = vmatprep.subr.mxu0 0.0
    %3156 = vmatpush1.msra.mxu0 0.0
    %3157 = vmatprep.subr.mxu0 0.0
    %3158 = vmatpush1.msra.mxu0 0.0
    %3159 = vmatprep.subr.mxu0 0.0
    %3160 = vmatpush1.msra.mxu0 0.0
    %3161 = vmatprep.subr.mxu0 0.0
    %3162 = vmatpush1.msra.mxu0 0.0
    %3163 = vmatprep.subr.mxu0 0.0
    %3164 = vmatpush1.msra.mxu0 0.0
    %3165 = vmatprep.subr.mxu0 0.0
    %3166 = vmatpush1.msra.mxu0 0.0
    %3167 = vmatprep.subr.mxu0 0.0
    %3168 = vmatpush1.msra.mxu0 0.0
    %3169 = vmatprep.subr.mxu0 0.0
    %3170 = vmatpush1.msra.mxu0 0.0
    %3171 = vmatprep.subr.mxu0 0.0
    %3172 = vmatpush1.msra.mxu0 0.0
    %3173 = vmatprep.subr.mxu0 0.0
    %3174 = vmatpush1.msra.mxu0 0.0
    %3175 = vmatprep.subr.mxu0 0.0
    %3176 = vmatpush1.msra.mxu0 0.0
    %3177 = vmatprep.subr.mxu0 0.0
    %3178 = vmatpush1.msra.mxu0 0.0
    %3179 = vmatprep.subr.mxu0 0.0
    %3180 = vmatpush1.msra.mxu0 0.0
    %3181 = vmatprep.subr.mxu0 0.0
    %3182 = vmatpush1.msra.mxu0 0.0
    %3183 = vmatprep.subr.mxu0 0.0
    %3184 = vmatpush1.msra.mxu0 0.0
    %3185 = vmatprep.subr.mxu0 0.0
    %3186 = vmatpush1.msra.mxu0 0.0
    %3187 = vmatprep.subr.mxu0 0.0
    %3188 = vmatpush1.msra.mxu0 0.0
    %3189 = vmatprep.subr.mxu0 0.0
    %3190 = vmatpush1.msra.mxu0 0.0
    %3191 = vmatprep.subr.mxu0 0.0
    %3192 = vmatpush1.msra.mxu0 0.0
    %3193 = vmatprep.subr.mxu0 0.0
    %3194 = vmatpush1.msra.mxu0 0.0
    %3195 = vmatprep.subr.mxu0 0.0
    %3196 = vmatpush1.msra.mxu0 0.0
    %3197 = vmatprep.subr.mxu0 0.0
    %3198 = vmatpush1.msra.mxu0 0.0
    %3199 = vmatprep.subr.mxu0 0.0
    %3200 = vmatpush1.msra.mxu0 0.0
    %3201 = vmatprep.subr.mxu0 0.0
    %3202 = vmatpush1.msra.mxu0 0.0
    %3203 = vmatprep.subr.mxu0 0.0
    %3204 = vmatpush1.msra.mxu0 0.0
    %3205 = vmatprep.subr.mxu0 0.0
    %3206 = vmatpush1.msra.mxu0 0.0
    %3207 = vmatprep.subr.mxu0 0.0
    %3208 = vmatpush1.msra.mxu0 0.0
    %3209 = vmatprep.subr.mxu0 0.0
    %3210 = vmatpush1.msra.mxu0 0.0
    %3211 = vmatprep.mubr.f32.mxu0 0.0
    %3212 = vmatmul.mubr.f32.gmra.mrb[0].mxu0 %v2503
    %v3213 = vpop.f32.mrb[0].mxu0
    %v3214 = vadd.f32 %v2214, %v3213
    %v3215 = vpop.f32.mrb[0].mxu0
    %3216 = vdwg.mxu0
    %v3217 = vadd.f32 %v3144, %v3214
    %v3218 = vxor.u32 %v3217, 2147483648
    %v3219 = vmul.f32 %v3218, 1.442695
    %v3220 = vpow.pop %v3219
    %v3221 = vadd.f32 %v3220, 1.0
    %v3222 = vrcp.pop %v3221
    %v3223 = vmul.f32 1.0, %v3222
    %3225 = vrot.lane.b32.xlu0 %v3214, 64
    %v3226 = vpop.permute.xlu0 %3225
    %v3228 = vmul.f32 %v3223, %v3226
    %3230 = vrot.lane.b32.xlu0 %v3228, 64
    %v3231 = vpop.permute.xlu0 %3230
    %v3233 = vadd.f32 %v3144, %v3231
    %v3234 = vtanh.pop %v3233
    %v3235 = vsub.f32 1.0, %v3223
    %3237 = vrot.lane.b32.xlu0 %v3234, 96
    %v3238 = vpop.permute.xlu0 %3237
    %v3240 = vmul.f32 %v3235, %v3238
    %v3241 = vmul.f32 %v3223, %v2499
    %v3242 = vadd.f32 %v3240, %v3241
    %3244 = vrot.lane.b32.xlu0 %v3242, 96
    %v3245 = vpop.permute.xlu0 %3244
    %v3246 = vsel %vm254, %v3245, 0
    %3248 = vmatprep.subr.mxu0 0.0
    %3249 = vmatpush1.xpose.msra.mxu0 %v2506
    %3250 = vmatprep.subr.mxu0 0.0
    %3251 = vmatpush1.xpose.msra.mxu0 0.0
    %3252 = vmatprep.subr.mxu0 0.0
    %3253 = vmatpush1.xpose.msra.mxu0 0.0
    %3254 = vmatprep.subr.mxu0 0.0
    %3255 = vmatpush1.xpose.msra.mxu0 0.0
    %3256 = vmatprep.subr.mxu0 0.0
    %3257 = vmatpush1.xpose.msra.mxu0 0.0
    %3258 = vmatprep.subr.mxu0 0.0
    %3259 = vmatpush1.xpose.msra.mxu0 0.0
    %3260 = vmatprep.subr.mxu0 0.0
    %3261 = vmatpush1.xpose.msra.mxu0 0.0
    %3262 = vmatprep.subr.mxu0 0.0
    %3263 = vmatpush1.xpose.msra.mxu0 0.0
    %3264 = vmatprep.subr.mxu0 0.0
    %3265 = vmatpush1.xpose.msra.mxu0 0.0
    %3266 = vmatprep.subr.mxu0 0.0
    %3267 = vmatpush1.xpose.msra.mxu0 0.0
    %3268 = vmatprep.subr.mxu0 0.0
    %3269 = vmatpush1.xpose.msra.mxu0 0.0
    %3270 = vmatprep.subr.mxu0 0.0
    %3271 = vmatpush1.xpose.msra.mxu0 0.0
    %3272 = vmatprep.subr.mxu0 0.0
    %3273 = vmatpush1.xpose.msra.mxu0 0.0
    %3274 = vmatprep.subr.mxu0 0.0
    %3275 = vmatpush1.xpose.msra.mxu0 0.0
    %3276 = vmatprep.subr.mxu0 0.0
    %3277 = vmatpush1.xpose.msra.mxu0 0.0
    %3278 = vmatprep.subr.mxu0 0.0
    %3279 = vmatpush1.xpose.msra.mxu0 0.0
    %3280 = vmatprep.subr.mxu0 0.0
    %3281 = vmatpush1.xpose.msra.mxu0 0.0
    %3282 = vmatprep.subr.mxu0 0.0
    %3283 = vmatpush1.xpose.msra.mxu0 0.0
    %3284 = vmatprep.subr.mxu0 0.0
    %3285 = vmatpush1.xpose.msra.mxu0 0.0
    %3286 = vmatprep.subr.mxu0 0.0
    %3287 = vmatpush1.xpose.msra.mxu0 0.0
    %3288 = vmatprep.subr.mxu0 0.0
    %3289 = vmatpush1.xpose.msra.mxu0 0.0
    %3290 = vmatprep.subr.mxu0 0.0
    %3291 = vmatpush1.xpose.msra.mxu0 0.0
    %3292 = vmatprep.subr.mxu0 0.0
    %3293 = vmatpush1.xpose.msra.mxu0 0.0
    %3294 = vmatprep.subr.mxu0 0.0
    %3295 = vmatpush1.xpose.msra.mxu0 0.0
    %3296 = vmatprep.subr.mxu0 0.0
    %3297 = vmatpush1.xpose.msra.mxu0 0.0
    %3298 = vmatprep.subr.mxu0 0.0
    %3299 = vmatpush1.xpose.msra.mxu0 0.0
    %3300 = vmatprep.subr.mxu0 0.0
    %3301 = vmatpush1.xpose.msra.mxu0 0.0
    %3302 = vmatprep.subr.mxu0 0.0
    %3303 = vmatpush1.xpose.msra.mxu0 0.0
    %3304 = vmatprep.subr.mxu0 0.0
    %3305 = vmatpush1.xpose.msra.mxu0 0.0
    %3306 = vmatprep.subr.mxu0 0.0
    %3307 = vmatpush1.xpose.msra.mxu0 0.0
    %3308 = vmatprep.subr.mxu0 0.0
    %3309 = vmatpush1.xpose.msra.mxu0 0.0
    %3310 = vmatprep.subr.mxu0 0.0
    %3311 = vmatpush1.xpose.msra.mxu0 0.0
    %3312 = vmatprep.mubr.f32.mxu0 0.0
    %3313 = vmatmul.mubr.f32.gmra.mrb[0].mxu0 %v3246
    %v3314 = vpop.f32.mrb[0].mxu0
    %v3315 = vadd.f32 0.0, %v3314
    %v3316 = vpop.f32.mrb[0].mxu0
    %3317 = vdwg.mxu0
    %v3318 = vsel %vm2578, %v3315, -inf
    %3319 = vmax.xlane.f32.xlu0 %v3318
    %v3320 = vpop.xlane.xlu0 %3319
    %v3321 = vsub.f32 %v3315, %v3320
    %v3322 = vmul.f32 %v3321, 1.442695
    %v3323 = vpow.pop %v3322
    %v3324 = vsel %vm2578, %v3323, 0.0
    %3325 = vadd.xlane.f32.xlu0 %v3324
    %v3326 = vpop.xlane.xlu0 %3325
    %v3327 = vrcp.pop %v3326
    %v3328 = vmul.f32 %v3323, %v3327
    %v3330 = vsel %vm2590, %v3328, 0
    %3332 = vmatprep.subr.mxu0 0.0
    %3333 = vmatpush1.msra.mxu0 %v2204
    %3334 = vmatprep.subr.mxu0 0.0
    %3335 = vmatpush1.msra.mxu0 0.0
    %3336 = vmatprep.subr.mxu0 0.0
    %3337 = vmatpush1.msra.mxu0 0.0
    %3338 = vmatprep.subr.mxu0 0.0
    %3339 = vmatpush1.msra.mxu0 0.0
    %3340 = vmatprep.subr.mxu0 0.0
    %3341 = vmatpush1.msra.mxu0 0.0
    %3342 = vmatprep.subr.mxu0 0.0
    %3343 = vmatpush1.msra.mxu0 0.0
    %3344 = vmatprep.subr.mxu0 0.0
    %3345 = vmatpush1.msra.mxu0 0.0
    %3346 = vmatprep.subr.mxu0 0.0
    %3347 = vmatpush1.msra.mxu0 0.0
    %3348 = vmatprep.subr.mxu0 0.0
    %3349 = vmatpush1.msra.mxu0 0.0
    %3350 = vmatprep.subr.mxu0 0.0
    %3351 = vmatpush1.msra.mxu0 0.0
    %3352 = vmatprep.subr.mxu0 0.0
    %3353 = vmatpush1.msra.mxu0 0.0
    %3354 = vmatprep.subr.mxu0 0.0
    %3355 = vmatpush1.msra.mxu0 0.0
    %3356 = vmatprep.subr.mxu0 0.0
    %3357 = vmatpush1.msra.mxu0 0.0
    %3358 = vmatprep.subr.mxu0 0.0
    %3359 = vmatpush1.msra.mxu0 0.0
    %3360 = vmatprep.subr.mxu0 0.0
    %3361 = vmatpush1.msra.mxu0 0.0
    %3362 = vmatprep.subr.mxu0 0.0
    %3363 = vmatpush1.msra.mxu0 0.0
    %3364 = vmatprep.subr.mxu0 0.0
    %3365 = vmatpush1.msra.mxu0 0.0
    %3366 = vmatprep.subr.mxu0 0.0
    %3367 = vmatpush1.msra.mxu0 0.0
    %3368 = vmatprep.subr.mxu0 0.0
    %3369 = vmatpush1.msra.mxu0 0.0
    %3370 = vmatprep.subr.mxu0 0.0
    %3371 = vmatpush1.msra.mxu0 0.0
    %3372 = vmatprep.subr.mxu0 0.0
    %3373 = vmatpush1.msra.mxu0 0.0
    %3374 = vmatprep.subr.mxu0 0.0
    %3375 = vmatpush1.msra.mxu0 0.0
    %3376 = vmatprep.subr.mxu0 0.0
    %3377 = vmatpush1.msra.mxu0 0.0
    %3378 = vmatprep.subr.mxu0 0.0
    %3379 = vmatpush1.msra.mxu0 0.0
    %3380 = vmatprep.subr.mxu0 0.0
    %3381 = vmatpush1.msra.mxu0 0.0
    %3382 = vmatprep.subr.mxu0 0.0
    %3383 = vmatpush1.msra.mxu0 0.0
    %3384 = vmatprep.subr.mxu0 0.0
    %3385 = vmatpush1.msra.mxu0 0.0
    %3386 = vmatprep.subr.mxu0 0.0
    %3387 = vmatpush1.msra.mxu0 0.0
    %3388 = vmatprep.subr.mxu0 0.0
    %3389 = vmatpush1.msra.mxu0 0.0
    %3390 = vmatprep.subr.mxu0 0.0
    %3391 = vmatpush1.msra.mxu0 0.0
    %3392 = vmatprep.subr.mxu0 0.0
    %3393 = vmatpush1.msra.mxu0 0.0
    %3394 = vmatprep.subr.mxu0 0.0
    %3395 = vmatpush1.msra.mxu0 0.0
    %3396 = vmatprep.mubr.f32.mxu0 0.0
    %3397 = vmatmul.mubr.f32.gmra.mrb[0].mxu0 %v3330
    %v3398 = vpop.f32.mrb[0].mxu0
    %v3399 = vadd.f32 0.0, %v3398
    %v3400 = vpop.f32.mrb[0].mxu0
    %3401 = vdwg.mxu0
    %v3403 = vsel %vm254, %v3399, 0
    %3405 = vmatprep.subr.mxu0 0.0
    %3406 = vmatpush1.msra.mxu0 %v2219
    %3407 = vmatprep.subr.mxu0 0.0
    %3408 = vmatpush1.msra.mxu0 %v2220
    %3409 = vmatprep.subr.mxu0 0.0
    %3410 = vmatpush1.msra.mxu0 %v2221
    %3411 = vmatprep.subr.mxu0 0.0
    %3412 = vmatpush1.msra.mxu0 %v2222
    %3413 = vmatprep.subr.mxu0 0.0
    %3414 = vmatpush1.msra.mxu0 0.0
    %3415 = vmatprep.subr.mxu0 0.0
    %3416 = vmatpush1.msra.mxu0 0.0
    %3417 = vmatprep.subr.mxu0 0.0
    %3418 = vmatpush1.msra.mxu0 0.0
    %3419 = vmatprep.subr.mxu0 0.0
    %3420 = vmatpush1.msra.mxu0 0.0
    %3421 = vmatprep.subr.mxu0 0.0
    %3422 = vmatpush1.msra.mxu0 0.0
    %3423 = vmatprep.subr.mxu0 0.0
    %3424 = vmatpush1.msra.mxu0 0.0
    %3425 = vmatprep.subr.mxu0 0.0
    %3426 = vmatpush1.msra.mxu0 0.0
    %3427 = vmatprep.subr.mxu0 0.0
    %3428 = vmatpush1.msra.mxu0 0.0
    %3429 = vmatprep.subr.mxu0 0.0
    %3430 = vmatpush1.msra.mxu0 0.0
    %3431 = vmatprep.subr.mxu0 0.0
    %3432 = vmatpush1.msra.mxu0 0.0
    %3433 = vmatprep.subr.mxu0 0.0
    %3434 = vmatpush1.msra.mxu0 0.0
    %3435 = vmatprep.subr.mxu0 0.0
    %3436 = vmatpush1.msra.mxu0 0.0
    %3437 = vmatprep.subr.mxu0 0.0
    %3438 = vmatpush1.msra.mxu0 0.0
    %3439 = vmatprep.subr.mxu0 0.0
    %3440 = vmatpush1.msra.mxu0 0.0
    %3441 = vmatprep.subr.mxu0 0.0
    %3442 = vmatpush1.msra.mxu0 0.0
    %3443 = vmatprep.subr.mxu0 0.0
    %3444 = vmatpush1.msra.mxu0 0.0
    %3445 = vmatprep.subr.mxu0 0.0
    %3446 = vmatpush1.msra.mxu0 0.0
    %3447 = vmatprep.subr.mxu0 0.0
    %3448 = vmatpush1.msra.mxu0 0.0
    %3449 = vmatprep.subr.mxu0 0.0
    %3450 = vmatpush1.msra.mxu0 0.0
    %3451 = vmatprep.subr.mxu0 0.0
    %3452 = vmatpush1.msra.mxu0 0.0
    %3453 = vmatprep.subr.mxu0 0.0
    %3454 = vmatpush1.msra.mxu0 0.0
    %3455 = vmatprep.subr.mxu0 0.0
    %3456 = vmatpush1.msra.mxu0 0.0
    %3457 = vmatprep.subr.mxu0 0.0
    %3458 = vmatpush1.msra.mxu0 0.0
    %3459 = vmatprep.subr.mxu0 0.0
    %3460 = vmatpush1.msra.mxu0 0.0
    %3461 = vmatprep.subr.mxu0 0.0
    %3462 = vmatpush1.msra.mxu0 0.0
    %3463 = vmatprep.subr.mxu0 0.0
    %3464 = vmatpush1.msra.mxu0 0.0
    %3465 = vmatprep.subr.mxu0 0.0
    %3466 = vmatpush1.msra.mxu0 0.0
    %3467 = vmatprep.subr.mxu0 0.0
    %3468 = vmatpush1.msra.mxu0 0.0
    %3469 = vmatprep.mubr.f32.mxu0 0.0
    %3470 = vmatmul.mubr.f32.gmra.mrb[0].mxu0 %v3403
    %v3471 = vpop.f32.mrb[0].mxu0
    %v3472 = vadd.f32 0.0, %v3471
    %v3473 = vpop.f32.mrb[0].mxu0
    %3474 = vdwg.mxu0
    %3475 = vmatprep.subr.mxu0 0.0
    %3476 = vmatpush1.msra.mxu0 %v2215
    %3477 = vmatprep.subr.mxu0 0.0
    %3478 = vmatpush1.msra.mxu0 %v2216
    %3479 = vmatprep.subr.mxu0 0.0
    %3480 = vmatpush1.msra.mxu0 %v2217
    %3481 = vmatprep.subr.mxu0 0.0
    %3482 = vmatpush1.msra.mxu0 %v2218
    %3483 = vmatprep.subr.mxu0 0.0
    %3484 = vmatpush1.msra.mxu0 0.0
    %3485 = vmatprep.subr.mxu0 0.0
    %3486 = vmatpush1.msra.mxu0 0.0
    %3487 = vmatprep.subr.mxu0 0.0
    %3488 = vmatpush1.msra.mxu0 0.0
    %3489 = vmatprep.subr.mxu0 0.0
    %3490 = vmatpush1.msra.mxu0 0.0
    %3491 = vmatprep.subr.mxu0 0.0
    %3492 = vmatpush1.msra.mxu0 0.0
    %3493 = vmatprep.subr.mxu0 0.0
    %3494 = vmatpush1.msra.mxu0 0.0
    %3495 = vmatprep.subr.mxu0 0.0
    %3496 = vmatpush1.msra.mxu0 0.0
    %3497 = vmatprep.subr.mxu0 0.0
    %3498 = vmatpush1.msra.mxu0 0.0
    %3499 = vmatprep.subr.mxu0 0.0
    %3500 = vmatpush1.msra.mxu0 0.0
    %3501 = vmatprep.subr.mxu0 0.0
    %3502 = vmatpush1.msra.mxu0 0.0
    %3503 = vmatprep.subr.mxu0 0.0
    %3504 = vmatpush1.msra.mxu0 0.0
    %3505 = vmatprep.subr.mxu0 0.0
    %3506 = vmatpush1.msra.mxu0 0.0
    %3507 = vmatprep.subr.mxu0 0.0
    %3508 = vmatpush1.msra.mxu0 0.0
    %3509 = vmatprep.subr.mxu0 0.0
    %3510 = vmatpush1.msra.mxu0 0.0
    %3511 = vmatprep.subr.mxu0 0.0
    %3512 = vmatpush1.msra.mxu0 0.0
    %3513 = vmatprep.subr.mxu0 0.0
    %3514 = vmatpush1.msra.mxu0 0.0
    %3515 = vmatprep.subr.mxu0 0.0
    %3516 = vmatpush1.msra.mxu0 0.0
    %3517 = vmatprep.subr.mxu0 0.0
    %3518 = vmatpush1.msra.mxu0 0.0
    %3519 = vmatprep.subr.mxu0 0.0
    %3520 = vmatpush1.msra.mxu0 0.0
    %3521 = vmatprep.subr.mxu0 0.0
    %3522 = vmatpush1.msra.mxu0 0.0
    %3523 = vmatprep.subr.mxu0 0.0
    %3524 = vmatpush1.msra.mxu0 0.0
    %3525 = vmatprep.subr.mxu0 0.0
    %3526 = vmatpush1.msra.mxu0 0.0
    %3527 = vmatprep.subr.mxu0 0.0
    %3528 = vmatpush1.msra.mxu0 0.0
    %3529 = vmatprep.subr.mxu0 0.0
    %3530 = vmatpush1.msra.mxu0 0.0
    %3531 = vmatprep.subr.mxu0 0.0
    %3532 = vmatpush1.msra.mxu0 0.0
    %3533 = vmatprep.subr.mxu0 0.0
    %3534 = vmatpush1.msra.mxu0 0.0
    %3535 = vmatprep.subr.mxu0 0.0
    %3536 = vmatpush1.msra.mxu0 0.0
    %3537 = vmatprep.subr.mxu0 0.0
    %3538 = vmatpush1.msra.mxu0 0.0
    %3539 = vmatprep.mubr.f32.mxu0 0.0
    %3540 = vmatmul.mubr.f32.gmra.mrb[0].mxu0 %v3246
    %v3541 = vpop.f32.mrb[0].mxu0
    %v3542 = vadd.f32 %v3472, %v3541
    %v3543 = vpop.f32.mrb[0].mxu0
    %3544 = vdwg.mxu0
    %v3545 = vadd.f32 %v3542, %v2223
    %v3546 = vtanh.pop %v3545
    %v3548 = vsel %vm254, %v3546, 0
    %3550 = vmatprep.subr.mxu0 0.0
    %3551 = vmatpush1.msra.mxu0 %v2224
    %3552 = vmatprep.subr.mxu0 0.0
    %3553 = vmatpush1.msra.mxu0 %v2225
    %3554 = vmatprep.subr.mxu0 0.0
    %3555 = vmatpush1.msra.mxu0 %v2226
    %3556 = vmatprep.subr.mxu0 0.0
    %3557 = vmatpush1.msra.mxu0 %v2227
    %3558 = vmatprep.subr.mxu0 0.0
    %3559 = vmatpush1.msra.mxu0 0.0
    %3560 = vmatprep.subr.mxu0 0.0
    %3561 = vmatpush1.msra.mxu0 0.0
    %3562 = vmatprep.subr.mxu0 0.0
    %3563 = vmatpush1.msra.mxu0 0.0
    %3564 = vmatprep.subr.mxu0 0.0
    %3565 = vmatpush1.msra.mxu0 0.0
    %3566 = vmatprep.subr.mxu0 0.0
    %3567 = vmatpush1.msra.mxu0 0.0
    %3568 = vmatprep.subr.mxu0 0.0
    %3569 = vmatpush1.msra.mxu0 0.0
    %3570 = vmatprep.subr.mxu0 0.0
    %3571 = vmatpush1.msra.mxu0 0.0
    %3572 = vmatprep.subr.mxu0 0.0
    %3573 = vmatpush1.msra.mxu0 0.0
    %3574 = vmatprep.subr.mxu0 0.0
    %3575 = vmatpush1.msra.mxu0 0.0
    %3576 = vmatprep.subr.mxu0 0.0
    %3577 = vmatpush1.msra.mxu0 0.0
    %3578 = vmatprep.subr.mxu0 0.0
    %3579 = vmatpush1.msra.mxu0 0.0
    %3580 = vmatprep.subr.mxu0 0.0
    %3581 = vmatpush1.msra.mxu0 0.0
    %3582 = vmatprep.subr.mxu0 0.0
    %3583 = vmatpush1.msra.mxu0 0.0
    %3584 = vmatprep.subr.mxu0 0.0
    %3585 = vmatpush1.msra.mxu0 0.0
    %3586 = vmatprep.subr.mxu0 0.0
    %3587 = vmatpush1.msra.mxu0 0.0
    %3588 = vmatprep.subr.mxu0 0.0
    %3589 = vmatpush1.msra.mxu0 0.0
    %3590 = vmatprep.subr.mxu0 0.0
    %3591 = vmatpush1.msra.mxu0 0.0
    %3592 = vmatprep.subr.mxu0 0.0
    %3593 = vmatpush1.msra.mxu0 0.0
    %3594 = vmatprep.subr.mxu0 0.0
    %3595 = vmatpush1.msra.mxu0 0.0
    %3596 = vmatprep.subr.mxu0 0.0
    %3597 = vmatpush1.msra.mxu0 0.0
    %3598 = vmatprep.subr.mxu0 0.0
    %3599 = vmatpush1.msra.mxu0 0.0
    %3600 = vmatprep.subr.mxu0 0.0
    %3601 = vmatpush1.msra.mxu0 0.0
    %3602 = vmatprep.subr.mxu0 0.0
    %3603 = vmatpush1.msra.mxu0 0.0
    %3604 = vmatprep.subr.mxu0 0.0
    %3605 = vmatpush1.msra.mxu0 0.0
    %3606 = vmatprep.subr.mxu0 0.0
    %3607 = vmatpush1.msra.mxu0 0.0
    %3608 = vmatprep.subr.mxu0 0.0
    %3609 = vmatpush1.msra.mxu0 0.0
    %3610 = vmatprep.subr.mxu0 0.0
    %3611 = vmatpush1.msra.mxu0 0.0
    %3612 = vmatprep.subr.mxu0 0.0
    %3613 = vmatpush1.msra.mxu0 0.0
    %3614 = vmatprep.mubr.f32.mxu0 0.0
    %3615 = vmatmul.mubr.f32.gmra.mrb[0].mxu0 %v3548
    %v3616 = vpop.f32.mrb[0].mxu0
    %v3617 = vadd.f32 %v2228, %v3616
    %v3618 = vpop.f32.mrb[0].mxu0
    %3619 = vdwg.mxu0
    %v3620 = vsel %vm2882, %v3617, -inf
    %3621 = vmax.xlane.f32.xlu0 %v3620
    %v3622 = vpop.xlane.xlu0 %3621
    %v3623 = vsub.f32 %v3617, %v3622
    %v3624 = vmul.f32 %v3623, 1.442695
    %v3625 = vpow.pop %v3624
    %v3626 = vsel %vm2882, %v3625, 0.0
    %3627 = vadd.xlane.f32.xlu0 %v3626
    %v3628 = vpop.xlane.xlu0 %3627
    %v3629 = vrcp.pop %v3628
    %v3630 = vmul.f32 %v3625, %v3629
    %s3631 = sld [smem:[#allocation8 + $0x1]]
    %v3633 = vsel %vm180, %v3630, 0
    %3635 = vmatprep.subr.mxu0 0.0
    %3636 = vmatpush1.msra.mxu0 %v2246
    %3637 = vmatprep.subr.mxu0 0.0
    %3638 = vmatpush1.msra.mxu0 %v2247
    %3639 = vmatprep.subr.mxu0 0.0
    %3640 = vmatpush1.msra.mxu0 %v2248
    %3641 = vmatprep.subr.mxu0 0.0
    %3642 = vmatpush1.msra.mxu0 %v2249
    %3643 = vmatprep.subr.mxu0 0.0
    %3644 = vmatpush1.msra.mxu0 %v2250
    %3645 = vmatprep.subr.mxu0 0.0
    %3646 = vmatpush1.msra.mxu0 %v2251
    %3647 = vmatprep.subr.mxu0 0.0
    %3648 = vmatpush1.msra.mxu0 %v2252
    %3649 = vmatprep.subr.mxu0 0.0
    %3650 = vmatpush1.msra.mxu0 %v2253
    %3651 = vmatprep.subr.mxu0 0.0
    %3652 = vmatpush1.msra.mxu0 0.0
    %3653 = vmatprep.subr.mxu0 0.0
    %3654 = vmatpush1.msra.mxu0 0.0
    %3655 = vmatprep.subr.mxu0 0.0
    %3656 = vmatpush1.msra.mxu0 0.0
    %3657 = vmatprep.subr.mxu0 0.0
    %3658 = vmatpush1.msra.mxu0 0.0
    %3659 = vmatprep.subr.mxu0 0.0
    %3660 = vmatpush1.msra.mxu0 0.0
    %3661 = vmatprep.subr.mxu0 0.0
    %3662 = vmatpush1.msra.mxu0 0.0
    %3663 = vmatprep.subr.mxu0 0.0
    %3664 = vmatpush1.msra.mxu0 0.0
    %3665 = vmatprep.subr.mxu0 0.0
    %3666 = vmatpush1.msra.mxu0 0.0
    %3667 = vmatprep.subr.mxu0 0.0
    %3668 = vmatpush1.msra.mxu0 0.0
    %3669 = vmatprep.subr.mxu0 0.0
    %3670 = vmatpush1.msra.mxu0 0.0
    %3671 = vmatprep.subr.mxu0 0.0
    %3672 = vmatpush1.msra.mxu0 0.0
    %3673 = vmatprep.subr.mxu0 0.0
    %3674 = vmatpush1.msra.mxu0 0.0
    %3675 = vmatprep.subr.mxu0 0.0
    %3676 = vmatpush1.msra.mxu0 0.0
    %3677 = vmatprep.subr.mxu0 0.0
    %3678 = vmatpush1.msra.mxu0 0.0
    %3679 = vmatprep.subr.mxu0 0.0
    %3680 = vmatpush1.msra.mxu0 0.0
    %3681 = vmatprep.subr.mxu0 0.0
    %3682 = vmatpush1.msra.mxu0 0.0
    %3683 = vmatprep.subr.mxu0 0.0
    %3684 = vmatpush1.msra.mxu0 0.0
    %3685 = vmatprep.subr.mxu0 0.0
    %3686 = vmatpush1.msra.mxu0 0.0
    %3687 = vmatprep.subr.mxu0 0.0
    %3688 = vmatpush1.msra.mxu0 0.0
    %3689 = vmatprep.subr.mxu0 0.0
    %3690 = vmatpush1.msra.mxu0 0.0
    %3691 = vmatprep.subr.mxu0 0.0
    %3692 = vmatpush1.msra.mxu0 0.0
    %3693 = vmatprep.subr.mxu0 0.0
    %3694 = vmatpush1.msra.mxu0 0.0
    %3695 = vmatprep.subr.mxu0 0.0
    %3696 = vmatpush1.msra.mxu0 0.0
    %3697 = vmatprep.subr.mxu0 0.0
    %3698 = vmatpush1.msra.mxu0 0.0
    %3699 = vmatprep.mubr.f32.mxu0 0.0
    %3700 = vmatmul.mubr.f32.gmra.mrb[0].mxu0 %v3633
    %v3701 = vpop.f32.mrb[0].mxu0
    %v3702 = vadd.f32 0.0, %v3701
    %v3703 = vpop.f32.mrb[0].mxu0
    %3704 = vdwg.mxu0
    %v3705 = vstv %s3631
    %vm3706 = vcmp.ge.f32.partialorder %v3705, %v3702
    %v3707 = vsel %vm3706, 1.0, 0.0
    %v3708 = vsel %vm2882, %v3707, 0.0
    %3709 = vadd.xlane.f32.xlu0 %v3708
    %v3710 = vpop.xlane.xlu0 %3709
    %v3711 = vrot.slane %v3710, 4
    %v3712 = vadd.f32 %v3710, %v3711
    %v3713 = vrot.slane %v3712, 2
    %v3714 = vadd.f32 %v3712, %v3713
    %v3715 = vrot.slane %v3714, 1
    %v3716 = vadd.f32 %v3714, %v3715
    %s3717 = vtos %v3716
    %s3718 = smin.f32 %s3717, 63.0
    %s3719 = scvt.f32.s32.to.zero.pseudo %s3718
    %v3720 = vstv %s3719
    %vm3721 = vcmp.eq.s32.totalorder %v165, %v3720
    %v3722 = vsel %vm3721, 1.0, 0.0
    %v3723 = vmul.f32 %v3630, %v3722
    %v3724 = vsel %vm2882, %v3723, 0.0
    %3725 = vadd.xlane.f32.xlu0 %v3724
    %v3726 = vpop.xlane.xlu0 %3725
    %v3727 = vrot.slane %v3726, 4
    %v3728 = vadd.f32 %v3726, %v3727
    %v3729 = vrot.slane %v3728, 2
    %v3730 = vadd.f32 %v3728, %v3729
    %v3731 = vrot.slane %v3730, 1
    %v3732 = vadd.f32 %v3730, %v3731
    %s3733 = vtos %v3732
    %s3734 = scalar_lea.smem [#allocation18], 1
    %3735 = sst [smem:[%s3734]] %s3719
    %s3736 = scalar_lea.smem [#allocation19], 1
    %3737 = sst [smem:[%s3736]] %s3733
    %v3739 = vsel %vm180, %v3722, 0
    %3741 = vmatprep.subr.mxu0 0.0
    %3742 = vmatpush1.msra.mxu0 %v156
    %3743 = vmatprep.subr.mxu0 0.0
    %3744 = vmatpush1.msra.mxu0 %v157
    %3745 = vmatprep.subr.mxu0 0.0
    %3746 = vmatpush1.msra.mxu0 %v158
    %3747 = vmatprep.subr.mxu0 0.0
    %3748 = vmatpush1.msra.mxu0 %v159
    %3749 = vmatprep.subr.mxu0 0.0
    %3750 = vmatpush1.msra.mxu0 %v160
    %3751 = vmatprep.subr.mxu0 0.0
    %3752 = vmatpush1.msra.mxu0 %v161
    %3753 = vmatprep.subr.mxu0 0.0
    %3754 = vmatpush1.msra.mxu0 %v162
    %3755 = vmatprep.subr.mxu0 0.0
    %3756 = vmatpush1.msra.mxu0 %v163
    %3757 = vmatprep.subr.mxu0 0.0
    %3758 = vmatpush1.msra.mxu0 0.0
    %3759 = vmatprep.subr.mxu0 0.0
    %3760 = vmatpush1.msra.mxu0 0.0
    %3761 = vmatprep.subr.mxu0 0.0
    %3762 = vmatpush1.msra.mxu0 0.0
    %3763 = vmatprep.subr.mxu0 0.0
    %3764 = vmatpush1.msra.mxu0 0.0
    %3765 = vmatprep.subr.mxu0 0.0
    %3766 = vmatpush1.msra.mxu0 0.0
    %3767 = vmatprep.subr.mxu0 0.0
    %3768 = vmatpush1.msra.mxu0 0.0
    %3769 = vmatprep.subr.mxu0 0.0
    %3770 = vmatpush1.msra.mxu0 0.0
    %3771 = vmatprep.subr.mxu0 0.0
    %3772 = vmatpush1.msra.mxu0 0.0
    %3773 = vmatprep.subr.mxu0 0.0
    %3774 = vmatpush1.msra.mxu0 0.0
    %3775 = vmatprep.subr.mxu0 0.0
    %3776 = vmatpush1.msra.mxu0 0.0
    %3777 = vmatprep.subr.mxu0 0.0
    %3778 = vmatpush1.msra.mxu0 0.0
    %3779 = vmatprep.subr.mxu0 0.0
    %3780 = vmatpush1.msra.mxu0 0.0
    %3781 = vmatprep.subr.mxu0 0.0
    %3782 = vmatpush1.msra.mxu0 0.0
    %3783 = vmatprep.subr.mxu0 0.0
    %3784 = vmatpush1.msra.mxu0 0.0
    %3785 = vmatprep.subr.mxu0 0.0
    %3786 = vmatpush1.msra.mxu0 0.0
    %3787 = vmatprep.subr.mxu0 0.0
    %3788 = vmatpush1.msra.mxu0 0.0
    %3789 = vmatprep.subr.mxu0 0.0
    %3790 = vmatpush1.msra.mxu0 0.0
    %3791 = vmatprep.subr.mxu0 0.0
    %3792 = vmatpush1.msra.mxu0 0.0
    %3793 = vmatprep.subr.mxu0 0.0
    %3794 = vmatpush1.msra.mxu0 0.0
    %3795 = vmatprep.subr.mxu0 0.0
    %3796 = vmatpush1.msra.mxu0 0.0
    %3797 = vmatprep.subr.mxu0 0.0
    %3798 = vmatpush1.msra.mxu0 0.0
    %3799 = vmatprep.subr.mxu0 0.0
    %3800 = vmatpush1.msra.mxu0 0.0
    %3801 = vmatprep.subr.mxu0 0.0
    %3802 = vmatpush1.msra.mxu0 0.0
    %3803 = vmatprep.subr.mxu0 0.0
    %3804 = vmatpush1.msra.mxu0 0.0
    %3805 = vmatprep.mubr.f32.mxu0 0.0
    %3806 = vmatmul.mubr.f32.gmra.mrb[0].mxu0 %v3739
    %v3807 = vpop.f32.mrb[0].mxu0
    %v3808 = vadd.f32 0.0, %v3807
    %v3809 = vpop.f32.mrb[0].mxu0
    %3810 = vdwg.mxu0
    %v3812 = vsel %vm254, %v3808, 0
    %3814 = vmatprep.subr.mxu0 0.0
    %3815 = vmatpush1.msra.mxu0 %v2205
    %3816 = vmatprep.subr.mxu0 0.0
    %3817 = vmatpush1.msra.mxu0 %v2206
    %3818 = vmatprep.subr.mxu0 0.0
    %3819 = vmatpush1.msra.mxu0 %v2207
    %3820 = vmatprep.subr.mxu0 0.0
    %3821 = vmatpush1.msra.mxu0 %v2208
    %3822 = vmatprep.subr.mxu0 0.0
    %3823 = vmatpush1.msra.mxu0 0.0
    %3824 = vmatprep.subr.mxu0 0.0
    %3825 = vmatpush1.msra.mxu0 0.0
    %3826 = vmatprep.subr.mxu0 0.0
    %3827 = vmatpush1.msra.mxu0 0.0
    %3828 = vmatprep.subr.mxu0 0.0
    %3829 = vmatpush1.msra.mxu0 0.0
    %3830 = vmatprep.subr.mxu0 0.0
    %3831 = vmatpush1.msra.mxu0 0.0
    %3832 = vmatprep.subr.mxu0 0.0
    %3833 = vmatpush1.msra.mxu0 0.0
    %3834 = vmatprep.subr.mxu0 0.0
    %3835 = vmatpush1.msra.mxu0 0.0
    %3836 = vmatprep.subr.mxu0 0.0
    %3837 = vmatpush1.msra.mxu0 0.0
    %3838 = vmatprep.subr.mxu0 0.0
    %3839 = vmatpush1.msra.mxu0 0.0
    %3840 = vmatprep.subr.mxu0 0.0
    %3841 = vmatpush1.msra.mxu0 0.0
    %3842 = vmatprep.subr.mxu0 0.0
    %3843 = vmatpush1.msra.mxu0 0.0
    %3844 = vmatprep.subr.mxu0 0.0
    %3845 = vmatpush1.msra.mxu0 0.0
    %3846 = vmatprep.subr.mxu0 0.0
    %3847 = vmatpush1.msra.mxu0 0.0
    %3848 = vmatprep.subr.mxu0 0.0
    %3849 = vmatpush1.msra.mxu0 0.0
    %3850 = vmatprep.subr.mxu0 0.0
    %3851 = vmatpush1.msra.mxu0 0.0
    %3852 = vmatprep.subr.mxu0 0.0
    %3853 = vmatpush1.msra.mxu0 0.0
    %3854 = vmatprep.subr.mxu0 0.0
    %3855 = vmatpush1.msra.mxu0 0.0
    %3856 = vmatprep.subr.mxu0 0.0
    %3857 = vmatpush1.msra.mxu0 0.0
    %3858 = vmatprep.subr.mxu0 0.0
    %3859 = vmatpush1.msra.mxu0 0.0
    %3860 = vmatprep.subr.mxu0 0.0
    %3861 = vmatpush1.msra.mxu0 0.0
    %3862 = vmatprep.subr.mxu0 0.0
    %3863 = vmatpush1.msra.mxu0 0.0
    %3864 = vmatprep.subr.mxu0 0.0
    %3865 = vmatpush1.msra.mxu0 0.0
    %3866 = vmatprep.subr.mxu0 0.0
    %3867 = vmatpush1.msra.mxu0 0.0
    %3868 = vmatprep.subr.mxu0 0.0
    %3869 = vmatpush1.msra.mxu0 0.0
    %3870 = vmatprep.subr.mxu0 0.0
    %3871 = vmatpush1.msra.mxu0 0.0
    %3872 = vmatprep.subr.mxu0 0.0
    %3873 = vmatpush1.msra.mxu0 0.0
    %3874 = vmatprep.subr.mxu0 0.0
    %3875 = vmatpush1.msra.mxu0 0.0
    %3876 = vmatprep.subr.mxu0 0.0
    %3877 = vmatpush1.msra.mxu0 0.0
    %3878 = vmatprep.mubr.f32.mxu0 0.0
    %3879 = vmatmul.mubr.f32.gmra.mrb[0].mxu0 %v3812
    %v3880 = vpop.f32.mrb[0].mxu0
    %v3881 = vadd.f32 %v2213, %v3880
    %v3882 = vpop.f32.mrb[0].mxu0
    %3883 = vdwg.mxu0
    %3884 = vmatprep.subr.mxu0 0.0
    %3885 = vmatpush1.msra.mxu0 %v2209
    %3886 = vmatprep.subr.mxu0 0.0
    %3887 = vmatpush1.msra.mxu0 %v2210
    %3888 = vmatprep.subr.mxu0 0.0
    %3889 = vmatpush1.msra.mxu0 %v2211
    %3890 = vmatprep.subr.mxu0 0.0
    %3891 = vmatpush1.msra.mxu0 %v2212
    %3892 = vmatprep.subr.mxu0 0.0
    %3893 = vmatpush1.msra.mxu0 0.0
    %3894 = vmatprep.subr.mxu0 0.0
    %3895 = vmatpush1.msra.mxu0 0.0
    %3896 = vmatprep.subr.mxu0 0.0
    %3897 = vmatpush1.msra.mxu0 0.0
    %3898 = vmatprep.subr.mxu0 0.0
    %3899 = vmatpush1.msra.mxu0 0.0
    %3900 = vmatprep.subr.mxu0 0.0
    %3901 = vmatpush1.msra.mxu0 0.0
    %3902 = vmatprep.subr.mxu0 0.0
    %3903 = vmatpush1.msra.mxu0 0.0
    %3904 = vmatprep.subr.mxu0 0.0
    %3905 = vmatpush1.msra.mxu0 0.0
    %3906 = vmatprep.subr.mxu0 0.0
    %3907 = vmatpush1.msra.mxu0 0.0
    %3908 = vmatprep.subr.mxu0 0.0
    %3909 = vmatpush1.msra.mxu0 0.0
    %3910 = vmatprep.subr.mxu0 0.0
    %3911 = vmatpush1.msra.mxu0 0.0
    %3912 = vmatprep.subr.mxu0 0.0
    %3913 = vmatpush1.msra.mxu0 0.0
    %3914 = vmatprep.subr.mxu0 0.0
    %3915 = vmatpush1.msra.mxu0 0.0
    %3916 = vmatprep.subr.mxu0 0.0
    %3917 = vmatpush1.msra.mxu0 0.0
    %3918 = vmatprep.subr.mxu0 0.0
    %3919 = vmatpush1.msra.mxu0 0.0
    %3920 = vmatprep.subr.mxu0 0.0
    %3921 = vmatpush1.msra.mxu0 0.0
    %3922 = vmatprep.subr.mxu0 0.0
    %3923 = vmatpush1.msra.mxu0 0.0
    %3924 = vmatprep.subr.mxu0 0.0
    %3925 = vmatpush1.msra.mxu0 0.0
    %3926 = vmatprep.subr.mxu0 0.0
    %3927 = vmatpush1.msra.mxu0 0.0
    %3928 = vmatprep.subr.mxu0 0.0
    %3929 = vmatpush1.msra.mxu0 0.0
    %3930 = vmatprep.subr.mxu0 0.0
    %3931 = vmatpush1.msra.mxu0 0.0
    %3932 = vmatprep.subr.mxu0 0.0
    %3933 = vmatpush1.msra.mxu0 0.0
    %3934 = vmatprep.subr.mxu0 0.0
    %3935 = vmatpush1.msra.mxu0 0.0
    %3936 = vmatprep.subr.mxu0 0.0
    %3937 = vmatpush1.msra.mxu0 0.0
    %3938 = vmatprep.subr.mxu0 0.0
    %3939 = vmatpush1.msra.mxu0 0.0
    %3940 = vmatprep.subr.mxu0 0.0
    %3941 = vmatpush1.msra.mxu0 0.0
    %3942 = vmatprep.subr.mxu0 0.0
    %3943 = vmatpush1.msra.mxu0 0.0
    %3944 = vmatprep.subr.mxu0 0.0
    %3945 = vmatpush1.msra.mxu0 0.0
    %3946 = vmatprep.subr.mxu0 0.0
    %3947 = vmatpush1.msra.mxu0 0.0
    %3948 = vmatprep.mubr.f32.mxu0 0.0
    %3949 = vmatmul.mubr.f32.gmra.mrb[0].mxu0 %v3246
    %v3950 = vpop.f32.mrb[0].mxu0
    %v3951 = vadd.f32 %v2214, %v3950
    %v3952 = vpop.f32.mrb[0].mxu0
    %3953 = vdwg.mxu0
    %v3954 = vadd.f32 %v3881, %v3951
    %v3955 = vxor.u32 %v3954, 2147483648
    %v3956 = vmul.f32 %v3955, 1.442695
    %v3957 = vpow.pop %v3956
    %v3958 = vadd.f32 %v3957, 1.0
    %v3959 = vrcp.pop %v3958
    %v3960 = vmul.f32 1.0, %v3959
    %3962 = vrot.lane.b32.xlu0 %v3951, 64
    %v3963 = vpop.permute.xlu0 %3962
    %v3965 = vmul.f32 %v3960, %v3963
    %3967 = vrot.lane.b32.xlu0 %v3965, 64
    %v3968 = vpop.permute.xlu0 %3967
    %v3970 = vadd.f32 %v3881, %v3968
    %v3971 = vtanh.pop %v3970
    %v3972 = vsub.f32 1.0, %v3960
    %3974 = vrot.lane.b32.xlu0 %v3971, 96
    %v3975 = vpop.permute.xlu0 %3974
    %v3977 = vmul.f32 %v3972, %v3975
    %v3978 = vmul.f32 %v3960, %v3242
    %v3979 = vadd.f32 %v3977, %v3978
    %3981 = vrot.lane.b32.xlu0 %v3979, 96
    %v3982 = vpop.permute.xlu0 %3981
    %v3983 = vsel %vm254, %v3982, 0
    %3985 = vmatprep.subr.mxu0 0.0
    %3986 = vmatpush1.xpose.msra.mxu0 %v2506
    %3987 = vmatprep.subr.mxu0 0.0
    %3988 = vmatpush1.xpose.msra.mxu0 0.0
    %3989 = vmatprep.subr.mxu0 0.0
    %3990 = vmatpush1.xpose.msra.mxu0 0.0
    %3991 = vmatprep.subr.mxu0 0.0
    %3992 = vmatpush1.xpose.msra.mxu0 0.0
    %3993 = vmatprep.subr.mxu0 0.0
    %3994 = vmatpush1.xpose.msra.mxu0 0.0
    %3995 = vmatprep.subr.mxu0 0.0
    %3996 = vmatpush1.xpose.msra.mxu0 0.0
    %3997 = vmatprep.subr.mxu0 0.0
    %3998 = vmatpush1.xpose.msra.mxu0 0.0
    %3999 = vmatprep.subr.mxu0 0.0
    %4000 = vmatpush1.xpose.msra.mxu0 0.0
    %4001 = vmatprep.subr.mxu0 0.0
    %4002 = vmatpush1.xpose.msra.mxu0 0.0
    %4003 = vmatprep.subr.mxu0 0.0
    %4004 = vmatpush1.xpose.msra.mxu0 0.0
    %4005 = vmatprep.subr.mxu0 0.0
    %4006 = vmatpush1.xpose.msra.mxu0 0.0
    %4007 = vmatprep.subr.mxu0 0.0
    %4008 = vmatpush1.xpose.msra.mxu0 0.0
    %4009 = vmatprep.subr.mxu0 0.0
    %4010 = vmatpush1.xpose.msra.mxu0 0.0
    %4011 = vmatprep.subr.mxu0 0.0
    %4012 = vmatpush1.xpose.msra.mxu0 0.0
    %4013 = vmatprep.subr.mxu0 0.0
    %4014 = vmatpush1.xpose.msra.mxu0 0.0
    %4015 = vmatprep.subr.mxu0 0.0
    %4016 = vmatpush1.xpose.msra.mxu0 0.0
    %4017 = vmatprep.subr.mxu0 0.0
    %4018 = vmatpush1.xpose.msra.mxu0 0.0
    %4019 = vmatprep.subr.mxu0 0.0
    %4020 = vmatpush1.xpose.msra.mxu0 0.0
    %4021 = vmatprep.subr.mxu0 0.0
    %4022 = vmatpush1.xpose.msra.mxu0 0.0
    %4023 = vmatprep.subr.mxu0 0.0
    %4024 = vmatpush1.xpose.msra.mxu0 0.0
    %4025 = vmatprep.subr.mxu0 0.0
    %4026 = vmatpush1.xpose.msra.mxu0 0.0
    %4027 = vmatprep.subr.mxu0 0.0
    %4028 = vmatpush1.xpose.msra.mxu0 0.0
    %4029 = vmatprep.subr.mxu0 0.0
    %4030 = vmatpush1.xpose.msra.mxu0 0.0
    %4031 = vmatprep.subr.mxu0 0.0
    %4032 = vmatpush1.xpose.msra.mxu0 0.0
    %4033 = vmatprep.subr.mxu0 0.0
    %4034 = vmatpush1.xpose.msra.mxu0 0.0
    %4035 = vmatprep.subr.mxu0 0.0
    %4036 = vmatpush1.xpose.msra.mxu0 0.0
    %4037 = vmatprep.subr.mxu0 0.0
    %4038 = vmatpush1.xpose.msra.mxu0 0.0
    %4039 = vmatprep.subr.mxu0 0.0
    %4040 = vmatpush1.xpose.msra.mxu0 0.0
    %4041 = vmatprep.subr.mxu0 0.0
    %4042 = vmatpush1.xpose.msra.mxu0 0.0
    %4043 = vmatprep.subr.mxu0 0.0
    %4044 = vmatpush1.xpose.msra.mxu0 0.0
    %4045 = vmatprep.subr.mxu0 0.0
    %4046 = vmatpush1.xpose.msra.mxu0 0.0
    %4047 = vmatprep.subr.mxu0 0.0
    %4048 = vmatpush1.xpose.msra.mxu0 0.0
    %4049 = vmatprep.mubr.f32.mxu0 0.0
    %4050 = vmatmul.mubr.f32.gmra.mrb[0].mxu0 %v3983
    %v4051 = vpop.f32.mrb[0].mxu0
    %v4052 = vadd.f32 0.0, %v4051
    %v4053 = vpop.f32.mrb[0].mxu0
    %4054 = vdwg.mxu0
    %v4055 = vsel %vm2578, %v4052, -inf
    %4056 = vmax.xlane.f32.xlu0 %v4055
    %v4057 = vpop.xlane.xlu0 %4056
    %v4058 = vsub.f32 %v4052, %v4057
    %v4059 = vmul.f32 %v4058, 1.442695
    %v4060 = vpow.pop %v4059
    %v4061 = vsel %vm2578, %v4060, 0.0
    %4062 = vadd.xlane.f32.xlu0 %v4061
    %v4063 = vpop.xlane.xlu0 %4062
    %v4064 = vrcp.pop %v4063
    %v4065 = vmul.f32 %v4060, %v4064
    %v4067 = vsel %vm2590, %v4065, 0
    %4069 = vmatprep.subr.mxu0 0.0
    %4070 = vmatpush1.msra.mxu0 %v2204
    %4071 = vmatprep.subr.mxu0 0.0
    %4072 = vmatpush1.msra.mxu0 0.0
    %4073 = vmatprep.subr.mxu0 0.0
    %4074 = vmatpush1.msra.mxu0 0.0
    %4075 = vmatprep.subr.mxu0 0.0
    %4076 = vmatpush1.msra.mxu0 0.0
    %4077 = vmatprep.subr.mxu0 0.0
    %4078 = vmatpush1.msra.mxu0 0.0
    %4079 = vmatprep.subr.mxu0 0.0
    %4080 = vmatpush1.msra.mxu0 0.0
    %4081 = vmatprep.subr.mxu0 0.0
    %4082 = vmatpush1.msra.mxu0 0.0
    %4083 = vmatprep.subr.mxu0 0.0
    %4084 = vmatpush1.msra.mxu0 0.0
    %4085 = vmatprep.subr.mxu0 0.0
    %4086 = vmatpush1.msra.mxu0 0.0
    %4087 = vmatprep.subr.mxu0 0.0
    %4088 = vmatpush1.msra.mxu0 0.0
    %4089 = vmatprep.subr.mxu0 0.0
    %4090 = vmatpush1.msra.mxu0 0.0
    %4091 = vmatprep.subr.mxu0 0.0
    %4092 = vmatpush1.msra.mxu0 0.0
    %4093 = vmatprep.subr.mxu0 0.0
    %4094 = vmatpush1.msra.mxu0 0.0
    %4095 = vmatprep.subr.mxu0 0.0
    %4096 = vmatpush1.msra.mxu0 0.0
    %4097 = vmatprep.subr.mxu0 0.0
    %4098 = vmatpush1.msra.mxu0 0.0
    %4099 = vmatprep.subr.mxu0 0.0
    %4100 = vmatpush1.msra.mxu0 0.0
    %4101 = vmatprep.subr.mxu0 0.0
    %4102 = vmatpush1.msra.mxu0 0.0
    %4103 = vmatprep.subr.mxu0 0.0
    %4104 = vmatpush1.msra.mxu0 0.0
    %4105 = vmatprep.subr.mxu0 0.0
    %4106 = vmatpush1.msra.mxu0 0.0
    %4107 = vmatprep.subr.mxu0 0.0
    %4108 = vmatpush1.msra.mxu0 0.0
    %4109 = vmatprep.subr.mxu0 0.0
    %4110 = vmatpush1.msra.mxu0 0.0
    %4111 = vmatprep.subr.mxu0 0.0
    %4112 = vmatpush1.msra.mxu0 0.0
    %4113 = vmatprep.subr.mxu0 0.0
    %4114 = vmatpush1.msra.mxu0 0.0
    %4115 = vmatprep.subr.mxu0 0.0
    %4116 = vmatpush1.msra.mxu0 0.0
    %4117 = vmatprep.subr.mxu0 0.0
    %4118 = vmatpush1.msra.mxu0 0.0
    %4119 = vmatprep.subr.mxu0 0.0
    %4120 = vmatpush1.msra.mxu0 0.0
    %4121 = vmatprep.subr.mxu0 0.0
    %4122 = vmatpush1.msra.mxu0 0.0
    %4123 = vmatprep.subr.mxu0 0.0
    %4124 = vmatpush1.msra.mxu0 0.0
    %4125 = vmatprep.subr.mxu0 0.0
    %4126 = vmatpush1.msra.mxu0 0.0
    %4127 = vmatprep.subr.mxu0 0.0
    %4128 = vmatpush1.msra.mxu0 0.0
    %4129 = vmatprep.subr.mxu0 0.0
    %4130 = vmatpush1.msra.mxu0 0.0
    %4131 = vmatprep.subr.mxu0 0.0
    %4132 = vmatpush1.msra.mxu0 0.0
    %4133 = vmatprep.mubr.f32.mxu0 0.0
    %4134 = vmatmul.mubr.f32.gmra.mrb[0].mxu0 %v4067
    %v4135 = vpop.f32.mrb[0].mxu0
    %v4136 = vadd.f32 0.0, %v4135
    %v4137 = vpop.f32.mrb[0].mxu0
    %4138 = vdwg.mxu0
    %v4140 = vsel %vm254, %v4136, 0
    %4142 = vmatprep.subr.mxu0 0.0
    %4143 = vmatpush1.msra.mxu0 %v2219
    %4144 = vmatprep.subr.mxu0 0.0
    %4145 = vmatpush1.msra.mxu0 %v2220
    %4146 = vmatprep.subr.mxu0 0.0
    %4147 = vmatpush1.msra.mxu0 %v2221
    %4148 = vmatprep.subr.mxu0 0.0
    %4149 = vmatpush1.msra.mxu0 %v2222
    %4150 = vmatprep.subr.mxu0 0.0
    %4151 = vmatpush1.msra.mxu0 0.0
    %4152 = vmatprep.subr.mxu0 0.0
    %4153 = vmatpush1.msra.mxu0 0.0
    %4154 = vmatprep.subr.mxu0 0.0
    %4155 = vmatpush1.msra.mxu0 0.0
    %4156 = vmatprep.subr.mxu0 0.0
    %4157 = vmatpush1.msra.mxu0 0.0
    %4158 = vmatprep.subr.mxu0 0.0
    %4159 = vmatpush1.msra.mxu0 0.0
    %4160 = vmatprep.subr.mxu0 0.0
    %4161 = vmatpush1.msra.mxu0 0.0
    %4162 = vmatprep.subr.mxu0 0.0
    %4163 = vmatpush1.msra.mxu0 0.0
    %4164 = vmatprep.subr.mxu0 0.0
    %4165 = vmatpush1.msra.mxu0 0.0
    %4166 = vmatprep.subr.mxu0 0.0
    %4167 = vmatpush1.msra.mxu0 0.0
    %4168 = vmatprep.subr.mxu0 0.0
    %4169 = vmatpush1.msra.mxu0 0.0
    %4170 = vmatprep.subr.mxu0 0.0
    %4171 = vmatpush1.msra.mxu0 0.0
    %4172 = vmatprep.subr.mxu0 0.0
    %4173 = vmatpush1.msra.mxu0 0.0
    %4174 = vmatprep.subr.mxu0 0.0
    %4175 = vmatpush1.msra.mxu0 0.0
    %4176 = vmatprep.subr.mxu0 0.0
    %4177 = vmatpush1.msra.mxu0 0.0
    %4178 = vmatprep.subr.mxu0 0.0
    %4179 = vmatpush1.msra.mxu0 0.0
    %4180 = vmatprep.subr.mxu0 0.0
    %4181 = vmatpush1.msra.mxu0 0.0
    %4182 = vmatprep.subr.mxu0 0.0
    %4183 = vmatpush1.msra.mxu0 0.0
    %4184 = vmatprep.subr.mxu0 0.0
    %4185 = vmatpush1.msra.mxu0 0.0
    %4186 = vmatprep.subr.mxu0 0.0
    %4187 = vmatpush1.msra.mxu0 0.0
    %4188 = vmatprep.subr.mxu0 0.0
    %4189 = vmatpush1.msra.mxu0 0.0
    %4190 = vmatprep.subr.mxu0 0.0
    %4191 = vmatpush1.msra.mxu0 0.0
    %4192 = vmatprep.subr.mxu0 0.0
    %4193 = vmatpush1.msra.mxu0 0.0
    %4194 = vmatprep.subr.mxu0 0.0
    %4195 = vmatpush1.msra.mxu0 0.0
    %4196 = vmatprep.subr.mxu0 0.0
    %4197 = vmatpush1.msra.mxu0 0.0
    %4198 = vmatprep.subr.mxu0 0.0
    %4199 = vmatpush1.msra.mxu0 0.0
    %4200 = vmatprep.subr.mxu0 0.0
    %4201 = vmatpush1.msra.mxu0 0.0
    %4202 = vmatprep.subr.mxu0 0.0
    %4203 = vmatpush1.msra.mxu0 0.0
    %4204 = vmatprep.subr.mxu0 0.0
    %4205 = vmatpush1.msra.mxu0 0.0
    %4206 = vmatprep.mubr.f32.mxu0 0.0
    %4207 = vmatmul.mubr.f32.gmra.mrb[0].mxu0 %v4140
    %v4208 = vpop.f32.mrb[0].mxu0
    %v4209 = vadd.f32 0.0, %v4208
    %v4210 = vpop.f32.mrb[0].mxu0
    %4211 = vdwg.mxu0
    %4212 = vmatprep.subr.mxu0 0.0
    %4213 = vmatpush1.msra.mxu0 %v2215
    %4214 = vmatprep.subr.mxu0 0.0
    %4215 = vmatpush1.msra.mxu0 %v2216
    %4216 = vmatprep.subr.mxu0 0.0
    %4217 = vmatpush1.msra.mxu0 %v2217
    %4218 = vmatprep.subr.mxu0 0.0
    %4219 = vmatpush1.msra.mxu0 %v2218
    %4220 = vmatprep.subr.mxu0 0.0
    %4221 = vmatpush1.msra.mxu0 0.0
    %4222 = vmatprep.subr.mxu0 0.0
    %4223 = vmatpush1.msra.mxu0 0.0
    %4224 = vmatprep.subr.mxu0 0.0
    %4225 = vmatpush1.msra.mxu0 0.0
    %4226 = vmatprep.subr.mxu0 0.0
    %4227 = vmatpush1.msra.mxu0 0.0
    %4228 = vmatprep.subr.mxu0 0.0
    %4229 = vmatpush1.msra.mxu0 0.0
    %4230 = vmatprep.subr.mxu0 0.0
    %4231 = vmatpush1.msra.mxu0 0.0
    %4232 = vmatprep.subr.mxu0 0.0
    %4233 = vmatpush1.msra.mxu0 0.0
    %4234 = vmatprep.subr.mxu0 0.0
    %4235 = vmatpush1.msra.mxu0 0.0
    %4236 = vmatprep.subr.mxu0 0.0
    %4237 = vmatpush1.msra.mxu0 0.0
    %4238 = vmatprep.subr.mxu0 0.0
    %4239 = vmatpush1.msra.mxu0 0.0
    %4240 = vmatprep.subr.mxu0 0.0
    %4241 = vmatpush1.msra.mxu0 0.0
    %4242 = vmatprep.subr.mxu0 0.0
    %4243 = vmatpush1.msra.mxu0 0.0
    %4244 = vmatprep.subr.mxu0 0.0
    %4245 = vmatpush1.msra.mxu0 0.0
    %4246 = vmatprep.subr.mxu0 0.0
    %4247 = vmatpush1.msra.mxu0 0.0
    %4248 = vmatprep.subr.mxu0 0.0
    %4249 = vmatpush1.msra.mxu0 0.0
    %4250 = vmatprep.subr.mxu0 0.0
    %4251 = vmatpush1.msra.mxu0 0.0
    %4252 = vmatprep.subr.mxu0 0.0
    %4253 = vmatpush1.msra.mxu0 0.0
    %4254 = vmatprep.subr.mxu0 0.0
    %4255 = vmatpush1.msra.mxu0 0.0
    %4256 = vmatprep.subr.mxu0 0.0
    %4257 = vmatpush1.msra.mxu0 0.0
    %4258 = vmatprep.subr.mxu0 0.0
    %4259 = vmatpush1.msra.mxu0 0.0
    %4260 = vmatprep.subr.mxu0 0.0
    %4261 = vmatpush1.msra.mxu0 0.0
    %4262 = vmatprep.subr.mxu0 0.0
    %4263 = vmatpush1.msra.mxu0 0.0
    %4264 = vmatprep.subr.mxu0 0.0
    %4265 = vmatpush1.msra.mxu0 0.0
    %4266 = vmatprep.subr.mxu0 0.0
    %4267 = vmatpush1.msra.mxu0 0.0
    %4268 = vmatprep.subr.mxu0 0.0
    %4269 = vmatpush1.msra.mxu0 0.0
    %4270 = vmatprep.subr.mxu0 0.0
    %4271 = vmatpush1.msra.mxu0 0.0
    %4272 = vmatprep.subr.mxu0 0.0
    %4273 = vmatpush1.msra.mxu0 0.0
    %4274 = vmatprep.subr.mxu0 0.0
    %4275 = vmatpush1.msra.mxu0 0.0
    %4276 = vmatprep.mubr.f32.mxu0 0.0
    %4277 = vmatmul.mubr.f32.gmra.mrb[0].mxu0 %v3983
    %v4278 = vpop.f32.mrb[0].mxu0
    %v4279 = vadd.f32 %v4209, %v4278
    %v4280 = vpop.f32.mrb[0].mxu0
    %4281 = vdwg.mxu0
    %v4282 = vadd.f32 %v4279, %v2223
    %v4283 = vtanh.pop %v4282
    %v4285 = vsel %vm254, %v4283, 0
    %4287 = vmatprep.subr.mxu0 0.0
    %4288 = vmatpush1.msra.mxu0 %v2224
    %4289 = vmatprep.subr.mxu0 0.0
    %4290 = vmatpush1.msra.mxu0 %v2225
    %4291 = vmatprep.subr.mxu0 0.0
    %4292 = vmatpush1.msra.mxu0 %v2226
    %4293 = vmatprep.subr.mxu0 0.0
    %4294 = vmatpush1.msra.mxu0 %v2227
    %4295 = vmatprep.subr.mxu0 0.0
    %4296 = vmatpush1.msra.mxu0 0.0
    %4297 = vmatprep.subr.mxu0 0.0
    %4298 = vmatpush1.msra.mxu0 0.0
    %4299 = vmatprep.subr.mxu0 0.0
    %4300 = vmatpush1.msra.mxu0 0.0
    %4301 = vmatprep.subr.mxu0 0.0
    %4302 = vmatpush1.msra.mxu0 0.0
    %4303 = vmatprep.subr.mxu0 0.0
    %4304 = vmatpush1.msra.mxu0 0.0
    %4305 = vmatprep.subr.mxu0 0.0
    %4306 = vmatpush1.msra.mxu0 0.0
    %4307 = vmatprep.subr.mxu0 0.0
    %4308 = vmatpush1.msra.mxu0 0.0
    %4309 = vmatprep.subr.mxu0 0.0
    %4310 = vmatpush1.msra.mxu0 0.0
    %4311 = vmatprep.subr.mxu0 0.0
    %4312 = vmatpush1.msra.mxu0 0.0
    %4313 = vmatprep.subr.mxu0 0.0
    %4314 = vmatpush1.msra.mxu0 0.0
    %4315 = vmatprep.subr.mxu0 0.0
    %4316 = vmatpush1.msra.mxu0 0.0
    %4317 = vmatprep.subr.mxu0 0.0
    %4318 = vmatpush1.msra.mxu0 0.0
    %4319 = vmatprep.subr.mxu0 0.0
    %4320 = vmatpush1.msra.mxu0 0.0
    %4321 = vmatprep.subr.mxu0 0.0
    %4322 = vmatpush1.msra.mxu0 0.0
    %4323 = vmatprep.subr.mxu0 0.0
    %4324 = vmatpush1.msra.mxu0 0.0
    %4325 = vmatprep.subr.mxu0 0.0
    %4326 = vmatpush1.msra.mxu0 0.0
    %4327 = vmatprep.subr.mxu0 0.0
    %4328 = vmatpush1.msra.mxu0 0.0
    %4329 = vmatprep.subr.mxu0 0.0
    %4330 = vmatpush1.msra.mxu0 0.0
    %4331 = vmatprep.subr.mxu0 0.0
    %4332 = vmatpush1.msra.mxu0 0.0
    %4333 = vmatprep.subr.mxu0 0.0
    %4334 = vmatpush1.msra.mxu0 0.0
    %4335 = vmatprep.subr.mxu0 0.0
    %4336 = vmatpush1.msra.mxu0 0.0
    %4337 = vmatprep.subr.mxu0 0.0
    %4338 = vmatpush1.msra.mxu0 0.0
    %4339 = vmatprep.subr.mxu0 0.0
    %4340 = vmatpush1.msra.mxu0 0.0
    %4341 = vmatprep.subr.mxu0 0.0
    %4342 = vmatpush1.msra.mxu0 0.0
    %4343 = vmatprep.subr.mxu0 0.0
    %4344 = vmatpush1.msra.mxu0 0.0
    %4345 = vmatprep.subr.mxu0 0.0
    %4346 = vmatpush1.msra.mxu0 0.0
    %4347 = vmatprep.subr.mxu0 0.0
    %4348 = vmatpush1.msra.mxu0 0.0
    %4349 = vmatprep.subr.mxu0 0.0
    %4350 = vmatpush1.msra.mxu0 0.0
    %4351 = vmatprep.mubr.f32.mxu0 0.0
    %4352 = vmatmul.mubr.f32.gmra.mrb[0].mxu0 %v4285
    %v4353 = vpop.f32.mrb[0].mxu0
    %v4354 = vadd.f32 %v2228, %v4353
    %v4355 = vpop.f32.mrb[0].mxu0
    %4356 = vdwg.mxu0
    %v4357 = vsel %vm2882, %v4354, -inf
    %4358 = vmax.xlane.f32.xlu0 %v4357
    %v4359 = vpop.xlane.xlu0 %4358
    %v4360 = vsub.f32 %v4354, %v4359
    %v4361 = vmul.f32 %v4360, 1.442695
    %v4362 = vpow.pop %v4361
    %v4363 = vsel %vm2882, %v4362, 0.0
    %4364 = vadd.xlane.f32.xlu0 %v4363
    %v4365 = vpop.xlane.xlu0 %4364
    %v4366 = vrcp.pop %v4365
    %v4367 = vmul.f32 %v4362, %v4366
    %s4368 = sld [smem:[#allocation8 + $0x2]]
    %v4370 = vsel %vm180, %v4367, 0
    %4372 = vmatprep.subr.mxu0 0.0
    %4373 = vmatpush1.msra.mxu0 %v2246
    %4374 = vmatprep.subr.mxu0 0.0
    %4375 = vmatpush1.msra.mxu0 %v2247
    %4376 = vmatprep.subr.mxu0 0.0
    %4377 = vmatpush1.msra.mxu0 %v2248
    %4378 = vmatprep.subr.mxu0 0.0
    %4379 = vmatpush1.msra.mxu0 %v2249
    %4380 = vmatprep.subr.mxu0 0.0
    %4381 = vmatpush1.msra.mxu0 %v2250
    %4382 = vmatprep.subr.mxu0 0.0
    %4383 = vmatpush1.msra.mxu0 %v2251
    %4384 = vmatprep.subr.mxu0 0.0
    %4385 = vmatpush1.msra.mxu0 %v2252
    %4386 = vmatprep.subr.mxu0 0.0
    %4387 = vmatpush1.msra.mxu0 %v2253
    %4388 = vmatprep.subr.mxu0 0.0
    %4389 = vmatpush1.msra.mxu0 0.0
    %4390 = vmatprep.subr.mxu0 0.0
    %4391 = vmatpush1.msra.mxu0 0.0
    %4392 = vmatprep.subr.mxu0 0.0
    %4393 = vmatpush1.msra.mxu0 0.0
    %4394 = vmatprep.subr.mxu0 0.0
    %4395 = vmatpush1.msra.mxu0 0.0
    %4396 = vmatprep.subr.mxu0 0.0
    %4397 = vmatpush1.msra.mxu0 0.0
    %4398 = vmatprep.subr.mxu0 0.0
    %4399 = vmatpush1.msra.mxu0 0.0
    %4400 = vmatprep.subr.mxu0 0.0
    %4401 = vmatpush1.msra.mxu0 0.0
    %4402 = vmatprep.subr.mxu0 0.0
    %4403 = vmatpush1.msra.mxu0 0.0
    %4404 = vmatprep.subr.mxu0 0.0
    %4405 = vmatpush1.msra.mxu0 0.0
    %4406 = vmatprep.subr.mxu0 0.0
    %4407 = vmatpush1.msra.mxu0 0.0
    %4408 = vmatprep.subr.mxu0 0.0
    %4409 = vmatpush1.msra.mxu0 0.0
    %4410 = vmatprep.subr.mxu0 0.0
    %4411 = vmatpush1.msra.mxu0 0.0
    %4412 = vmatprep.subr.mxu0 0.0
    %4413 = vmatpush1.msra.mxu0 0.0
    %4414 = vmatprep.subr.mxu0 0.0
    %4415 = vmatpush1.msra.mxu0 0.0
    %4416 = vmatprep.subr.mxu0 0.0
    %4417 = vmatpush1.msra.mxu0 0.0
    %4418 = vmatprep.subr.mxu0 0.0
    %4419 = vmatpush1.msra.mxu0 0.0
    %4420 = vmatprep.subr.mxu0 0.0
    %4421 = vmatpush1.msra.mxu0 0.0
    %4422 = vmatprep.subr.mxu0 0.0
    %4423 = vmatpush1.msra.mxu0 0.0
    %4424 = vmatprep.subr.mxu0 0.0
    %4425 = vmatpush1.msra.mxu0 0.0
    %4426 = vmatprep.subr.mxu0 0.0
    %4427 = vmatpush1.msra.mxu0 0.0
    %4428 = vmatprep.subr.mxu0 0.0
    %4429 = vmatpush1.msra.mxu0 0.0
    %4430 = vmatprep.subr.mxu0 0.0
    %4431 = vmatpush1.msra.mxu0 0.0
    %4432 = vmatprep.subr.mxu0 0.0
    %4433 = vmatpush1.msra.mxu0 0.0
    %4434 = vmatprep.subr.mxu0 0.0
    %4435 = vmatpush1.msra.mxu0 0.0
    %4436 = vmatprep.mubr.f32.mxu0 0.0
    %4437 = vmatmul.mubr.f32.gmra.mrb[0].mxu0 %v4370
    %v4438 = vpop.f32.mrb[0].mxu0
    %v4439 = vadd.f32 0.0, %v4438
    %v4440 = vpop.f32.mrb[0].mxu0
    %4441 = vdwg.mxu0
    %v4442 = vstv %s4368
    %vm4443 = vcmp.ge.f32.partialorder %v4442, %v4439
    %v4444 = vsel %vm4443, 1.0, 0.0
    %v4445 = vsel %vm2882, %v4444, 0.0
    %4446 = vadd.xlane.f32.xlu0 %v4445
    %v4447 = vpop.xlane.xlu0 %4446
    %v4448 = vrot.slane %v4447, 4
    %v4449 = vadd.f32 %v4447, %v4448
    %v4450 = vrot.slane %v4449, 2
    %v4451 = vadd.f32 %v4449, %v4450
    %v4452 = vrot.slane %v4451, 1
    %v4453 = vadd.f32 %v4451, %v4452
    %s4454 = vtos %v4453
    %s4455 = smin.f32 %s4454, 63.0
    %s4456 = scvt.f32.s32.to.zero.pseudo %s4455
    %v4457 = vstv %s4456
    %vm4458 = vcmp.eq.s32.totalorder %v165, %v4457
    %v4459 = vsel %vm4458, 1.0, 0.0
    %v4460 = vmul.f32 %v4367, %v4459
    %v4461 = vsel %vm2882, %v4460, 0.0
    %4462 = vadd.xlane.f32.xlu0 %v4461
    %v4463 = vpop.xlane.xlu0 %4462
    %v4464 = vrot.slane %v4463, 4
    %v4465 = vadd.f32 %v4463, %v4464
    %v4466 = vrot.slane %v4465, 2
    %v4467 = vadd.f32 %v4465, %v4466
    %v4468 = vrot.slane %v4467, 1
    %v4469 = vadd.f32 %v4467, %v4468
    %s4470 = vtos %v4469
    %s4471 = scalar_lea.smem [#allocation18], 2
    %4472 = sst [smem:[%s4471]] %s4456
    %s4473 = scalar_lea.smem [#allocation19], 2
    %4474 = sst [smem:[%s4473]] %s4470
    %v4476 = vsel %vm180, %v4459, 0
    %4478 = vmatprep.subr.mxu0 0.0
    %4479 = vmatpush1.msra.mxu0 %v156
    %4480 = vmatprep.subr.mxu0 0.0
    %4481 = vmatpush1.msra.mxu0 %v157
    %4482 = vmatprep.subr.mxu0 0.0
    %4483 = vmatpush1.msra.mxu0 %v158
    %4484 = vmatprep.subr.mxu0 0.0
    %4485 = vmatpush1.msra.mxu0 %v159
    %4486 = vmatprep.subr.mxu0 0.0
    %4487 = vmatpush1.msra.mxu0 %v160
    %4488 = vmatprep.subr.mxu0 0.0
    %4489 = vmatpush1.msra.mxu0 %v161
    %4490 = vmatprep.subr.mxu0 0.0
    %4491 = vmatpush1.msra.mxu0 %v162
    %4492 = vmatprep.subr.mxu0 0.0
    %4493 = vmatpush1.msra.mxu0 %v163
    %4494 = vmatprep.subr.mxu0 0.0
    %4495 = vmatpush1.msra.mxu0 0.0
    %4496 = vmatprep.subr.mxu0 0.0
    %4497 = vmatpush1.msra.mxu0 0.0
    %4498 = vmatprep.subr.mxu0 0.0
    %4499 = vmatpush1.msra.mxu0 0.0
    %4500 = vmatprep.subr.mxu0 0.0
    %4501 = vmatpush1.msra.mxu0 0.0
    %4502 = vmatprep.subr.mxu0 0.0
    %4503 = vmatpush1.msra.mxu0 0.0
    %4504 = vmatprep.subr.mxu0 0.0
    %4505 = vmatpush1.msra.mxu0 0.0
    %4506 = vmatprep.subr.mxu0 0.0
    %4507 = vmatpush1.msra.mxu0 0.0
    %4508 = vmatprep.subr.mxu0 0.0
    %4509 = vmatpush1.msra.mxu0 0.0
    %4510 = vmatprep.subr.mxu0 0.0
    %4511 = vmatpush1.msra.mxu0 0.0
    %4512 = vmatprep.subr.mxu0 0.0
    %4513 = vmatpush1.msra.mxu0 0.0
    %4514 = vmatprep.subr.mxu0 0.0
    %4515 = vmatpush1.msra.mxu0 0.0
    %4516 = vmatprep.subr.mxu0 0.0
    %4517 = vmatpush1.msra.mxu0 0.0
    %4518 = vmatprep.subr.mxu0 0.0
    %4519 = vmatpush1.msra.mxu0 0.0
    %4520 = vmatprep.subr.mxu0 0.0
    %4521 = vmatpush1.msra.mxu0 0.0
    %4522 = vmatprep.subr.mxu0 0.0
    %4523 = vmatpush1.msra.mxu0 0.0
    %4524 = vmatprep.subr.mxu0 0.0
    %4525 = vmatpush1.msra.mxu0 0.0
    %4526 = vmatprep.subr.mxu0 0.0
    %4527 = vmatpush1.msra.mxu0 0.0
    %4528 = vmatprep.subr.mxu0 0.0
    %4529 = vmatpush1.msra.mxu0 0.0
    %4530 = vmatprep.subr.mxu0 0.0
    %4531 = vmatpush1.msra.mxu0 0.0
    %4532 = vmatprep.subr.mxu0 0.0
    %4533 = vmatpush1.msra.mxu0 0.0
    %4534 = vmatprep.subr.mxu0 0.0
    %4535 = vmatpush1.msra.mxu0 0.0
    %4536 = vmatprep.subr.mxu0 0.0
    %4537 = vmatpush1.msra.mxu0 0.0
    %4538 = vmatprep.subr.mxu0 0.0
    %4539 = vmatpush1.msra.mxu0 0.0
    %4540 = vmatprep.subr.mxu0 0.0
    %4541 = vmatpush1.msra.mxu0 0.0
    %4542 = vmatprep.mubr.f32.mxu0 0.0
    %4543 = vmatmul.mubr.f32.gmra.mrb[0].mxu0 %v4476
    %v4544 = vpop.f32.mrb[0].mxu0
    %v4545 = vadd.f32 0.0, %v4544
    %v4546 = vpop.f32.mrb[0].mxu0
    %4547 = vdwg.mxu0
    %v4549 = vsel %vm254, %v4545, 0
    %4551 = vmatprep.subr.mxu0 0.0
    %4552 = vmatpush1.msra.mxu0 %v2205
    %4553 = vmatprep.subr.mxu0 0.0
    %4554 = vmatpush1.msra.mxu0 %v2206
    %4555 = vmatprep.subr.mxu0 0.0
    %4556 = vmatpush1.msra.mxu0 %v2207
    %4557 = vmatprep.subr.mxu0 0.0
    %4558 = vmatpush1.msra.mxu0 %v2208
    %4559 = vmatprep.subr.mxu0 0.0
    %4560 = vmatpush1.msra.mxu0 0.0
    %4561 = vmatprep.subr.mxu0 0.0
    %4562 = vmatpush1.msra.mxu0 0.0
    %4563 = vmatprep.subr.mxu0 0.0
    %4564 = vmatpush1.msra.mxu0 0.0
    %4565 = vmatprep.subr.mxu0 0.0
    %4566 = vmatpush1.msra.mxu0 0.0
    %4567 = vmatprep.subr.mxu0 0.0
    %4568 = vmatpush1.msra.mxu0 0.0
    %4569 = vmatprep.subr.mxu0 0.0
    %4570 = vmatpush1.msra.mxu0 0.0
    %4571 = vmatprep.subr.mxu0 0.0
    %4572 = vmatpush1.msra.mxu0 0.0
    %4573 = vmatprep.subr.mxu0 0.0
    %4574 = vmatpush1.msra.mxu0 0.0
    %4575 = vmatprep.subr.mxu0 0.0
    %4576 = vmatpush1.msra.mxu0 0.0
    %4577 = vmatprep.subr.mxu0 0.0
    %4578 = vmatpush1.msra.mxu0 0.0
    %4579 = vmatprep.subr.mxu0 0.0
    %4580 = vmatpush1.msra.mxu0 0.0
    %4581 = vmatprep.subr.mxu0 0.0
    %4582 = vmatpush1.msra.mxu0 0.0
    %4583 = vmatprep.subr.mxu0 0.0
    %4584 = vmatpush1.msra.mxu0 0.0
    %4585 = vmatprep.subr.mxu0 0.0
    %4586 = vmatpush1.msra.mxu0 0.0
    %4587 = vmatprep.subr.mxu0 0.0
    %4588 = vmatpush1.msra.mxu0 0.0
    %4589 = vmatprep.subr.mxu0 0.0
    %4590 = vmatpush1.msra.mxu0 0.0
    %4591 = vmatprep.subr.mxu0 0.0
    %4592 = vmatpush1.msra.mxu0 0.0
    %4593 = vmatprep.subr.mxu0 0.0
    %4594 = vmatpush1.msra.mxu0 0.0
    %4595 = vmatprep.subr.mxu0 0.0
    %4596 = vmatpush1.msra.mxu0 0.0
    %4597 = vmatprep.subr.mxu0 0.0
    %4598 = vmatpush1.msra.mxu0 0.0
    %4599 = vmatprep.subr.mxu0 0.0
    %4600 = vmatpush1.msra.mxu0 0.0
    %4601 = vmatprep.subr.mxu0 0.0
    %4602 = vmatpush1.msra.mxu0 0.0
    %4603 = vmatprep.subr.mxu0 0.0
    %4604 = vmatpush1.msra.mxu0 0.0
    %4605 = vmatprep.subr.mxu0 0.0
    %4606 = vmatpush1.msra.mxu0 0.0
    %4607 = vmatprep.subr.mxu0 0.0
    %4608 = vmatpush1.msra.mxu0 0.0
    %4609 = vmatprep.subr.mxu0 0.0
    %4610 = vmatpush1.msra.mxu0 0.0
    %4611 = vmatprep.subr.mxu0 0.0
    %4612 = vmatpush1.msra.mxu0 0.0
    %4613 = vmatprep.subr.mxu0 0.0
    %4614 = vmatpush1.msra.mxu0 0.0
    %4615 = vmatprep.mubr.f32.mxu0 0.0
    %4616 = vmatmul.mubr.f32.gmra.mrb[0].mxu0 %v4549
    %v4617 = vpop.f32.mrb[0].mxu0
    %v4618 = vadd.f32 %v2213, %v4617
    %v4619 = vpop.f32.mrb[0].mxu0
    %4620 = vdwg.mxu0
    %4621 = vmatprep.subr.mxu0 0.0
    %4622 = vmatpush1.msra.mxu0 %v2209
    %4623 = vmatprep.subr.mxu0 0.0
    %4624 = vmatpush1.msra.mxu0 %v2210
    %4625 = vmatprep.subr.mxu0 0.0
    %4626 = vmatpush1.msra.mxu0 %v2211
    %4627 = vmatprep.subr.mxu0 0.0
    %4628 = vmatpush1.msra.mxu0 %v2212
    %4629 = vmatprep.subr.mxu0 0.0
    %4630 = vmatpush1.msra.mxu0 0.0
    %4631 = vmatprep.subr.mxu0 0.0
    %4632 = vmatpush1.msra.mxu0 0.0
    %4633 = vmatprep.subr.mxu0 0.0
    %4634 = vmatpush1.msra.mxu0 0.0
    %4635 = vmatprep.subr.mxu0 0.0
    %4636 = vmatpush1.msra.mxu0 0.0
    %4637 = vmatprep.subr.mxu0 0.0
    %4638 = vmatpush1.msra.mxu0 0.0
    %4639 = vmatprep.subr.mxu0 0.0
    %4640 = vmatpush1.msra.mxu0 0.0
    %4641 = vmatprep.subr.mxu0 0.0
    %4642 = vmatpush1.msra.mxu0 0.0
    %4643 = vmatprep.subr.mxu0 0.0
    %4644 = vmatpush1.msra.mxu0 0.0
    %4645 = vmatprep.subr.mxu0 0.0
    %4646 = vmatpush1.msra.mxu0 0.0
    %4647 = vmatprep.subr.mxu0 0.0
    %4648 = vmatpush1.msra.mxu0 0.0
    %4649 = vmatprep.subr.mxu0 0.0
    %4650 = vmatpush1.msra.mxu0 0.0
    %4651 = vmatprep.subr.mxu0 0.0
    %4652 = vmatpush1.msra.mxu0 0.0
    %4653 = vmatprep.subr.mxu0 0.0
    %4654 = vmatpush1.msra.mxu0 0.0
    %4655 = vmatprep.subr.mxu0 0.0
    %4656 = vmatpush1.msra.mxu0 0.0
    %4657 = vmatprep.subr.mxu0 0.0
    %4658 = vmatpush1.msra.mxu0 0.0
    %4659 = vmatprep.subr.mxu0 0.0
    %4660 = vmatpush1.msra.mxu0 0.0
    %4661 = vmatprep.subr.mxu0 0.0
    %4662 = vmatpush1.msra.mxu0 0.0
    %4663 = vmatprep.subr.mxu0 0.0
    %4664 = vmatpush1.msra.mxu0 0.0
    %4665 = vmatprep.subr.mxu0 0.0
    %4666 = vmatpush1.msra.mxu0 0.0
    %4667 = vmatprep.subr.mxu0 0.0
    %4668 = vmatpush1.msra.mxu0 0.0
    %4669 = vmatprep.subr.mxu0 0.0
    %4670 = vmatpush1.msra.mxu0 0.0
    %4671 = vmatprep.subr.mxu0 0.0
    %4672 = vmatpush1.msra.mxu0 0.0
    %4673 = vmatprep.subr.mxu0 0.0
    %4674 = vmatpush1.msra.mxu0 0.0
    %4675 = vmatprep.subr.mxu0 0.0
    %4676 = vmatpush1.msra.mxu0 0.0
    %4677 = vmatprep.subr.mxu0 0.0
    %4678 = vmatpush1.msra.mxu0 0.0
    %4679 = vmatprep.subr.mxu0 0.0
    %4680 = vmatpush1.msra.mxu0 0.0
    %4681 = vmatprep.subr.mxu0 0.0
    %4682 = vmatpush1.msra.mxu0 0.0
    %4683 = vmatprep.subr.mxu0 0.0
    %4684 = vmatpush1.msra.mxu0 0.0
    %4685 = vmatprep.mubr.f32.mxu0 0.0
    %4686 = vmatmul.mubr.f32.gmra.mrb[0].mxu0 %v3983
    %v4687 = vpop.f32.mrb[0].mxu0
    %v4688 = vadd.f32 %v2214, %v4687
    %v4689 = vpop.f32.mrb[0].mxu0
    %4690 = vdwg.mxu0
    %v4691 = vadd.f32 %v4618, %v4688
    %v4692 = vxor.u32 %v4691, 2147483648
    %v4693 = vmul.f32 %v4692, 1.442695
    %v4694 = vpow.pop %v4693
    %v4695 = vadd.f32 %v4694, 1.0
    %v4696 = vrcp.pop %v4695
    %v4697 = vmul.f32 1.0, %v4696
    %4699 = vrot.lane.b32.xlu0 %v4688, 64
    %v4700 = vpop.permute.xlu0 %4699
    %v4702 = vmul.f32 %v4697, %v4700
    %4704 = vrot.lane.b32.xlu0 %v4702, 64
    %v4705 = vpop.permute.xlu0 %4704
    %v4707 = vadd.f32 %v4618, %v4705
    %v4708 = vtanh.pop %v4707
    %v4709 = vsub.f32 1.0, %v4697
    %4711 = vrot.lane.b32.xlu0 %v4708, 96
    %v4712 = vpop.permute.xlu0 %4711
    %v4714 = vmul.f32 %v4709, %v4712
    %v4715 = vmul.f32 %v4697, %v3979
    %v4716 = vadd.f32 %v4714, %v4715
    %4718 = vrot.lane.b32.xlu0 %v4716, 96
    %v4719 = vpop.permute.xlu0 %4718
    %v4720 = vsel %vm254, %v4719, 0
    %4722 = vmatprep.subr.mxu0 0.0
    %4723 = vmatpush1.xpose.msra.mxu0 %v2506
    %4724 = vmatprep.subr.mxu0 0.0
    %4725 = vmatpush1.xpose.msra.mxu0 0.0
    %4726 = vmatprep.subr.mxu0 0.0
    %4727 = vmatpush1.xpose.msra.mxu0 0.0
    %4728 = vmatprep.subr.mxu0 0.0
    %4729 = vmatpush1.xpose.msra.mxu0 0.0
    %4730 = vmatprep.subr.mxu0 0.0
    %4731 = vmatpush1.xpose.msra.mxu0 0.0
    %4732 = vmatprep.subr.mxu0 0.0
    %4733 = vmatpush1.xpose.msra.mxu0 0.0
    %4734 = vmatprep.subr.mxu0 0.0
    %4735 = vmatpush1.xpose.msra.mxu0 0.0
    %4736 = vmatprep.subr.mxu0 0.0
    %4737 = vmatpush1.xpose.msra.mxu0 0.0
    %4738 = vmatprep.subr.mxu0 0.0
    %4739 = vmatpush1.xpose.msra.mxu0 0.0
    %4740 = vmatprep.subr.mxu0 0.0
    %4741 = vmatpush1.xpose.msra.mxu0 0.0
    %4742 = vmatprep.subr.mxu0 0.0
    %4743 = vmatpush1.xpose.msra.mxu0 0.0
    %4744 = vmatprep.subr.mxu0 0.0
    %4745 = vmatpush1.xpose.msra.mxu0 0.0
    %4746 = vmatprep.subr.mxu0 0.0
    %4747 = vmatpush1.xpose.msra.mxu0 0.0
    %4748 = vmatprep.subr.mxu0 0.0
    %4749 = vmatpush1.xpose.msra.mxu0 0.0
    %4750 = vmatprep.subr.mxu0 0.0
    %4751 = vmatpush1.xpose.msra.mxu0 0.0
    %4752 = vmatprep.subr.mxu0 0.0
    %4753 = vmatpush1.xpose.msra.mxu0 0.0
    %4754 = vmatprep.subr.mxu0 0.0
    %4755 = vmatpush1.xpose.msra.mxu0 0.0
    %4756 = vmatprep.subr.mxu0 0.0
    %4757 = vmatpush1.xpose.msra.mxu0 0.0
    %4758 = vmatprep.subr.mxu0 0.0
    %4759 = vmatpush1.xpose.msra.mxu0 0.0
    %4760 = vmatprep.subr.mxu0 0.0
    %4761 = vmatpush1.xpose.msra.mxu0 0.0
    %4762 = vmatprep.subr.mxu0 0.0
    %4763 = vmatpush1.xpose.msra.mxu0 0.0
    %4764 = vmatprep.subr.mxu0 0.0
    %4765 = vmatpush1.xpose.msra.mxu0 0.0
    %4766 = vmatprep.subr.mxu0 0.0
    %4767 = vmatpush1.xpose.msra.mxu0 0.0
    %4768 = vmatprep.subr.mxu0 0.0
    %4769 = vmatpush1.xpose.msra.mxu0 0.0
    %4770 = vmatprep.subr.mxu0 0.0
    %4771 = vmatpush1.xpose.msra.mxu0 0.0
    %4772 = vmatprep.subr.mxu0 0.0
    %4773 = vmatpush1.xpose.msra.mxu0 0.0
    %4774 = vmatprep.subr.mxu0 0.0
    %4775 = vmatpush1.xpose.msra.mxu0 0.0
    %4776 = vmatprep.subr.mxu0 0.0
    %4777 = vmatpush1.xpose.msra.mxu0 0.0
    %4778 = vmatprep.subr.mxu0 0.0
    %4779 = vmatpush1.xpose.msra.mxu0 0.0
    %4780 = vmatprep.subr.mxu0 0.0
    %4781 = vmatpush1.xpose.msra.mxu0 0.0
    %4782 = vmatprep.subr.mxu0 0.0
    %4783 = vmatpush1.xpose.msra.mxu0 0.0
    %4784 = vmatprep.subr.mxu0 0.0
    %4785 = vmatpush1.xpose.msra.mxu0 0.0
    %4786 = vmatprep.mubr.f32.mxu0 0.0
    %4787 = vmatmul.mubr.f32.gmra.mrb[0].mxu0 %v4720
    %v4788 = vpop.f32.mrb[0].mxu0
    %v4789 = vadd.f32 0.0, %v4788
    %v4790 = vpop.f32.mrb[0].mxu0
    %4791 = vdwg.mxu0
    %v4792 = vsel %vm2578, %v4789, -inf
    %4793 = vmax.xlane.f32.xlu0 %v4792
    %v4794 = vpop.xlane.xlu0 %4793
    %v4795 = vsub.f32 %v4789, %v4794
    %v4796 = vmul.f32 %v4795, 1.442695
    %v4797 = vpow.pop %v4796
    %v4798 = vsel %vm2578, %v4797, 0.0
    %4799 = vadd.xlane.f32.xlu0 %v4798
    %v4800 = vpop.xlane.xlu0 %4799
    %v4801 = vrcp.pop %v4800
    %v4802 = vmul.f32 %v4797, %v4801
    %v4804 = vsel %vm2590, %v4802, 0
    %4806 = vmatprep.subr.mxu0 0.0
    %4807 = vmatpush1.msra.mxu0 %v2204
    %4808 = vmatprep.subr.mxu0 0.0
    %4809 = vmatpush1.msra.mxu0 0.0
    %4810 = vmatprep.subr.mxu0 0.0
    %4811 = vmatpush1.msra.mxu0 0.0
    %4812 = vmatprep.subr.mxu0 0.0
    %4813 = vmatpush1.msra.mxu0 0.0
    %4814 = vmatprep.subr.mxu0 0.0
    %4815 = vmatpush1.msra.mxu0 0.0
    %4816 = vmatprep.subr.mxu0 0.0
    %4817 = vmatpush1.msra.mxu0 0.0
    %4818 = vmatprep.subr.mxu0 0.0
    %4819 = vmatpush1.msra.mxu0 0.0
    %4820 = vmatprep.subr.mxu0 0.0
    %4821 = vmatpush1.msra.mxu0 0.0
    %4822 = vmatprep.subr.mxu0 0.0
    %4823 = vmatpush1.msra.mxu0 0.0
    %4824 = vmatprep.subr.mxu0 0.0
    %4825 = vmatpush1.msra.mxu0 0.0
    %4826 = vmatprep.subr.mxu0 0.0
    %4827 = vmatpush1.msra.mxu0 0.0
    %4828 = vmatprep.subr.mxu0 0.0
    %4829 = vmatpush1.msra.mxu0 0.0
    %4830 = vmatprep.subr.mxu0 0.0
    %4831 = vmatpush1.msra.mxu0 0.0
    %4832 = vmatprep.subr.mxu0 0.0
    %4833 = vmatpush1.msra.mxu0 0.0
    %4834 = vmatprep.subr.mxu0 0.0
    %4835 = vmatpush1.msra.mxu0 0.0
    %4836 = vmatprep.subr.mxu0 0.0
    %4837 = vmatpush1.msra.mxu0 0.0
    %4838 = vmatprep.subr.mxu0 0.0
    %4839 = vmatpush1.msra.mxu0 0.0
    %4840 = vmatprep.subr.mxu0 0.0
    %4841 = vmatpush1.msra.mxu0 0.0
    %4842 = vmatprep.subr.mxu0 0.0
    %4843 = vmatpush1.msra.mxu0 0.0
    %4844 = vmatprep.subr.mxu0 0.0
    %4845 = vmatpush1.msra.mxu0 0.0
    %4846 = vmatprep.subr.mxu0 0.0
    %4847 = vmatpush1.msra.mxu0 0.0
    %4848 = vmatprep.subr.mxu0 0.0
    %4849 = vmatpush1.msra.mxu0 0.0
    %4850 = vmatprep.subr.mxu0 0.0
    %4851 = vmatpush1.msra.mxu0 0.0
    %4852 = vmatprep.subr.mxu0 0.0
    %4853 = vmatpush1.msra.mxu0 0.0
    %4854 = vmatprep.subr.mxu0 0.0
    %4855 = vmatpush1.msra.mxu0 0.0
    %4856 = vmatprep.subr.mxu0 0.0
    %4857 = vmatpush1.msra.mxu0 0.0
    %4858 = vmatprep.subr.mxu0 0.0
    %4859 = vmatpush1.msra.mxu0 0.0
    %4860 = vmatprep.subr.mxu0 0.0
    %4861 = vmatpush1.msra.mxu0 0.0
    %4862 = vmatprep.subr.mxu0 0.0
    %4863 = vmatpush1.msra.mxu0 0.0
    %4864 = vmatprep.subr.mxu0 0.0
    %4865 = vmatpush1.msra.mxu0 0.0
    %4866 = vmatprep.subr.mxu0 0.0
    %4867 = vmatpush1.msra.mxu0 0.0
    %4868 = vmatprep.subr.mxu0 0.0
    %4869 = vmatpush1.msra.mxu0 0.0
    %4870 = vmatprep.mubr.f32.mxu0 0.0
    %4871 = vmatmul.mubr.f32.gmra.mrb[0].mxu0 %v4804
    %v4872 = vpop.f32.mrb[0].mxu0
    %v4873 = vadd.f32 0.0, %v4872
    %v4874 = vpop.f32.mrb[0].mxu0
    %4875 = vdwg.mxu0
    %v4877 = vsel %vm254, %v4873, 0
    %4879 = vmatprep.subr.mxu0 0.0
    %4880 = vmatpush1.msra.mxu0 %v2219
    %4881 = vmatprep.subr.mxu0 0.0
    %4882 = vmatpush1.msra.mxu0 %v2220
    %4883 = vmatprep.subr.mxu0 0.0
    %4884 = vmatpush1.msra.mxu0 %v2221
    %4885 = vmatprep.subr.mxu0 0.0
    %4886 = vmatpush1.msra.mxu0 %v2222
    %4887 = vmatprep.subr.mxu0 0.0
    %4888 = vmatpush1.msra.mxu0 0.0
    %4889 = vmatprep.subr.mxu0 0.0
    %4890 = vmatpush1.msra.mxu0 0.0
    %4891 = vmatprep.subr.mxu0 0.0
    %4892 = vmatpush1.msra.mxu0 0.0
    %4893 = vmatprep.subr.mxu0 0.0
    %4894 = vmatpush1.msra.mxu0 0.0
    %4895 = vmatprep.subr.mxu0 0.0
    %4896 = vmatpush1.msra.mxu0 0.0
    %4897 = vmatprep.subr.mxu0 0.0
    %4898 = vmatpush1.msra.mxu0 0.0
    %4899 = vmatprep.subr.mxu0 0.0
    %4900 = vmatpush1.msra.mxu0 0.0
    %4901 = vmatprep.subr.mxu0 0.0
    %4902 = vmatpush1.msra.mxu0 0.0
    %4903 = vmatprep.subr.mxu0 0.0
    %4904 = vmatpush1.msra.mxu0 0.0
    %4905 = vmatprep.subr.mxu0 0.0
    %4906 = vmatpush1.msra.mxu0 0.0
    %4907 = vmatprep.subr.mxu0 0.0
    %4908 = vmatpush1.msra.mxu0 0.0
    %4909 = vmatprep.subr.mxu0 0.0
    %4910 = vmatpush1.msra.mxu0 0.0
    %4911 = vmatprep.subr.mxu0 0.0
    %4912 = vmatpush1.msra.mxu0 0.0
    %4913 = vmatprep.subr.mxu0 0.0
    %4914 = vmatpush1.msra.mxu0 0.0
    %4915 = vmatprep.subr.mxu0 0.0
    %4916 = vmatpush1.msra.mxu0 0.0
    %4917 = vmatprep.subr.mxu0 0.0
    %4918 = vmatpush1.msra.mxu0 0.0
    %4919 = vmatprep.subr.mxu0 0.0
    %4920 = vmatpush1.msra.mxu0 0.0
    %4921 = vmatprep.subr.mxu0 0.0
    %4922 = vmatpush1.msra.mxu0 0.0
    %4923 = vmatprep.subr.mxu0 0.0
    %4924 = vmatpush1.msra.mxu0 0.0
    %4925 = vmatprep.subr.mxu0 0.0
    %4926 = vmatpush1.msra.mxu0 0.0
    %4927 = vmatprep.subr.mxu0 0.0
    %4928 = vmatpush1.msra.mxu0 0.0
    %4929 = vmatprep.subr.mxu0 0.0
    %4930 = vmatpush1.msra.mxu0 0.0
    %4931 = vmatprep.subr.mxu0 0.0
    %4932 = vmatpush1.msra.mxu0 0.0
    %4933 = vmatprep.subr.mxu0 0.0
    %4934 = vmatpush1.msra.mxu0 0.0
    %4935 = vmatprep.subr.mxu0 0.0
    %4936 = vmatpush1.msra.mxu0 0.0
    %4937 = vmatprep.subr.mxu0 0.0
    %4938 = vmatpush1.msra.mxu0 0.0
    %4939 = vmatprep.subr.mxu0 0.0
    %4940 = vmatpush1.msra.mxu0 0.0
    %4941 = vmatprep.subr.mxu0 0.0
    %4942 = vmatpush1.msra.mxu0 0.0
    %4943 = vmatprep.mubr.f32.mxu0 0.0
    %4944 = vmatmul.mubr.f32.gmra.mrb[0].mxu0 %v4877
    %v4945 = vpop.f32.mrb[0].mxu0
    %v4946 = vadd.f32 0.0, %v4945
    %v4947 = vpop.f32.mrb[0].mxu0
    %4948 = vdwg.mxu0
    %4949 = vmatprep.subr.mxu0 0.0
    %4950 = vmatpush1.msra.mxu0 %v2215
    %4951 = vmatprep.subr.mxu0 0.0
    %4952 = vmatpush1.msra.mxu0 %v2216
    %4953 = vmatprep.subr.mxu0 0.0
    %4954 = vmatpush1.msra.mxu0 %v2217
    %4955 = vmatprep.subr.mxu0 0.0
    %4956 = vmatpush1.msra.mxu0 %v2218
    %4957 = vmatprep.subr.mxu0 0.0
    %4958 = vmatpush1.msra.mxu0 0.0
    %4959 = vmatprep.subr.mxu0 0.0
    %4960 = vmatpush1.msra.mxu0 0.0
    %4961 = vmatprep.subr.mxu0 0.0
    %4962 = vmatpush1.msra.mxu0 0.0
    %4963 = vmatprep.subr.mxu0 0.0
    %4964 = vmatpush1.msra.mxu0 0.0
    %4965 = vmatprep.subr.mxu0 0.0
    %4966 = vmatpush1.msra.mxu0 0.0
    %4967 = vmatprep.subr.mxu0 0.0
    %4968 = vmatpush1.msra.mxu0 0.0
    %4969 = vmatprep.subr.mxu0 0.0
    %4970 = vmatpush1.msra.mxu0 0.0
    %4971 = vmatprep.subr.mxu0 0.0
    %4972 = vmatpush1.msra.mxu0 0.0
    %4973 = vmatprep.subr.mxu0 0.0
    %4974 = vmatpush1.msra.mxu0 0.0
    %4975 = vmatprep.subr.mxu0 0.0
    %4976 = vmatpush1.msra.mxu0 0.0
    %4977 = vmatprep.subr.mxu0 0.0
    %4978 = vmatpush1.msra.mxu0 0.0
    %4979 = vmatprep.subr.mxu0 0.0
    %4980 = vmatpush1.msra.mxu0 0.0
    %4981 = vmatprep.subr.mxu0 0.0
    %4982 = vmatpush1.msra.mxu0 0.0
    %4983 = vmatprep.subr.mxu0 0.0
    %4984 = vmatpush1.msra.mxu0 0.0
    %4985 = vmatprep.subr.mxu0 0.0
    %4986 = vmatpush1.msra.mxu0 0.0
    %4987 = vmatprep.subr.mxu0 0.0
    %4988 = vmatpush1.msra.mxu0 0.0
    %4989 = vmatprep.subr.mxu0 0.0
    %4990 = vmatpush1.msra.mxu0 0.0
    %4991 = vmatprep.subr.mxu0 0.0
    %4992 = vmatpush1.msra.mxu0 0.0
    %4993 = vmatprep.subr.mxu0 0.0
    %4994 = vmatpush1.msra.mxu0 0.0
    %4995 = vmatprep.subr.mxu0 0.0
    %4996 = vmatpush1.msra.mxu0 0.0
    %4997 = vmatprep.subr.mxu0 0.0
    %4998 = vmatpush1.msra.mxu0 0.0
    %4999 = vmatprep.subr.mxu0 0.0
    %5000 = vmatpush1.msra.mxu0 0.0
    %5001 = vmatprep.subr.mxu0 0.0
    %5002 = vmatpush1.msra.mxu0 0.0
    %5003 = vmatprep.subr.mxu0 0.0
    %5004 = vmatpush1.msra.mxu0 0.0
    %5005 = vmatprep.subr.mxu0 0.0
    %5006 = vmatpush1.msra.mxu0 0.0
    %5007 = vmatprep.subr.mxu0 0.0
    %5008 = vmatpush1.msra.mxu0 0.0
    %5009 = vmatprep.subr.mxu0 0.0
    %5010 = vmatpush1.msra.mxu0 0.0
    %5011 = vmatprep.subr.mxu0 0.0
    %5012 = vmatpush1.msra.mxu0 0.0
    %5013 = vmatprep.mubr.f32.mxu0 0.0
    %5014 = vmatmul.mubr.f32.gmra.mrb[0].mxu0 %v4720
    %v5015 = vpop.f32.mrb[0].mxu0
    %v5016 = vadd.f32 %v4946, %v5015
    %v5017 = vpop.f32.mrb[0].mxu0
    %5018 = vdwg.mxu0
    %v5019 = vadd.f32 %v5016, %v2223
    %v5020 = vtanh.pop %v5019
    %v5022 = vsel %vm254, %v5020, 0
    %5024 = vmatprep.subr.mxu0 0.0
    %5025 = vmatpush1.msra.mxu0 %v2224
    %5026 = vmatprep.subr.mxu0 0.0
    %5027 = vmatpush1.msra.mxu0 %v2225
    %5028 = vmatprep.subr.mxu0 0.0
    %5029 = vmatpush1.msra.mxu0 %v2226
    %5030 = vmatprep.subr.mxu0 0.0
    %5031 = vmatpush1.msra.mxu0 %v2227
    %5032 = vmatprep.subr.mxu0 0.0
    %5033 = vmatpush1.msra.mxu0 0.0
    %5034 = vmatprep.subr.mxu0 0.0
    %5035 = vmatpush1.msra.mxu0 0.0
    %5036 = vmatprep.subr.mxu0 0.0
    %5037 = vmatpush1.msra.mxu0 0.0
    %5038 = vmatprep.subr.mxu0 0.0
    %5039 = vmatpush1.msra.mxu0 0.0
    %5040 = vmatprep.subr.mxu0 0.0
    %5041 = vmatpush1.msra.mxu0 0.0
    %5042 = vmatprep.subr.mxu0 0.0
    %5043 = vmatpush1.msra.mxu0 0.0
    %5044 = vmatprep.subr.mxu0 0.0
    %5045 = vmatpush1.msra.mxu0 0.0
    %5046 = vmatprep.subr.mxu0 0.0
    %5047 = vmatpush1.msra.mxu0 0.0
    %5048 = vmatprep.subr.mxu0 0.0
    %5049 = vmatpush1.msra.mxu0 0.0
    %5050 = vmatprep.subr.mxu0 0.0
    %5051 = vmatpush1.msra.mxu0 0.0
    %5052 = vmatprep.subr.mxu0 0.0
    %5053 = vmatpush1.msra.mxu0 0.0
    %5054 = vmatprep.subr.mxu0 0.0
    %5055 = vmatpush1.msra.mxu0 0.0
    %5056 = vmatprep.subr.mxu0 0.0
    %5057 = vmatpush1.msra.mxu0 0.0
    %5058 = vmatprep.subr.mxu0 0.0
    %5059 = vmatpush1.msra.mxu0 0.0
    %5060 = vmatprep.subr.mxu0 0.0
    %5061 = vmatpush1.msra.mxu0 0.0
    %5062 = vmatprep.subr.mxu0 0.0
    %5063 = vmatpush1.msra.mxu0 0.0
    %5064 = vmatprep.subr.mxu0 0.0
    %5065 = vmatpush1.msra.mxu0 0.0
    %5066 = vmatprep.subr.mxu0 0.0
    %5067 = vmatpush1.msra.mxu0 0.0
    %5068 = vmatprep.subr.mxu0 0.0
    %5069 = vmatpush1.msra.mxu0 0.0
    %5070 = vmatprep.subr.mxu0 0.0
    %5071 = vmatpush1.msra.mxu0 0.0
    %5072 = vmatprep.subr.mxu0 0.0
    %5073 = vmatpush1.msra.mxu0 0.0
    %5074 = vmatprep.subr.mxu0 0.0
    %5075 = vmatpush1.msra.mxu0 0.0
    %5076 = vmatprep.subr.mxu0 0.0
    %5077 = vmatpush1.msra.mxu0 0.0
    %5078 = vmatprep.subr.mxu0 0.0
    %5079 = vmatpush1.msra.mxu0 0.0
    %5080 = vmatprep.subr.mxu0 0.0
    %5081 = vmatpush1.msra.mxu0 0.0
    %5082 = vmatprep.subr.mxu0 0.0
    %5083 = vmatpush1.msra.mxu0 0.0
    %5084 = vmatprep.subr.mxu0 0.0
    %5085 = vmatpush1.msra.mxu0 0.0
    %5086 = vmatprep.subr.mxu0 0.0
    %5087 = vmatpush1.msra.mxu0 0.0
    %5088 = vmatprep.mubr.f32.mxu0 0.0
    %5089 = vmatmul.mubr.f32.gmra.mrb[0].mxu0 %v5022
    %v5090 = vpop.f32.mrb[0].mxu0
    %v5091 = vadd.f32 %v2228, %v5090
    %v5092 = vpop.f32.mrb[0].mxu0
    %5093 = vdwg.mxu0
    %v5094 = vsel %vm2882, %v5091, -inf
    %5095 = vmax.xlane.f32.xlu0 %v5094
    %v5096 = vpop.xlane.xlu0 %5095
    %v5097 = vsub.f32 %v5091, %v5096
    %v5098 = vmul.f32 %v5097, 1.442695
    %v5099 = vpow.pop %v5098
    %v5100 = vsel %vm2882, %v5099, 0.0
    %5101 = vadd.xlane.f32.xlu0 %v5100
    %v5102 = vpop.xlane.xlu0 %5101
    %v5103 = vrcp.pop %v5102
    %v5104 = vmul.f32 %v5099, %v5103
    %s5105 = sld [smem:[#allocation8 + $0x3]]
    %v5107 = vsel %vm180, %v5104, 0
    %5109 = vmatprep.subr.mxu0 0.0
    %5110 = vmatpush1.msra.mxu0 %v2246
    %5111 = vmatprep.subr.mxu0 0.0
    %5112 = vmatpush1.msra.mxu0 %v2247
    %5113 = vmatprep.subr.mxu0 0.0
    %5114 = vmatpush1.msra.mxu0 %v2248
    %5115 = vmatprep.subr.mxu0 0.0
    %5116 = vmatpush1.msra.mxu0 %v2249
    %5117 = vmatprep.subr.mxu0 0.0
    %5118 = vmatpush1.msra.mxu0 %v2250
    %5119 = vmatprep.subr.mxu0 0.0
    %5120 = vmatpush1.msra.mxu0 %v2251
    %5121 = vmatprep.subr.mxu0 0.0
    %5122 = vmatpush1.msra.mxu0 %v2252
    %5123 = vmatprep.subr.mxu0 0.0
    %5124 = vmatpush1.msra.mxu0 %v2253
    %5125 = vmatprep.subr.mxu0 0.0
    %5126 = vmatpush1.msra.mxu0 0.0
    %5127 = vmatprep.subr.mxu0 0.0
    %5128 = vmatpush1.msra.mxu0 0.0
    %5129 = vmatprep.subr.mxu0 0.0
    %5130 = vmatpush1.msra.mxu0 0.0
    %5131 = vmatprep.subr.mxu0 0.0
    %5132 = vmatpush1.msra.mxu0 0.0
    %5133 = vmatprep.subr.mxu0 0.0
    %5134 = vmatpush1.msra.mxu0 0.0
    %5135 = vmatprep.subr.mxu0 0.0
    %5136 = vmatpush1.msra.mxu0 0.0
    %5137 = vmatprep.subr.mxu0 0.0
    %5138 = vmatpush1.msra.mxu0 0.0
    %5139 = vmatprep.subr.mxu0 0.0
    %5140 = vmatpush1.msra.mxu0 0.0
    %5141 = vmatprep.subr.mxu0 0.0
    %5142 = vmatpush1.msra.mxu0 0.0
    %5143 = vmatprep.subr.mxu0 0.0
    %5144 = vmatpush1.msra.mxu0 0.0
    %5145 = vmatprep.subr.mxu0 0.0
    %5146 = vmatpush1.msra.mxu0 0.0
    %5147 = vmatprep.subr.mxu0 0.0
    %5148 = vmatpush1.msra.mxu0 0.0
    %5149 = vmatprep.subr.mxu0 0.0
    %5150 = vmatpush1.msra.mxu0 0.0
    %5151 = vmatprep.subr.mxu0 0.0
    %5152 = vmatpush1.msra.mxu0 0.0
    %5153 = vmatprep.subr.mxu0 0.0
    %5154 = vmatpush1.msra.mxu0 0.0
    %5155 = vmatprep.subr.mxu0 0.0
    %5156 = vmatpush1.msra.mxu0 0.0
    %5157 = vmatprep.subr.mxu0 0.0
    %5158 = vmatpush1.msra.mxu0 0.0
    %5159 = vmatprep.subr.mxu0 0.0
    %5160 = vmatpush1.msra.mxu0 0.0
    %5161 = vmatprep.subr.mxu0 0.0
    %5162 = vmatpush1.msra.mxu0 0.0
    %5163 = vmatprep.subr.mxu0 0.0
    %5164 = vmatpush1.msra.mxu0 0.0
    %5165 = vmatprep.subr.mxu0 0.0
    %5166 = vmatpush1.msra.mxu0 0.0
    %5167 = vmatprep.subr.mxu0 0.0
    %5168 = vmatpush1.msra.mxu0 0.0
    %5169 = vmatprep.subr.mxu0 0.0
    %5170 = vmatpush1.msra.mxu0 0.0
    %5171 = vmatprep.subr.mxu0 0.0
    %5172 = vmatpush1.msra.mxu0 0.0
    %5173 = vmatprep.mubr.f32.mxu0 0.0
    %5174 = vmatmul.mubr.f32.gmra.mrb[0].mxu0 %v5107
    %v5175 = vpop.f32.mrb[0].mxu0
    %v5176 = vadd.f32 0.0, %v5175
    %v5177 = vpop.f32.mrb[0].mxu0
    %5178 = vdwg.mxu0
    %v5179 = vstv %s5105
    %vm5180 = vcmp.ge.f32.partialorder %v5179, %v5176
    %v5181 = vsel %vm5180, 1.0, 0.0
    %v5182 = vsel %vm2882, %v5181, 0.0
    %5183 = vadd.xlane.f32.xlu0 %v5182
    %v5184 = vpop.xlane.xlu0 %5183
    %v5185 = vrot.slane %v5184, 4
    %v5186 = vadd.f32 %v5184, %v5185
    %v5187 = vrot.slane %v5186, 2
    %v5188 = vadd.f32 %v5186, %v5187
    %v5189 = vrot.slane %v5188, 1
    %v5190 = vadd.f32 %v5188, %v5189
    %s5191 = vtos %v5190
    %s5192 = smin.f32 %s5191, 63.0
    %s5193 = scvt.f32.s32.to.zero.pseudo %s5192
    %v5194 = vstv %s5193
    %vm5195 = vcmp.eq.s32.totalorder %v165, %v5194
    %v5196 = vsel %vm5195, 1.0, 0.0
    %v5197 = vmul.f32 %v5104, %v5196
    %v5198 = vsel %vm2882, %v5197, 0.0
    %5199 = vadd.xlane.f32.xlu0 %v5198
    %v5200 = vpop.xlane.xlu0 %5199
    %v5201 = vrot.slane %v5200, 4
    %v5202 = vadd.f32 %v5200, %v5201
    %v5203 = vrot.slane %v5202, 2
    %v5204 = vadd.f32 %v5202, %v5203
    %v5205 = vrot.slane %v5204, 1
    %v5206 = vadd.f32 %v5204, %v5205
    %s5207 = vtos %v5206
    %s5208 = scalar_lea.smem [#allocation18], 3
    %5209 = sst [smem:[%s5208]] %s5193
    %s5210 = scalar_lea.smem [#allocation19], 3
    %5211 = sst [smem:[%s5210]] %s5207
    %v5213 = vsel %vm180, %v5196, 0
    %5215 = vmatprep.subr.mxu0 0.0
    %5216 = vmatpush1.msra.mxu0 %v156
    %5217 = vmatprep.subr.mxu0 0.0
    %5218 = vmatpush1.msra.mxu0 %v157
    %5219 = vmatprep.subr.mxu0 0.0
    %5220 = vmatpush1.msra.mxu0 %v158
    %5221 = vmatprep.subr.mxu0 0.0
    %5222 = vmatpush1.msra.mxu0 %v159
    %5223 = vmatprep.subr.mxu0 0.0
    %5224 = vmatpush1.msra.mxu0 %v160
    %5225 = vmatprep.subr.mxu0 0.0
    %5226 = vmatpush1.msra.mxu0 %v161
    %5227 = vmatprep.subr.mxu0 0.0
    %5228 = vmatpush1.msra.mxu0 %v162
    %5229 = vmatprep.subr.mxu0 0.0
    %5230 = vmatpush1.msra.mxu0 %v163
    %5231 = vmatprep.subr.mxu0 0.0
    %5232 = vmatpush1.msra.mxu0 0.0
    %5233 = vmatprep.subr.mxu0 0.0
    %5234 = vmatpush1.msra.mxu0 0.0
    %5235 = vmatprep.subr.mxu0 0.0
    %5236 = vmatpush1.msra.mxu0 0.0
    %5237 = vmatprep.subr.mxu0 0.0
    %5238 = vmatpush1.msra.mxu0 0.0
    %5239 = vmatprep.subr.mxu0 0.0
    %5240 = vmatpush1.msra.mxu0 0.0
    %5241 = vmatprep.subr.mxu0 0.0
    %5242 = vmatpush1.msra.mxu0 0.0
    %5243 = vmatprep.subr.mxu0 0.0
    %5244 = vmatpush1.msra.mxu0 0.0
    %5245 = vmatprep.subr.mxu0 0.0
    %5246 = vmatpush1.msra.mxu0 0.0
    %5247 = vmatprep.subr.mxu0 0.0
    %5248 = vmatpush1.msra.mxu0 0.0
    %5249 = vmatprep.subr.mxu0 0.0
    %5250 = vmatpush1.msra.mxu0 0.0
    %5251 = vmatprep.subr.mxu0 0.0
    %5252 = vmatpush1.msra.mxu0 0.0
    %5253 = vmatprep.subr.mxu0 0.0
    %5254 = vmatpush1.msra.mxu0 0.0
    %5255 = vmatprep.subr.mxu0 0.0
    %5256 = vmatpush1.msra.mxu0 0.0
    %5257 = vmatprep.subr.mxu0 0.0
    %5258 = vmatpush1.msra.mxu0 0.0
    %5259 = vmatprep.subr.mxu0 0.0
    %5260 = vmatpush1.msra.mxu0 0.0
    %5261 = vmatprep.subr.mxu0 0.0
    %5262 = vmatpush1.msra.mxu0 0.0
    %5263 = vmatprep.subr.mxu0 0.0
    %5264 = vmatpush1.msra.mxu0 0.0
    %5265 = vmatprep.subr.mxu0 0.0
    %5266 = vmatpush1.msra.mxu0 0.0
    %5267 = vmatprep.subr.mxu0 0.0
    %5268 = vmatpush1.msra.mxu0 0.0
    %5269 = vmatprep.subr.mxu0 0.0
    %5270 = vmatpush1.msra.mxu0 0.0
    %5271 = vmatprep.subr.mxu0 0.0
    %5272 = vmatpush1.msra.mxu0 0.0
    %5273 = vmatprep.subr.mxu0 0.0
    %5274 = vmatpush1.msra.mxu0 0.0
    %5275 = vmatprep.subr.mxu0 0.0
    %5276 = vmatpush1.msra.mxu0 0.0
    %5277 = vmatprep.subr.mxu0 0.0
    %5278 = vmatpush1.msra.mxu0 0.0
    %5279 = vmatprep.mubr.f32.mxu0 0.0
    %5280 = vmatmul.mubr.f32.gmra.mrb[0].mxu0 %v5213
    %v5281 = vpop.f32.mrb[0].mxu0
    %v5282 = vadd.f32 0.0, %v5281
    %v5283 = vpop.f32.mrb[0].mxu0
    %5284 = vdwg.mxu0
    %v5286 = vsel %vm254, %v5282, 0
    %5288 = vmatprep.subr.mxu0 0.0
    %5289 = vmatpush1.msra.mxu0 %v2205
    %5290 = vmatprep.subr.mxu0 0.0
    %5291 = vmatpush1.msra.mxu0 %v2206
    %5292 = vmatprep.subr.mxu0 0.0
    %5293 = vmatpush1.msra.mxu0 %v2207
    %5294 = vmatprep.subr.mxu0 0.0
    %5295 = vmatpush1.msra.mxu0 %v2208
    %5296 = vmatprep.subr.mxu0 0.0
    %5297 = vmatpush1.msra.mxu0 0.0
    %5298 = vmatprep.subr.mxu0 0.0
    %5299 = vmatpush1.msra.mxu0 0.0
    %5300 = vmatprep.subr.mxu0 0.0
    %5301 = vmatpush1.msra.mxu0 0.0
    %5302 = vmatprep.subr.mxu0 0.0
    %5303 = vmatpush1.msra.mxu0 0.0
    %5304 = vmatprep.subr.mxu0 0.0
    %5305 = vmatpush1.msra.mxu0 0.0
    %5306 = vmatprep.subr.mxu0 0.0
    %5307 = vmatpush1.msra.mxu0 0.0
    %5308 = vmatprep.subr.mxu0 0.0
    %5309 = vmatpush1.msra.mxu0 0.0
    %5310 = vmatprep.subr.mxu0 0.0
    %5311 = vmatpush1.msra.mxu0 0.0
    %5312 = vmatprep.subr.mxu0 0.0
    %5313 = vmatpush1.msra.mxu0 0.0
    %5314 = vmatprep.subr.mxu0 0.0
    %5315 = vmatpush1.msra.mxu0 0.0
    %5316 = vmatprep.subr.mxu0 0.0
    %5317 = vmatpush1.msra.mxu0 0.0
    %5318 = vmatprep.subr.mxu0 0.0
    %5319 = vmatpush1.msra.mxu0 0.0
    %5320 = vmatprep.subr.mxu0 0.0
    %5321 = vmatpush1.msra.mxu0 0.0
    %5322 = vmatprep.subr.mxu0 0.0
    %5323 = vmatpush1.msra.mxu0 0.0
    %5324 = vmatprep.subr.mxu0 0.0
    %5325 = vmatpush1.msra.mxu0 0.0
    %5326 = vmatprep.subr.mxu0 0.0
    %5327 = vmatpush1.msra.mxu0 0.0
    %5328 = vmatprep.subr.mxu0 0.0
    %5329 = vmatpush1.msra.mxu0 0.0
    %5330 = vmatprep.subr.mxu0 0.0
    %5331 = vmatpush1.msra.mxu0 0.0
    %5332 = vmatprep.subr.mxu0 0.0
    %5333 = vmatpush1.msra.mxu0 0.0
    %5334 = vmatprep.subr.mxu0 0.0
    %5335 = vmatpush1.msra.mxu0 0.0
    %5336 = vmatprep.subr.mxu0 0.0
    %5337 = vmatpush1.msra.mxu0 0.0
    %5338 = vmatprep.subr.mxu0 0.0
    %5339 = vmatpush1.msra.mxu0 0.0
    %5340 = vmatprep.subr.mxu0 0.0
    %5341 = vmatpush1.msra.mxu0 0.0
    %5342 = vmatprep.subr.mxu0 0.0
    %5343 = vmatpush1.msra.mxu0 0.0
    %5344 = vmatprep.subr.mxu0 0.0
    %5345 = vmatpush1.msra.mxu0 0.0
    %5346 = vmatprep.subr.mxu0 0.0
    %5347 = vmatpush1.msra.mxu0 0.0
    %5348 = vmatprep.subr.mxu0 0.0
    %5349 = vmatpush1.msra.mxu0 0.0
    %5350 = vmatprep.subr.mxu0 0.0
    %5351 = vmatpush1.msra.mxu0 0.0
    %5352 = vmatprep.mubr.f32.mxu0 0.0
    %5353 = vmatmul.mubr.f32.gmra.mrb[0].mxu0 %v5286
    %v5354 = vpop.f32.mrb[0].mxu0
    %v5355 = vadd.f32 %v2213, %v5354
    %v5356 = vpop.f32.mrb[0].mxu0
    %5357 = vdwg.mxu0
    %5358 = vmatprep.subr.mxu0 0.0
    %5359 = vmatpush1.msra.mxu0 %v2209
    %5360 = vmatprep.subr.mxu0 0.0
    %5361 = vmatpush1.msra.mxu0 %v2210
    %5362 = vmatprep.subr.mxu0 0.0
    %5363 = vmatpush1.msra.mxu0 %v2211
    %5364 = vmatprep.subr.mxu0 0.0
    %5365 = vmatpush1.msra.mxu0 %v2212
    %5366 = vmatprep.subr.mxu0 0.0
    %5367 = vmatpush1.msra.mxu0 0.0
    %5368 = vmatprep.subr.mxu0 0.0
    %5369 = vmatpush1.msra.mxu0 0.0
    %5370 = vmatprep.subr.mxu0 0.0
    %5371 = vmatpush1.msra.mxu0 0.0
    %5372 = vmatprep.subr.mxu0 0.0
    %5373 = vmatpush1.msra.mxu0 0.0
    %5374 = vmatprep.subr.mxu0 0.0
    %5375 = vmatpush1.msra.mxu0 0.0
    %5376 = vmatprep.subr.mxu0 0.0
    %5377 = vmatpush1.msra.mxu0 0.0
    %5378 = vmatprep.subr.mxu0 0.0
    %5379 = vmatpush1.msra.mxu0 0.0
    %5380 = vmatprep.subr.mxu0 0.0
    %5381 = vmatpush1.msra.mxu0 0.0
    %5382 = vmatprep.subr.mxu0 0.0
    %5383 = vmatpush1.msra.mxu0 0.0
    %5384 = vmatprep.subr.mxu0 0.0
    %5385 = vmatpush1.msra.mxu0 0.0
    %5386 = vmatprep.subr.mxu0 0.0
    %5387 = vmatpush1.msra.mxu0 0.0
    %5388 = vmatprep.subr.mxu0 0.0
    %5389 = vmatpush1.msra.mxu0 0.0
    %5390 = vmatprep.subr.mxu0 0.0
    %5391 = vmatpush1.msra.mxu0 0.0
    %5392 = vmatprep.subr.mxu0 0.0
    %5393 = vmatpush1.msra.mxu0 0.0
    %5394 = vmatprep.subr.mxu0 0.0
    %5395 = vmatpush1.msra.mxu0 0.0
    %5396 = vmatprep.subr.mxu0 0.0
    %5397 = vmatpush1.msra.mxu0 0.0
    %5398 = vmatprep.subr.mxu0 0.0
    %5399 = vmatpush1.msra.mxu0 0.0
    %5400 = vmatprep.subr.mxu0 0.0
    %5401 = vmatpush1.msra.mxu0 0.0
    %5402 = vmatprep.subr.mxu0 0.0
    %5403 = vmatpush1.msra.mxu0 0.0
    %5404 = vmatprep.subr.mxu0 0.0
    %5405 = vmatpush1.msra.mxu0 0.0
    %5406 = vmatprep.subr.mxu0 0.0
    %5407 = vmatpush1.msra.mxu0 0.0
    %5408 = vmatprep.subr.mxu0 0.0
    %5409 = vmatpush1.msra.mxu0 0.0
    %5410 = vmatprep.subr.mxu0 0.0
    %5411 = vmatpush1.msra.mxu0 0.0
    %5412 = vmatprep.subr.mxu0 0.0
    %5413 = vmatpush1.msra.mxu0 0.0
    %5414 = vmatprep.subr.mxu0 0.0
    %5415 = vmatpush1.msra.mxu0 0.0
    %5416 = vmatprep.subr.mxu0 0.0
    %5417 = vmatpush1.msra.mxu0 0.0
    %5418 = vmatprep.subr.mxu0 0.0
    %5419 = vmatpush1.msra.mxu0 0.0
    %5420 = vmatprep.subr.mxu0 0.0
    %5421 = vmatpush1.msra.mxu0 0.0
    %5422 = vmatprep.mubr.f32.mxu0 0.0
    %5423 = vmatmul.mubr.f32.gmra.mrb[0].mxu0 %v4720
    %v5424 = vpop.f32.mrb[0].mxu0
    %v5425 = vadd.f32 %v2214, %v5424
    %v5426 = vpop.f32.mrb[0].mxu0
    %5427 = vdwg.mxu0
    %v5428 = vadd.f32 %v5355, %v5425
    %v5429 = vxor.u32 %v5428, 2147483648
    %v5430 = vmul.f32 %v5429, 1.442695
    %v5431 = vpow.pop %v5430
    %v5432 = vadd.f32 %v5431, 1.0
    %v5433 = vrcp.pop %v5432
    %v5434 = vmul.f32 1.0, %v5433
    %5436 = vrot.lane.b32.xlu0 %v5425, 64
    %v5437 = vpop.permute.xlu0 %5436
    %v5439 = vmul.f32 %v5434, %v5437
    %5441 = vrot.lane.b32.xlu0 %v5439, 64
    %v5442 = vpop.permute.xlu0 %5441
    %v5444 = vadd.f32 %v5355, %v5442
    %v5445 = vtanh.pop %v5444
    %v5446 = vsub.f32 1.0, %v5434
    %5448 = vrot.lane.b32.xlu0 %v5445, 96
    %v5449 = vpop.permute.xlu0 %5448
    %v5451 = vmul.f32 %v5446, %v5449
    %v5452 = vmul.f32 %v5434, %v4716
    %v5453 = vadd.f32 %v5451, %v5452
    %5455 = vrot.lane.b32.xlu0 %v5453, 96
    %v5456 = vpop.permute.xlu0 %5455
    %v5457 = vsel %vm254, %v5456, 0
    %5459 = vmatprep.subr.mxu0 0.0
    %5460 = vmatpush1.xpose.msra.mxu0 %v2506
    %5461 = vmatprep.subr.mxu0 0.0
    %5462 = vmatpush1.xpose.msra.mxu0 0.0
    %5463 = vmatprep.subr.mxu0 0.0
    %5464 = vmatpush1.xpose.msra.mxu0 0.0
    %5465 = vmatprep.subr.mxu0 0.0
    %5466 = vmatpush1.xpose.msra.mxu0 0.0
    %5467 = vmatprep.subr.mxu0 0.0
    %5468 = vmatpush1.xpose.msra.mxu0 0.0
    %5469 = vmatprep.subr.mxu0 0.0
    %5470 = vmatpush1.xpose.msra.mxu0 0.0
    %5471 = vmatprep.subr.mxu0 0.0
    %5472 = vmatpush1.xpose.msra.mxu0 0.0
    %5473 = vmatprep.subr.mxu0 0.0
    %5474 = vmatpush1.xpose.msra.mxu0 0.0
    %5475 = vmatprep.subr.mxu0 0.0
    %5476 = vmatpush1.xpose.msra.mxu0 0.0
    %5477 = vmatprep.subr.mxu0 0.0
    %5478 = vmatpush1.xpose.msra.mxu0 0.0
    %5479 = vmatprep.subr.mxu0 0.0
    %5480 = vmatpush1.xpose.msra.mxu0 0.0
    %5481 = vmatprep.subr.mxu0 0.0
    %5482 = vmatpush1.xpose.msra.mxu0 0.0
    %5483 = vmatprep.subr.mxu0 0.0
    %5484 = vmatpush1.xpose.msra.mxu0 0.0
    %5485 = vmatprep.subr.mxu0 0.0
    %5486 = vmatpush1.xpose.msra.mxu0 0.0
    %5487 = vmatprep.subr.mxu0 0.0
    %5488 = vmatpush1.xpose.msra.mxu0 0.0
    %5489 = vmatprep.subr.mxu0 0.0
    %5490 = vmatpush1.xpose.msra.mxu0 0.0
    %5491 = vmatprep.subr.mxu0 0.0
    %5492 = vmatpush1.xpose.msra.mxu0 0.0
    %5493 = vmatprep.subr.mxu0 0.0
    %5494 = vmatpush1.xpose.msra.mxu0 0.0
    %5495 = vmatprep.subr.mxu0 0.0
    %5496 = vmatpush1.xpose.msra.mxu0 0.0
    %5497 = vmatprep.subr.mxu0 0.0
    %5498 = vmatpush1.xpose.msra.mxu0 0.0
    %5499 = vmatprep.subr.mxu0 0.0
    %5500 = vmatpush1.xpose.msra.mxu0 0.0
    %5501 = vmatprep.subr.mxu0 0.0
    %5502 = vmatpush1.xpose.msra.mxu0 0.0
    %5503 = vmatprep.subr.mxu0 0.0
    %5504 = vmatpush1.xpose.msra.mxu0 0.0
    %5505 = vmatprep.subr.mxu0 0.0
    %5506 = vmatpush1.xpose.msra.mxu0 0.0
    %5507 = vmatprep.subr.mxu0 0.0
    %5508 = vmatpush1.xpose.msra.mxu0 0.0
    %5509 = vmatprep.subr.mxu0 0.0
    %5510 = vmatpush1.xpose.msra.mxu0 0.0
    %5511 = vmatprep.subr.mxu0 0.0
    %5512 = vmatpush1.xpose.msra.mxu0 0.0
    %5513 = vmatprep.subr.mxu0 0.0
    %5514 = vmatpush1.xpose.msra.mxu0 0.0
    %5515 = vmatprep.subr.mxu0 0.0
    %5516 = vmatpush1.xpose.msra.mxu0 0.0
    %5517 = vmatprep.subr.mxu0 0.0
    %5518 = vmatpush1.xpose.msra.mxu0 0.0
    %5519 = vmatprep.subr.mxu0 0.0
    %5520 = vmatpush1.xpose.msra.mxu0 0.0
    %5521 = vmatprep.subr.mxu0 0.0
    %5522 = vmatpush1.xpose.msra.mxu0 0.0
    %5523 = vmatprep.mubr.f32.mxu0 0.0
    %5524 = vmatmul.mubr.f32.gmra.mrb[0].mxu0 %v5457
    %v5525 = vpop.f32.mrb[0].mxu0
    %v5526 = vadd.f32 0.0, %v5525
    %v5527 = vpop.f32.mrb[0].mxu0
    %5528 = vdwg.mxu0
    %v5529 = vsel %vm2578, %v5526, -inf
    %5530 = vmax.xlane.f32.xlu0 %v5529
    %v5531 = vpop.xlane.xlu0 %5530
    %v5532 = vsub.f32 %v5526, %v5531
    %v5533 = vmul.f32 %v5532, 1.442695
    %v5534 = vpow.pop %v5533
    %v5535 = vsel %vm2578, %v5534, 0.0
    %5536 = vadd.xlane.f32.xlu0 %v5535
    %v5537 = vpop.xlane.xlu0 %5536
    %v5538 = vrcp.pop %v5537
    %v5539 = vmul.f32 %v5534, %v5538
    %v5541 = vsel %vm2590, %v5539, 0
    %5543 = vmatprep.subr.mxu0 0.0
    %5544 = vmatpush1.msra.mxu0 %v2204
    %5545 = vmatprep.subr.mxu0 0.0
    %5546 = vmatpush1.msra.mxu0 0.0
    %5547 = vmatprep.subr.mxu0 0.0
    %5548 = vmatpush1.msra.mxu0 0.0
    %5549 = vmatprep.subr.mxu0 0.0
    %5550 = vmatpush1.msra.mxu0 0.0
    %5551 = vmatprep.subr.mxu0 0.0
    %5552 = vmatpush1.msra.mxu0 0.0
    %5553 = vmatprep.subr.mxu0 0.0
    %5554 = vmatpush1.msra.mxu0 0.0
    %5555 = vmatprep.subr.mxu0 0.0
    %5556 = vmatpush1.msra.mxu0 0.0
    %5557 = vmatprep.subr.mxu0 0.0
    %5558 = vmatpush1.msra.mxu0 0.0
    %5559 = vmatprep.subr.mxu0 0.0
    %5560 = vmatpush1.msra.mxu0 0.0
    %5561 = vmatprep.subr.mxu0 0.0
    %5562 = vmatpush1.msra.mxu0 0.0
    %5563 = vmatprep.subr.mxu0 0.0
    %5564 = vmatpush1.msra.mxu0 0.0
    %5565 = vmatprep.subr.mxu0 0.0
    %5566 = vmatpush1.msra.mxu0 0.0
    %5567 = vmatprep.subr.mxu0 0.0
    %5568 = vmatpush1.msra.mxu0 0.0
    %5569 = vmatprep.subr.mxu0 0.0
    %5570 = vmatpush1.msra.mxu0 0.0
    %5571 = vmatprep.subr.mxu0 0.0
    %5572 = vmatpush1.msra.mxu0 0.0
    %5573 = vmatprep.subr.mxu0 0.0
    %5574 = vmatpush1.msra.mxu0 0.0
    %5575 = vmatprep.subr.mxu0 0.0
    %5576 = vmatpush1.msra.mxu0 0.0
    %5577 = vmatprep.subr.mxu0 0.0
    %5578 = vmatpush1.msra.mxu0 0.0
    %5579 = vmatprep.subr.mxu0 0.0
    %5580 = vmatpush1.msra.mxu0 0.0
    %5581 = vmatprep.subr.mxu0 0.0
    %5582 = vmatpush1.msra.mxu0 0.0
    %5583 = vmatprep.subr.mxu0 0.0
    %5584 = vmatpush1.msra.mxu0 0.0
    %5585 = vmatprep.subr.mxu0 0.0
    %5586 = vmatpush1.msra.mxu0 0.0
    %5587 = vmatprep.subr.mxu0 0.0
    %5588 = vmatpush1.msra.mxu0 0.0
    %5589 = vmatprep.subr.mxu0 0.0
    %5590 = vmatpush1.msra.mxu0 0.0
    %5591 = vmatprep.subr.mxu0 0.0
    %5592 = vmatpush1.msra.mxu0 0.0
    %5593 = vmatprep.subr.mxu0 0.0
    %5594 = vmatpush1.msra.mxu0 0.0
    %5595 = vmatprep.subr.mxu0 0.0
    %5596 = vmatpush1.msra.mxu0 0.0
    %5597 = vmatprep.subr.mxu0 0.0
    %5598 = vmatpush1.msra.mxu0 0.0
    %5599 = vmatprep.subr.mxu0 0.0
    %5600 = vmatpush1.msra.mxu0 0.0
    %5601 = vmatprep.subr.mxu0 0.0
    %5602 = vmatpush1.msra.mxu0 0.0
    %5603 = vmatprep.subr.mxu0 0.0
    %5604 = vmatpush1.msra.mxu0 0.0
    %5605 = vmatprep.subr.mxu0 0.0
    %5606 = vmatpush1.msra.mxu0 0.0
    %5607 = vmatprep.mubr.f32.mxu0 0.0
    %5608 = vmatmul.mubr.f32.gmra.mrb[0].mxu0 %v5541
    %v5609 = vpop.f32.mrb[0].mxu0
    %v5610 = vadd.f32 0.0, %v5609
    %v5611 = vpop.f32.mrb[0].mxu0
    %5612 = vdwg.mxu0
    %v5614 = vsel %vm254, %v5610, 0
    %5616 = vmatprep.subr.mxu0 0.0
    %5617 = vmatpush1.msra.mxu0 %v2219
    %5618 = vmatprep.subr.mxu0 0.0
    %5619 = vmatpush1.msra.mxu0 %v2220
    %5620 = vmatprep.subr.mxu0 0.0
    %5621 = vmatpush1.msra.mxu0 %v2221
    %5622 = vmatprep.subr.mxu0 0.0
    %5623 = vmatpush1.msra.mxu0 %v2222
    %5624 = vmatprep.subr.mxu0 0.0
    %5625 = vmatpush1.msra.mxu0 0.0
    %5626 = vmatprep.subr.mxu0 0.0
    %5627 = vmatpush1.msra.mxu0 0.0
    %5628 = vmatprep.subr.mxu0 0.0
    %5629 = vmatpush1.msra.mxu0 0.0
    %5630 = vmatprep.subr.mxu0 0.0
    %5631 = vmatpush1.msra.mxu0 0.0
    %5632 = vmatprep.subr.mxu0 0.0
    %5633 = vmatpush1.msra.mxu0 0.0
    %5634 = vmatprep.subr.mxu0 0.0
    %5635 = vmatpush1.msra.mxu0 0.0
    %5636 = vmatprep.subr.mxu0 0.0
    %5637 = vmatpush1.msra.mxu0 0.0
    %5638 = vmatprep.subr.mxu0 0.0
    %5639 = vmatpush1.msra.mxu0 0.0
    %5640 = vmatprep.subr.mxu0 0.0
    %5641 = vmatpush1.msra.mxu0 0.0
    %5642 = vmatprep.subr.mxu0 0.0
    %5643 = vmatpush1.msra.mxu0 0.0
    %5644 = vmatprep.subr.mxu0 0.0
    %5645 = vmatpush1.msra.mxu0 0.0
    %5646 = vmatprep.subr.mxu0 0.0
    %5647 = vmatpush1.msra.mxu0 0.0
    %5648 = vmatprep.subr.mxu0 0.0
    %5649 = vmatpush1.msra.mxu0 0.0
    %5650 = vmatprep.subr.mxu0 0.0
    %5651 = vmatpush1.msra.mxu0 0.0
    %5652 = vmatprep.subr.mxu0 0.0
    %5653 = vmatpush1.msra.mxu0 0.0
    %5654 = vmatprep.subr.mxu0 0.0
    %5655 = vmatpush1.msra.mxu0 0.0
    %5656 = vmatprep.subr.mxu0 0.0
    %5657 = vmatpush1.msra.mxu0 0.0
    %5658 = vmatprep.subr.mxu0 0.0
    %5659 = vmatpush1.msra.mxu0 0.0
    %5660 = vmatprep.subr.mxu0 0.0
    %5661 = vmatpush1.msra.mxu0 0.0
    %5662 = vmatprep.subr.mxu0 0.0
    %5663 = vmatpush1.msra.mxu0 0.0
    %5664 = vmatprep.subr.mxu0 0.0
    %5665 = vmatpush1.msra.mxu0 0.0
    %5666 = vmatprep.subr.mxu0 0.0
    %5667 = vmatpush1.msra.mxu0 0.0
    %5668 = vmatprep.subr.mxu0 0.0
    %5669 = vmatpush1.msra.mxu0 0.0
    %5670 = vmatprep.subr.mxu0 0.0
    %5671 = vmatpush1.msra.mxu0 0.0
    %5672 = vmatprep.subr.mxu0 0.0
    %5673 = vmatpush1.msra.mxu0 0.0
    %5674 = vmatprep.subr.mxu0 0.0
    %5675 = vmatpush1.msra.mxu0 0.0
    %5676 = vmatprep.subr.mxu0 0.0
    %5677 = vmatpush1.msra.mxu0 0.0
    %5678 = vmatprep.subr.mxu0 0.0
    %5679 = vmatpush1.msra.mxu0 0.0
    %5680 = vmatprep.mubr.f32.mxu0 0.0
    %5681 = vmatmul.mubr.f32.gmra.mrb[0].mxu0 %v5614
    %v5682 = vpop.f32.mrb[0].mxu0
    %v5683 = vadd.f32 0.0, %v5682
    %v5684 = vpop.f32.mrb[0].mxu0
    %5685 = vdwg.mxu0
    %5686 = vmatprep.subr.mxu0 0.0
    %5687 = vmatpush1.msra.mxu0 %v2215
    %5688 = vmatprep.subr.mxu0 0.0
    %5689 = vmatpush1.msra.mxu0 %v2216
    %5690 = vmatprep.subr.mxu0 0.0
    %5691 = vmatpush1.msra.mxu0 %v2217
    %5692 = vmatprep.subr.mxu0 0.0
    %5693 = vmatpush1.msra.mxu0 %v2218
    %5694 = vmatprep.subr.mxu0 0.0
    %5695 = vmatpush1.msra.mxu0 0.0
    %5696 = vmatprep.subr.mxu0 0.0
    %5697 = vmatpush1.msra.mxu0 0.0
    %5698 = vmatprep.subr.mxu0 0.0
    %5699 = vmatpush1.msra.mxu0 0.0
    %5700 = vmatprep.subr.mxu0 0.0
    %5701 = vmatpush1.msra.mxu0 0.0
    %5702 = vmatprep.subr.mxu0 0.0
    %5703 = vmatpush1.msra.mxu0 0.0
    %5704 = vmatprep.subr.mxu0 0.0
    %5705 = vmatpush1.msra.mxu0 0.0
    %5706 = vmatprep.subr.mxu0 0.0
    %5707 = vmatpush1.msra.mxu0 0.0
    %5708 = vmatprep.subr.mxu0 0.0
    %5709 = vmatpush1.msra.mxu0 0.0
    %5710 = vmatprep.subr.mxu0 0.0
    %5711 = vmatpush1.msra.mxu0 0.0
    %5712 = vmatprep.subr.mxu0 0.0
    %5713 = vmatpush1.msra.mxu0 0.0
    %5714 = vmatprep.subr.mxu0 0.0
    %5715 = vmatpush1.msra.mxu0 0.0
    %5716 = vmatprep.subr.mxu0 0.0
    %5717 = vmatpush1.msra.mxu0 0.0
    %5718 = vmatprep.subr.mxu0 0.0
    %5719 = vmatpush1.msra.mxu0 0.0
    %5720 = vmatprep.subr.mxu0 0.0
    %5721 = vmatpush1.msra.mxu0 0.0
    %5722 = vmatprep.subr.mxu0 0.0
    %5723 = vmatpush1.msra.mxu0 0.0
    %5724 = vmatprep.subr.mxu0 0.0
    %5725 = vmatpush1.msra.mxu0 0.0
    %5726 = vmatprep.subr.mxu0 0.0
    %5727 = vmatpush1.msra.mxu0 0.0
    %5728 = vmatprep.subr.mxu0 0.0
    %5729 = vmatpush1.msra.mxu0 0.0
    %5730 = vmatprep.subr.mxu0 0.0
    %5731 = vmatpush1.msra.mxu0 0.0
    %5732 = vmatprep.subr.mxu0 0.0
    %5733 = vmatpush1.msra.mxu0 0.0
    %5734 = vmatprep.subr.mxu0 0.0
    %5735 = vmatpush1.msra.mxu0 0.0
    %5736 = vmatprep.subr.mxu0 0.0
    %5737 = vmatpush1.msra.mxu0 0.0
    %5738 = vmatprep.subr.mxu0 0.0
    %5739 = vmatpush1.msra.mxu0 0.0
    %5740 = vmatprep.subr.mxu0 0.0
    %5741 = vmatpush1.msra.mxu0 0.0
    %5742 = vmatprep.subr.mxu0 0.0
    %5743 = vmatpush1.msra.mxu0 0.0
    %5744 = vmatprep.subr.mxu0 0.0
    %5745 = vmatpush1.msra.mxu0 0.0
    %5746 = vmatprep.subr.mxu0 0.0
    %5747 = vmatpush1.msra.mxu0 0.0
    %5748 = vmatprep.subr.mxu0 0.0
    %5749 = vmatpush1.msra.mxu0 0.0
    %5750 = vmatprep.mubr.f32.mxu0 0.0
    %5751 = vmatmul.mubr.f32.gmra.mrb[0].mxu0 %v5457
    %v5752 = vpop.f32.mrb[0].mxu0
    %v5753 = vadd.f32 %v5683, %v5752
    %v5754 = vpop.f32.mrb[0].mxu0
    %5755 = vdwg.mxu0
    %v5756 = vadd.f32 %v5753, %v2223
    %v5757 = vtanh.pop %v5756
    %v5759 = vsel %vm254, %v5757, 0
    %5761 = vmatprep.subr.mxu0 0.0
    %5762 = vmatpush1.msra.mxu0 %v2224
    %5763 = vmatprep.subr.mxu0 0.0
    %5764 = vmatpush1.msra.mxu0 %v2225
    %5765 = vmatprep.subr.mxu0 0.0
    %5766 = vmatpush1.msra.mxu0 %v2226
    %5767 = vmatprep.subr.mxu0 0.0
    %5768 = vmatpush1.msra.mxu0 %v2227
    %5769 = vmatprep.subr.mxu0 0.0
    %5770 = vmatpush1.msra.mxu0 0.0
    %5771 = vmatprep.subr.mxu0 0.0
    %5772 = vmatpush1.msra.mxu0 0.0
    %5773 = vmatprep.subr.mxu0 0.0
    %5774 = vmatpush1.msra.mxu0 0.0
    %5775 = vmatprep.subr.mxu0 0.0
    %5776 = vmatpush1.msra.mxu0 0.0
    %5777 = vmatprep.subr.mxu0 0.0
    %5778 = vmatpush1.msra.mxu0 0.0
    %5779 = vmatprep.subr.mxu0 0.0
    %5780 = vmatpush1.msra.mxu0 0.0
    %5781 = vmatprep.subr.mxu0 0.0
    %5782 = vmatpush1.msra.mxu0 0.0
    %5783 = vmatprep.subr.mxu0 0.0
    %5784 = vmatpush1.msra.mxu0 0.0
    %5785 = vmatprep.subr.mxu0 0.0
    %5786 = vmatpush1.msra.mxu0 0.0
    %5787 = vmatprep.subr.mxu0 0.0
    %5788 = vmatpush1.msra.mxu0 0.0
    %5789 = vmatprep.subr.mxu0 0.0
    %5790 = vmatpush1.msra.mxu0 0.0
    %5791 = vmatprep.subr.mxu0 0.0
    %5792 = vmatpush1.msra.mxu0 0.0
    %5793 = vmatprep.subr.mxu0 0.0
    %5794 = vmatpush1.msra.mxu0 0.0
    %5795 = vmatprep.subr.mxu0 0.0
    %5796 = vmatpush1.msra.mxu0 0.0
    %5797 = vmatprep.subr.mxu0 0.0
    %5798 = vmatpush1.msra.mxu0 0.0
    %5799 = vmatprep.subr.mxu0 0.0
    %5800 = vmatpush1.msra.mxu0 0.0
    %5801 = vmatprep.subr.mxu0 0.0
    %5802 = vmatpush1.msra.mxu0 0.0
    %5803 = vmatprep.subr.mxu0 0.0
    %5804 = vmatpush1.msra.mxu0 0.0
    %5805 = vmatprep.subr.mxu0 0.0
    %5806 = vmatpush1.msra.mxu0 0.0
    %5807 = vmatprep.subr.mxu0 0.0
    %5808 = vmatpush1.msra.mxu0 0.0
    %5809 = vmatprep.subr.mxu0 0.0
    %5810 = vmatpush1.msra.mxu0 0.0
    %5811 = vmatprep.subr.mxu0 0.0
    %5812 = vmatpush1.msra.mxu0 0.0
    %5813 = vmatprep.subr.mxu0 0.0
    %5814 = vmatpush1.msra.mxu0 0.0
    %5815 = vmatprep.subr.mxu0 0.0
    %5816 = vmatpush1.msra.mxu0 0.0
    %5817 = vmatprep.subr.mxu0 0.0
    %5818 = vmatpush1.msra.mxu0 0.0
    %5819 = vmatprep.subr.mxu0 0.0
    %5820 = vmatpush1.msra.mxu0 0.0
    %5821 = vmatprep.subr.mxu0 0.0
    %5822 = vmatpush1.msra.mxu0 0.0
    %5823 = vmatprep.subr.mxu0 0.0
    %5824 = vmatpush1.msra.mxu0 0.0
    %5825 = vmatprep.mubr.f32.mxu0 0.0
    %5826 = vmatmul.mubr.f32.gmra.mrb[0].mxu0 %v5759
    %v5827 = vpop.f32.mrb[0].mxu0
    %v5828 = vadd.f32 %v2228, %v5827
    %v5829 = vpop.f32.mrb[0].mxu0
    %5830 = vdwg.mxu0
    %v5831 = vsel %vm2882, %v5828, -inf
    %5832 = vmax.xlane.f32.xlu0 %v5831
    %v5833 = vpop.xlane.xlu0 %5832
    %v5834 = vsub.f32 %v5828, %v5833
    %v5835 = vmul.f32 %v5834, 1.442695
    %v5836 = vpow.pop %v5835
    %v5837 = vsel %vm2882, %v5836, 0.0
    %5838 = vadd.xlane.f32.xlu0 %v5837
    %v5839 = vpop.xlane.xlu0 %5838
    %v5840 = vrcp.pop %v5839
    %v5841 = vmul.f32 %v5836, %v5840
    %s5842 = sld [smem:[#allocation8 + $0x4]]
    %v5844 = vsel %vm180, %v5841, 0
    %5846 = vmatprep.subr.mxu0 0.0
    %5847 = vmatpush1.msra.mxu0 %v2246
    %5848 = vmatprep.subr.mxu0 0.0
    %5849 = vmatpush1.msra.mxu0 %v2247
    %5850 = vmatprep.subr.mxu0 0.0
    %5851 = vmatpush1.msra.mxu0 %v2248
    %5852 = vmatprep.subr.mxu0 0.0
    %5853 = vmatpush1.msra.mxu0 %v2249
    %5854 = vmatprep.subr.mxu0 0.0
    %5855 = vmatpush1.msra.mxu0 %v2250
    %5856 = vmatprep.subr.mxu0 0.0
    %5857 = vmatpush1.msra.mxu0 %v2251
    %5858 = vmatprep.subr.mxu0 0.0
    %5859 = vmatpush1.msra.mxu0 %v2252
    %5860 = vmatprep.subr.mxu0 0.0
    %5861 = vmatpush1.msra.mxu0 %v2253
    %5862 = vmatprep.subr.mxu0 0.0
    %5863 = vmatpush1.msra.mxu0 0.0
    %5864 = vmatprep.subr.mxu0 0.0
    %5865 = vmatpush1.msra.mxu0 0.0
    %5866 = vmatprep.subr.mxu0 0.0
    %5867 = vmatpush1.msra.mxu0 0.0
    %5868 = vmatprep.subr.mxu0 0.0
    %5869 = vmatpush1.msra.mxu0 0.0
    %5870 = vmatprep.subr.mxu0 0.0
    %5871 = vmatpush1.msra.mxu0 0.0
    %5872 = vmatprep.subr.mxu0 0.0
    %5873 = vmatpush1.msra.mxu0 0.0
    %5874 = vmatprep.subr.mxu0 0.0
    %5875 = vmatpush1.msra.mxu0 0.0
    %5876 = vmatprep.subr.mxu0 0.0
    %5877 = vmatpush1.msra.mxu0 0.0
    %5878 = vmatprep.subr.mxu0 0.0
    %5879 = vmatpush1.msra.mxu0 0.0
    %5880 = vmatprep.subr.mxu0 0.0
    %5881 = vmatpush1.msra.mxu0 0.0
    %5882 = vmatprep.subr.mxu0 0.0
    %5883 = vmatpush1.msra.mxu0 0.0
    %5884 = vmatprep.subr.mxu0 0.0
    %5885 = vmatpush1.msra.mxu0 0.0
    %5886 = vmatprep.subr.mxu0 0.0
    %5887 = vmatpush1.msra.mxu0 0.0
    %5888 = vmatprep.subr.mxu0 0.0
    %5889 = vmatpush1.msra.mxu0 0.0
    %5890 = vmatprep.subr.mxu0 0.0
    %5891 = vmatpush1.msra.mxu0 0.0
    %5892 = vmatprep.subr.mxu0 0.0
    %5893 = vmatpush1.msra.mxu0 0.0
    %5894 = vmatprep.subr.mxu0 0.0
    %5895 = vmatpush1.msra.mxu0 0.0
    %5896 = vmatprep.subr.mxu0 0.0
    %5897 = vmatpush1.msra.mxu0 0.0
    %5898 = vmatprep.subr.mxu0 0.0
    %5899 = vmatpush1.msra.mxu0 0.0
    %5900 = vmatprep.subr.mxu0 0.0
    %5901 = vmatpush1.msra.mxu0 0.0
    %5902 = vmatprep.subr.mxu0 0.0
    %5903 = vmatpush1.msra.mxu0 0.0
    %5904 = vmatprep.subr.mxu0 0.0
    %5905 = vmatpush1.msra.mxu0 0.0
    %5906 = vmatprep.subr.mxu0 0.0
    %5907 = vmatpush1.msra.mxu0 0.0
    %5908 = vmatprep.subr.mxu0 0.0
    %5909 = vmatpush1.msra.mxu0 0.0
    %5910 = vmatprep.mubr.f32.mxu0 0.0
    %5911 = vmatmul.mubr.f32.gmra.mrb[0].mxu0 %v5844
    %v5912 = vpop.f32.mrb[0].mxu0
    %v5913 = vadd.f32 0.0, %v5912
    %v5914 = vpop.f32.mrb[0].mxu0
    %5915 = vdwg.mxu0
    %v5916 = vstv %s5842
    %vm5917 = vcmp.ge.f32.partialorder %v5916, %v5913
    %v5918 = vsel %vm5917, 1.0, 0.0
    %v5919 = vsel %vm2882, %v5918, 0.0
    %5920 = vadd.xlane.f32.xlu0 %v5919
    %v5921 = vpop.xlane.xlu0 %5920
    %v5922 = vrot.slane %v5921, 4
    %v5923 = vadd.f32 %v5921, %v5922
    %v5924 = vrot.slane %v5923, 2
    %v5925 = vadd.f32 %v5923, %v5924
    %v5926 = vrot.slane %v5925, 1
    %v5927 = vadd.f32 %v5925, %v5926
    %s5928 = vtos %v5927
    %s5929 = smin.f32 %s5928, 63.0
    %s5930 = scvt.f32.s32.to.zero.pseudo %s5929
    %v5931 = vstv %s5930
    %vm5932 = vcmp.eq.s32.totalorder %v165, %v5931
    %v5933 = vsel %vm5932, 1.0, 0.0
    %v5934 = vmul.f32 %v5841, %v5933
    %v5935 = vsel %vm2882, %v5934, 0.0
    %5936 = vadd.xlane.f32.xlu0 %v5935
    %v5937 = vpop.xlane.xlu0 %5936
    %v5938 = vrot.slane %v5937, 4
    %v5939 = vadd.f32 %v5937, %v5938
    %v5940 = vrot.slane %v5939, 2
    %v5941 = vadd.f32 %v5939, %v5940
    %v5942 = vrot.slane %v5941, 1
    %v5943 = vadd.f32 %v5941, %v5942
    %s5944 = vtos %v5943
    %s5945 = scalar_lea.smem [#allocation18], 4
    %5946 = sst [smem:[%s5945]] %s5930
    %s5947 = scalar_lea.smem [#allocation19], 4
    %5948 = sst [smem:[%s5947]] %s5944
    %v5950 = vsel %vm180, %v5933, 0
    %5952 = vmatprep.subr.mxu0 0.0
    %5953 = vmatpush1.msra.mxu0 %v156
    %5954 = vmatprep.subr.mxu0 0.0
    %5955 = vmatpush1.msra.mxu0 %v157
    %5956 = vmatprep.subr.mxu0 0.0
    %5957 = vmatpush1.msra.mxu0 %v158
    %5958 = vmatprep.subr.mxu0 0.0
    %5959 = vmatpush1.msra.mxu0 %v159
    %5960 = vmatprep.subr.mxu0 0.0
    %5961 = vmatpush1.msra.mxu0 %v160
    %5962 = vmatprep.subr.mxu0 0.0
    %5963 = vmatpush1.msra.mxu0 %v161
    %5964 = vmatprep.subr.mxu0 0.0
    %5965 = vmatpush1.msra.mxu0 %v162
    %5966 = vmatprep.subr.mxu0 0.0
    %5967 = vmatpush1.msra.mxu0 %v163
    %5968 = vmatprep.subr.mxu0 0.0
    %5969 = vmatpush1.msra.mxu0 0.0
    %5970 = vmatprep.subr.mxu0 0.0
    %5971 = vmatpush1.msra.mxu0 0.0
    %5972 = vmatprep.subr.mxu0 0.0
    %5973 = vmatpush1.msra.mxu0 0.0
    %5974 = vmatprep.subr.mxu0 0.0
    %5975 = vmatpush1.msra.mxu0 0.0
    %5976 = vmatprep.subr.mxu0 0.0
    %5977 = vmatpush1.msra.mxu0 0.0
    %5978 = vmatprep.subr.mxu0 0.0
    %5979 = vmatpush1.msra.mxu0 0.0
    %5980 = vmatprep.subr.mxu0 0.0
    %5981 = vmatpush1.msra.mxu0 0.0
    %5982 = vmatprep.subr.mxu0 0.0
    %5983 = vmatpush1.msra.mxu0 0.0
    %5984 = vmatprep.subr.mxu0 0.0
    %5985 = vmatpush1.msra.mxu0 0.0
    %5986 = vmatprep.subr.mxu0 0.0
    %5987 = vmatpush1.msra.mxu0 0.0
    %5988 = vmatprep.subr.mxu0 0.0
    %5989 = vmatpush1.msra.mxu0 0.0
    %5990 = vmatprep.subr.mxu0 0.0
    %5991 = vmatpush1.msra.mxu0 0.0
    %5992 = vmatprep.subr.mxu0 0.0
    %5993 = vmatpush1.msra.mxu0 0.0
    %5994 = vmatprep.subr.mxu0 0.0
    %5995 = vmatpush1.msra.mxu0 0.0
    %5996 = vmatprep.subr.mxu0 0.0
    %5997 = vmatpush1.msra.mxu0 0.0
    %5998 = vmatprep.subr.mxu0 0.0
    %5999 = vmatpush1.msra.mxu0 0.0
    %6000 = vmatprep.subr.mxu0 0.0
    %6001 = vmatpush1.msra.mxu0 0.0
    %6002 = vmatprep.subr.mxu0 0.0
    %6003 = vmatpush1.msra.mxu0 0.0
    %6004 = vmatprep.subr.mxu0 0.0
    %6005 = vmatpush1.msra.mxu0 0.0
    %6006 = vmatprep.subr.mxu0 0.0
    %6007 = vmatpush1.msra.mxu0 0.0
    %6008 = vmatprep.subr.mxu0 0.0
    %6009 = vmatpush1.msra.mxu0 0.0
    %6010 = vmatprep.subr.mxu0 0.0
    %6011 = vmatpush1.msra.mxu0 0.0
    %6012 = vmatprep.subr.mxu0 0.0
    %6013 = vmatpush1.msra.mxu0 0.0
    %6014 = vmatprep.subr.mxu0 0.0
    %6015 = vmatpush1.msra.mxu0 0.0
    %6016 = vmatprep.mubr.f32.mxu0 0.0
    %6017 = vmatmul.mubr.f32.gmra.mrb[0].mxu0 %v5950
    %v6018 = vpop.f32.mrb[0].mxu0
    %v6019 = vadd.f32 0.0, %v6018
    %v6020 = vpop.f32.mrb[0].mxu0
    %6021 = vdwg.mxu0
    %v6023 = vsel %vm254, %v6019, 0
    %6025 = vmatprep.subr.mxu0 0.0
    %6026 = vmatpush1.msra.mxu0 %v2205
    %6027 = vmatprep.subr.mxu0 0.0
    %6028 = vmatpush1.msra.mxu0 %v2206
    %6029 = vmatprep.subr.mxu0 0.0
    %6030 = vmatpush1.msra.mxu0 %v2207
    %6031 = vmatprep.subr.mxu0 0.0
    %6032 = vmatpush1.msra.mxu0 %v2208
    %6033 = vmatprep.subr.mxu0 0.0
    %6034 = vmatpush1.msra.mxu0 0.0
    %6035 = vmatprep.subr.mxu0 0.0
    %6036 = vmatpush1.msra.mxu0 0.0
    %6037 = vmatprep.subr.mxu0 0.0
    %6038 = vmatpush1.msra.mxu0 0.0
    %6039 = vmatprep.subr.mxu0 0.0
    %6040 = vmatpush1.msra.mxu0 0.0
    %6041 = vmatprep.subr.mxu0 0.0
    %6042 = vmatpush1.msra.mxu0 0.0
    %6043 = vmatprep.subr.mxu0 0.0
    %6044 = vmatpush1.msra.mxu0 0.0
    %6045 = vmatprep.subr.mxu0 0.0
    %6046 = vmatpush1.msra.mxu0 0.0
    %6047 = vmatprep.subr.mxu0 0.0
    %6048 = vmatpush1.msra.mxu0 0.0
    %6049 = vmatprep.subr.mxu0 0.0
    %6050 = vmatpush1.msra.mxu0 0.0
    %6051 = vmatprep.subr.mxu0 0.0
    %6052 = vmatpush1.msra.mxu0 0.0
    %6053 = vmatprep.subr.mxu0 0.0
    %6054 = vmatpush1.msra.mxu0 0.0
    %6055 = vmatprep.subr.mxu0 0.0
    %6056 = vmatpush1.msra.mxu0 0.0
    %6057 = vmatprep.subr.mxu0 0.0
    %6058 = vmatpush1.msra.mxu0 0.0
    %6059 = vmatprep.subr.mxu0 0.0
    %6060 = vmatpush1.msra.mxu0 0.0
    %6061 = vmatprep.subr.mxu0 0.0
    %6062 = vmatpush1.msra.mxu0 0.0
    %6063 = vmatprep.subr.mxu0 0.0
    %6064 = vmatpush1.msra.mxu0 0.0
    %6065 = vmatprep.subr.mxu0 0.0
    %6066 = vmatpush1.msra.mxu0 0.0
    %6067 = vmatprep.subr.mxu0 0.0
    %6068 = vmatpush1.msra.mxu0 0.0
    %6069 = vmatprep.subr.mxu0 0.0
    %6070 = vmatpush1.msra.mxu0 0.0
    %6071 = vmatprep.subr.mxu0 0.0
    %6072 = vmatpush1.msra.mxu0 0.0
    %6073 = vmatprep.subr.mxu0 0.0
    %6074 = vmatpush1.msra.mxu0 0.0
    %6075 = vmatprep.subr.mxu0 0.0
    %6076 = vmatpush1.msra.mxu0 0.0
    %6077 = vmatprep.subr.mxu0 0.0
    %6078 = vmatpush1.msra.mxu0 0.0
    %6079 = vmatprep.subr.mxu0 0.0
    %6080 = vmatpush1.msra.mxu0 0.0
    %6081 = vmatprep.subr.mxu0 0.0
    %6082 = vmatpush1.msra.mxu0 0.0
    %6083 = vmatprep.subr.mxu0 0.0
    %6084 = vmatpush1.msra.mxu0 0.0
    %6085 = vmatprep.subr.mxu0 0.0
    %6086 = vmatpush1.msra.mxu0 0.0
    %6087 = vmatprep.subr.mxu0 0.0
    %6088 = vmatpush1.msra.mxu0 0.0
    %6089 = vmatprep.mubr.f32.mxu0 0.0
    %6090 = vmatmul.mubr.f32.gmra.mrb[0].mxu0 %v6023
    %v6091 = vpop.f32.mrb[0].mxu0
    %v6092 = vadd.f32 %v2213, %v6091
    %v6093 = vpop.f32.mrb[0].mxu0
    %6094 = vdwg.mxu0
    %6095 = vmatprep.subr.mxu0 0.0
    %6096 = vmatpush1.msra.mxu0 %v2209
    %6097 = vmatprep.subr.mxu0 0.0
    %6098 = vmatpush1.msra.mxu0 %v2210
    %6099 = vmatprep.subr.mxu0 0.0
    %6100 = vmatpush1.msra.mxu0 %v2211
    %6101 = vmatprep.subr.mxu0 0.0
    %6102 = vmatpush1.msra.mxu0 %v2212
    %6103 = vmatprep.subr.mxu0 0.0
    %6104 = vmatpush1.msra.mxu0 0.0
    %6105 = vmatprep.subr.mxu0 0.0
    %6106 = vmatpush1.msra.mxu0 0.0
    %6107 = vmatprep.subr.mxu0 0.0
    %6108 = vmatpush1.msra.mxu0 0.0
    %6109 = vmatprep.subr.mxu0 0.0
    %6110 = vmatpush1.msra.mxu0 0.0
    %6111 = vmatprep.subr.mxu0 0.0
    %6112 = vmatpush1.msra.mxu0 0.0
    %6113 = vmatprep.subr.mxu0 0.0
    %6114 = vmatpush1.msra.mxu0 0.0
    %6115 = vmatprep.subr.mxu0 0.0
    %6116 = vmatpush1.msra.mxu0 0.0
    %6117 = vmatprep.subr.mxu0 0.0
    %6118 = vmatpush1.msra.mxu0 0.0
    %6119 = vmatprep.subr.mxu0 0.0
    %6120 = vmatpush1.msra.mxu0 0.0
    %6121 = vmatprep.subr.mxu0 0.0
    %6122 = vmatpush1.msra.mxu0 0.0
    %6123 = vmatprep.subr.mxu0 0.0
    %6124 = vmatpush1.msra.mxu0 0.0
    %6125 = vmatprep.subr.mxu0 0.0
    %6126 = vmatpush1.msra.mxu0 0.0
    %6127 = vmatprep.subr.mxu0 0.0
    %6128 = vmatpush1.msra.mxu0 0.0
    %6129 = vmatprep.subr.mxu0 0.0
    %6130 = vmatpush1.msra.mxu0 0.0
    %6131 = vmatprep.subr.mxu0 0.0
    %6132 = vmatpush1.msra.mxu0 0.0
    %6133 = vmatprep.subr.mxu0 0.0
    %6134 = vmatpush1.msra.mxu0 0.0
    %6135 = vmatprep.subr.mxu0 0.0
    %6136 = vmatpush1.msra.mxu0 0.0
    %6137 = vmatprep.subr.mxu0 0.0
    %6138 = vmatpush1.msra.mxu0 0.0
    %6139 = vmatprep.subr.mxu0 0.0
    %6140 = vmatpush1.msra.mxu0 0.0
    %6141 = vmatprep.subr.mxu0 0.0
    %6142 = vmatpush1.msra.mxu0 0.0
    %6143 = vmatprep.subr.mxu0 0.0
    %6144 = vmatpush1.msra.mxu0 0.0
    %6145 = vmatprep.subr.mxu0 0.0
    %6146 = vmatpush1.msra.mxu0 0.0
    %6147 = vmatprep.subr.mxu0 0.0
    %6148 = vmatpush1.msra.mxu0 0.0
    %6149 = vmatprep.subr.mxu0 0.0
    %6150 = vmatpush1.msra.mxu0 0.0
    %6151 = vmatprep.subr.mxu0 0.0
    %6152 = vmatpush1.msra.mxu0 0.0
    %6153 = vmatprep.subr.mxu0 0.0
    %6154 = vmatpush1.msra.mxu0 0.0
    %6155 = vmatprep.subr.mxu0 0.0
    %6156 = vmatpush1.msra.mxu0 0.0
    %6157 = vmatprep.subr.mxu0 0.0
    %6158 = vmatpush1.msra.mxu0 0.0
    %6159 = vmatprep.mubr.f32.mxu0 0.0
    %6160 = vmatmul.mubr.f32.gmra.mrb[0].mxu0 %v5457
    %v6161 = vpop.f32.mrb[0].mxu0
    %v6162 = vadd.f32 %v2214, %v6161
    %v6163 = vpop.f32.mrb[0].mxu0
    %6164 = vdwg.mxu0
    %v6165 = vadd.f32 %v6092, %v6162
    %v6166 = vxor.u32 %v6165, 2147483648
    %v6167 = vmul.f32 %v6166, 1.442695
    %v6168 = vpow.pop %v6167
    %v6169 = vadd.f32 %v6168, 1.0
    %v6170 = vrcp.pop %v6169
    %v6171 = vmul.f32 1.0, %v6170
    %6173 = vrot.lane.b32.xlu0 %v6162, 64
    %v6174 = vpop.permute.xlu0 %6173
    %v6176 = vmul.f32 %v6171, %v6174
    %6178 = vrot.lane.b32.xlu0 %v6176, 64
    %v6179 = vpop.permute.xlu0 %6178
    %v6181 = vadd.f32 %v6092, %v6179
    %v6182 = vtanh.pop %v6181
    %v6183 = vsub.f32 1.0, %v6171
    %6185 = vrot.lane.b32.xlu0 %v6182, 96
    %v6186 = vpop.permute.xlu0 %6185
    %v6188 = vmul.f32 %v6183, %v6186
    %v6189 = vmul.f32 %v6171, %v5453
    %v6190 = vadd.f32 %v6188, %v6189
    %6192 = vrot.lane.b32.xlu0 %v6190, 96
    %v6193 = vpop.permute.xlu0 %6192
    %v6194 = vsel %vm254, %v6193, 0
    %6196 = vmatprep.subr.mxu0 0.0
    %6197 = vmatpush1.xpose.msra.mxu0 %v2506
    %6198 = vmatprep.subr.mxu0 0.0
    %6199 = vmatpush1.xpose.msra.mxu0 0.0
    %6200 = vmatprep.subr.mxu0 0.0
    %6201 = vmatpush1.xpose.msra.mxu0 0.0
    %6202 = vmatprep.subr.mxu0 0.0
    %6203 = vmatpush1.xpose.msra.mxu0 0.0
    %6204 = vmatprep.subr.mxu0 0.0
    %6205 = vmatpush1.xpose.msra.mxu0 0.0
    %6206 = vmatprep.subr.mxu0 0.0
    %6207 = vmatpush1.xpose.msra.mxu0 0.0
    %6208 = vmatprep.subr.mxu0 0.0
    %6209 = vmatpush1.xpose.msra.mxu0 0.0
    %6210 = vmatprep.subr.mxu0 0.0
    %6211 = vmatpush1.xpose.msra.mxu0 0.0
    %6212 = vmatprep.subr.mxu0 0.0
    %6213 = vmatpush1.xpose.msra.mxu0 0.0
    %6214 = vmatprep.subr.mxu0 0.0
    %6215 = vmatpush1.xpose.msra.mxu0 0.0
    %6216 = vmatprep.subr.mxu0 0.0
    %6217 = vmatpush1.xpose.msra.mxu0 0.0
    %6218 = vmatprep.subr.mxu0 0.0
    %6219 = vmatpush1.xpose.msra.mxu0 0.0
    %6220 = vmatprep.subr.mxu0 0.0
    %6221 = vmatpush1.xpose.msra.mxu0 0.0
    %6222 = vmatprep.subr.mxu0 0.0
    %6223 = vmatpush1.xpose.msra.mxu0 0.0
    %6224 = vmatprep.subr.mxu0 0.0
    %6225 = vmatpush1.xpose.msra.mxu0 0.0
    %6226 = vmatprep.subr.mxu0 0.0
    %6227 = vmatpush1.xpose.msra.mxu0 0.0
    %6228 = vmatprep.subr.mxu0 0.0
    %6229 = vmatpush1.xpose.msra.mxu0 0.0
    %6230 = vmatprep.subr.mxu0 0.0
    %6231 = vmatpush1.xpose.msra.mxu0 0.0
    %6232 = vmatprep.subr.mxu0 0.0
    %6233 = vmatpush1.xpose.msra.mxu0 0.0
    %6234 = vmatprep.subr.mxu0 0.0
    %6235 = vmatpush1.xpose.msra.mxu0 0.0
    %6236 = vmatprep.subr.mxu0 0.0
    %6237 = vmatpush1.xpose.msra.mxu0 0.0
    %6238 = vmatprep.subr.mxu0 0.0
    %6239 = vmatpush1.xpose.msra.mxu0 0.0
    %6240 = vmatprep.subr.mxu0 0.0
    %6241 = vmatpush1.xpose.msra.mxu0 0.0
    %6242 = vmatprep.subr.mxu0 0.0
    %6243 = vmatpush1.xpose.msra.mxu0 0.0
    %6244 = vmatprep.subr.mxu0 0.0
    %6245 = vmatpush1.xpose.msra.mxu0 0.0
    %6246 = vmatprep.subr.mxu0 0.0
    %6247 = vmatpush1.xpose.msra.mxu0 0.0
    %6248 = vmatprep.subr.mxu0 0.0
    %6249 = vmatpush1.xpose.msra.mxu0 0.0
    %6250 = vmatprep.subr.mxu0 0.0
    %6251 = vmatpush1.xpose.msra.mxu0 0.0
    %6252 = vmatprep.subr.mxu0 0.0
    %6253 = vmatpush1.xpose.msra.mxu0 0.0
    %6254 = vmatprep.subr.mxu0 0.0
    %6255 = vmatpush1.xpose.msra.mxu0 0.0
    %6256 = vmatprep.subr.mxu0 0.0
    %6257 = vmatpush1.xpose.msra.mxu0 0.0
    %6258 = vmatprep.subr.mxu0 0.0
    %6259 = vmatpush1.xpose.msra.mxu0 0.0
    %6260 = vmatprep.mubr.f32.mxu0 0.0
    %6261 = vmatmul.mubr.f32.gmra.mrb[0].mxu0 %v6194
    %v6262 = vpop.f32.mrb[0].mxu0
    %v6263 = vadd.f32 0.0, %v6262
    %v6264 = vpop.f32.mrb[0].mxu0
    %6265 = vdwg.mxu0
    %v6266 = vsel %vm2578, %v6263, -inf
    %6267 = vmax.xlane.f32.xlu0 %v6266
    %v6268 = vpop.xlane.xlu0 %6267
    %v6269 = vsub.f32 %v6263, %v6268
    %v6270 = vmul.f32 %v6269, 1.442695
    %v6271 = vpow.pop %v6270
    %v6272 = vsel %vm2578, %v6271, 0.0
    %6273 = vadd.xlane.f32.xlu0 %v6272
    %v6274 = vpop.xlane.xlu0 %6273
    %v6275 = vrcp.pop %v6274
    %v6276 = vmul.f32 %v6271, %v6275
    %v6278 = vsel %vm2590, %v6276, 0
    %6280 = vmatprep.subr.mxu0 0.0
    %6281 = vmatpush1.msra.mxu0 %v2204
    %6282 = vmatprep.subr.mxu0 0.0
    %6283 = vmatpush1.msra.mxu0 0.0
    %6284 = vmatprep.subr.mxu0 0.0
    %6285 = vmatpush1.msra.mxu0 0.0
    %6286 = vmatprep.subr.mxu0 0.0
    %6287 = vmatpush1.msra.mxu0 0.0
    %6288 = vmatprep.subr.mxu0 0.0
    %6289 = vmatpush1.msra.mxu0 0.0
    %6290 = vmatprep.subr.mxu0 0.0
    %6291 = vmatpush1.msra.mxu0 0.0
    %6292 = vmatprep.subr.mxu0 0.0
    %6293 = vmatpush1.msra.mxu0 0.0
    %6294 = vmatprep.subr.mxu0 0.0
    %6295 = vmatpush1.msra.mxu0 0.0
    %6296 = vmatprep.subr.mxu0 0.0
    %6297 = vmatpush1.msra.mxu0 0.0
    %6298 = vmatprep.subr.mxu0 0.0
    %6299 = vmatpush1.msra.mxu0 0.0
    %6300 = vmatprep.subr.mxu0 0.0
    %6301 = vmatpush1.msra.mxu0 0.0
    %6302 = vmatprep.subr.mxu0 0.0
    %6303 = vmatpush1.msra.mxu0 0.0
    %6304 = vmatprep.subr.mxu0 0.0
    %6305 = vmatpush1.msra.mxu0 0.0
    %6306 = vmatprep.subr.mxu0 0.0
    %6307 = vmatpush1.msra.mxu0 0.0
    %6308 = vmatprep.subr.mxu0 0.0
    %6309 = vmatpush1.msra.mxu0 0.0
    %6310 = vmatprep.subr.mxu0 0.0
    %6311 = vmatpush1.msra.mxu0 0.0
    %6312 = vmatprep.subr.mxu0 0.0
    %6313 = vmatpush1.msra.mxu0 0.0
    %6314 = vmatprep.subr.mxu0 0.0
    %6315 = vmatpush1.msra.mxu0 0.0
    %6316 = vmatprep.subr.mxu0 0.0
    %6317 = vmatpush1.msra.mxu0 0.0
    %6318 = vmatprep.subr.mxu0 0.0
    %6319 = vmatpush1.msra.mxu0 0.0
    %6320 = vmatprep.subr.mxu0 0.0
    %6321 = vmatpush1.msra.mxu0 0.0
    %6322 = vmatprep.subr.mxu0 0.0
    %6323 = vmatpush1.msra.mxu0 0.0
    %6324 = vmatprep.subr.mxu0 0.0
    %6325 = vmatpush1.msra.mxu0 0.0
    %6326 = vmatprep.subr.mxu0 0.0
    %6327 = vmatpush1.msra.mxu0 0.0
    %6328 = vmatprep.subr.mxu0 0.0
    %6329 = vmatpush1.msra.mxu0 0.0
    %6330 = vmatprep.subr.mxu0 0.0
    %6331 = vmatpush1.msra.mxu0 0.0
    %6332 = vmatprep.subr.mxu0 0.0
    %6333 = vmatpush1.msra.mxu0 0.0
    %6334 = vmatprep.subr.mxu0 0.0
    %6335 = vmatpush1.msra.mxu0 0.0
    %6336 = vmatprep.subr.mxu0 0.0
    %6337 = vmatpush1.msra.mxu0 0.0
    %6338 = vmatprep.subr.mxu0 0.0
    %6339 = vmatpush1.msra.mxu0 0.0
    %6340 = vmatprep.subr.mxu0 0.0
    %6341 = vmatpush1.msra.mxu0 0.0
    %6342 = vmatprep.subr.mxu0 0.0
    %6343 = vmatpush1.msra.mxu0 0.0
    %6344 = vmatprep.mubr.f32.mxu0 0.0
    %6345 = vmatmul.mubr.f32.gmra.mrb[0].mxu0 %v6278
    %v6346 = vpop.f32.mrb[0].mxu0
    %v6347 = vadd.f32 0.0, %v6346
    %v6348 = vpop.f32.mrb[0].mxu0
    %6349 = vdwg.mxu0
    %v6351 = vsel %vm254, %v6347, 0
    %6353 = vmatprep.subr.mxu0 0.0
    %6354 = vmatpush1.msra.mxu0 %v2219
    %6355 = vmatprep.subr.mxu0 0.0
    %6356 = vmatpush1.msra.mxu0 %v2220
    %6357 = vmatprep.subr.mxu0 0.0
    %6358 = vmatpush1.msra.mxu0 %v2221
    %6359 = vmatprep.subr.mxu0 0.0
    %6360 = vmatpush1.msra.mxu0 %v2222
    %6361 = vmatprep.subr.mxu0 0.0
    %6362 = vmatpush1.msra.mxu0 0.0
    %6363 = vmatprep.subr.mxu0 0.0
    %6364 = vmatpush1.msra.mxu0 0.0
    %6365 = vmatprep.subr.mxu0 0.0
    %6366 = vmatpush1.msra.mxu0 0.0
    %6367 = vmatprep.subr.mxu0 0.0
    %6368 = vmatpush1.msra.mxu0 0.0
    %6369 = vmatprep.subr.mxu0 0.0
    %6370 = vmatpush1.msra.mxu0 0.0
    %6371 = vmatprep.subr.mxu0 0.0
    %6372 = vmatpush1.msra.mxu0 0.0
    %6373 = vmatprep.subr.mxu0 0.0
    %6374 = vmatpush1.msra.mxu0 0.0
    %6375 = vmatprep.subr.mxu0 0.0
    %6376 = vmatpush1.msra.mxu0 0.0
    %6377 = vmatprep.subr.mxu0 0.0
    %6378 = vmatpush1.msra.mxu0 0.0
    %6379 = vmatprep.subr.mxu0 0.0
    %6380 = vmatpush1.msra.mxu0 0.0
    %6381 = vmatprep.subr.mxu0 0.0
    %6382 = vmatpush1.msra.mxu0 0.0
    %6383 = vmatprep.subr.mxu0 0.0
    %6384 = vmatpush1.msra.mxu0 0.0
    %6385 = vmatprep.subr.mxu0 0.0
    %6386 = vmatpush1.msra.mxu0 0.0
    %6387 = vmatprep.subr.mxu0 0.0
    %6388 = vmatpush1.msra.mxu0 0.0
    %6389 = vmatprep.subr.mxu0 0.0
    %6390 = vmatpush1.msra.mxu0 0.0
    %6391 = vmatprep.subr.mxu0 0.0
    %6392 = vmatpush1.msra.mxu0 0.0
    %6393 = vmatprep.subr.mxu0 0.0
    %6394 = vmatpush1.msra.mxu0 0.0
    %6395 = vmatprep.subr.mxu0 0.0
    %6396 = vmatpush1.msra.mxu0 0.0
    %6397 = vmatprep.subr.mxu0 0.0
    %6398 = vmatpush1.msra.mxu0 0.0
    %6399 = vmatprep.subr.mxu0 0.0
    %6400 = vmatpush1.msra.mxu0 0.0
    %6401 = vmatprep.subr.mxu0 0.0
    %6402 = vmatpush1.msra.mxu0 0.0
    %6403 = vmatprep.subr.mxu0 0.0
    %6404 = vmatpush1.msra.mxu0 0.0
    %6405 = vmatprep.subr.mxu0 0.0
    %6406 = vmatpush1.msra.mxu0 0.0
    %6407 = vmatprep.subr.mxu0 0.0
    %6408 = vmatpush1.msra.mxu0 0.0
    %6409 = vmatprep.subr.mxu0 0.0
    %6410 = vmatpush1.msra.mxu0 0.0
    %6411 = vmatprep.subr.mxu0 0.0
    %6412 = vmatpush1.msra.mxu0 0.0
    %6413 = vmatprep.subr.mxu0 0.0
    %6414 = vmatpush1.msra.mxu0 0.0
    %6415 = vmatprep.subr.mxu0 0.0
    %6416 = vmatpush1.msra.mxu0 0.0
    %6417 = vmatprep.mubr.f32.mxu0 0.0
    %6418 = vmatmul.mubr.f32.gmra.mrb[0].mxu0 %v6351
    %v6419 = vpop.f32.mrb[0].mxu0
    %v6420 = vadd.f32 0.0, %v6419
    %v6421 = vpop.f32.mrb[0].mxu0
    %6422 = vdwg.mxu0
    %6423 = vmatprep.subr.mxu0 0.0
    %6424 = vmatpush1.msra.mxu0 %v2215
    %6425 = vmatprep.subr.mxu0 0.0
    %6426 = vmatpush1.msra.mxu0 %v2216
    %6427 = vmatprep.subr.mxu0 0.0
    %6428 = vmatpush1.msra.mxu0 %v2217
    %6429 = vmatprep.subr.mxu0 0.0
    %6430 = vmatpush1.msra.mxu0 %v2218
    %6431 = vmatprep.subr.mxu0 0.0
    %6432 = vmatpush1.msra.mxu0 0.0
    %6433 = vmatprep.subr.mxu0 0.0
    %6434 = vmatpush1.msra.mxu0 0.0
    %6435 = vmatprep.subr.mxu0 0.0
    %6436 = vmatpush1.msra.mxu0 0.0
    %6437 = vmatprep.subr.mxu0 0.0
    %6438 = vmatpush1.msra.mxu0 0.0
    %6439 = vmatprep.subr.mxu0 0.0
    %6440 = vmatpush1.msra.mxu0 0.0
    %6441 = vmatprep.subr.mxu0 0.0
    %6442 = vmatpush1.msra.mxu0 0.0
    %6443 = vmatprep.subr.mxu0 0.0
    %6444 = vmatpush1.msra.mxu0 0.0
    %6445 = vmatprep.subr.mxu0 0.0
    %6446 = vmatpush1.msra.mxu0 0.0
    %6447 = vmatprep.subr.mxu0 0.0
    %6448 = vmatpush1.msra.mxu0 0.0
    %6449 = vmatprep.subr.mxu0 0.0
    %6450 = vmatpush1.msra.mxu0 0.0
    %6451 = vmatprep.subr.mxu0 0.0
    %6452 = vmatpush1.msra.mxu0 0.0
    %6453 = vmatprep.subr.mxu0 0.0
    %6454 = vmatpush1.msra.mxu0 0.0
    %6455 = vmatprep.subr.mxu0 0.0
    %6456 = vmatpush1.msra.mxu0 0.0
    %6457 = vmatprep.subr.mxu0 0.0
    %6458 = vmatpush1.msra.mxu0 0.0
    %6459 = vmatprep.subr.mxu0 0.0
    %6460 = vmatpush1.msra.mxu0 0.0
    %6461 = vmatprep.subr.mxu0 0.0
    %6462 = vmatpush1.msra.mxu0 0.0
    %6463 = vmatprep.subr.mxu0 0.0
    %6464 = vmatpush1.msra.mxu0 0.0
    %6465 = vmatprep.subr.mxu0 0.0
    %6466 = vmatpush1.msra.mxu0 0.0
    %6467 = vmatprep.subr.mxu0 0.0
    %6468 = vmatpush1.msra.mxu0 0.0
    %6469 = vmatprep.subr.mxu0 0.0
    %6470 = vmatpush1.msra.mxu0 0.0
    %6471 = vmatprep.subr.mxu0 0.0
    %6472 = vmatpush1.msra.mxu0 0.0
    %6473 = vmatprep.subr.mxu0 0.0
    %6474 = vmatpush1.msra.mxu0 0.0
    %6475 = vmatprep.subr.mxu0 0.0
    %6476 = vmatpush1.msra.mxu0 0.0
    %6477 = vmatprep.subr.mxu0 0.0
    %6478 = vmatpush1.msra.mxu0 0.0
    %6479 = vmatprep.subr.mxu0 0.0
    %6480 = vmatpush1.msra.mxu0 0.0
    %6481 = vmatprep.subr.mxu0 0.0
    %6482 = vmatpush1.msra.mxu0 0.0
    %6483 = vmatprep.subr.mxu0 0.0
    %6484 = vmatpush1.msra.mxu0 0.0
    %6485 = vmatprep.subr.mxu0 0.0
    %6486 = vmatpush1.msra.mxu0 0.0
    %6487 = vmatprep.mubr.f32.mxu0 0.0
    %6488 = vmatmul.mubr.f32.gmra.mrb[0].mxu0 %v6194
    %v6489 = vpop.f32.mrb[0].mxu0
    %v6490 = vadd.f32 %v6420, %v6489
    %v6491 = vpop.f32.mrb[0].mxu0
    %6492 = vdwg.mxu0
    %v6493 = vadd.f32 %v6490, %v2223
    %v6494 = vtanh.pop %v6493
    %v6496 = vsel %vm254, %v6494, 0
    %6498 = vmatprep.subr.mxu0 0.0
    %6499 = vmatpush1.msra.mxu0 %v2224
    %6500 = vmatprep.subr.mxu0 0.0
    %6501 = vmatpush1.msra.mxu0 %v2225
    %6502 = vmatprep.subr.mxu0 0.0
    %6503 = vmatpush1.msra.mxu0 %v2226
    %6504 = vmatprep.subr.mxu0 0.0
    %6505 = vmatpush1.msra.mxu0 %v2227
    %6506 = vmatprep.subr.mxu0 0.0
    %6507 = vmatpush1.msra.mxu0 0.0
    %6508 = vmatprep.subr.mxu0 0.0
    %6509 = vmatpush1.msra.mxu0 0.0
    %6510 = vmatprep.subr.mxu0 0.0
    %6511 = vmatpush1.msra.mxu0 0.0
    %6512 = vmatprep.subr.mxu0 0.0
    %6513 = vmatpush1.msra.mxu0 0.0
    %6514 = vmatprep.subr.mxu0 0.0
    %6515 = vmatpush1.msra.mxu0 0.0
    %6516 = vmatprep.subr.mxu0 0.0
    %6517 = vmatpush1.msra.mxu0 0.0
    %6518 = vmatprep.subr.mxu0 0.0
    %6519 = vmatpush1.msra.mxu0 0.0
    %6520 = vmatprep.subr.mxu0 0.0
    %6521 = vmatpush1.msra.mxu0 0.0
    %6522 = vmatprep.subr.mxu0 0.0
    %6523 = vmatpush1.msra.mxu0 0.0
    %6524 = vmatprep.subr.mxu0 0.0
    %6525 = vmatpush1.msra.mxu0 0.0
    %6526 = vmatprep.subr.mxu0 0.0
    %6527 = vmatpush1.msra.mxu0 0.0
    %6528 = vmatprep.subr.mxu0 0.0
    %6529 = vmatpush1.msra.mxu0 0.0
    %6530 = vmatprep.subr.mxu0 0.0
    %6531 = vmatpush1.msra.mxu0 0.0
    %6532 = vmatprep.subr.mxu0 0.0
    %6533 = vmatpush1.msra.mxu0 0.0
    %6534 = vmatprep.subr.mxu0 0.0
    %6535 = vmatpush1.msra.mxu0 0.0
    %6536 = vmatprep.subr.mxu0 0.0
    %6537 = vmatpush1.msra.mxu0 0.0
    %6538 = vmatprep.subr.mxu0 0.0
    %6539 = vmatpush1.msra.mxu0 0.0
    %6540 = vmatprep.subr.mxu0 0.0
    %6541 = vmatpush1.msra.mxu0 0.0
    %6542 = vmatprep.subr.mxu0 0.0
    %6543 = vmatpush1.msra.mxu0 0.0
    %6544 = vmatprep.subr.mxu0 0.0
    %6545 = vmatpush1.msra.mxu0 0.0
    %6546 = vmatprep.subr.mxu0 0.0
    %6547 = vmatpush1.msra.mxu0 0.0
    %6548 = vmatprep.subr.mxu0 0.0
    %6549 = vmatpush1.msra.mxu0 0.0
    %6550 = vmatprep.subr.mxu0 0.0
    %6551 = vmatpush1.msra.mxu0 0.0
    %6552 = vmatprep.subr.mxu0 0.0
    %6553 = vmatpush1.msra.mxu0 0.0
    %6554 = vmatprep.subr.mxu0 0.0
    %6555 = vmatpush1.msra.mxu0 0.0
    %6556 = vmatprep.subr.mxu0 0.0
    %6557 = vmatpush1.msra.mxu0 0.0
    %6558 = vmatprep.subr.mxu0 0.0
    %6559 = vmatpush1.msra.mxu0 0.0
    %6560 = vmatprep.subr.mxu0 0.0
    %6561 = vmatpush1.msra.mxu0 0.0
    %6562 = vmatprep.mubr.f32.mxu0 0.0
    %6563 = vmatmul.mubr.f32.gmra.mrb[0].mxu0 %v6496
    %v6564 = vpop.f32.mrb[0].mxu0
    %v6565 = vadd.f32 %v2228, %v6564
    %v6566 = vpop.f32.mrb[0].mxu0
    %6567 = vdwg.mxu0
    %v6568 = vsel %vm2882, %v6565, -inf
    %6569 = vmax.xlane.f32.xlu0 %v6568
    %v6570 = vpop.xlane.xlu0 %6569
    %v6571 = vsub.f32 %v6565, %v6570
    %v6572 = vmul.f32 %v6571, 1.442695
    %v6573 = vpow.pop %v6572
    %v6574 = vsel %vm2882, %v6573, 0.0
    %6575 = vadd.xlane.f32.xlu0 %v6574
    %v6576 = vpop.xlane.xlu0 %6575
    %v6577 = vrcp.pop %v6576
    %v6578 = vmul.f32 %v6573, %v6577
    %s6579 = sld [smem:[#allocation8 + $0x5]]
    %v6581 = vsel %vm180, %v6578, 0
    %6583 = vmatprep.subr.mxu0 0.0
    %6584 = vmatpush1.msra.mxu0 %v2246
    %6585 = vmatprep.subr.mxu0 0.0
    %6586 = vmatpush1.msra.mxu0 %v2247
    %6587 = vmatprep.subr.mxu0 0.0
    %6588 = vmatpush1.msra.mxu0 %v2248
    %6589 = vmatprep.subr.mxu0 0.0
    %6590 = vmatpush1.msra.mxu0 %v2249
    %6591 = vmatprep.subr.mxu0 0.0
    %6592 = vmatpush1.msra.mxu0 %v2250
    %6593 = vmatprep.subr.mxu0 0.0
    %6594 = vmatpush1.msra.mxu0 %v2251
    %6595 = vmatprep.subr.mxu0 0.0
    %6596 = vmatpush1.msra.mxu0 %v2252
    %6597 = vmatprep.subr.mxu0 0.0
    %6598 = vmatpush1.msra.mxu0 %v2253
    %6599 = vmatprep.subr.mxu0 0.0
    %6600 = vmatpush1.msra.mxu0 0.0
    %6601 = vmatprep.subr.mxu0 0.0
    %6602 = vmatpush1.msra.mxu0 0.0
    %6603 = vmatprep.subr.mxu0 0.0
    %6604 = vmatpush1.msra.mxu0 0.0
    %6605 = vmatprep.subr.mxu0 0.0
    %6606 = vmatpush1.msra.mxu0 0.0
    %6607 = vmatprep.subr.mxu0 0.0
    %6608 = vmatpush1.msra.mxu0 0.0
    %6609 = vmatprep.subr.mxu0 0.0
    %6610 = vmatpush1.msra.mxu0 0.0
    %6611 = vmatprep.subr.mxu0 0.0
    %6612 = vmatpush1.msra.mxu0 0.0
    %6613 = vmatprep.subr.mxu0 0.0
    %6614 = vmatpush1.msra.mxu0 0.0
    %6615 = vmatprep.subr.mxu0 0.0
    %6616 = vmatpush1.msra.mxu0 0.0
    %6617 = vmatprep.subr.mxu0 0.0
    %6618 = vmatpush1.msra.mxu0 0.0
    %6619 = vmatprep.subr.mxu0 0.0
    %6620 = vmatpush1.msra.mxu0 0.0
    %6621 = vmatprep.subr.mxu0 0.0
    %6622 = vmatpush1.msra.mxu0 0.0
    %6623 = vmatprep.subr.mxu0 0.0
    %6624 = vmatpush1.msra.mxu0 0.0
    %6625 = vmatprep.subr.mxu0 0.0
    %6626 = vmatpush1.msra.mxu0 0.0
    %6627 = vmatprep.subr.mxu0 0.0
    %6628 = vmatpush1.msra.mxu0 0.0
    %6629 = vmatprep.subr.mxu0 0.0
    %6630 = vmatpush1.msra.mxu0 0.0
    %6631 = vmatprep.subr.mxu0 0.0
    %6632 = vmatpush1.msra.mxu0 0.0
    %6633 = vmatprep.subr.mxu0 0.0
    %6634 = vmatpush1.msra.mxu0 0.0
    %6635 = vmatprep.subr.mxu0 0.0
    %6636 = vmatpush1.msra.mxu0 0.0
    %6637 = vmatprep.subr.mxu0 0.0
    %6638 = vmatpush1.msra.mxu0 0.0
    %6639 = vmatprep.subr.mxu0 0.0
    %6640 = vmatpush1.msra.mxu0 0.0
    %6641 = vmatprep.subr.mxu0 0.0
    %6642 = vmatpush1.msra.mxu0 0.0
    %6643 = vmatprep.subr.mxu0 0.0
    %6644 = vmatpush1.msra.mxu0 0.0
    %6645 = vmatprep.subr.mxu0 0.0
    %6646 = vmatpush1.msra.mxu0 0.0
    %6647 = vmatprep.mubr.f32.mxu0 0.0
    %6648 = vmatmul.mubr.f32.gmra.mrb[0].mxu0 %v6581
    %v6649 = vpop.f32.mrb[0].mxu0
    %v6650 = vadd.f32 0.0, %v6649
    %v6651 = vpop.f32.mrb[0].mxu0
    %6652 = vdwg.mxu0
    %v6653 = vstv %s6579
    %vm6654 = vcmp.ge.f32.partialorder %v6653, %v6650
    %v6655 = vsel %vm6654, 1.0, 0.0
    %v6656 = vsel %vm2882, %v6655, 0.0
    %6657 = vadd.xlane.f32.xlu0 %v6656
    %v6658 = vpop.xlane.xlu0 %6657
    %v6659 = vrot.slane %v6658, 4
    %v6660 = vadd.f32 %v6658, %v6659
    %v6661 = vrot.slane %v6660, 2
    %v6662 = vadd.f32 %v6660, %v6661
    %v6663 = vrot.slane %v6662, 1
    %v6664 = vadd.f32 %v6662, %v6663
    %s6665 = vtos %v6664
    %s6666 = smin.f32 %s6665, 63.0
    %s6667 = scvt.f32.s32.to.zero.pseudo %s6666
    %v6668 = vstv %s6667
    %vm6669 = vcmp.eq.s32.totalorder %v165, %v6668
    %v6670 = vsel %vm6669, 1.0, 0.0
    %v6671 = vmul.f32 %v6578, %v6670
    %v6672 = vsel %vm2882, %v6671, 0.0
    %6673 = vadd.xlane.f32.xlu0 %v6672
    %v6674 = vpop.xlane.xlu0 %6673
    %v6675 = vrot.slane %v6674, 4
    %v6676 = vadd.f32 %v6674, %v6675
    %v6677 = vrot.slane %v6676, 2
    %v6678 = vadd.f32 %v6676, %v6677
    %v6679 = vrot.slane %v6678, 1
    %v6680 = vadd.f32 %v6678, %v6679
    %s6681 = vtos %v6680
    %s6682 = scalar_lea.smem [#allocation18], 5
    %6683 = sst [smem:[%s6682]] %s6667
    %s6684 = scalar_lea.smem [#allocation19], 5
    %6685 = sst [smem:[%s6684]] %s6681
    // Predicated region
    $region98: #{probability_search_decode.1} parent=1 // pred_check
      _
    $region99: #{probability_search_decode.1} parent=1 // pred_check_branch
      %6687 = sbr.rel (0) target = $region101
    $region100: #{probability_search_decode.1} parent=1 // pred_region
      %s6689 = ssub.s32 16, 16
      %6690 = vsyncadd [#allocation6], %s6689
      %6693 = dma.smem_to_hbm [#allocation18], 16, %s16, [#allocation6]
    $region101: #{probability_search_decode.1} parent=1 // pred_fallthru
      _
    // Predicated region
    $region102: #{probability_search_decode.1} parent=1 // pred_check
      _
    $region103: #{probability_search_decode.1} parent=1 // pred_check_branch
      %6695 = sbr.rel (0) target = $region105
    $region104: #{probability_search_decode.1} parent=1 // pred_region
      %s6697 = ssub.s32 16, 16
      %6698 = vsyncadd [#allocation20], %s6697
      %6701 = dma.smem_to_hbm [#allocation19], 16, %s17, [#allocation20]
    $region105: #{probability_search_decode.1} parent=1 // pred_fallthru
      _
    // Predicated region
    $region106: #{probability_search_decode.1} parent=1 // pred_check
      _
    $region107: #{probability_search_decode.1} parent=1 // pred_check_branch
      %6703 = sbr.rel (0) target = $region109
    $region108: #{probability_search_decode.1} parent=1 // pred_region
      %6704 = dma.done [#allocation6], 16
    $region109: #{probability_search_decode.1} parent=1 // pred_fallthru
      _
    // Predicated region
    $region110: #{probability_search_decode.1} parent=1 // pred_check
      _
    $region111: #{probability_search_decode.1} parent=1 // pred_check_branch
      %6706 = sbr.rel (0) target = $region113
    $region112: #{probability_search_decode.1} parent=1 // pred_region
      %6707 = dma.done [#allocation20], 16
    $region113: #{probability_search_decode.1} parent=1 // pred_fallthru
      _
    %6708 = sfence
    %6709 = vsyncpa [#allocation4], 1
    %6710 = vsyncpa [#allocation11], 1
    %6711 = vsyncpa [#allocation14], 1
    %6712 = vsyncpa [#allocation17], 1
    %6713 = vsyncpa [#allocation5], 1
    %6714 = vsyncpa [#allocation6], 1
    %6715 = vsyncpa [#allocation20], 1
    %6716 = vsyncpa [#allocation7], 1

</llo_original>
